<compile_context>
chip_gen: v7x
topology: tpu7x:2x2x1
jax: 0.10.0
libtpu: 0.0.40
codegen_flags: <defaults>
</compile_context>

<pallas_src>
import jax
import jax.numpy as jnp
from jax import lax
from jax.experimental import pallas as pl
from jax.experimental.pallas import tpu as pltpu

C_FEAT = 16                       # encoder feature channels
C9 = C_FEAT * 9                   # unfolded (3x3) feature width = 144
HIDDEN = 128                      # imnet hidden width


def _round_up(x, m):
    return -(-x // m) * m


def _pick_tn(n):
    """Query tile: prefer the largest tile (<=1024) giving an even grid of
    >= 4 steps (v7x has 2 TensorCores sharing the parallel axis); the 1024 cap
    keeps VMEM modest on v5e/v7x."""
    for tn in (1024, 512, 256, 128):
        steps = -(-n // tn)
        if steps >= 4 and steps % 2 == 0:
            return tn
    for tn in (1024, 512, 256, 128):
        if -(-n // tn) >= 2:
            return tn
    return 128


def _vmem_limit_bytes():
    """Explicit scoped-VMEM budget: half the part's physical VMEM, <= 64 MiB.
    Lifts v5e's 16 MiB default; stays honest on v7x's 64 MiB part."""
    try:
        cap = int(pltpu.get_tpu_info().vmem_capacity_bytes)
    except Exception:
        cap = 64 << 20
    return int(min(cap // 2, 64 << 20))


# ----------------------------- Pallas kernel ------------------------------ #
def liif_mlp_kernel(idx_ref, rc_ref, ew_ref, tw_ref, w1r_ref,
                    w2_ref, b2_ref, w3_ref, b3_ref, w4_ref, o_ref):
    """Fused nearest-feature gather + imnet MLP + local-ensemble reduction.

    idx_ref: (4, TN, 1)      int32  global nearest-pixel row per branch
    rc_ref : (4, TN, 4)      f32    [rel_y, rel_x, cell_h, cell_w] per branch
    ew_ref : (TN, 4)         f32    normalized (diag-swapped) ensemble weights
    tw_ref : (R_PAD, HIDDEN) bf16   per-pixel layer-1 pre-activations (+b1 folded)
    w1r_ref: (4, HIDDEN)     f32    layer-1 rows for rel_coord / rel_cell
    o_ref  : (TN, 1)         f32    prediction (scalar output bias added outside)
    """
    nb, tn, _ = idx_ref.shape
    r_pad = tw_ref.shape[0]

    # --- Layer 1: in-kernel gather fused into the GEMM.
    # one_hot(flat_idx) @ TW  ==  unfold(feat)[flat_idx] @ W1_feat + b1 (exact).
    idx = idx_ref[...].reshape(nb * tn, 1)                      # leading-dim collapse
    cols = lax.broadcasted_iota(jnp.int32, (nb * tn, r_pad), 1)
    onehot = jnp.where(cols == idx, 1.0, 0.0).astype(jnp.bfloat16)
    h = jnp.dot(onehot, tw_ref[...], preferred_element_type=jnp.float32)  # (4*TN, H)

    # rel_coord / rel_cell contribution in f32 on the VPU (free filler under MXU).
    rc = rc_ref[...].reshape(nb * tn, 4)
    w1r = w1r_ref[...]
    h = h + (rc[:, 0:1] * w1r[0:1, :] + rc[:, 1:2] * w1r[1:2, :]
             + rc[:, 2:3] * w1r[2:3, :] + rc[:, 3:4] * w1r[3:4, :])
    h = jnp.maximum(h.astype(jnp.bfloat16), 0)                  # bf16 ReLU (packed)

    # --- Layers 2..3: one batched GEMM per layer over all 4 branches.
    h = jnp.dot(h, w2_ref[...], preferred_element_type=jnp.float32) + b2_ref[...]
    h = jnp.maximum(h.astype(jnp.bfloat16), 0)
    h = jnp.dot(h, w3_ref[...], preferred_element_type=jnp.float32) + b3_ref[...]
    h = jnp.maximum(h, 0.0)                                      # (4*TN, HIDDEN) f32

    # --- Final 1-wide layer: VPU multiply + lane (XLU) reduce.
    p = jnp.sum(h * w4_ref[...], axis=-1, keepdims=True)         # (4*TN, 1)

    # --- Area / tot_area weighting + 4-way branch reduction.
    ew = ew_ref[...]                                             # (TN, 4)
    acc = p[0 * tn:1 * tn] * ew[:, 0:1]
    acc = acc + p[1 * tn:2 * tn] * ew[:, 1:2]
    acc = acc + p[2 * tn:3 * tn] * ew[:, 2:3]
    acc = acc + p[3 * tn:4 * tn] * ew[:, 3:4]
    o_ref[...] = acc


def run_liif_mlp(idx4, rc4, ens_w, tw, params):
    """idx4: (4,N,1) i32; rc4: (4,N,4) f32; ens_w: (N,4) f32; tw: (R_pad,H) bf16."""
    n = ens_w.shape[0]
    r_pad = tw.shape[0]
    tn = _pick_tn(n)
    n_pad = _round_up(n, tn)
    if n_pad != n:
        idx4 = jnp.pad(idx4, ((0, 0), (0, n_pad - n), (0, 0)))
        rc4 = jnp.pad(rc4, ((0, 0), (0, n_pad - n), (0, 0)))
        ens_w = jnp.pad(ens_w, ((0, n_pad - n), (0, 0)))

    flops = 2 * 4 * n_pad * (r_pad * HIDDEN + 2 * HIDDEN * HIDDEN + HIDDEN)
    bytes_accessed = (n_pad * (4 * 4 + 4 * 4 * 4 + 4 * 4 + 4)
                      + r_pad * HIDDEN * 2 + 2 * HIDDEN * HIDDEN * 2
                      + 8 * HIDDEN * 4)

    out = pl.pallas_call(
        liif_mlp_kernel,
        out_shape=jax.ShapeDtypeStruct((n_pad, 1), jnp.float32),
        grid_spec=pltpu.PrefetchScalarGridSpec(
            num_scalar_prefetch=0,
            grid=(n_pad // tn,),
            in_specs=[
                pl.BlockSpec((4, tn, 1), lambda i: (0, i, 0)),
                pl.BlockSpec((4, tn, 4), lambda i: (0, i, 0)),
                pl.BlockSpec((tn, 4), lambda i: (i, 0)),
                pl.BlockSpec((r_pad, HIDDEN), lambda i: (0, 0)),   # resident table
                pl.BlockSpec((4, HIDDEN), lambda i: (0, 0)),
                pl.BlockSpec((HIDDEN, HIDDEN), lambda i: (0, 0)),
                pl.BlockSpec((1, HIDDEN), lambda i: (0, 0)),
                pl.BlockSpec((HIDDEN, HIDDEN), lambda i: (0, 0)),
                pl.BlockSpec((1, HIDDEN), lambda i: (0, 0)),
                pl.BlockSpec((1, HIDDEN), lambda i: (0, 0)),
            ],
            out_specs=pl.BlockSpec((tn, 1), lambda i: (i, 0)),
        ),
        compiler_params=pltpu.CompilerParams(
            dimension_semantics=("parallel",),
            vmem_limit_bytes=_vmem_limit_bytes()),
        cost_estimate=pl.CostEstimate(flops=flops, transcendentals=0,
                                      bytes_accessed=bytes_accessed),
    )(idx4, rc4, ens_w, tw,
      params["w1_rel"], params["w2"], params["b2"],
      params["w3"], params["b3"], params["w4"])
    # Ensemble weights sum to 1 => the scalar output bias factors out exactly
    # (up to ~1 ulp of the weight normalization).
    return out[:n, 0] + params["b4"]


# ------------------------------- JAX glue --------------------------------- #
def make_coord(h, w):
    """Pixel-center coordinates in [-1, 1], shape (h, w, 2), (row, col)."""
    ys = -1.0 + (2.0 * jnp.arange(h, dtype=jnp.float32) + 1.0) / h
    xs = -1.0 + (2.0 * jnp.arange(w, dtype=jnp.float32) + 1.0) / w
    yy, xx = jnp.meshgrid(ys, xs, indexing="ij")
    return jnp.stack([yy, xx], axis=-1)


def unfold3x3(feat):
    """F.unfold(feat, 3, padding=1).view(B, C*9, H, W) equivalent."""
    B, C, H, W = feat.shape
    fp = jnp.pad(feat, ((0, 0), (0, 0), (1, 1), (1, 1)))
    patches = [fp[:, :, ki:ki + H, kj:kj + W] for ki in range(3) for kj in range(3)]
    out = jnp.stack(patches, axis=2)                # (B, C, 9, H, W)
    return out.reshape(B, C * 9, H, W)


def encoder(x, w_enc, b_enc):
    y = lax.conv_general_dilated(
        x, w_enc, window_strides=(1, 1), padding="SAME",
        dimension_numbers=("NCHW", "OIHW", "NCHW"))
    return y + b_enc[None, :, None, None]


def liif_forward(image_lr, coord, cell, params, out_hw):
    """Replicates LIIF.forward: returns (d, d.detach(), zeros_like(d))."""
    B, _, H, W = image_lr.shape
    Q = coord.shape[1]
    N = B * Q

    feat = encoder(image_lr, params["w_enc"], params["b_enc"])   # (B, C, H, W)
    unf = unfold3x3(feat)                                        # (B, C9, H, W)

    # Per-pixel layer-1 pre-activation table gathered inside the kernel.
    table = jnp.transpose(unf.reshape(B, C9, H * W), (0, 2, 1)).reshape(B * H * W, C9)
    tw = (table @ params["w1_feat"] + params["b1"][None, :]).astype(jnp.bfloat16)
    R = B * H * W
    R_pad = _round_up(R, 128)
    if R_pad != R:
        tw = jnp.pad(tw, ((0, R_pad - R), (0, 0)))

    rx, ry, eps = 1.0 / H, 1.0 / W, 1e-6
    cell_h = (cell[..., 0] * H).reshape(N)
    cell_w = (cell[..., 1] * W).reshape(N)
    boff = (jnp.arange(B, dtype=jnp.int32) * (H * W))[:, None]   # per-batch row offset

    idxs, rcs, areas = [], [], []
    for vx in (-1, 1):
        for vy in (-1, 1):
            c = coord + jnp.array([vx * rx + eps, vy * ry + eps], jnp.float32)
            c = jnp.clip(c, -1.0 + 1e-6, 1.0 - 1e-6)
            # grid_sample(mode='nearest', align_corners=False)
            # TODO(synk): PyTorch rounds exact half-pixel ties to even; floor()
            # can pick the other neighbour on ties.
            iy = jnp.clip(jnp.floor((c[..., 0] + 1.0) * 0.5 * H), 0, H - 1).astype(jnp.int32)
            ix = jnp.clip(jnp.floor((c[..., 1] + 1.0) * 0.5 * W), 0, W - 1).astype(jnp.int32)
            flat = (iy * W + ix + boff).reshape(N)                          # global table row
            qy = -1.0 + (2.0 * iy.astype(jnp.float32) + 1.0) / H
            qx = -1.0 + (2.0 * ix.astype(jnp.float32) + 1.0) / W
            rel_y = ((coord[..., 0] - qy) * H).reshape(N)
            rel_x = ((coord[..., 1] - qx) * W).reshape(N)
            idxs.append(flat)
            rcs.append(jnp.stack([rel_y, rel_x, cell_h, cell_w], axis=-1))  # (N, 4)
            areas.append(jnp.abs(rel_y * rel_x) + 1e-9)

    tot = areas[0] + areas[1] + areas[2] + areas[3]
    # LIIF local-ensemble diagonal swap of areas, then normalize (sums to 1).
    ens_w = jnp.stack([areas[3], areas[2], areas[1], areas[0]], axis=-1) / tot[:, None]

    idx4 = jnp.stack(idxs, axis=0)[..., None].astype(jnp.int32)  # (4, N, 1)
    rc4 = jnp.stack(rcs, axis=0).astype(jnp.float32)             # (4, N, 4)

    pred = run_liif_mlp(idx4, rc4, ens_w.astype(jnp.float32), tw, params)
    d = pred.reshape(B, 1, out_hw[0], out_hw[1])
    return d, jax.lax.stop_gradient(d), jnp.zeros_like(d)


def init_params(key):
    ks = jax.random.split(key, 6)

    def norm(k, shape, scale=0.05):
        return jax.random.normal(k, shape, jnp.float32) * scale

    p = {}
    p["w_enc"] = norm(ks[0], (C_FEAT, 1, 3, 3), 0.1)
    p["b_enc"] = jnp.zeros((C_FEAT,), jnp.float32)
    # imnet layer 1 split: feature rows (folded with b1 into the gather table on
    # the host) + the 4 rel_coord/rel_cell rows applied on the VPU in-kernel.
    w1 = norm(ks[1], (C9 + 4, HIDDEN))
    p["w1_feat"] = w1[:C9]                                   # (144, 128) f32
    p["w1_rel"] = w1[C9:]                                    # (4, 128) f32
    p["b1"] = jnp.zeros((HIDDEN,), jnp.float32)
    p["w2"] = norm(ks[2], (HIDDEN, HIDDEN)).astype(jnp.bfloat16)
    p["b2"] = jnp.zeros((1, HIDDEN), jnp.float32)
    p["w3"] = norm(ks[3], (HIDDEN, HIDDEN)).astype(jnp.bfloat16)
    p["b3"] = jnp.zeros((1, HIDDEN), jnp.float32)
    p["w4"] = norm(ks[4], (1, HIDDEN))                       # final-layer weight row
    p["b4"] = jnp.zeros((), jnp.float32)                     # scalar output bias
    return p


if __name__ == "__main__":
    key = jax.random.PRNGKey(0)
    kp, kx = jax.random.split(key)
    params = init_params(kp)

    B = 2
    H_in, W_in = 8, 16           # lidar_in: 8 channels x 16 points per ring ("8_16")
    C_out, P_out = 16, 32        # lidar_out: 16 channels x 32 points per ring ("16_32")
    Q = C_out * P_out

    image_lr = jax.random.normal(kx, (B, 1, H_in, W_in), jnp.float32)

    # self.coord: normalized query directions for the output grid, repeated over batch.
    coord = jnp.tile(make_coord(C_out, P_out).reshape(1, Q, 2), (B, 1, 1))
    cell = jnp.tile(jnp.array([[2.0 / C_out, 2.0 / P_out]], jnp.float32)[None], (B, Q, 1))

    d, d_detached, d_zeros = liif_forward(image_lr, coord, cell, params, (C_out, P_out))
    jax.block_until_ready((d, d_detached, d_zeros))
    assert d.shape == (B, 1, C_out, P_out)
    assert d_detached.shape == d.shape and d_zeros.shape == d.shape
    assert bool(jnp.all(d_zeros == 0))
    assert bool(jnp.all(jnp.isfinite(d)))
    print("KERNEL_OK")
</pallas_src>

<mosaic_0001>
module attributes {stable_mosaic.version = 11 : i64} {
  func.func @liif_mlp_kernel(%arg0: i32, %arg1: memref<4x256x1xi32, #tpu.memory_space<vmem>>, %arg2: memref<4x256x4xf32, #tpu.memory_space<vmem>>, %arg3: memref<256x4xf32, #tpu.memory_space<vmem>>, %arg4: memref<256x128xbf16, #tpu.memory_space<vmem>>, %arg5: memref<4x128xf32, #tpu.memory_space<vmem>>, %arg6: memref<128x128xbf16, #tpu.memory_space<vmem>>, %arg7: memref<1x128xf32, #tpu.memory_space<vmem>>, %arg8: memref<128x128xbf16, #tpu.memory_space<vmem>>, %arg9: memref<1x128xf32, #tpu.memory_space<vmem>>, %arg10: memref<1x128xf32, #tpu.memory_space<vmem>>, %arg11: memref<256x1xf32, #tpu.memory_space<vmem>>) attributes {dimension_semantics = [#tpu.dimension_semantics<parallel>], iteration_bounds = array<i64: 4>, scalar_prefetch = 0 : i64, scratch_operands = 0 : i64, tpu.core_type = #tpu.core_type<tc>, window_params = [{transform_indices = @transform_0, window_bounds = array<i64: 4, 256, 1>}, {transform_indices = @transform_1, window_bounds = array<i64: 4, 256, 4>}, {transform_indices = @transform_2, window_bounds = array<i64: 256, 4>}, {pipeline_mode = #tpu.pipeline_mode<synchronous>, transform_indices = @transform_3, window_bounds = array<i64: 256, 128>}, {pipeline_mode = #tpu.pipeline_mode<synchronous>, transform_indices = @transform_4, window_bounds = array<i64: 4, 128>}, {pipeline_mode = #tpu.pipeline_mode<synchronous>, transform_indices = @transform_5, window_bounds = array<i64: 128, 128>}, {pipeline_mode = #tpu.pipeline_mode<synchronous>, transform_indices = @transform_6, window_bounds = array<i64: 1, 128>}, {pipeline_mode = #tpu.pipeline_mode<synchronous>, transform_indices = @transform_7, window_bounds = array<i64: 128, 128>}, {pipeline_mode = #tpu.pipeline_mode<synchronous>, transform_indices = @transform_8, window_bounds = array<i64: 1, 128>}, {pipeline_mode = #tpu.pipeline_mode<synchronous>, transform_indices = @transform_9, window_bounds = array<i64: 1, 128>}, {transform_indices = @transform_10, window_bounds = array<i64: 256, 1>}]} {
    %c0 = arith.constant 0 : index
    %c0_0 = arith.constant 0 : index
    %c0_1 = arith.constant 0 : index
    %0 = vector.load %arg1[%c0, %c0_0, %c0_1] : memref<4x256x1xi32, #tpu.memory_space<vmem>>, vector<4x256x1xi32>
    %1 = vector.shape_cast %0 : vector<4x256x1xi32> to vector<1024x1xi32>
    %2 = tpu.iota {dimensions = array<i32: 1>} : vector<1024x256xi32>
    %3 = vector.broadcast %1 : vector<1024x1xi32> to vector<1024x256xi32>
    %4 = arith.cmpi eq, %2, %3 : vector<1024x256xi32>
    %cst = arith.constant 1.000000e+00 : f32
    %cst_2 = arith.constant 0.000000e+00 : f32
    %5 = vector.broadcast %cst : f32 to vector<1024x256xf32>
    %6 = vector.broadcast %cst_2 : f32 to vector<1024x256xf32>
    %7 = arith.select %4, %5, %6 : vector<1024x256xi1>, vector<1024x256xf32>
    %8 = arith.truncf %7 : vector<1024x256xf32> to vector<1024x256xbf16>
    %c0_3 = arith.constant 0 : index
    %c0_4 = arith.constant 0 : index
    %9 = vector.load %arg4[%c0_3, %c0_4] : memref<256x128xbf16, #tpu.memory_space<vmem>>, vector<256x128xbf16>
    %cst_5 = arith.constant dense<0.000000e+00> : vector<1024x128xf32>
    %10 = tpu.matmul %8, %9, %cst_5 {dimension_numbers = #tpu.dot_dimension_numbers<[1], [0], [0], [1], [0, 0, 1, 1], [], []>} : vector<1024x256xbf16>, vector<256x128xbf16>, vector<1024x128xf32> -> vector<1024x128xf32>
    %c0_6 = arith.constant 0 : index
    %c0_7 = arith.constant 0 : index
    %c0_8 = arith.constant 0 : index
    %11 = vector.load %arg2[%c0_6, %c0_7, %c0_8] : memref<4x256x4xf32, #tpu.memory_space<vmem>>, vector<4x256x4xf32>
    %12 = vector.shape_cast %11 : vector<4x256x4xf32> to vector<1024x4xf32>
    %c0_9 = arith.constant 0 : index
    %c0_10 = arith.constant 0 : index
    %13 = vector.load %arg5[%c0_9, %c0_10] : memref<4x128xf32, #tpu.memory_space<vmem>>, vector<4x128xf32>
    %14 = vector.extract_strided_slice %12 {offsets = [0, 0], sizes = [1024, 1], strides = [1, 1]} : vector<1024x4xf32> to vector<1024x1xf32>
    %15 = vector.extract_strided_slice %13 {offsets = [0, 0], sizes = [1, 128], strides = [1, 1]} : vector<4x128xf32> to vector<1x128xf32>
    %16 = vector.broadcast %14 : vector<1024x1xf32> to vector<1024x128xf32>
    %17 = vector.broadcast %15 : vector<1x128xf32> to vector<1024x128xf32>
    %18 = arith.mulf %16, %17 : vector<1024x128xf32>
    %19 = vector.extract_strided_slice %12 {offsets = [0, 1], sizes = [1024, 1], strides = [1, 1]} : vector<1024x4xf32> to vector<1024x1xf32>
    %20 = vector.extract_strided_slice %13 {offsets = [1, 0], sizes = [1, 128], strides = [1, 1]} : vector<4x128xf32> to vector<1x128xf32>
    %21 = vector.broadcast %19 : vector<1024x1xf32> to vector<1024x128xf32>
    %22 = vector.broadcast %20 : vector<1x128xf32> to vector<1024x128xf32>
    %23 = arith.mulf %21, %22 : vector<1024x128xf32>
    %24 = arith.addf %18, %23 : vector<1024x128xf32>
    %25 = vector.extract_strided_slice %12 {offsets = [0, 2], sizes = [1024, 1], strides = [1, 1]} : vector<1024x4xf32> to vector<1024x1xf32>
    %26 = vector.extract_strided_slice %13 {offsets = [2, 0], sizes = [1, 128], strides = [1, 1]} : vector<4x128xf32> to vector<1x128xf32>
    %27 = vector.broadcast %25 : vector<1024x1xf32> to vector<1024x128xf32>
    %28 = vector.broadcast %26 : vector<1x128xf32> to vector<1024x128xf32>
    %29 = arith.mulf %27, %28 : vector<1024x128xf32>
    %30 = arith.addf %24, %29 : vector<1024x128xf32>
    %31 = vector.extract_strided_slice %12 {offsets = [0, 3], sizes = [1024, 1], strides = [1, 1]} : vector<1024x4xf32> to vector<1024x1xf32>
    %32 = vector.extract_strided_slice %13 {offsets = [3, 0], sizes = [1, 128], strides = [1, 1]} : vector<4x128xf32> to vector<1x128xf32>
    %33 = vector.broadcast %31 : vector<1024x1xf32> to vector<1024x128xf32>
    %34 = vector.broadcast %32 : vector<1x128xf32> to vector<1024x128xf32>
    %35 = arith.mulf %33, %34 : vector<1024x128xf32>
    %36 = arith.addf %30, %35 : vector<1024x128xf32>
    %37 = arith.addf %10, %36 : vector<1024x128xf32>
    %38 = arith.truncf %37 : vector<1024x128xf32> to vector<1024x128xbf16>
    %cst_11 = arith.constant 0.000000e+00 : bf16
    %39 = vector.broadcast %cst_11 : bf16 to vector<1024x128xbf16>
    %40 = arith.maximumf %38, %39 : vector<1024x128xbf16>
    %c0_12 = arith.constant 0 : index
    %c0_13 = arith.constant 0 : index
    %41 = vector.load %arg6[%c0_12, %c0_13] : memref<128x128xbf16, #tpu.memory_space<vmem>>, vector<128x128xbf16>
    %cst_14 = arith.constant dense<0.000000e+00> : vector<1024x128xf32>
    %42 = tpu.matmul %40, %41, %cst_14 {dimension_numbers = #tpu.dot_dimension_numbers<[1], [0], [0], [1], [0, 0, 1, 1], [], []>} : vector<1024x128xbf16>, vector<128x128xbf16>, vector<1024x128xf32> -> vector<1024x128xf32>
    %c0_15 = arith.constant 0 : index
    %c0_16 = arith.constant 0 : index
    %43 = vector.load %arg7[%c0_15, %c0_16] : memref<1x128xf32, #tpu.memory_space<vmem>>, vector<1x128xf32>
    %44 = vector.broadcast %43 : vector<1x128xf32> to vector<1024x128xf32>
    %45 = arith.addf %42, %44 : vector<1024x128xf32>
    %46 = arith.truncf %45 : vector<1024x128xf32> to vector<1024x128xbf16>
    %cst_17 = arith.constant 0.000000e+00 : bf16
    %47 = vector.broadcast %cst_17 : bf16 to vector<1024x128xbf16>
    %48 = arith.maximumf %46, %47 : vector<1024x128xbf16>
    %c0_18 = arith.constant 0 : index
    %c0_19 = arith.constant 0 : index
    %49 = vector.load %arg8[%c0_18, %c0_19] : memref<128x128xbf16, #tpu.memory_space<vmem>>, vector<128x128xbf16>
    %cst_20 = arith.constant dense<0.000000e+00> : vector<1024x128xf32>
    %50 = tpu.matmul %48, %49, %cst_20 {dimension_numbers = #tpu.dot_dimension_numbers<[1], [0], [0], [1], [0, 0, 1, 1], [], []>} : vector<1024x128xbf16>, vector<128x128xbf16>, vector<1024x128xf32> -> vector<1024x128xf32>
    %c0_21 = arith.constant 0 : index
    %c0_22 = arith.constant 0 : index
    %51 = vector.load %arg9[%c0_21, %c0_22] : memref<1x128xf32, #tpu.memory_space<vmem>>, vector<1x128xf32>
    %52 = vector.broadcast %51 : vector<1x128xf32> to vector<1024x128xf32>
    %53 = arith.addf %50, %52 : vector<1024x128xf32>
    %cst_23 = arith.constant 0.000000e+00 : f32
    %54 = vector.broadcast %cst_23 : f32 to vector<1024x128xf32>
    %55 = arith.maximumf %53, %54 : vector<1024x128xf32>
    %c0_24 = arith.constant 0 : index
    %c0_25 = arith.constant 0 : index
    %56 = vector.load %arg10[%c0_24, %c0_25] : memref<1x128xf32, #tpu.memory_space<vmem>>, vector<1x128xf32>
    %57 = vector.broadcast %56 : vector<1x128xf32> to vector<1024x128xf32>
    %58 = arith.mulf %55, %57 : vector<1024x128xf32>
    %cst_26 = arith.constant dense<0.000000e+00> : vector<1024xf32>
    %59 = vector.multi_reduction <add>, %58, %cst_26 [1] : vector<1024x128xf32> to vector<1024xf32>
    %60 = vector.shape_cast %59 : vector<1024xf32> to vector<1024x1xf32>
    %c0_27 = arith.constant 0 : index
    %c0_28 = arith.constant 0 : index
    %61 = vector.load %arg3[%c0_27, %c0_28] : memref<256x4xf32, #tpu.memory_space<vmem>>, vector<256x4xf32>
    %62 = vector.extract_strided_slice %60 {offsets = [0, 0], sizes = [256, 1], strides = [1, 1]} : vector<1024x1xf32> to vector<256x1xf32>
    %63 = vector.extract_strided_slice %61 {offsets = [0, 0], sizes = [256, 1], strides = [1, 1]} : vector<256x4xf32> to vector<256x1xf32>
    %64 = arith.mulf %62, %63 : vector<256x1xf32>
    %65 = vector.extract_strided_slice %60 {offsets = [256, 0], sizes = [256, 1], strides = [1, 1]} : vector<1024x1xf32> to vector<256x1xf32>
    %66 = vector.extract_strided_slice %61 {offsets = [0, 1], sizes = [256, 1], strides = [1, 1]} : vector<256x4xf32> to vector<256x1xf32>
    %67 = arith.mulf %65, %66 : vector<256x1xf32>
    %68 = arith.addf %64, %67 : vector<256x1xf32>
    %69 = vector.extract_strided_slice %60 {offsets = [512, 0], sizes = [256, 1], strides = [1, 1]} : vector<1024x1xf32> to vector<256x1xf32>
    %70 = vector.extract_strided_slice %61 {offsets = [0, 2], sizes = [256, 1], strides = [1, 1]} : vector<256x4xf32> to vector<256x1xf32>
    %71 = arith.mulf %69, %70 : vector<256x1xf32>
    %72 = arith.addf %68, %71 : vector<256x1xf32>
    %73 = vector.extract_strided_slice %60 {offsets = [768, 0], sizes = [256, 1], strides = [1, 1]} : vector<1024x1xf32> to vector<256x1xf32>
    %74 = vector.extract_strided_slice %61 {offsets = [0, 3], sizes = [256, 1], strides = [1, 1]} : vector<256x4xf32> to vector<256x1xf32>
    %75 = arith.mulf %73, %74 : vector<256x1xf32>
    %76 = arith.addf %72, %75 : vector<256x1xf32>
    %c0_29 = arith.constant 0 : index
    %c0_30 = arith.constant 0 : index
    %77 = vector.load %arg11[%c0_29, %c0_30] : memref<256x1xf32, #tpu.memory_space<vmem>>, vector<256x1xf32>
    tpu.vector_store %arg11[%c0_29, %c0_30], %76 {strides = array<i32>} : memref<256x1xf32, #tpu.memory_space<vmem>>, vector<256x1xf32>,
    return
  }
  func.func @transform_0(%arg0: i32) -> (i32, i32, i32) {
    %c0_i32 = arith.constant 0 : i32
    %c0_i32_0 = arith.constant 0 : i32
    %c0_i32_1 = arith.constant 0 : i32
    return %c0_i32, %arg0, %c0_i32_0 : i32, i32, i32
  }
  func.func @transform_1(%arg0: i32) -> (i32, i32, i32) {
    %c0_i32 = arith.constant 0 : i32
    %c0_i32_0 = arith.constant 0 : i32
    %c0_i32_1 = arith.constant 0 : i32
    return %c0_i32, %arg0, %c0_i32_0 : i32, i32, i32
  }
  func.func @transform_2(%arg0: i32) -> (i32, i32) {
    %c0_i32 = arith.constant 0 : i32
    %c0_i32_0 = arith.constant 0 : i32
    return %arg0, %c0_i32 : i32, i32
  }
  func.func @transform_3(%arg0: i32) -> (i32, i32) {
    %c0_i32 = arith.constant 0 : i32
    %c0_i32_0 = arith.constant 0 : i32
    %c0_i32_1 = arith.constant 0 : i32
    return %c0_i32, %c0_i32_0 : i32, i32
  }
  func.func @transform_4(%arg0: i32) -> (i32, i32) {
    %c0_i32 = arith.constant 0 : i32
    %c0_i32_0 = arith.constant 0 : i32
    %c0_i32_1 = arith.constant 0 : i32
    return %c0_i32, %c0_i32_0 : i32, i32
  }
  func.func @transform_5(%arg0: i32) -> (i32, i32) {
    %c0_i32 = arith.constant 0 : i32
    %c0_i32_0 = arith.constant 0 : i32
    %c0_i32_1 = arith.constant 0 : i32
    return %c0_i32, %c0_i32_0 : i32, i32
  }
  func.func @transform_6(%arg0: i32) -> (i32, i32) {
    %c0_i32 = arith.constant 0 : i32
    %c0_i32_0 = arith.constant 0 : i32
    %c0_i32_1 = arith.constant 0 : i32
    return %c0_i32, %c0_i32_0 : i32, i32
  }
  func.func @transform_7(%arg0: i32) -> (i32, i32) {
    %c0_i32 = arith.constant 0 : i32
    %c0_i32_0 = arith.constant 0 : i32
    %c0_i32_1 = arith.constant 0 : i32
    return %c0_i32, %c0_i32_0 : i32, i32
  }
  func.func @transform_8(%arg0: i32) -> (i32, i32) {
    %c0_i32 = arith.constant 0 : i32
    %c0_i32_0 = arith.constant 0 : i32
    %c0_i32_1 = arith.constant 0 : i32
    return %c0_i32, %c0_i32_0 : i32, i32
  }
  func.func @transform_9(%arg0: i32) -> (i32, i32) {
    %c0_i32 = arith.constant 0 : i32
    %c0_i32_0 = arith.constant 0 : i32
    %c0_i32_1 = arith.constant 0 : i32
    return %c0_i32, %c0_i32_0 : i32, i32
  }
  func.func @transform_10(%arg0: i32) -> (i32, i32) {
    %c0_i32 = arith.constant 0 : i32
    %c0_i32_0 = arith.constant 0 : i32
    return %arg0, %c0_i32 : i32, i32
  }
}

</mosaic_0001>

<llo_original>
// kernel: tpu_custom_call.1
$region0: #{tpu_custom_call.1}
  #allocation0 [shape = 'u32[]', space=smem, size = 0x4, offset = 0x4, fixed_abs, tag = 'smem constant byte address 0x4 - core index']
  #allocation1 [shape = 'u32[144,128]{1,0:T(1,128)}', space=vmem, size = 0x12000, scoped, tag = 'internal scratch']
  %s0 = inlined_call_operand.vmem [shape: s32[4,1024,1], index: 0, kind: input, shape index: {}]
  %s1 = inlined_call_operand.vmem [shape: f32[4,1024,4], index: 1, kind: input, shape index: {}]
  %s2 = inlined_call_operand.vmem [shape: f32[1024,4], index: 2, kind: input, shape index: {}]
  %s3 = inlined_call_operand.vmem [shape: bf16[256,128], index: 3, kind: input, shape index: {}]
  %s4 = inlined_call_operand.vmem [shape: f32[4,128], index: 4, kind: input, shape index: {}]
  %s5 = inlined_call_operand.vmem [shape: bf16[128,128], index: 5, kind: input, shape index: {}]
  %s6 = inlined_call_operand.vmem [shape: f32[1,128], index: 6, kind: input, shape index: {}]
  %s7 = inlined_call_operand.vmem [shape: bf16[128,128], index: 7, kind: input, shape index: {}]
  %s8 = inlined_call_operand.vmem [shape: f32[1,128], index: 8, kind: input, shape index: {}]
  %s9 = inlined_call_operand.vmem [shape: f32[1,128], index: 9, kind: input, shape index: {}]
  %s10 = inlined_call_operand.vmem [shape: f32[1024,1], index: 10, kind: output, shape index: {}]
  %s11 = sld [smem:[#allocation0]]
  $region149: #{tpu_custom_call.1} parent=0
    _
  %s13 = ssub.s32 1, %s11
  %s14 = scalar_select 0, %s13, %s11
  $region1: #{tpu_custom_call.1} parent=0
    #allocation2 [shape = 'u8[1048576]{0}', space=vmem, size = 0x100000, scoped, tag = 'input window, operand 0']
    #allocation3 [shape = 'u8[1048576]{0}', space=vmem, size = 0x100000, scoped, tag = 'input window, operand 1']
    loop: start=0, step=1, limit=6
    $region2: #{tpu_custom_call.1} parent=1 // loop_pre_header
      _
    $region3: #{tpu_custom_call.1} parent=1 // loop_header
      %s16 = sphi 0, %s20
      %p17 = scmp.ge.s32.totalorder %s16, 6
      %s26 = sphi 0, %s28
      %s29 = sphi 0, %s26
      %s30 = sphi 0, %s29
      %s46 = sphi 0, %s30
      %s52 = sphi 0, %s54
      %s55 = sphi 0, %s52
      %s56 = sphi 0, %s55
      %s72 = sphi 0, %s56
      %s78 = sphi 0, %s80
      %s81 = sphi 0, %s78
      %s82 = sphi 0, %s81
      %s98 = sphi 0, %s82
      %s102 = sphi 0, %s102
      %s104 = sphi 0, %s102
      %s105 = sphi 0, %s104
      %s119 = sphi 0, %s105
      %s123 = sphi 0, %s123
      %s125 = sphi 0, %s123
      %s126 = sphi 0, %s125
      %s140 = sphi 0, %s126
      %s144 = sphi 0, %s144
      %s146 = sphi 0, %s144
      %s147 = sphi 0, %s146
      %s161 = sphi 0, %s147
      %s165 = sphi 0, %s165
      %s167 = sphi 0, %s165
      %s168 = sphi 0, %s167
      %s182 = sphi 0, %s168
      %s186 = sphi 0, %s186
      %s188 = sphi 0, %s186
      %s189 = sphi 0, %s188
      %s203 = sphi 0, %s189
      %s207 = sphi 0, %s207
      %s209 = sphi 0, %s207
      %s210 = sphi 0, %s209
      %s224 = sphi 0, %s210
      %s228 = sphi 0, %s228
      %s230 = sphi 0, %s228
      %s231 = sphi 0, %s230
      %s245 = sphi 0, %s231
      %s251 = sphi 0, %s253
      %s254 = sphi 0, %s251
      %s255 = sphi 0, %s254
      %s271 = sphi 0, %s255
    $region4: #{tpu_custom_call.1} parent=1 // loop_header_branch
      %19 = sbr.rel (%p17) target = $region8
    $region5: #{tpu_custom_call.1} parent=1 // loop_body
      %s21 = ssub.s32 %s16, 1
      %s22 = ssub.s32 %s16, 2
      %s23 = sadd.s32 %s16, 1
      %s24 = ssub.s32 %s16, %s23
      %p25 = scmp.eq.s32.totalorder %s24, 0
      %s27 = sadd.s32 %s26, 1
      %s28 = scalar_select %p25, %s26, %s27
      %p31 = pneg %p25
      %p32 = scmp.eq.s32.totalorder %s16, 3
      %p33 = por %p31, %p32
      %p34 = scmp.ne.s32.totalorder %s26, %s29
      %p35 = scmp.eq.s32.totalorder %s16, 0
      %p36 = por %p34, %p35
      %p37 = scmp.ne.s32.totalorder %s26, %s29
      %p38 = scmp.eq.s32.totalorder %s21, 3
      %p39 = por %p37, %p38
      %p40 = scmp.ne.s32.totalorder %s29, %s30
      %p41 = scmp.eq.s32.totalorder %s21, 0
      %p42 = por %p40, %p41
      %p43 = scmp.ne.s32.totalorder %s29, %s30
      %p44 = scmp.eq.s32.totalorder %s22, 3
      %p45 = por %p43, %p44
      %p47 = scmp.ne.s32.totalorder %s30, %s46
      %p48 = scmp.eq.s32.totalorder %s22, 0
      %p49 = por %p47, %p48
      %s50 = ssub.s32 %s16, %s23
      %p51 = scmp.eq.s32.totalorder %s50, 0
      %s53 = sadd.s32 %s52, 1
      %s54 = scalar_select %p51, %s52, %s53
      %p57 = pneg %p51
      %p58 = scmp.eq.s32.totalorder %s16, 3
      %p59 = por %p57, %p58
      %p60 = scmp.ne.s32.totalorder %s52, %s55
      %p61 = scmp.eq.s32.totalorder %s16, 0
      %p62 = por %p60, %p61
      %p63 = scmp.ne.s32.totalorder %s52, %s55
      %p64 = scmp.eq.s32.totalorder %s21, 3
      %p65 = por %p63, %p64
      %p66 = scmp.ne.s32.totalorder %s55, %s56
      %p67 = scmp.eq.s32.totalorder %s21, 0
      %p68 = por %p66, %p67
      %p69 = scmp.ne.s32.totalorder %s55, %s56
      %p70 = scmp.eq.s32.totalorder %s22, 3
      %p71 = por %p69, %p70
      %p73 = scmp.ne.s32.totalorder %s56, %s72
      %p74 = scmp.eq.s32.totalorder %s22, 0
      %p75 = por %p73, %p74
      %s76 = ssub.s32 %s16, %s23
      %p77 = scmp.eq.s32.totalorder %s76, 0
      %s79 = sadd.s32 %s78, 1
      %s80 = scalar_select %p77, %s78, %s79
      %p83 = pneg %p77
      %p84 = scmp.eq.s32.totalorder %s16, 3
      %p85 = por %p83, %p84
      %p86 = scmp.ne.s32.totalorder %s78, %s81
      %p87 = scmp.eq.s32.totalorder %s16, 0
      %p88 = por %p86, %p87
      %p89 = scmp.ne.s32.totalorder %s78, %s81
      %p90 = scmp.eq.s32.totalorder %s21, 3
      %p91 = por %p89, %p90
      %p92 = scmp.ne.s32.totalorder %s81, %s82
      %p93 = scmp.eq.s32.totalorder %s21, 0
      %p94 = por %p92, %p93
      %p95 = scmp.ne.s32.totalorder %s81, %s82
      %p96 = scmp.eq.s32.totalorder %s22, 3
      %p97 = por %p95, %p96
      %p99 = scmp.ne.s32.totalorder %s82, %s98
      %p100 = scmp.eq.s32.totalorder %s22, 0
      %p101 = por %p99, %p100
      %s103 = sadd.s32 %s102, 1
      %p106 = scmp.eq.s32.totalorder %s16, 3
      %p107 = scmp.ne.s32.totalorder %s102, %s104
      %p108 = scmp.eq.s32.totalorder %s16, 0
      %p109 = por %p107, %p108
      %p110 = scmp.ne.s32.totalorder %s102, %s104
      %p111 = scmp.eq.s32.totalorder %s21, 3
      %p112 = por %p110, %p111
      %p113 = scmp.ne.s32.totalorder %s104, %s105
      %p114 = scmp.eq.s32.totalorder %s21, 0
      %p115 = por %p113, %p114
      %p116 = scmp.ne.s32.totalorder %s104, %s105
      %p117 = scmp.eq.s32.totalorder %s22, 3
      %p118 = por %p116, %p117
      %p120 = scmp.ne.s32.totalorder %s105, %s119
      %p121 = scmp.eq.s32.totalorder %s22, 0
      %p122 = por %p120, %p121
      %s124 = sadd.s32 %s123, 1
      %p127 = scmp.eq.s32.totalorder %s16, 3
      %p128 = scmp.ne.s32.totalorder %s123, %s125
      %p129 = scmp.eq.s32.totalorder %s16, 0
      %p130 = por %p128, %p129
      %p131 = scmp.ne.s32.totalorder %s123, %s125
      %p132 = scmp.eq.s32.totalorder %s21, 3
      %p133 = por %p131, %p132
      %p134 = scmp.ne.s32.totalorder %s125, %s126
      %p135 = scmp.eq.s32.totalorder %s21, 0
      %p136 = por %p134, %p135
      %p137 = scmp.ne.s32.totalorder %s125, %s126
      %p138 = scmp.eq.s32.totalorder %s22, 3
      %p139 = por %p137, %p138
      %p141 = scmp.ne.s32.totalorder %s126, %s140
      %p142 = scmp.eq.s32.totalorder %s22, 0
      %p143 = por %p141, %p142
      %s145 = sadd.s32 %s144, 1
      %p148 = scmp.eq.s32.totalorder %s16, 3
      %p149 = scmp.ne.s32.totalorder %s144, %s146
      %p150 = scmp.eq.s32.totalorder %s16, 0
      %p151 = por %p149, %p150
      %p152 = scmp.ne.s32.totalorder %s144, %s146
      %p153 = scmp.eq.s32.totalorder %s21, 3
      %p154 = por %p152, %p153
      %p155 = scmp.ne.s32.totalorder %s146, %s147
      %p156 = scmp.eq.s32.totalorder %s21, 0
      %p157 = por %p155, %p156
      %p158 = scmp.ne.s32.totalorder %s146, %s147
      %p159 = scmp.eq.s32.totalorder %s22, 3
      %p160 = por %p158, %p159
      %p162 = scmp.ne.s32.totalorder %s147, %s161
      %p163 = scmp.eq.s32.totalorder %s22, 0
      %p164 = por %p162, %p163
      %s166 = sadd.s32 %s165, 1
      %p169 = scmp.eq.s32.totalorder %s16, 3
      %p170 = scmp.ne.s32.totalorder %s165, %s167
      %p171 = scmp.eq.s32.totalorder %s16, 0
      %p172 = por %p170, %p171
      %p173 = scmp.ne.s32.totalorder %s165, %s167
      %p174 = scmp.eq.s32.totalorder %s21, 3
      %p175 = por %p173, %p174
      %p176 = scmp.ne.s32.totalorder %s167, %s168
      %p177 = scmp.eq.s32.totalorder %s21, 0
      %p178 = por %p176, %p177
      %p179 = scmp.ne.s32.totalorder %s167, %s168
      %p180 = scmp.eq.s32.totalorder %s22, 3
      %p181 = por %p179, %p180
      %p183 = scmp.ne.s32.totalorder %s168, %s182
      %p184 = scmp.eq.s32.totalorder %s22, 0
      %p185 = por %p183, %p184
      %s187 = sadd.s32 %s186, 1
      %p190 = scmp.eq.s32.totalorder %s16, 3
      %p191 = scmp.ne.s32.totalorder %s186, %s188
      %p192 = scmp.eq.s32.totalorder %s16, 0
      %p193 = por %p191, %p192
      %p194 = scmp.ne.s32.totalorder %s186, %s188
      %p195 = scmp.eq.s32.totalorder %s21, 3
      %p196 = por %p194, %p195
      %p197 = scmp.ne.s32.totalorder %s188, %s189
      %p198 = scmp.eq.s32.totalorder %s21, 0
      %p199 = por %p197, %p198
      %p200 = scmp.ne.s32.totalorder %s188, %s189
      %p201 = scmp.eq.s32.totalorder %s22, 3
      %p202 = por %p200, %p201
      %p204 = scmp.ne.s32.totalorder %s189, %s203
      %p205 = scmp.eq.s32.totalorder %s22, 0
      %p206 = por %p204, %p205
      %s208 = sadd.s32 %s207, 1
      %p211 = scmp.eq.s32.totalorder %s16, 3
      %p212 = scmp.ne.s32.totalorder %s207, %s209
      %p213 = scmp.eq.s32.totalorder %s16, 0
      %p214 = por %p212, %p213
      %p215 = scmp.ne.s32.totalorder %s207, %s209
      %p216 = scmp.eq.s32.totalorder %s21, 3
      %p217 = por %p215, %p216
      %p218 = scmp.ne.s32.totalorder %s209, %s210
      %p219 = scmp.eq.s32.totalorder %s21, 0
      %p220 = por %p218, %p219
      %p221 = scmp.ne.s32.totalorder %s209, %s210
      %p222 = scmp.eq.s32.totalorder %s22, 3
      %p223 = por %p221, %p222
      %p225 = scmp.ne.s32.totalorder %s210, %s224
      %p226 = scmp.eq.s32.totalorder %s22, 0
      %p227 = por %p225, %p226
      %s229 = sadd.s32 %s228, 1
      %p232 = scmp.eq.s32.totalorder %s16, 3
      %p233 = scmp.ne.s32.totalorder %s228, %s230
      %p234 = scmp.eq.s32.totalorder %s16, 0
      %p235 = por %p233, %p234
      %p236 = scmp.ne.s32.totalorder %s228, %s230
      %p237 = scmp.eq.s32.totalorder %s21, 3
      %p238 = por %p236, %p237
      %p239 = scmp.ne.s32.totalorder %s230, %s231
      %p240 = scmp.eq.s32.totalorder %s21, 0
      %p241 = por %p239, %p240
      %p242 = scmp.ne.s32.totalorder %s230, %s231
      %p243 = scmp.eq.s32.totalorder %s22, 3
      %p244 = por %p242, %p243
      %p246 = scmp.ne.s32.totalorder %s231, %s245
      %p247 = scmp.eq.s32.totalorder %s22, 0
      %p248 = por %p246, %p247
      %s249 = ssub.s32 %s16, %s23
      %p250 = scmp.eq.s32.totalorder %s249, 0
      %s252 = sadd.s32 %s251, 1
      %s253 = scalar_select %p250, %s251, %s252
      %p256 = pneg %p250
      %p257 = scmp.eq.s32.totalorder %s16, 3
      %p258 = por %p256, %p257
      %p259 = scmp.ne.s32.totalorder %s251, %s254
      %p260 = scmp.eq.s32.totalorder %s16, 0
      %p261 = por %p259, %p260
      %p262 = scmp.ne.s32.totalorder %s251, %s254
      %p263 = scmp.eq.s32.totalorder %s21, 3
      %p264 = por %p262, %p263
      %p265 = scmp.ne.s32.totalorder %s254, %s255
      %p266 = scmp.eq.s32.totalorder %s21, 0
      %p267 = por %p265, %p266
      %p268 = scmp.ne.s32.totalorder %s254, %s255
      %p269 = scmp.eq.s32.totalorder %s22, 3
      %p270 = por %p268, %p269
      %p272 = scmp.ne.s32.totalorder %s255, %s271
      %p273 = scmp.eq.s32.totalorder %s22, 0
      %p274 = por %p272, %p273
      %p275 = scmp.le.s32.totalorder 1, %s16
      %p276 = scmp.lt.s32.totalorder %s16, 5
      %p277 = pnand %p275, %p276
      %p278 = pneg %p277
      // Predicated region
      $region9: #{tpu_custom_call.1} parent=5 // pred_check
        _
      $region10: #{tpu_custom_call.1} parent=5 // pred_check_branch
        %280 = sbr.rel (%p277) target = $region12
      $region11: #{tpu_custom_call.1} parent=5 // pred_region
        %s281 = ssub.s32 %s16, 1
        // Predicated region
        $region13: #{tpu_custom_call.1} parent=11 // pred_check
          %p282 = pneg %p115
        $region14: #{tpu_custom_call.1} parent=11 // pred_check_branch
          %284 = sbr.rel (%p282) target = $region16
        $region15: #{tpu_custom_call.1} parent=11 // pred_region
          _
        $region16: #{tpu_custom_call.1} parent=11 // pred_fallthru
          _
        // Predicated region
        $region17: #{tpu_custom_call.1} parent=11 // pred_check
          %p285 = pneg %p136
        $region18: #{tpu_custom_call.1} parent=11 // pred_check_branch
          %287 = sbr.rel (%p285) target = $region20
        $region19: #{tpu_custom_call.1} parent=11 // pred_region
          _
        $region20: #{tpu_custom_call.1} parent=11 // pred_fallthru
          _
        // Predicated region
        $region21: #{tpu_custom_call.1} parent=11 // pred_check
          %p288 = pneg %p157
        $region22: #{tpu_custom_call.1} parent=11 // pred_check_branch
          %290 = sbr.rel (%p288) target = $region24
        $region23: #{tpu_custom_call.1} parent=11 // pred_region
          _
        $region24: #{tpu_custom_call.1} parent=11 // pred_fallthru
          _
        // Predicated region
        $region25: #{tpu_custom_call.1} parent=11 // pred_check
          %p291 = pneg %p178
        $region26: #{tpu_custom_call.1} parent=11 // pred_check_branch
          %293 = sbr.rel (%p291) target = $region28
        $region27: #{tpu_custom_call.1} parent=11 // pred_region
          _
        $region28: #{tpu_custom_call.1} parent=11 // pred_fallthru
          _
        // Predicated region
        $region29: #{tpu_custom_call.1} parent=11 // pred_check
          %p294 = pneg %p199
        $region30: #{tpu_custom_call.1} parent=11 // pred_check_branch
          %296 = sbr.rel (%p294) target = $region32
        $region31: #{tpu_custom_call.1} parent=11 // pred_region
          _
        $region32: #{tpu_custom_call.1} parent=11 // pred_fallthru
          _
        // Predicated region
        $region33: #{tpu_custom_call.1} parent=11 // pred_check
          %p297 = pneg %p220
        $region34: #{tpu_custom_call.1} parent=11 // pred_check_branch
          %299 = sbr.rel (%p297) target = $region36
        $region35: #{tpu_custom_call.1} parent=11 // pred_region
          _
        $region36: #{tpu_custom_call.1} parent=11 // pred_fallthru
          _
        // Predicated region
        $region37: #{tpu_custom_call.1} parent=11 // pred_check
          %p300 = pneg %p241
        $region38: #{tpu_custom_call.1} parent=11 // pred_check_branch
          %302 = sbr.rel (%p300) target = $region40
        $region39: #{tpu_custom_call.1} parent=11 // pred_region
          _
        $region40: #{tpu_custom_call.1} parent=11 // pred_fallthru
          _
      $region12: #{tpu_custom_call.1} parent=5 // pred_fallthru
        _
      %p303 = scmp.lt.s32.totalorder %s16, 4
      // Predicated region
      $region41: #{tpu_custom_call.1} parent=5 // pred_check
        %p304 = pneg %p303
      $region42: #{tpu_custom_call.1} parent=5 // pred_check_branch
        %306 = sbr.rel (%p304) target = $region44
      $region43: #{tpu_custom_call.1} parent=5 // pred_region
        // Predicated region
        $region45: #{tpu_custom_call.1} parent=43 // pred_check
          %p307 = pneg %p36
        $region46: #{tpu_custom_call.1} parent=43 // pred_check_branch
          %309 = sbr.rel (%p307) target = $region48
        $region47: #{tpu_custom_call.1} parent=43 // pred_region
          %s310 = sand.u32 %s26, 1
          %s311 = sand.u32 %s26, 1
          %s312 = smul.addr %s311, 1024
          %s313 = scalar_lea.vmem [#allocation2], %s312
          %s314 = smul.u32 32, %s16
          %s315 = smul.addr %s314, 8
          %s316 = scalar_lea.vmem %s0, %s315
          // Predicated region
          $region49: #{tpu_custom_call.1} parent=47 // pred_check
            _
          $region50: #{tpu_custom_call.1} parent=47 // pred_check_branch
            %318 = sbr.rel (0) target = $region52
          $region51: #{tpu_custom_call.1} parent=47 // pred_region
            // Predicated region
            $region53: #{tpu_custom_call.1} parent=51 // pred_check
              _
            $region54: #{tpu_custom_call.1} parent=51 // pred_check_branch
              %320 = sbr.rel (0) target = $region56
            $region55: #{tpu_custom_call.1} parent=51 // pred_region
              // Predicated region
              $region68: #{tpu_custom_call.1} parent=55 // pred_check
                _
              $region69: #{tpu_custom_call.1} parent=55 // pred_check_branch
                %589 = sbr.rel (0) target = $region71
              $region70: #{tpu_custom_call.1} parent=55 // pred_region
                loop: start=0, step=1, limit=1
                $region72: #{tpu_custom_call.1} parent=70 // loop_pre_header
                  _
                $region73: #{tpu_custom_call.1} parent=70 // loop_header
                  %s591 = sphi 0, %s595
                  %p592 = scmp.ge.s32.totalorder %s591, 1
                  %s596 = sphi %s316, %s316
                  %s597 = sphi %s313, %s313
                $region74: #{tpu_custom_call.1} parent=70 // loop_header_branch
                  %594 = sbr.rel (%p592) target = $region78
                $region75: #{tpu_custom_call.1} parent=70 // loop_body
                  %v598 = vld [vmem:[%s596] sm:$0xff]
                  %599 = vst [vmem:[%s597] sm:$0xff] %v598
                  %v600 = vld [vmem:[%s596 + $0x8] sm:$0xff]
                  %601 = vst [vmem:[%s597 + $0x8] sm:$0xff] %v600
                  %v602 = vld [vmem:[%s596 + $0x10] sm:$0xff]
                  %603 = vst [vmem:[%s597 + $0x10] sm:$0xff] %v602
                  %v604 = vld [vmem:[%s596 + $0x18] sm:$0xff]
                  %605 = vst [vmem:[%s597 + $0x18] sm:$0xff] %v604
                  %v606 = vld [vmem:[%s596 + $0x20] sm:$0xff]
                  %607 = vst [vmem:[%s597 + $0x20] sm:$0xff] %v606
                  %v608 = vld [vmem:[%s596 + $0x28] sm:$0xff]
                  %609 = vst [vmem:[%s597 + $0x28] sm:$0xff] %v608
                  %v610 = vld [vmem:[%s596 + $0x30] sm:$0xff]
                  %611 = vst [vmem:[%s597 + $0x30] sm:$0xff] %v610
                  %v612 = vld [vmem:[%s596 + $0x38] sm:$0xff]
                  %613 = vst [vmem:[%s597 + $0x38] sm:$0xff] %v612
                  %v614 = vld [vmem:[%s596 + $0x40] sm:$0xff]
                  %615 = vst [vmem:[%s597 + $0x40] sm:$0xff] %v614
                  %v616 = vld [vmem:[%s596 + $0x48] sm:$0xff]
                  %617 = vst [vmem:[%s597 + $0x48] sm:$0xff] %v616
                  %v618 = vld [vmem:[%s596 + $0x50] sm:$0xff]
                  %619 = vst [vmem:[%s597 + $0x50] sm:$0xff] %v618
                  %v620 = vld [vmem:[%s596 + $0x58] sm:$0xff]
                  %621 = vst [vmem:[%s597 + $0x58] sm:$0xff] %v620
                  %v622 = vld [vmem:[%s596 + $0x60] sm:$0xff]
                  %623 = vst [vmem:[%s597 + $0x60] sm:$0xff] %v622
                  %v624 = vld [vmem:[%s596 + $0x68] sm:$0xff]
                  %625 = vst [vmem:[%s597 + $0x68] sm:$0xff] %v624
                  %v626 = vld [vmem:[%s596 + $0x70] sm:$0xff]
                  %627 = vst [vmem:[%s597 + $0x70] sm:$0xff] %v626
                  %v628 = vld [vmem:[%s596 + $0x78] sm:$0xff]
                  %629 = vst [vmem:[%s597 + $0x78] sm:$0xff] %v628
                  %v630 = vld [vmem:[%s596 + $0x80] sm:$0xff]
                  %631 = vst [vmem:[%s597 + $0x80] sm:$0xff] %v630
                  %v632 = vld [vmem:[%s596 + $0x88] sm:$0xff]
                  %633 = vst [vmem:[%s597 + $0x88] sm:$0xff] %v632
                  %v634 = vld [vmem:[%s596 + $0x90] sm:$0xff]
                  %635 = vst [vmem:[%s597 + $0x90] sm:$0xff] %v634
                  %v636 = vld [vmem:[%s596 + $0x98] sm:$0xff]
                  %637 = vst [vmem:[%s597 + $0x98] sm:$0xff] %v636
                  %v638 = vld [vmem:[%s596 + $0xa0] sm:$0xff]
                  %639 = vst [vmem:[%s597 + $0xa0] sm:$0xff] %v638
                  %v640 = vld [vmem:[%s596 + $0xa8] sm:$0xff]
                  %641 = vst [vmem:[%s597 + $0xa8] sm:$0xff] %v640
                  %v642 = vld [vmem:[%s596 + $0xb0] sm:$0xff]
                  %643 = vst [vmem:[%s597 + $0xb0] sm:$0xff] %v642
                  %v644 = vld [vmem:[%s596 + $0xb8] sm:$0xff]
                  %645 = vst [vmem:[%s597 + $0xb8] sm:$0xff] %v644
                  %v646 = vld [vmem:[%s596 + $0xc0] sm:$0xff]
                  %647 = vst [vmem:[%s597 + $0xc0] sm:$0xff] %v646
                  %v648 = vld [vmem:[%s596 + $0xc8] sm:$0xff]
                  %649 = vst [vmem:[%s597 + $0xc8] sm:$0xff] %v648
                  %v650 = vld [vmem:[%s596 + $0xd0] sm:$0xff]
                  %651 = vst [vmem:[%s597 + $0xd0] sm:$0xff] %v650
                  %v652 = vld [vmem:[%s596 + $0xd8] sm:$0xff]
                  %653 = vst [vmem:[%s597 + $0xd8] sm:$0xff] %v652
                  %v654 = vld [vmem:[%s596 + $0xe0] sm:$0xff]
                  %655 = vst [vmem:[%s597 + $0xe0] sm:$0xff] %v654
                  %v656 = vld [vmem:[%s596 + $0xe8] sm:$0xff]
                  %657 = vst [vmem:[%s597 + $0xe8] sm:$0xff] %v656
                  %v658 = vld [vmem:[%s596 + $0xf0] sm:$0xff]
                  %659 = vst [vmem:[%s597 + $0xf0] sm:$0xff] %v658
                  %v660 = vld [vmem:[%s596 + $0xf8] sm:$0xff]
                  %661 = vst [vmem:[%s597 + $0xf8] sm:$0xff] %v660
                  %v662 = vld [vmem:[%s596 + $0x400] sm:$0xff]
                  %663 = vst [vmem:[%s597 + $0x100] sm:$0xff] %v662
                  %v664 = vld [vmem:[%s596 + $0x408] sm:$0xff]
                  %665 = vst [vmem:[%s597 + $0x108] sm:$0xff] %v664
                  %v666 = vld [vmem:[%s596 + $0x410] sm:$0xff]
                  %667 = vst [vmem:[%s597 + $0x110] sm:$0xff] %v666
                  %v668 = vld [vmem:[%s596 + $0x418] sm:$0xff]
                  %669 = vst [vmem:[%s597 + $0x118] sm:$0xff] %v668
                  %v670 = vld [vmem:[%s596 + $0x420] sm:$0xff]
                  %671 = vst [vmem:[%s597 + $0x120] sm:$0xff] %v670
                  %v672 = vld [vmem:[%s596 + $0x428] sm:$0xff]
                  %673 = vst [vmem:[%s597 + $0x128] sm:$0xff] %v672
                  %v674 = vld [vmem:[%s596 + $0x430] sm:$0xff]
                  %675 = vst [vmem:[%s597 + $0x130] sm:$0xff] %v674
                  %v676 = vld [vmem:[%s596 + $0x438] sm:$0xff]
                  %677 = vst [vmem:[%s597 + $0x138] sm:$0xff] %v676
                  %v678 = vld [vmem:[%s596 + $0x440] sm:$0xff]
                  %679 = vst [vmem:[%s597 + $0x140] sm:$0xff] %v678
                  %v680 = vld [vmem:[%s596 + $0x448] sm:$0xff]
                  %681 = vst [vmem:[%s597 + $0x148] sm:$0xff] %v680
                  %v682 = vld [vmem:[%s596 + $0x450] sm:$0xff]
                  %683 = vst [vmem:[%s597 + $0x150] sm:$0xff] %v682
                  %v684 = vld [vmem:[%s596 + $0x458] sm:$0xff]
                  %685 = vst [vmem:[%s597 + $0x158] sm:$0xff] %v684
                  %v686 = vld [vmem:[%s596 + $0x460] sm:$0xff]
                  %687 = vst [vmem:[%s597 + $0x160] sm:$0xff] %v686
                  %v688 = vld [vmem:[%s596 + $0x468] sm:$0xff]
                  %689 = vst [vmem:[%s597 + $0x168] sm:$0xff] %v688
                  %v690 = vld [vmem:[%s596 + $0x470] sm:$0xff]
                  %691 = vst [vmem:[%s597 + $0x170] sm:$0xff] %v690
                  %v692 = vld [vmem:[%s596 + $0x478] sm:$0xff]
                  %693 = vst [vmem:[%s597 + $0x178] sm:$0xff] %v692
                  %v694 = vld [vmem:[%s596 + $0x480] sm:$0xff]
                  %695 = vst [vmem:[%s597 + $0x180] sm:$0xff] %v694
                  %v696 = vld [vmem:[%s596 + $0x488] sm:$0xff]
                  %697 = vst [vmem:[%s597 + $0x188] sm:$0xff] %v696
                  %v698 = vld [vmem:[%s596 + $0x490] sm:$0xff]
                  %699 = vst [vmem:[%s597 + $0x190] sm:$0xff] %v698
                  %v700 = vld [vmem:[%s596 + $0x498] sm:$0xff]
                  %701 = vst [vmem:[%s597 + $0x198] sm:$0xff] %v700
                  %v702 = vld [vmem:[%s596 + $0x4a0] sm:$0xff]
                  %703 = vst [vmem:[%s597 + $0x1a0] sm:$0xff] %v702
                  %v704 = vld [vmem:[%s596 + $0x4a8] sm:$0xff]
                  %705 = vst [vmem:[%s597 + $0x1a8] sm:$0xff] %v704
                  %v706 = vld [vmem:[%s596 + $0x4b0] sm:$0xff]
                  %707 = vst [vmem:[%s597 + $0x1b0] sm:$0xff] %v706
                  %v708 = vld [vmem:[%s596 + $0x4b8] sm:$0xff]
                  %709 = vst [vmem:[%s597 + $0x1b8] sm:$0xff] %v708
                  %v710 = vld [vmem:[%s596 + $0x4c0] sm:$0xff]
                  %711 = vst [vmem:[%s597 + $0x1c0] sm:$0xff] %v710
                  %v712 = vld [vmem:[%s596 + $0x4c8] sm:$0xff]
                  %713 = vst [vmem:[%s597 + $0x1c8] sm:$0xff] %v712
                  %v714 = vld [vmem:[%s596 + $0x4d0] sm:$0xff]
                  %715 = vst [vmem:[%s597 + $0x1d0] sm:$0xff] %v714
                  %v716 = vld [vmem:[%s596 + $0x4d8] sm:$0xff]
                  %717 = vst [vmem:[%s597 + $0x1d8] sm:$0xff] %v716
                  %v718 = vld [vmem:[%s596 + $0x4e0] sm:$0xff]
                  %719 = vst [vmem:[%s597 + $0x1e0] sm:$0xff] %v718
                  %v720 = vld [vmem:[%s596 + $0x4e8] sm:$0xff]
                  %721 = vst [vmem:[%s597 + $0x1e8] sm:$0xff] %v720
                  %v722 = vld [vmem:[%s596 + $0x4f0] sm:$0xff]
                  %723 = vst [vmem:[%s597 + $0x1f0] sm:$0xff] %v722
                  %v724 = vld [vmem:[%s596 + $0x4f8] sm:$0xff]
                  %725 = vst [vmem:[%s597 + $0x1f8] sm:$0xff] %v724
                  %v726 = vld [vmem:[%s596 + $0x800] sm:$0xff]
                  %727 = vst [vmem:[%s597 + $0x200] sm:$0xff] %v726
                  %v728 = vld [vmem:[%s596 + $0x808] sm:$0xff]
                  %729 = vst [vmem:[%s597 + $0x208] sm:$0xff] %v728
                  %v730 = vld [vmem:[%s596 + $0x810] sm:$0xff]
                  %731 = vst [vmem:[%s597 + $0x210] sm:$0xff] %v730
                  %v732 = vld [vmem:[%s596 + $0x818] sm:$0xff]
                  %733 = vst [vmem:[%s597 + $0x218] sm:$0xff] %v732
                  %v734 = vld [vmem:[%s596 + $0x820] sm:$0xff]
                  %735 = vst [vmem:[%s597 + $0x220] sm:$0xff] %v734
                  %v736 = vld [vmem:[%s596 + $0x828] sm:$0xff]
                  %737 = vst [vmem:[%s597 + $0x228] sm:$0xff] %v736
                  %v738 = vld [vmem:[%s596 + $0x830] sm:$0xff]
                  %739 = vst [vmem:[%s597 + $0x230] sm:$0xff] %v738
                  %v740 = vld [vmem:[%s596 + $0x838] sm:$0xff]
                  %741 = vst [vmem:[%s597 + $0x238] sm:$0xff] %v740
                  %v742 = vld [vmem:[%s596 + $0x840] sm:$0xff]
                  %743 = vst [vmem:[%s597 + $0x240] sm:$0xff] %v742
                  %v744 = vld [vmem:[%s596 + $0x848] sm:$0xff]
                  %745 = vst [vmem:[%s597 + $0x248] sm:$0xff] %v744
                  %v746 = vld [vmem:[%s596 + $0x850] sm:$0xff]
                  %747 = vst [vmem:[%s597 + $0x250] sm:$0xff] %v746
                  %v748 = vld [vmem:[%s596 + $0x858] sm:$0xff]
                  %749 = vst [vmem:[%s597 + $0x258] sm:$0xff] %v748
                  %v750 = vld [vmem:[%s596 + $0x860] sm:$0xff]
                  %751 = vst [vmem:[%s597 + $0x260] sm:$0xff] %v750
                  %v752 = vld [vmem:[%s596 + $0x868] sm:$0xff]
                  %753 = vst [vmem:[%s597 + $0x268] sm:$0xff] %v752
                  %v754 = vld [vmem:[%s596 + $0x870] sm:$0xff]
                  %755 = vst [vmem:[%s597 + $0x270] sm:$0xff] %v754
                  %v756 = vld [vmem:[%s596 + $0x878] sm:$0xff]
                  %757 = vst [vmem:[%s597 + $0x278] sm:$0xff] %v756
                  %v758 = vld [vmem:[%s596 + $0x880] sm:$0xff]
                  %759 = vst [vmem:[%s597 + $0x280] sm:$0xff] %v758
                  %v760 = vld [vmem:[%s596 + $0x888] sm:$0xff]
                  %761 = vst [vmem:[%s597 + $0x288] sm:$0xff] %v760
                  %v762 = vld [vmem:[%s596 + $0x890] sm:$0xff]
                  %763 = vst [vmem:[%s597 + $0x290] sm:$0xff] %v762
                  %v764 = vld [vmem:[%s596 + $0x898] sm:$0xff]
                  %765 = vst [vmem:[%s597 + $0x298] sm:$0xff] %v764
                  %v766 = vld [vmem:[%s596 + $0x8a0] sm:$0xff]
                  %767 = vst [vmem:[%s597 + $0x2a0] sm:$0xff] %v766
                  %v768 = vld [vmem:[%s596 + $0x8a8] sm:$0xff]
                  %769 = vst [vmem:[%s597 + $0x2a8] sm:$0xff] %v768
                  %v770 = vld [vmem:[%s596 + $0x8b0] sm:$0xff]
                  %771 = vst [vmem:[%s597 + $0x2b0] sm:$0xff] %v770
                  %v772 = vld [vmem:[%s596 + $0x8b8] sm:$0xff]
                  %773 = vst [vmem:[%s597 + $0x2b8] sm:$0xff] %v772
                  %v774 = vld [vmem:[%s596 + $0x8c0] sm:$0xff]
                  %775 = vst [vmem:[%s597 + $0x2c0] sm:$0xff] %v774
                  %v776 = vld [vmem:[%s596 + $0x8c8] sm:$0xff]
                  %777 = vst [vmem:[%s597 + $0x2c8] sm:$0xff] %v776
                  %v778 = vld [vmem:[%s596 + $0x8d0] sm:$0xff]
                  %779 = vst [vmem:[%s597 + $0x2d0] sm:$0xff] %v778
                  %v780 = vld [vmem:[%s596 + $0x8d8] sm:$0xff]
                  %781 = vst [vmem:[%s597 + $0x2d8] sm:$0xff] %v780
                  %v782 = vld [vmem:[%s596 + $0x8e0] sm:$0xff]
                  %783 = vst [vmem:[%s597 + $0x2e0] sm:$0xff] %v782
                  %v784 = vld [vmem:[%s596 + $0x8e8] sm:$0xff]
                  %785 = vst [vmem:[%s597 + $0x2e8] sm:$0xff] %v784
                  %v786 = vld [vmem:[%s596 + $0x8f0] sm:$0xff]
                  %787 = vst [vmem:[%s597 + $0x2f0] sm:$0xff] %v786
                  %v788 = vld [vmem:[%s596 + $0x8f8] sm:$0xff]
                  %789 = vst [vmem:[%s597 + $0x2f8] sm:$0xff] %v788
                  %v790 = vld [vmem:[%s596 + $0xc00] sm:$0xff]
                  %791 = vst [vmem:[%s597 + $0x300] sm:$0xff] %v790
                  %v792 = vld [vmem:[%s596 + $0xc08] sm:$0xff]
                  %793 = vst [vmem:[%s597 + $0x308] sm:$0xff] %v792
                  %v794 = vld [vmem:[%s596 + $0xc10] sm:$0xff]
                  %795 = vst [vmem:[%s597 + $0x310] sm:$0xff] %v794
                  %v796 = vld [vmem:[%s596 + $0xc18] sm:$0xff]
                  %797 = vst [vmem:[%s597 + $0x318] sm:$0xff] %v796
                  %v798 = vld [vmem:[%s596 + $0xc20] sm:$0xff]
                  %799 = vst [vmem:[%s597 + $0x320] sm:$0xff] %v798
                  %v800 = vld [vmem:[%s596 + $0xc28] sm:$0xff]
                  %801 = vst [vmem:[%s597 + $0x328] sm:$0xff] %v800
                  %v802 = vld [vmem:[%s596 + $0xc30] sm:$0xff]
                  %803 = vst [vmem:[%s597 + $0x330] sm:$0xff] %v802
                  %v804 = vld [vmem:[%s596 + $0xc38] sm:$0xff]
                  %805 = vst [vmem:[%s597 + $0x338] sm:$0xff] %v804
                  %v806 = vld [vmem:[%s596 + $0xc40] sm:$0xff]
                  %807 = vst [vmem:[%s597 + $0x340] sm:$0xff] %v806
                  %v808 = vld [vmem:[%s596 + $0xc48] sm:$0xff]
                  %809 = vst [vmem:[%s597 + $0x348] sm:$0xff] %v808
                  %v810 = vld [vmem:[%s596 + $0xc50] sm:$0xff]
                  %811 = vst [vmem:[%s597 + $0x350] sm:$0xff] %v810
                  %v812 = vld [vmem:[%s596 + $0xc58] sm:$0xff]
                  %813 = vst [vmem:[%s597 + $0x358] sm:$0xff] %v812
                  %v814 = vld [vmem:[%s596 + $0xc60] sm:$0xff]
                  %815 = vst [vmem:[%s597 + $0x360] sm:$0xff] %v814
                  %v816 = vld [vmem:[%s596 + $0xc68] sm:$0xff]
                  %817 = vst [vmem:[%s597 + $0x368] sm:$0xff] %v816
                  %v818 = vld [vmem:[%s596 + $0xc70] sm:$0xff]
                  %819 = vst [vmem:[%s597 + $0x370] sm:$0xff] %v818
                  %v820 = vld [vmem:[%s596 + $0xc78] sm:$0xff]
                  %821 = vst [vmem:[%s597 + $0x378] sm:$0xff] %v820
                  %v822 = vld [vmem:[%s596 + $0xc80] sm:$0xff]
                  %823 = vst [vmem:[%s597 + $0x380] sm:$0xff] %v822
                  %v824 = vld [vmem:[%s596 + $0xc88] sm:$0xff]
                  %825 = vst [vmem:[%s597 + $0x388] sm:$0xff] %v824
                  %v826 = vld [vmem:[%s596 + $0xc90] sm:$0xff]
                  %827 = vst [vmem:[%s597 + $0x390] sm:$0xff] %v826
                  %v828 = vld [vmem:[%s596 + $0xc98] sm:$0xff]
                  %829 = vst [vmem:[%s597 + $0x398] sm:$0xff] %v828
                  %v830 = vld [vmem:[%s596 + $0xca0] sm:$0xff]
                  %831 = vst [vmem:[%s597 + $0x3a0] sm:$0xff] %v830
                  %v832 = vld [vmem:[%s596 + $0xca8] sm:$0xff]
                  %833 = vst [vmem:[%s597 + $0x3a8] sm:$0xff] %v832
                  %v834 = vld [vmem:[%s596 + $0xcb0] sm:$0xff]
                  %835 = vst [vmem:[%s597 + $0x3b0] sm:$0xff] %v834
                  %v836 = vld [vmem:[%s596 + $0xcb8] sm:$0xff]
                  %837 = vst [vmem:[%s597 + $0x3b8] sm:$0xff] %v836
                  %v838 = vld [vmem:[%s596 + $0xcc0] sm:$0xff]
                  %839 = vst [vmem:[%s597 + $0x3c0] sm:$0xff] %v838
                  %v840 = vld [vmem:[%s596 + $0xcc8] sm:$0xff]
                  %841 = vst [vmem:[%s597 + $0x3c8] sm:$0xff] %v840
                  %v842 = vld [vmem:[%s596 + $0xcd0] sm:$0xff]
                  %843 = vst [vmem:[%s597 + $0x3d0] sm:$0xff] %v842
                  %v844 = vld [vmem:[%s596 + $0xcd8] sm:$0xff]
                  %845 = vst [vmem:[%s597 + $0x3d8] sm:$0xff] %v844
                  %v846 = vld [vmem:[%s596 + $0xce0] sm:$0xff]
                  %847 = vst [vmem:[%s597 + $0x3e0] sm:$0xff] %v846
                  %v848 = vld [vmem:[%s596 + $0xce8] sm:$0xff]
                  %849 = vst [vmem:[%s597 + $0x3e8] sm:$0xff] %v848
                  %v850 = vld [vmem:[%s596 + $0xcf0] sm:$0xff]
                  %851 = vst [vmem:[%s597 + $0x3f0] sm:$0xff] %v850
                  %v852 = vld [vmem:[%s596 + $0xcf8] sm:$0xff]
                  %853 = vst [vmem:[%s597 + $0x3f8] sm:$0xff] %v852
                $region76: #{tpu_custom_call.1} parent=70 // loop_footer
                  %s595 = sadd.s32 1, %s591
                $region77: #{tpu_custom_call.1} parent=70 // loop_footer_branch
                  %590 = sbr.rel target = $region73
                $region78: #{tpu_custom_call.1} parent=70 // loop_exit
                  _
              $region71: #{tpu_custom_call.1} parent=55 // pred_fallthru
                _
              // Predicated region
              $region79: #{tpu_custom_call.1} parent=55 // pred_check
                _
              $region80: #{tpu_custom_call.1} parent=55 // pred_check_branch
                %855 = sbr.rel target = $region82
              $region81: #{tpu_custom_call.1} parent=55 // pred_region
                _
              $region82: #{tpu_custom_call.1} parent=55 // pred_fallthru
                _
            $region56: #{tpu_custom_call.1} parent=51 // pred_fallthru
              _
            // Predicated region
            $region57: #{tpu_custom_call.1} parent=51 // pred_check
              _
            $region58: #{tpu_custom_call.1} parent=51 // pred_check_branch
              %322 = sbr.rel target = $region60
            $region59: #{tpu_custom_call.1} parent=51 // pred_region
              loop: start=0, step=1, limit=1
              $region61: #{tpu_custom_call.1} parent=59 // loop_pre_header
                _
              $region62: #{tpu_custom_call.1} parent=59 // loop_header
                %s325 = sphi 0, %s329
                %p326 = scmp.ge.s32.totalorder %s325, 1
                %s330 = sphi %s316, %s316
                %s331 = sphi %s313, %s313
              $region63: #{tpu_custom_call.1} parent=59 // loop_header_branch
                %328 = sbr.rel (%p326) target = $region67
              $region64: #{tpu_custom_call.1} parent=59 // loop_body
                %v332 = vld [vmem:[%s330] sm:$0xff]
                %333 = vst [vmem:[%s331] sm:$0xff] %v332
                %v334 = vld [vmem:[%s330 + $0x8] sm:$0xff]
                %335 = vst [vmem:[%s331 + $0x8] sm:$0xff] %v334
                %v336 = vld [vmem:[%s330 + $0x10] sm:$0xff]
                %337 = vst [vmem:[%s331 + $0x10] sm:$0xff] %v336
                %v338 = vld [vmem:[%s330 + $0x18] sm:$0xff]
                %339 = vst [vmem:[%s331 + $0x18] sm:$0xff] %v338
                %v340 = vld [vmem:[%s330 + $0x20] sm:$0xff]
                %341 = vst [vmem:[%s331 + $0x20] sm:$0xff] %v340
                %v342 = vld [vmem:[%s330 + $0x28] sm:$0xff]
                %343 = vst [vmem:[%s331 + $0x28] sm:$0xff] %v342
                %v344 = vld [vmem:[%s330 + $0x30] sm:$0xff]
                %345 = vst [vmem:[%s331 + $0x30] sm:$0xff] %v344
                %v346 = vld [vmem:[%s330 + $0x38] sm:$0xff]
                %347 = vst [vmem:[%s331 + $0x38] sm:$0xff] %v346
                %v348 = vld [vmem:[%s330 + $0x40] sm:$0xff]
                %349 = vst [vmem:[%s331 + $0x40] sm:$0xff] %v348
                %v350 = vld [vmem:[%s330 + $0x48] sm:$0xff]
                %351 = vst [vmem:[%s331 + $0x48] sm:$0xff] %v350
                %v352 = vld [vmem:[%s330 + $0x50] sm:$0xff]
                %353 = vst [vmem:[%s331 + $0x50] sm:$0xff] %v352
                %v354 = vld [vmem:[%s330 + $0x58] sm:$0xff]
                %355 = vst [vmem:[%s331 + $0x58] sm:$0xff] %v354
                %v356 = vld [vmem:[%s330 + $0x60] sm:$0xff]
                %357 = vst [vmem:[%s331 + $0x60] sm:$0xff] %v356
                %v358 = vld [vmem:[%s330 + $0x68] sm:$0xff]
                %359 = vst [vmem:[%s331 + $0x68] sm:$0xff] %v358
                %v360 = vld [vmem:[%s330 + $0x70] sm:$0xff]
                %361 = vst [vmem:[%s331 + $0x70] sm:$0xff] %v360
                %v362 = vld [vmem:[%s330 + $0x78] sm:$0xff]
                %363 = vst [vmem:[%s331 + $0x78] sm:$0xff] %v362
                %v364 = vld [vmem:[%s330 + $0x80] sm:$0xff]
                %365 = vst [vmem:[%s331 + $0x80] sm:$0xff] %v364
                %v366 = vld [vmem:[%s330 + $0x88] sm:$0xff]
                %367 = vst [vmem:[%s331 + $0x88] sm:$0xff] %v366
                %v368 = vld [vmem:[%s330 + $0x90] sm:$0xff]
                %369 = vst [vmem:[%s331 + $0x90] sm:$0xff] %v368
                %v370 = vld [vmem:[%s330 + $0x98] sm:$0xff]
                %371 = vst [vmem:[%s331 + $0x98] sm:$0xff] %v370
                %v372 = vld [vmem:[%s330 + $0xa0] sm:$0xff]
                %373 = vst [vmem:[%s331 + $0xa0] sm:$0xff] %v372
                %v374 = vld [vmem:[%s330 + $0xa8] sm:$0xff]
                %375 = vst [vmem:[%s331 + $0xa8] sm:$0xff] %v374
                %v376 = vld [vmem:[%s330 + $0xb0] sm:$0xff]
                %377 = vst [vmem:[%s331 + $0xb0] sm:$0xff] %v376
                %v378 = vld [vmem:[%s330 + $0xb8] sm:$0xff]
                %379 = vst [vmem:[%s331 + $0xb8] sm:$0xff] %v378
                %v380 = vld [vmem:[%s330 + $0xc0] sm:$0xff]
                %381 = vst [vmem:[%s331 + $0xc0] sm:$0xff] %v380
                %v382 = vld [vmem:[%s330 + $0xc8] sm:$0xff]
                %383 = vst [vmem:[%s331 + $0xc8] sm:$0xff] %v382
                %v384 = vld [vmem:[%s330 + $0xd0] sm:$0xff]
                %385 = vst [vmem:[%s331 + $0xd0] sm:$0xff] %v384
                %v386 = vld [vmem:[%s330 + $0xd8] sm:$0xff]
                %387 = vst [vmem:[%s331 + $0xd8] sm:$0xff] %v386
                %v388 = vld [vmem:[%s330 + $0xe0] sm:$0xff]
                %389 = vst [vmem:[%s331 + $0xe0] sm:$0xff] %v388
                %v390 = vld [vmem:[%s330 + $0xe8] sm:$0xff]
                %391 = vst [vmem:[%s331 + $0xe8] sm:$0xff] %v390
                %v392 = vld [vmem:[%s330 + $0xf0] sm:$0xff]
                %393 = vst [vmem:[%s331 + $0xf0] sm:$0xff] %v392
                %v394 = vld [vmem:[%s330 + $0xf8] sm:$0xff]
                %395 = vst [vmem:[%s331 + $0xf8] sm:$0xff] %v394
                %v396 = vld [vmem:[%s330 + $0x400] sm:$0xff]
                %397 = vst [vmem:[%s331 + $0x100] sm:$0xff] %v396
                %v398 = vld [vmem:[%s330 + $0x408] sm:$0xff]
                %399 = vst [vmem:[%s331 + $0x108] sm:$0xff] %v398
                %v400 = vld [vmem:[%s330 + $0x410] sm:$0xff]
                %401 = vst [vmem:[%s331 + $0x110] sm:$0xff] %v400
                %v402 = vld [vmem:[%s330 + $0x418] sm:$0xff]
                %403 = vst [vmem:[%s331 + $0x118] sm:$0xff] %v402
                %v404 = vld [vmem:[%s330 + $0x420] sm:$0xff]
                %405 = vst [vmem:[%s331 + $0x120] sm:$0xff] %v404
                %v406 = vld [vmem:[%s330 + $0x428] sm:$0xff]
                %407 = vst [vmem:[%s331 + $0x128] sm:$0xff] %v406
                %v408 = vld [vmem:[%s330 + $0x430] sm:$0xff]
                %409 = vst [vmem:[%s331 + $0x130] sm:$0xff] %v408
                %v410 = vld [vmem:[%s330 + $0x438] sm:$0xff]
                %411 = vst [vmem:[%s331 + $0x138] sm:$0xff] %v410
                %v412 = vld [vmem:[%s330 + $0x440] sm:$0xff]
                %413 = vst [vmem:[%s331 + $0x140] sm:$0xff] %v412
                %v414 = vld [vmem:[%s330 + $0x448] sm:$0xff]
                %415 = vst [vmem:[%s331 + $0x148] sm:$0xff] %v414
                %v416 = vld [vmem:[%s330 + $0x450] sm:$0xff]
                %417 = vst [vmem:[%s331 + $0x150] sm:$0xff] %v416
                %v418 = vld [vmem:[%s330 + $0x458] sm:$0xff]
                %419 = vst [vmem:[%s331 + $0x158] sm:$0xff] %v418
                %v420 = vld [vmem:[%s330 + $0x460] sm:$0xff]
                %421 = vst [vmem:[%s331 + $0x160] sm:$0xff] %v420
                %v422 = vld [vmem:[%s330 + $0x468] sm:$0xff]
                %423 = vst [vmem:[%s331 + $0x168] sm:$0xff] %v422
                %v424 = vld [vmem:[%s330 + $0x470] sm:$0xff]
                %425 = vst [vmem:[%s331 + $0x170] sm:$0xff] %v424
                %v426 = vld [vmem:[%s330 + $0x478] sm:$0xff]
                %427 = vst [vmem:[%s331 + $0x178] sm:$0xff] %v426
                %v428 = vld [vmem:[%s330 + $0x480] sm:$0xff]
                %429 = vst [vmem:[%s331 + $0x180] sm:$0xff] %v428
                %v430 = vld [vmem:[%s330 + $0x488] sm:$0xff]
                %431 = vst [vmem:[%s331 + $0x188] sm:$0xff] %v430
                %v432 = vld [vmem:[%s330 + $0x490] sm:$0xff]
                %433 = vst [vmem:[%s331 + $0x190] sm:$0xff] %v432
                %v434 = vld [vmem:[%s330 + $0x498] sm:$0xff]
                %435 = vst [vmem:[%s331 + $0x198] sm:$0xff] %v434
                %v436 = vld [vmem:[%s330 + $0x4a0] sm:$0xff]
                %437 = vst [vmem:[%s331 + $0x1a0] sm:$0xff] %v436
                %v438 = vld [vmem:[%s330 + $0x4a8] sm:$0xff]
                %439 = vst [vmem:[%s331 + $0x1a8] sm:$0xff] %v438
                %v440 = vld [vmem:[%s330 + $0x4b0] sm:$0xff]
                %441 = vst [vmem:[%s331 + $0x1b0] sm:$0xff] %v440
                %v442 = vld [vmem:[%s330 + $0x4b8] sm:$0xff]
                %443 = vst [vmem:[%s331 + $0x1b8] sm:$0xff] %v442
                %v444 = vld [vmem:[%s330 + $0x4c0] sm:$0xff]
                %445 = vst [vmem:[%s331 + $0x1c0] sm:$0xff] %v444
                %v446 = vld [vmem:[%s330 + $0x4c8] sm:$0xff]
                %447 = vst [vmem:[%s331 + $0x1c8] sm:$0xff] %v446
                %v448 = vld [vmem:[%s330 + $0x4d0] sm:$0xff]
                %449 = vst [vmem:[%s331 + $0x1d0] sm:$0xff] %v448
                %v450 = vld [vmem:[%s330 + $0x4d8] sm:$0xff]
                %451 = vst [vmem:[%s331 + $0x1d8] sm:$0xff] %v450
                %v452 = vld [vmem:[%s330 + $0x4e0] sm:$0xff]
                %453 = vst [vmem:[%s331 + $0x1e0] sm:$0xff] %v452
                %v454 = vld [vmem:[%s330 + $0x4e8] sm:$0xff]
                %455 = vst [vmem:[%s331 + $0x1e8] sm:$0xff] %v454
                %v456 = vld [vmem:[%s330 + $0x4f0] sm:$0xff]
                %457 = vst [vmem:[%s331 + $0x1f0] sm:$0xff] %v456
                %v458 = vld [vmem:[%s330 + $0x4f8] sm:$0xff]
                %459 = vst [vmem:[%s331 + $0x1f8] sm:$0xff] %v458
                %v460 = vld [vmem:[%s330 + $0x800] sm:$0xff]
                %461 = vst [vmem:[%s331 + $0x200] sm:$0xff] %v460
                %v462 = vld [vmem:[%s330 + $0x808] sm:$0xff]
                %463 = vst [vmem:[%s331 + $0x208] sm:$0xff] %v462
                %v464 = vld [vmem:[%s330 + $0x810] sm:$0xff]
                %465 = vst [vmem:[%s331 + $0x210] sm:$0xff] %v464
                %v466 = vld [vmem:[%s330 + $0x818] sm:$0xff]
                %467 = vst [vmem:[%s331 + $0x218] sm:$0xff] %v466
                %v468 = vld [vmem:[%s330 + $0x820] sm:$0xff]
                %469 = vst [vmem:[%s331 + $0x220] sm:$0xff] %v468
                %v470 = vld [vmem:[%s330 + $0x828] sm:$0xff]
                %471 = vst [vmem:[%s331 + $0x228] sm:$0xff] %v470
                %v472 = vld [vmem:[%s330 + $0x830] sm:$0xff]
                %473 = vst [vmem:[%s331 + $0x230] sm:$0xff] %v472
                %v474 = vld [vmem:[%s330 + $0x838] sm:$0xff]
                %475 = vst [vmem:[%s331 + $0x238] sm:$0xff] %v474
                %v476 = vld [vmem:[%s330 + $0x840] sm:$0xff]
                %477 = vst [vmem:[%s331 + $0x240] sm:$0xff] %v476
                %v478 = vld [vmem:[%s330 + $0x848] sm:$0xff]
                %479 = vst [vmem:[%s331 + $0x248] sm:$0xff] %v478
                %v480 = vld [vmem:[%s330 + $0x850] sm:$0xff]
                %481 = vst [vmem:[%s331 + $0x250] sm:$0xff] %v480
                %v482 = vld [vmem:[%s330 + $0x858] sm:$0xff]
                %483 = vst [vmem:[%s331 + $0x258] sm:$0xff] %v482
                %v484 = vld [vmem:[%s330 + $0x860] sm:$0xff]
                %485 = vst [vmem:[%s331 + $0x260] sm:$0xff] %v484
                %v486 = vld [vmem:[%s330 + $0x868] sm:$0xff]
                %487 = vst [vmem:[%s331 + $0x268] sm:$0xff] %v486
                %v488 = vld [vmem:[%s330 + $0x870] sm:$0xff]
                %489 = vst [vmem:[%s331 + $0x270] sm:$0xff] %v488
                %v490 = vld [vmem:[%s330 + $0x878] sm:$0xff]
                %491 = vst [vmem:[%s331 + $0x278] sm:$0xff] %v490
                %v492 = vld [vmem:[%s330 + $0x880] sm:$0xff]
                %493 = vst [vmem:[%s331 + $0x280] sm:$0xff] %v492
                %v494 = vld [vmem:[%s330 + $0x888] sm:$0xff]
                %495 = vst [vmem:[%s331 + $0x288] sm:$0xff] %v494
                %v496 = vld [vmem:[%s330 + $0x890] sm:$0xff]
                %497 = vst [vmem:[%s331 + $0x290] sm:$0xff] %v496
                %v498 = vld [vmem:[%s330 + $0x898] sm:$0xff]
                %499 = vst [vmem:[%s331 + $0x298] sm:$0xff] %v498
                %v500 = vld [vmem:[%s330 + $0x8a0] sm:$0xff]
                %501 = vst [vmem:[%s331 + $0x2a0] sm:$0xff] %v500
                %v502 = vld [vmem:[%s330 + $0x8a8] sm:$0xff]
                %503 = vst [vmem:[%s331 + $0x2a8] sm:$0xff] %v502
                %v504 = vld [vmem:[%s330 + $0x8b0] sm:$0xff]
                %505 = vst [vmem:[%s331 + $0x2b0] sm:$0xff] %v504
                %v506 = vld [vmem:[%s330 + $0x8b8] sm:$0xff]
                %507 = vst [vmem:[%s331 + $0x2b8] sm:$0xff] %v506
                %v508 = vld [vmem:[%s330 + $0x8c0] sm:$0xff]
                %509 = vst [vmem:[%s331 + $0x2c0] sm:$0xff] %v508
                %v510 = vld [vmem:[%s330 + $0x8c8] sm:$0xff]
                %511 = vst [vmem:[%s331 + $0x2c8] sm:$0xff] %v510
                %v512 = vld [vmem:[%s330 + $0x8d0] sm:$0xff]
                %513 = vst [vmem:[%s331 + $0x2d0] sm:$0xff] %v512
                %v514 = vld [vmem:[%s330 + $0x8d8] sm:$0xff]
                %515 = vst [vmem:[%s331 + $0x2d8] sm:$0xff] %v514
                %v516 = vld [vmem:[%s330 + $0x8e0] sm:$0xff]
                %517 = vst [vmem:[%s331 + $0x2e0] sm:$0xff] %v516
                %v518 = vld [vmem:[%s330 + $0x8e8] sm:$0xff]
                %519 = vst [vmem:[%s331 + $0x2e8] sm:$0xff] %v518
                %v520 = vld [vmem:[%s330 + $0x8f0] sm:$0xff]
                %521 = vst [vmem:[%s331 + $0x2f0] sm:$0xff] %v520
                %v522 = vld [vmem:[%s330 + $0x8f8] sm:$0xff]
                %523 = vst [vmem:[%s331 + $0x2f8] sm:$0xff] %v522
                %v524 = vld [vmem:[%s330 + $0xc00] sm:$0xff]
                %525 = vst [vmem:[%s331 + $0x300] sm:$0xff] %v524
                %v526 = vld [vmem:[%s330 + $0xc08] sm:$0xff]
                %527 = vst [vmem:[%s331 + $0x308] sm:$0xff] %v526
                %v528 = vld [vmem:[%s330 + $0xc10] sm:$0xff]
                %529 = vst [vmem:[%s331 + $0x310] sm:$0xff] %v528
                %v530 = vld [vmem:[%s330 + $0xc18] sm:$0xff]
                %531 = vst [vmem:[%s331 + $0x318] sm:$0xff] %v530
                %v532 = vld [vmem:[%s330 + $0xc20] sm:$0xff]
                %533 = vst [vmem:[%s331 + $0x320] sm:$0xff] %v532
                %v534 = vld [vmem:[%s330 + $0xc28] sm:$0xff]
                %535 = vst [vmem:[%s331 + $0x328] sm:$0xff] %v534
                %v536 = vld [vmem:[%s330 + $0xc30] sm:$0xff]
                %537 = vst [vmem:[%s331 + $0x330] sm:$0xff] %v536
                %v538 = vld [vmem:[%s330 + $0xc38] sm:$0xff]
                %539 = vst [vmem:[%s331 + $0x338] sm:$0xff] %v538
                %v540 = vld [vmem:[%s330 + $0xc40] sm:$0xff]
                %541 = vst [vmem:[%s331 + $0x340] sm:$0xff] %v540
                %v542 = vld [vmem:[%s330 + $0xc48] sm:$0xff]
                %543 = vst [vmem:[%s331 + $0x348] sm:$0xff] %v542
                %v544 = vld [vmem:[%s330 + $0xc50] sm:$0xff]
                %545 = vst [vmem:[%s331 + $0x350] sm:$0xff] %v544
                %v546 = vld [vmem:[%s330 + $0xc58] sm:$0xff]
                %547 = vst [vmem:[%s331 + $0x358] sm:$0xff] %v546
                %v548 = vld [vmem:[%s330 + $0xc60] sm:$0xff]
                %549 = vst [vmem:[%s331 + $0x360] sm:$0xff] %v548
                %v550 = vld [vmem:[%s330 + $0xc68] sm:$0xff]
                %551 = vst [vmem:[%s331 + $0x368] sm:$0xff] %v550
                %v552 = vld [vmem:[%s330 + $0xc70] sm:$0xff]
                %553 = vst [vmem:[%s331 + $0x370] sm:$0xff] %v552
                %v554 = vld [vmem:[%s330 + $0xc78] sm:$0xff]
                %555 = vst [vmem:[%s331 + $0x378] sm:$0xff] %v554
                %v556 = vld [vmem:[%s330 + $0xc80] sm:$0xff]
                %557 = vst [vmem:[%s331 + $0x380] sm:$0xff] %v556
                %v558 = vld [vmem:[%s330 + $0xc88] sm:$0xff]
                %559 = vst [vmem:[%s331 + $0x388] sm:$0xff] %v558
                %v560 = vld [vmem:[%s330 + $0xc90] sm:$0xff]
                %561 = vst [vmem:[%s331 + $0x390] sm:$0xff] %v560
                %v562 = vld [vmem:[%s330 + $0xc98] sm:$0xff]
                %563 = vst [vmem:[%s331 + $0x398] sm:$0xff] %v562
                %v564 = vld [vmem:[%s330 + $0xca0] sm:$0xff]
                %565 = vst [vmem:[%s331 + $0x3a0] sm:$0xff] %v564
                %v566 = vld [vmem:[%s330 + $0xca8] sm:$0xff]
                %567 = vst [vmem:[%s331 + $0x3a8] sm:$0xff] %v566
                %v568 = vld [vmem:[%s330 + $0xcb0] sm:$0xff]
                %569 = vst [vmem:[%s331 + $0x3b0] sm:$0xff] %v568
                %v570 = vld [vmem:[%s330 + $0xcb8] sm:$0xff]
                %571 = vst [vmem:[%s331 + $0x3b8] sm:$0xff] %v570
                %v572 = vld [vmem:[%s330 + $0xcc0] sm:$0xff]
                %573 = vst [vmem:[%s331 + $0x3c0] sm:$0xff] %v572
                %v574 = vld [vmem:[%s330 + $0xcc8] sm:$0xff]
                %575 = vst [vmem:[%s331 + $0x3c8] sm:$0xff] %v574
                %v576 = vld [vmem:[%s330 + $0xcd0] sm:$0xff]
                %577 = vst [vmem:[%s331 + $0x3d0] sm:$0xff] %v576
                %v578 = vld [vmem:[%s330 + $0xcd8] sm:$0xff]
                %579 = vst [vmem:[%s331 + $0x3d8] sm:$0xff] %v578
                %v580 = vld [vmem:[%s330 + $0xce0] sm:$0xff]
                %581 = vst [vmem:[%s331 + $0x3e0] sm:$0xff] %v580
                %v582 = vld [vmem:[%s330 + $0xce8] sm:$0xff]
                %583 = vst [vmem:[%s331 + $0x3e8] sm:$0xff] %v582
                %v584 = vld [vmem:[%s330 + $0xcf0] sm:$0xff]
                %585 = vst [vmem:[%s331 + $0x3f0] sm:$0xff] %v584
                %v586 = vld [vmem:[%s330 + $0xcf8] sm:$0xff]
                %587 = vst [vmem:[%s331 + $0x3f8] sm:$0xff] %v586
              $region65: #{tpu_custom_call.1} parent=59 // loop_footer
                %s329 = sadd.s32 1, %s325
              $region66: #{tpu_custom_call.1} parent=59 // loop_footer_branch
                %324 = sbr.rel target = $region62
              $region67: #{tpu_custom_call.1} parent=59 // loop_exit
                _
            $region60: #{tpu_custom_call.1} parent=51 // pred_fallthru
              _
          $region52: #{tpu_custom_call.1} parent=47 // pred_fallthru
            _
          %856 = vnop
        $region48: #{tpu_custom_call.1} parent=43 // pred_fallthru
          _
        // Predicated region
        $region83: #{tpu_custom_call.1} parent=43 // pred_check
          %p857 = pneg %p62
        $region84: #{tpu_custom_call.1} parent=43 // pred_check_branch
          %859 = sbr.rel (%p857) target = $region86
        $region85: #{tpu_custom_call.1} parent=43 // pred_region
          %s860 = sand.u32 %s52, 1
          %s861 = sand.u32 %s52, 1
          %s862 = smul.addr %s861, 1024
          %s863 = scalar_lea.vmem [#allocation3], %s862
          %s864 = smul.u32 32, %s16
          %s865 = smul.addr %s864, 8
          %s866 = scalar_lea.vmem %s1, %s865
          // Predicated region
          $region87: #{tpu_custom_call.1} parent=85 // pred_check
            _
          $region88: #{tpu_custom_call.1} parent=85 // pred_check_branch
            %868 = sbr.rel (0) target = $region90
          $region89: #{tpu_custom_call.1} parent=85 // pred_region
            // Predicated region
            $region91: #{tpu_custom_call.1} parent=89 // pred_check
              _
            $region92: #{tpu_custom_call.1} parent=89 // pred_check_branch
              %870 = sbr.rel (0) target = $region94
            $region93: #{tpu_custom_call.1} parent=89 // pred_region
              // Predicated region
              $region106: #{tpu_custom_call.1} parent=93 // pred_check
                _
              $region107: #{tpu_custom_call.1} parent=93 // pred_check_branch
                %1139 = sbr.rel (0) target = $region109
              $region108: #{tpu_custom_call.1} parent=93 // pred_region
                loop: start=0, step=1, limit=1
                $region110: #{tpu_custom_call.1} parent=108 // loop_pre_header
                  _
                $region111: #{tpu_custom_call.1} parent=108 // loop_header
                  %s1141 = sphi 0, %s1145
                  %p1142 = scmp.ge.s32.totalorder %s1141, 1
                  %s1146 = sphi %s866, %s866
                  %s1147 = sphi %s863, %s863
                $region112: #{tpu_custom_call.1} parent=108 // loop_header_branch
                  %1144 = sbr.rel (%p1142) target = $region116
                $region113: #{tpu_custom_call.1} parent=108 // loop_body
                  %v1148 = vld [vmem:[%s1146] sm:$0xff]
                  %1149 = vst [vmem:[%s1147] sm:$0xff] %v1148
                  %v1150 = vld [vmem:[%s1146 + $0x8] sm:$0xff]
                  %1151 = vst [vmem:[%s1147 + $0x8] sm:$0xff] %v1150
                  %v1152 = vld [vmem:[%s1146 + $0x10] sm:$0xff]
                  %1153 = vst [vmem:[%s1147 + $0x10] sm:$0xff] %v1152
                  %v1154 = vld [vmem:[%s1146 + $0x18] sm:$0xff]
                  %1155 = vst [vmem:[%s1147 + $0x18] sm:$0xff] %v1154
                  %v1156 = vld [vmem:[%s1146 + $0x20] sm:$0xff]
                  %1157 = vst [vmem:[%s1147 + $0x20] sm:$0xff] %v1156
                  %v1158 = vld [vmem:[%s1146 + $0x28] sm:$0xff]
                  %1159 = vst [vmem:[%s1147 + $0x28] sm:$0xff] %v1158
                  %v1160 = vld [vmem:[%s1146 + $0x30] sm:$0xff]
                  %1161 = vst [vmem:[%s1147 + $0x30] sm:$0xff] %v1160
                  %v1162 = vld [vmem:[%s1146 + $0x38] sm:$0xff]
                  %1163 = vst [vmem:[%s1147 + $0x38] sm:$0xff] %v1162
                  %v1164 = vld [vmem:[%s1146 + $0x40] sm:$0xff]
                  %1165 = vst [vmem:[%s1147 + $0x40] sm:$0xff] %v1164
                  %v1166 = vld [vmem:[%s1146 + $0x48] sm:$0xff]
                  %1167 = vst [vmem:[%s1147 + $0x48] sm:$0xff] %v1166
                  %v1168 = vld [vmem:[%s1146 + $0x50] sm:$0xff]
                  %1169 = vst [vmem:[%s1147 + $0x50] sm:$0xff] %v1168
                  %v1170 = vld [vmem:[%s1146 + $0x58] sm:$0xff]
                  %1171 = vst [vmem:[%s1147 + $0x58] sm:$0xff] %v1170
                  %v1172 = vld [vmem:[%s1146 + $0x60] sm:$0xff]
                  %1173 = vst [vmem:[%s1147 + $0x60] sm:$0xff] %v1172
                  %v1174 = vld [vmem:[%s1146 + $0x68] sm:$0xff]
                  %1175 = vst [vmem:[%s1147 + $0x68] sm:$0xff] %v1174
                  %v1176 = vld [vmem:[%s1146 + $0x70] sm:$0xff]
                  %1177 = vst [vmem:[%s1147 + $0x70] sm:$0xff] %v1176
                  %v1178 = vld [vmem:[%s1146 + $0x78] sm:$0xff]
                  %1179 = vst [vmem:[%s1147 + $0x78] sm:$0xff] %v1178
                  %v1180 = vld [vmem:[%s1146 + $0x80] sm:$0xff]
                  %1181 = vst [vmem:[%s1147 + $0x80] sm:$0xff] %v1180
                  %v1182 = vld [vmem:[%s1146 + $0x88] sm:$0xff]
                  %1183 = vst [vmem:[%s1147 + $0x88] sm:$0xff] %v1182
                  %v1184 = vld [vmem:[%s1146 + $0x90] sm:$0xff]
                  %1185 = vst [vmem:[%s1147 + $0x90] sm:$0xff] %v1184
                  %v1186 = vld [vmem:[%s1146 + $0x98] sm:$0xff]
                  %1187 = vst [vmem:[%s1147 + $0x98] sm:$0xff] %v1186
                  %v1188 = vld [vmem:[%s1146 + $0xa0] sm:$0xff]
                  %1189 = vst [vmem:[%s1147 + $0xa0] sm:$0xff] %v1188
                  %v1190 = vld [vmem:[%s1146 + $0xa8] sm:$0xff]
                  %1191 = vst [vmem:[%s1147 + $0xa8] sm:$0xff] %v1190
                  %v1192 = vld [vmem:[%s1146 + $0xb0] sm:$0xff]
                  %1193 = vst [vmem:[%s1147 + $0xb0] sm:$0xff] %v1192
                  %v1194 = vld [vmem:[%s1146 + $0xb8] sm:$0xff]
                  %1195 = vst [vmem:[%s1147 + $0xb8] sm:$0xff] %v1194
                  %v1196 = vld [vmem:[%s1146 + $0xc0] sm:$0xff]
                  %1197 = vst [vmem:[%s1147 + $0xc0] sm:$0xff] %v1196
                  %v1198 = vld [vmem:[%s1146 + $0xc8] sm:$0xff]
                  %1199 = vst [vmem:[%s1147 + $0xc8] sm:$0xff] %v1198
                  %v1200 = vld [vmem:[%s1146 + $0xd0] sm:$0xff]
                  %1201 = vst [vmem:[%s1147 + $0xd0] sm:$0xff] %v1200
                  %v1202 = vld [vmem:[%s1146 + $0xd8] sm:$0xff]
                  %1203 = vst [vmem:[%s1147 + $0xd8] sm:$0xff] %v1202
                  %v1204 = vld [vmem:[%s1146 + $0xe0] sm:$0xff]
                  %1205 = vst [vmem:[%s1147 + $0xe0] sm:$0xff] %v1204
                  %v1206 = vld [vmem:[%s1146 + $0xe8] sm:$0xff]
                  %1207 = vst [vmem:[%s1147 + $0xe8] sm:$0xff] %v1206
                  %v1208 = vld [vmem:[%s1146 + $0xf0] sm:$0xff]
                  %1209 = vst [vmem:[%s1147 + $0xf0] sm:$0xff] %v1208
                  %v1210 = vld [vmem:[%s1146 + $0xf8] sm:$0xff]
                  %1211 = vst [vmem:[%s1147 + $0xf8] sm:$0xff] %v1210
                  %v1212 = vld [vmem:[%s1146 + $0x400] sm:$0xff]
                  %1213 = vst [vmem:[%s1147 + $0x100] sm:$0xff] %v1212
                  %v1214 = vld [vmem:[%s1146 + $0x408] sm:$0xff]
                  %1215 = vst [vmem:[%s1147 + $0x108] sm:$0xff] %v1214
                  %v1216 = vld [vmem:[%s1146 + $0x410] sm:$0xff]
                  %1217 = vst [vmem:[%s1147 + $0x110] sm:$0xff] %v1216
                  %v1218 = vld [vmem:[%s1146 + $0x418] sm:$0xff]
                  %1219 = vst [vmem:[%s1147 + $0x118] sm:$0xff] %v1218
                  %v1220 = vld [vmem:[%s1146 + $0x420] sm:$0xff]
                  %1221 = vst [vmem:[%s1147 + $0x120] sm:$0xff] %v1220
                  %v1222 = vld [vmem:[%s1146 + $0x428] sm:$0xff]
                  %1223 = vst [vmem:[%s1147 + $0x128] sm:$0xff] %v1222
                  %v1224 = vld [vmem:[%s1146 + $0x430] sm:$0xff]
                  %1225 = vst [vmem:[%s1147 + $0x130] sm:$0xff] %v1224
                  %v1226 = vld [vmem:[%s1146 + $0x438] sm:$0xff]
                  %1227 = vst [vmem:[%s1147 + $0x138] sm:$0xff] %v1226
                  %v1228 = vld [vmem:[%s1146 + $0x440] sm:$0xff]
                  %1229 = vst [vmem:[%s1147 + $0x140] sm:$0xff] %v1228
                  %v1230 = vld [vmem:[%s1146 + $0x448] sm:$0xff]
                  %1231 = vst [vmem:[%s1147 + $0x148] sm:$0xff] %v1230
                  %v1232 = vld [vmem:[%s1146 + $0x450] sm:$0xff]
                  %1233 = vst [vmem:[%s1147 + $0x150] sm:$0xff] %v1232
                  %v1234 = vld [vmem:[%s1146 + $0x458] sm:$0xff]
                  %1235 = vst [vmem:[%s1147 + $0x158] sm:$0xff] %v1234
                  %v1236 = vld [vmem:[%s1146 + $0x460] sm:$0xff]
                  %1237 = vst [vmem:[%s1147 + $0x160] sm:$0xff] %v1236
                  %v1238 = vld [vmem:[%s1146 + $0x468] sm:$0xff]
                  %1239 = vst [vmem:[%s1147 + $0x168] sm:$0xff] %v1238
                  %v1240 = vld [vmem:[%s1146 + $0x470] sm:$0xff]
                  %1241 = vst [vmem:[%s1147 + $0x170] sm:$0xff] %v1240
                  %v1242 = vld [vmem:[%s1146 + $0x478] sm:$0xff]
                  %1243 = vst [vmem:[%s1147 + $0x178] sm:$0xff] %v1242
                  %v1244 = vld [vmem:[%s1146 + $0x480] sm:$0xff]
                  %1245 = vst [vmem:[%s1147 + $0x180] sm:$0xff] %v1244
                  %v1246 = vld [vmem:[%s1146 + $0x488] sm:$0xff]
                  %1247 = vst [vmem:[%s1147 + $0x188] sm:$0xff] %v1246
                  %v1248 = vld [vmem:[%s1146 + $0x490] sm:$0xff]
                  %1249 = vst [vmem:[%s1147 + $0x190] sm:$0xff] %v1248
                  %v1250 = vld [vmem:[%s1146 + $0x498] sm:$0xff]
                  %1251 = vst [vmem:[%s1147 + $0x198] sm:$0xff] %v1250
                  %v1252 = vld [vmem:[%s1146 + $0x4a0] sm:$0xff]
                  %1253 = vst [vmem:[%s1147 + $0x1a0] sm:$0xff] %v1252
                  %v1254 = vld [vmem:[%s1146 + $0x4a8] sm:$0xff]
                  %1255 = vst [vmem:[%s1147 + $0x1a8] sm:$0xff] %v1254
                  %v1256 = vld [vmem:[%s1146 + $0x4b0] sm:$0xff]
                  %1257 = vst [vmem:[%s1147 + $0x1b0] sm:$0xff] %v1256
                  %v1258 = vld [vmem:[%s1146 + $0x4b8] sm:$0xff]
                  %1259 = vst [vmem:[%s1147 + $0x1b8] sm:$0xff] %v1258
                  %v1260 = vld [vmem:[%s1146 + $0x4c0] sm:$0xff]
                  %1261 = vst [vmem:[%s1147 + $0x1c0] sm:$0xff] %v1260
                  %v1262 = vld [vmem:[%s1146 + $0x4c8] sm:$0xff]
                  %1263 = vst [vmem:[%s1147 + $0x1c8] sm:$0xff] %v1262
                  %v1264 = vld [vmem:[%s1146 + $0x4d0] sm:$0xff]
                  %1265 = vst [vmem:[%s1147 + $0x1d0] sm:$0xff] %v1264
                  %v1266 = vld [vmem:[%s1146 + $0x4d8] sm:$0xff]
                  %1267 = vst [vmem:[%s1147 + $0x1d8] sm:$0xff] %v1266
                  %v1268 = vld [vmem:[%s1146 + $0x4e0] sm:$0xff]
                  %1269 = vst [vmem:[%s1147 + $0x1e0] sm:$0xff] %v1268
                  %v1270 = vld [vmem:[%s1146 + $0x4e8] sm:$0xff]
                  %1271 = vst [vmem:[%s1147 + $0x1e8] sm:$0xff] %v1270
                  %v1272 = vld [vmem:[%s1146 + $0x4f0] sm:$0xff]
                  %1273 = vst [vmem:[%s1147 + $0x1f0] sm:$0xff] %v1272
                  %v1274 = vld [vmem:[%s1146 + $0x4f8] sm:$0xff]
                  %1275 = vst [vmem:[%s1147 + $0x1f8] sm:$0xff] %v1274
                  %v1276 = vld [vmem:[%s1146 + $0x800] sm:$0xff]
                  %1277 = vst [vmem:[%s1147 + $0x200] sm:$0xff] %v1276
                  %v1278 = vld [vmem:[%s1146 + $0x808] sm:$0xff]
                  %1279 = vst [vmem:[%s1147 + $0x208] sm:$0xff] %v1278
                  %v1280 = vld [vmem:[%s1146 + $0x810] sm:$0xff]
                  %1281 = vst [vmem:[%s1147 + $0x210] sm:$0xff] %v1280
                  %v1282 = vld [vmem:[%s1146 + $0x818] sm:$0xff]
                  %1283 = vst [vmem:[%s1147 + $0x218] sm:$0xff] %v1282
                  %v1284 = vld [vmem:[%s1146 + $0x820] sm:$0xff]
                  %1285 = vst [vmem:[%s1147 + $0x220] sm:$0xff] %v1284
                  %v1286 = vld [vmem:[%s1146 + $0x828] sm:$0xff]
                  %1287 = vst [vmem:[%s1147 + $0x228] sm:$0xff] %v1286
                  %v1288 = vld [vmem:[%s1146 + $0x830] sm:$0xff]
                  %1289 = vst [vmem:[%s1147 + $0x230] sm:$0xff] %v1288
                  %v1290 = vld [vmem:[%s1146 + $0x838] sm:$0xff]
                  %1291 = vst [vmem:[%s1147 + $0x238] sm:$0xff] %v1290
                  %v1292 = vld [vmem:[%s1146 + $0x840] sm:$0xff]
                  %1293 = vst [vmem:[%s1147 + $0x240] sm:$0xff] %v1292
                  %v1294 = vld [vmem:[%s1146 + $0x848] sm:$0xff]
                  %1295 = vst [vmem:[%s1147 + $0x248] sm:$0xff] %v1294
                  %v1296 = vld [vmem:[%s1146 + $0x850] sm:$0xff]
                  %1297 = vst [vmem:[%s1147 + $0x250] sm:$0xff] %v1296
                  %v1298 = vld [vmem:[%s1146 + $0x858] sm:$0xff]
                  %1299 = vst [vmem:[%s1147 + $0x258] sm:$0xff] %v1298
                  %v1300 = vld [vmem:[%s1146 + $0x860] sm:$0xff]
                  %1301 = vst [vmem:[%s1147 + $0x260] sm:$0xff] %v1300
                  %v1302 = vld [vmem:[%s1146 + $0x868] sm:$0xff]
                  %1303 = vst [vmem:[%s1147 + $0x268] sm:$0xff] %v1302
                  %v1304 = vld [vmem:[%s1146 + $0x870] sm:$0xff]
                  %1305 = vst [vmem:[%s1147 + $0x270] sm:$0xff] %v1304
                  %v1306 = vld [vmem:[%s1146 + $0x878] sm:$0xff]
                  %1307 = vst [vmem:[%s1147 + $0x278] sm:$0xff] %v1306
                  %v1308 = vld [vmem:[%s1146 + $0x880] sm:$0xff]
                  %1309 = vst [vmem:[%s1147 + $0x280] sm:$0xff] %v1308
                  %v1310 = vld [vmem:[%s1146 + $0x888] sm:$0xff]
                  %1311 = vst [vmem:[%s1147 + $0x288] sm:$0xff] %v1310
                  %v1312 = vld [vmem:[%s1146 + $0x890] sm:$0xff]
                  %1313 = vst [vmem:[%s1147 + $0x290] sm:$0xff] %v1312
                  %v1314 = vld [vmem:[%s1146 + $0x898] sm:$0xff]
                  %1315 = vst [vmem:[%s1147 + $0x298] sm:$0xff] %v1314
                  %v1316 = vld [vmem:[%s1146 + $0x8a0] sm:$0xff]
                  %1317 = vst [vmem:[%s1147 + $0x2a0] sm:$0xff] %v1316
                  %v1318 = vld [vmem:[%s1146 + $0x8a8] sm:$0xff]
                  %1319 = vst [vmem:[%s1147 + $0x2a8] sm:$0xff] %v1318
                  %v1320 = vld [vmem:[%s1146 + $0x8b0] sm:$0xff]
                  %1321 = vst [vmem:[%s1147 + $0x2b0] sm:$0xff] %v1320
                  %v1322 = vld [vmem:[%s1146 + $0x8b8] sm:$0xff]
                  %1323 = vst [vmem:[%s1147 + $0x2b8] sm:$0xff] %v1322
                  %v1324 = vld [vmem:[%s1146 + $0x8c0] sm:$0xff]
                  %1325 = vst [vmem:[%s1147 + $0x2c0] sm:$0xff] %v1324
                  %v1326 = vld [vmem:[%s1146 + $0x8c8] sm:$0xff]
                  %1327 = vst [vmem:[%s1147 + $0x2c8] sm:$0xff] %v1326
                  %v1328 = vld [vmem:[%s1146 + $0x8d0] sm:$0xff]
                  %1329 = vst [vmem:[%s1147 + $0x2d0] sm:$0xff] %v1328
                  %v1330 = vld [vmem:[%s1146 + $0x8d8] sm:$0xff]
                  %1331 = vst [vmem:[%s1147 + $0x2d8] sm:$0xff] %v1330
                  %v1332 = vld [vmem:[%s1146 + $0x8e0] sm:$0xff]
                  %1333 = vst [vmem:[%s1147 + $0x2e0] sm:$0xff] %v1332
                  %v1334 = vld [vmem:[%s1146 + $0x8e8] sm:$0xff]
                  %1335 = vst [vmem:[%s1147 + $0x2e8] sm:$0xff] %v1334
                  %v1336 = vld [vmem:[%s1146 + $0x8f0] sm:$0xff]
                  %1337 = vst [vmem:[%s1147 + $0x2f0] sm:$0xff] %v1336
                  %v1338 = vld [vmem:[%s1146 + $0x8f8] sm:$0xff]
                  %1339 = vst [vmem:[%s1147 + $0x2f8] sm:$0xff] %v1338
                  %v1340 = vld [vmem:[%s1146 + $0xc00] sm:$0xff]
                  %1341 = vst [vmem:[%s1147 + $0x300] sm:$0xff] %v1340
                  %v1342 = vld [vmem:[%s1146 + $0xc08] sm:$0xff]
                  %1343 = vst [vmem:[%s1147 + $0x308] sm:$0xff] %v1342
                  %v1344 = vld [vmem:[%s1146 + $0xc10] sm:$0xff]
                  %1345 = vst [vmem:[%s1147 + $0x310] sm:$0xff] %v1344
                  %v1346 = vld [vmem:[%s1146 + $0xc18] sm:$0xff]
                  %1347 = vst [vmem:[%s1147 + $0x318] sm:$0xff] %v1346
                  %v1348 = vld [vmem:[%s1146 + $0xc20] sm:$0xff]
                  %1349 = vst [vmem:[%s1147 + $0x320] sm:$0xff] %v1348
                  %v1350 = vld [vmem:[%s1146 + $0xc28] sm:$0xff]
                  %1351 = vst [vmem:[%s1147 + $0x328] sm:$0xff] %v1350
                  %v1352 = vld [vmem:[%s1146 + $0xc30] sm:$0xff]
                  %1353 = vst [vmem:[%s1147 + $0x330] sm:$0xff] %v1352
                  %v1354 = vld [vmem:[%s1146 + $0xc38] sm:$0xff]
                  %1355 = vst [vmem:[%s1147 + $0x338] sm:$0xff] %v1354
                  %v1356 = vld [vmem:[%s1146 + $0xc40] sm:$0xff]
                  %1357 = vst [vmem:[%s1147 + $0x340] sm:$0xff] %v1356
                  %v1358 = vld [vmem:[%s1146 + $0xc48] sm:$0xff]
                  %1359 = vst [vmem:[%s1147 + $0x348] sm:$0xff] %v1358
                  %v1360 = vld [vmem:[%s1146 + $0xc50] sm:$0xff]
                  %1361 = vst [vmem:[%s1147 + $0x350] sm:$0xff] %v1360
                  %v1362 = vld [vmem:[%s1146 + $0xc58] sm:$0xff]
                  %1363 = vst [vmem:[%s1147 + $0x358] sm:$0xff] %v1362
                  %v1364 = vld [vmem:[%s1146 + $0xc60] sm:$0xff]
                  %1365 = vst [vmem:[%s1147 + $0x360] sm:$0xff] %v1364
                  %v1366 = vld [vmem:[%s1146 + $0xc68] sm:$0xff]
                  %1367 = vst [vmem:[%s1147 + $0x368] sm:$0xff] %v1366
                  %v1368 = vld [vmem:[%s1146 + $0xc70] sm:$0xff]
                  %1369 = vst [vmem:[%s1147 + $0x370] sm:$0xff] %v1368
                  %v1370 = vld [vmem:[%s1146 + $0xc78] sm:$0xff]
                  %1371 = vst [vmem:[%s1147 + $0x378] sm:$0xff] %v1370
                  %v1372 = vld [vmem:[%s1146 + $0xc80] sm:$0xff]
                  %1373 = vst [vmem:[%s1147 + $0x380] sm:$0xff] %v1372
                  %v1374 = vld [vmem:[%s1146 + $0xc88] sm:$0xff]
                  %1375 = vst [vmem:[%s1147 + $0x388] sm:$0xff] %v1374
                  %v1376 = vld [vmem:[%s1146 + $0xc90] sm:$0xff]
                  %1377 = vst [vmem:[%s1147 + $0x390] sm:$0xff] %v1376
                  %v1378 = vld [vmem:[%s1146 + $0xc98] sm:$0xff]
                  %1379 = vst [vmem:[%s1147 + $0x398] sm:$0xff] %v1378
                  %v1380 = vld [vmem:[%s1146 + $0xca0] sm:$0xff]
                  %1381 = vst [vmem:[%s1147 + $0x3a0] sm:$0xff] %v1380
                  %v1382 = vld [vmem:[%s1146 + $0xca8] sm:$0xff]
                  %1383 = vst [vmem:[%s1147 + $0x3a8] sm:$0xff] %v1382
                  %v1384 = vld [vmem:[%s1146 + $0xcb0] sm:$0xff]
                  %1385 = vst [vmem:[%s1147 + $0x3b0] sm:$0xff] %v1384
                  %v1386 = vld [vmem:[%s1146 + $0xcb8] sm:$0xff]
                  %1387 = vst [vmem:[%s1147 + $0x3b8] sm:$0xff] %v1386
                  %v1388 = vld [vmem:[%s1146 + $0xcc0] sm:$0xff]
                  %1389 = vst [vmem:[%s1147 + $0x3c0] sm:$0xff] %v1388
                  %v1390 = vld [vmem:[%s1146 + $0xcc8] sm:$0xff]
                  %1391 = vst [vmem:[%s1147 + $0x3c8] sm:$0xff] %v1390
                  %v1392 = vld [vmem:[%s1146 + $0xcd0] sm:$0xff]
                  %1393 = vst [vmem:[%s1147 + $0x3d0] sm:$0xff] %v1392
                  %v1394 = vld [vmem:[%s1146 + $0xcd8] sm:$0xff]
                  %1395 = vst [vmem:[%s1147 + $0x3d8] sm:$0xff] %v1394
                  %v1396 = vld [vmem:[%s1146 + $0xce0] sm:$0xff]
                  %1397 = vst [vmem:[%s1147 + $0x3e0] sm:$0xff] %v1396
                  %v1398 = vld [vmem:[%s1146 + $0xce8] sm:$0xff]
                  %1399 = vst [vmem:[%s1147 + $0x3e8] sm:$0xff] %v1398
                  %v1400 = vld [vmem:[%s1146 + $0xcf0] sm:$0xff]
                  %1401 = vst [vmem:[%s1147 + $0x3f0] sm:$0xff] %v1400
                  %v1402 = vld [vmem:[%s1146 + $0xcf8] sm:$0xff]
                  %1403 = vst [vmem:[%s1147 + $0x3f8] sm:$0xff] %v1402
                $region114: #{tpu_custom_call.1} parent=108 // loop_footer
                  %s1145 = sadd.s32 1, %s1141
                $region115: #{tpu_custom_call.1} parent=108 // loop_footer_branch
                  %1140 = sbr.rel target = $region111
                $region116: #{tpu_custom_call.1} parent=108 // loop_exit
                  _
              $region109: #{tpu_custom_call.1} parent=93 // pred_fallthru
                _
              // Predicated region
              $region117: #{tpu_custom_call.1} parent=93 // pred_check
                _
              $region118: #{tpu_custom_call.1} parent=93 // pred_check_branch
                %1405 = sbr.rel target = $region120
              $region119: #{tpu_custom_call.1} parent=93 // pred_region
                _
              $region120: #{tpu_custom_call.1} parent=93 // pred_fallthru
                _
            $region94: #{tpu_custom_call.1} parent=89 // pred_fallthru
              _
            // Predicated region
            $region95: #{tpu_custom_call.1} parent=89 // pred_check
              _
            $region96: #{tpu_custom_call.1} parent=89 // pred_check_branch
              %872 = sbr.rel target = $region98
            $region97: #{tpu_custom_call.1} parent=89 // pred_region
              loop: start=0, step=1, limit=1
              $region99: #{tpu_custom_call.1} parent=97 // loop_pre_header
                _
              $region100: #{tpu_custom_call.1} parent=97 // loop_header
                %s875 = sphi 0, %s879
                %p876 = scmp.ge.s32.totalorder %s875, 1
                %s880 = sphi %s866, %s866
                %s881 = sphi %s863, %s863
              $region101: #{tpu_custom_call.1} parent=97 // loop_header_branch
                %878 = sbr.rel (%p876) target = $region105
              $region102: #{tpu_custom_call.1} parent=97 // loop_body
                %v882 = vld [vmem:[%s880] sm:$0xff]
                %883 = vst [vmem:[%s881] sm:$0xff] %v882
                %v884 = vld [vmem:[%s880 + $0x8] sm:$0xff]
                %885 = vst [vmem:[%s881 + $0x8] sm:$0xff] %v884
                %v886 = vld [vmem:[%s880 + $0x10] sm:$0xff]
                %887 = vst [vmem:[%s881 + $0x10] sm:$0xff] %v886
                %v888 = vld [vmem:[%s880 + $0x18] sm:$0xff]
                %889 = vst [vmem:[%s881 + $0x18] sm:$0xff] %v888
                %v890 = vld [vmem:[%s880 + $0x20] sm:$0xff]
                %891 = vst [vmem:[%s881 + $0x20] sm:$0xff] %v890
                %v892 = vld [vmem:[%s880 + $0x28] sm:$0xff]
                %893 = vst [vmem:[%s881 + $0x28] sm:$0xff] %v892
                %v894 = vld [vmem:[%s880 + $0x30] sm:$0xff]
                %895 = vst [vmem:[%s881 + $0x30] sm:$0xff] %v894
                %v896 = vld [vmem:[%s880 + $0x38] sm:$0xff]
                %897 = vst [vmem:[%s881 + $0x38] sm:$0xff] %v896
                %v898 = vld [vmem:[%s880 + $0x40] sm:$0xff]
                %899 = vst [vmem:[%s881 + $0x40] sm:$0xff] %v898
                %v900 = vld [vmem:[%s880 + $0x48] sm:$0xff]
                %901 = vst [vmem:[%s881 + $0x48] sm:$0xff] %v900
                %v902 = vld [vmem:[%s880 + $0x50] sm:$0xff]
                %903 = vst [vmem:[%s881 + $0x50] sm:$0xff] %v902
                %v904 = vld [vmem:[%s880 + $0x58] sm:$0xff]
                %905 = vst [vmem:[%s881 + $0x58] sm:$0xff] %v904
                %v906 = vld [vmem:[%s880 + $0x60] sm:$0xff]
                %907 = vst [vmem:[%s881 + $0x60] sm:$0xff] %v906
                %v908 = vld [vmem:[%s880 + $0x68] sm:$0xff]
                %909 = vst [vmem:[%s881 + $0x68] sm:$0xff] %v908
                %v910 = vld [vmem:[%s880 + $0x70] sm:$0xff]
                %911 = vst [vmem:[%s881 + $0x70] sm:$0xff] %v910
                %v912 = vld [vmem:[%s880 + $0x78] sm:$0xff]
                %913 = vst [vmem:[%s881 + $0x78] sm:$0xff] %v912
                %v914 = vld [vmem:[%s880 + $0x80] sm:$0xff]
                %915 = vst [vmem:[%s881 + $0x80] sm:$0xff] %v914
                %v916 = vld [vmem:[%s880 + $0x88] sm:$0xff]
                %917 = vst [vmem:[%s881 + $0x88] sm:$0xff] %v916
                %v918 = vld [vmem:[%s880 + $0x90] sm:$0xff]
                %919 = vst [vmem:[%s881 + $0x90] sm:$0xff] %v918
                %v920 = vld [vmem:[%s880 + $0x98] sm:$0xff]
                %921 = vst [vmem:[%s881 + $0x98] sm:$0xff] %v920
                %v922 = vld [vmem:[%s880 + $0xa0] sm:$0xff]
                %923 = vst [vmem:[%s881 + $0xa0] sm:$0xff] %v922
                %v924 = vld [vmem:[%s880 + $0xa8] sm:$0xff]
                %925 = vst [vmem:[%s881 + $0xa8] sm:$0xff] %v924
                %v926 = vld [vmem:[%s880 + $0xb0] sm:$0xff]
                %927 = vst [vmem:[%s881 + $0xb0] sm:$0xff] %v926
                %v928 = vld [vmem:[%s880 + $0xb8] sm:$0xff]
                %929 = vst [vmem:[%s881 + $0xb8] sm:$0xff] %v928
                %v930 = vld [vmem:[%s880 + $0xc0] sm:$0xff]
                %931 = vst [vmem:[%s881 + $0xc0] sm:$0xff] %v930
                %v932 = vld [vmem:[%s880 + $0xc8] sm:$0xff]
                %933 = vst [vmem:[%s881 + $0xc8] sm:$0xff] %v932
                %v934 = vld [vmem:[%s880 + $0xd0] sm:$0xff]
                %935 = vst [vmem:[%s881 + $0xd0] sm:$0xff] %v934
                %v936 = vld [vmem:[%s880 + $0xd8] sm:$0xff]
                %937 = vst [vmem:[%s881 + $0xd8] sm:$0xff] %v936
                %v938 = vld [vmem:[%s880 + $0xe0] sm:$0xff]
                %939 = vst [vmem:[%s881 + $0xe0] sm:$0xff] %v938
                %v940 = vld [vmem:[%s880 + $0xe8] sm:$0xff]
                %941 = vst [vmem:[%s881 + $0xe8] sm:$0xff] %v940
                %v942 = vld [vmem:[%s880 + $0xf0] sm:$0xff]
                %943 = vst [vmem:[%s881 + $0xf0] sm:$0xff] %v942
                %v944 = vld [vmem:[%s880 + $0xf8] sm:$0xff]
                %945 = vst [vmem:[%s881 + $0xf8] sm:$0xff] %v944
                %v946 = vld [vmem:[%s880 + $0x400] sm:$0xff]
                %947 = vst [vmem:[%s881 + $0x100] sm:$0xff] %v946
                %v948 = vld [vmem:[%s880 + $0x408] sm:$0xff]
                %949 = vst [vmem:[%s881 + $0x108] sm:$0xff] %v948
                %v950 = vld [vmem:[%s880 + $0x410] sm:$0xff]
                %951 = vst [vmem:[%s881 + $0x110] sm:$0xff] %v950
                %v952 = vld [vmem:[%s880 + $0x418] sm:$0xff]
                %953 = vst [vmem:[%s881 + $0x118] sm:$0xff] %v952
                %v954 = vld [vmem:[%s880 + $0x420] sm:$0xff]
                %955 = vst [vmem:[%s881 + $0x120] sm:$0xff] %v954
                %v956 = vld [vmem:[%s880 + $0x428] sm:$0xff]
                %957 = vst [vmem:[%s881 + $0x128] sm:$0xff] %v956
                %v958 = vld [vmem:[%s880 + $0x430] sm:$0xff]
                %959 = vst [vmem:[%s881 + $0x130] sm:$0xff] %v958
                %v960 = vld [vmem:[%s880 + $0x438] sm:$0xff]
                %961 = vst [vmem:[%s881 + $0x138] sm:$0xff] %v960
                %v962 = vld [vmem:[%s880 + $0x440] sm:$0xff]
                %963 = vst [vmem:[%s881 + $0x140] sm:$0xff] %v962
                %v964 = vld [vmem:[%s880 + $0x448] sm:$0xff]
                %965 = vst [vmem:[%s881 + $0x148] sm:$0xff] %v964
                %v966 = vld [vmem:[%s880 + $0x450] sm:$0xff]
                %967 = vst [vmem:[%s881 + $0x150] sm:$0xff] %v966
                %v968 = vld [vmem:[%s880 + $0x458] sm:$0xff]
                %969 = vst [vmem:[%s881 + $0x158] sm:$0xff] %v968
                %v970 = vld [vmem:[%s880 + $0x460] sm:$0xff]
                %971 = vst [vmem:[%s881 + $0x160] sm:$0xff] %v970
                %v972 = vld [vmem:[%s880 + $0x468] sm:$0xff]
                %973 = vst [vmem:[%s881 + $0x168] sm:$0xff] %v972
                %v974 = vld [vmem:[%s880 + $0x470] sm:$0xff]
                %975 = vst [vmem:[%s881 + $0x170] sm:$0xff] %v974
                %v976 = vld [vmem:[%s880 + $0x478] sm:$0xff]
                %977 = vst [vmem:[%s881 + $0x178] sm:$0xff] %v976
                %v978 = vld [vmem:[%s880 + $0x480] sm:$0xff]
                %979 = vst [vmem:[%s881 + $0x180] sm:$0xff] %v978
                %v980 = vld [vmem:[%s880 + $0x488] sm:$0xff]
                %981 = vst [vmem:[%s881 + $0x188] sm:$0xff] %v980
                %v982 = vld [vmem:[%s880 + $0x490] sm:$0xff]
                %983 = vst [vmem:[%s881 + $0x190] sm:$0xff] %v982
                %v984 = vld [vmem:[%s880 + $0x498] sm:$0xff]
                %985 = vst [vmem:[%s881 + $0x198] sm:$0xff] %v984
                %v986 = vld [vmem:[%s880 + $0x4a0] sm:$0xff]
                %987 = vst [vmem:[%s881 + $0x1a0] sm:$0xff] %v986
                %v988 = vld [vmem:[%s880 + $0x4a8] sm:$0xff]
                %989 = vst [vmem:[%s881 + $0x1a8] sm:$0xff] %v988
                %v990 = vld [vmem:[%s880 + $0x4b0] sm:$0xff]
                %991 = vst [vmem:[%s881 + $0x1b0] sm:$0xff] %v990
                %v992 = vld [vmem:[%s880 + $0x4b8] sm:$0xff]
                %993 = vst [vmem:[%s881 + $0x1b8] sm:$0xff] %v992
                %v994 = vld [vmem:[%s880 + $0x4c0] sm:$0xff]
                %995 = vst [vmem:[%s881 + $0x1c0] sm:$0xff] %v994
                %v996 = vld [vmem:[%s880 + $0x4c8] sm:$0xff]
                %997 = vst [vmem:[%s881 + $0x1c8] sm:$0xff] %v996
                %v998 = vld [vmem:[%s880 + $0x4d0] sm:$0xff]
                %999 = vst [vmem:[%s881 + $0x1d0] sm:$0xff] %v998
                %v1000 = vld [vmem:[%s880 + $0x4d8] sm:$0xff]
                %1001 = vst [vmem:[%s881 + $0x1d8] sm:$0xff] %v1000
                %v1002 = vld [vmem:[%s880 + $0x4e0] sm:$0xff]
                %1003 = vst [vmem:[%s881 + $0x1e0] sm:$0xff] %v1002
                %v1004 = vld [vmem:[%s880 + $0x4e8] sm:$0xff]
                %1005 = vst [vmem:[%s881 + $0x1e8] sm:$0xff] %v1004
                %v1006 = vld [vmem:[%s880 + $0x4f0] sm:$0xff]
                %1007 = vst [vmem:[%s881 + $0x1f0] sm:$0xff] %v1006
                %v1008 = vld [vmem:[%s880 + $0x4f8] sm:$0xff]
                %1009 = vst [vmem:[%s881 + $0x1f8] sm:$0xff] %v1008
                %v1010 = vld [vmem:[%s880 + $0x800] sm:$0xff]
                %1011 = vst [vmem:[%s881 + $0x200] sm:$0xff] %v1010
                %v1012 = vld [vmem:[%s880 + $0x808] sm:$0xff]
                %1013 = vst [vmem:[%s881 + $0x208] sm:$0xff] %v1012
                %v1014 = vld [vmem:[%s880 + $0x810] sm:$0xff]
                %1015 = vst [vmem:[%s881 + $0x210] sm:$0xff] %v1014
                %v1016 = vld [vmem:[%s880 + $0x818] sm:$0xff]
                %1017 = vst [vmem:[%s881 + $0x218] sm:$0xff] %v1016
                %v1018 = vld [vmem:[%s880 + $0x820] sm:$0xff]
                %1019 = vst [vmem:[%s881 + $0x220] sm:$0xff] %v1018
                %v1020 = vld [vmem:[%s880 + $0x828] sm:$0xff]
                %1021 = vst [vmem:[%s881 + $0x228] sm:$0xff] %v1020
                %v1022 = vld [vmem:[%s880 + $0x830] sm:$0xff]
                %1023 = vst [vmem:[%s881 + $0x230] sm:$0xff] %v1022
                %v1024 = vld [vmem:[%s880 + $0x838] sm:$0xff]
                %1025 = vst [vmem:[%s881 + $0x238] sm:$0xff] %v1024
                %v1026 = vld [vmem:[%s880 + $0x840] sm:$0xff]
                %1027 = vst [vmem:[%s881 + $0x240] sm:$0xff] %v1026
                %v1028 = vld [vmem:[%s880 + $0x848] sm:$0xff]
                %1029 = vst [vmem:[%s881 + $0x248] sm:$0xff] %v1028
                %v1030 = vld [vmem:[%s880 + $0x850] sm:$0xff]
                %1031 = vst [vmem:[%s881 + $0x250] sm:$0xff] %v1030
                %v1032 = vld [vmem:[%s880 + $0x858] sm:$0xff]
                %1033 = vst [vmem:[%s881 + $0x258] sm:$0xff] %v1032
                %v1034 = vld [vmem:[%s880 + $0x860] sm:$0xff]
                %1035 = vst [vmem:[%s881 + $0x260] sm:$0xff] %v1034
                %v1036 = vld [vmem:[%s880 + $0x868] sm:$0xff]
                %1037 = vst [vmem:[%s881 + $0x268] sm:$0xff] %v1036
                %v1038 = vld [vmem:[%s880 + $0x870] sm:$0xff]
                %1039 = vst [vmem:[%s881 + $0x270] sm:$0xff] %v1038
                %v1040 = vld [vmem:[%s880 + $0x878] sm:$0xff]
                %1041 = vst [vmem:[%s881 + $0x278] sm:$0xff] %v1040
                %v1042 = vld [vmem:[%s880 + $0x880] sm:$0xff]
                %1043 = vst [vmem:[%s881 + $0x280] sm:$0xff] %v1042
                %v1044 = vld [vmem:[%s880 + $0x888] sm:$0xff]
                %1045 = vst [vmem:[%s881 + $0x288] sm:$0xff] %v1044
                %v1046 = vld [vmem:[%s880 + $0x890] sm:$0xff]
                %1047 = vst [vmem:[%s881 + $0x290] sm:$0xff] %v1046
                %v1048 = vld [vmem:[%s880 + $0x898] sm:$0xff]
                %1049 = vst [vmem:[%s881 + $0x298] sm:$0xff] %v1048
                %v1050 = vld [vmem:[%s880 + $0x8a0] sm:$0xff]
                %1051 = vst [vmem:[%s881 + $0x2a0] sm:$0xff] %v1050
                %v1052 = vld [vmem:[%s880 + $0x8a8] sm:$0xff]
                %1053 = vst [vmem:[%s881 + $0x2a8] sm:$0xff] %v1052
                %v1054 = vld [vmem:[%s880 + $0x8b0] sm:$0xff]
                %1055 = vst [vmem:[%s881 + $0x2b0] sm:$0xff] %v1054
                %v1056 = vld [vmem:[%s880 + $0x8b8] sm:$0xff]
                %1057 = vst [vmem:[%s881 + $0x2b8] sm:$0xff] %v1056
                %v1058 = vld [vmem:[%s880 + $0x8c0] sm:$0xff]
                %1059 = vst [vmem:[%s881 + $0x2c0] sm:$0xff] %v1058
                %v1060 = vld [vmem:[%s880 + $0x8c8] sm:$0xff]
                %1061 = vst [vmem:[%s881 + $0x2c8] sm:$0xff] %v1060
                %v1062 = vld [vmem:[%s880 + $0x8d0] sm:$0xff]
                %1063 = vst [vmem:[%s881 + $0x2d0] sm:$0xff] %v1062
                %v1064 = vld [vmem:[%s880 + $0x8d8] sm:$0xff]
                %1065 = vst [vmem:[%s881 + $0x2d8] sm:$0xff] %v1064
                %v1066 = vld [vmem:[%s880 + $0x8e0] sm:$0xff]
                %1067 = vst [vmem:[%s881 + $0x2e0] sm:$0xff] %v1066
                %v1068 = vld [vmem:[%s880 + $0x8e8] sm:$0xff]
                %1069 = vst [vmem:[%s881 + $0x2e8] sm:$0xff] %v1068
                %v1070 = vld [vmem:[%s880 + $0x8f0] sm:$0xff]
                %1071 = vst [vmem:[%s881 + $0x2f0] sm:$0xff] %v1070
                %v1072 = vld [vmem:[%s880 + $0x8f8] sm:$0xff]
                %1073 = vst [vmem:[%s881 + $0x2f8] sm:$0xff] %v1072
                %v1074 = vld [vmem:[%s880 + $0xc00] sm:$0xff]
                %1075 = vst [vmem:[%s881 + $0x300] sm:$0xff] %v1074
                %v1076 = vld [vmem:[%s880 + $0xc08] sm:$0xff]
                %1077 = vst [vmem:[%s881 + $0x308] sm:$0xff] %v1076
                %v1078 = vld [vmem:[%s880 + $0xc10] sm:$0xff]
                %1079 = vst [vmem:[%s881 + $0x310] sm:$0xff] %v1078
                %v1080 = vld [vmem:[%s880 + $0xc18] sm:$0xff]
                %1081 = vst [vmem:[%s881 + $0x318] sm:$0xff] %v1080
                %v1082 = vld [vmem:[%s880 + $0xc20] sm:$0xff]
                %1083 = vst [vmem:[%s881 + $0x320] sm:$0xff] %v1082
                %v1084 = vld [vmem:[%s880 + $0xc28] sm:$0xff]
                %1085 = vst [vmem:[%s881 + $0x328] sm:$0xff] %v1084
                %v1086 = vld [vmem:[%s880 + $0xc30] sm:$0xff]
                %1087 = vst [vmem:[%s881 + $0x330] sm:$0xff] %v1086
                %v1088 = vld [vmem:[%s880 + $0xc38] sm:$0xff]
                %1089 = vst [vmem:[%s881 + $0x338] sm:$0xff] %v1088
                %v1090 = vld [vmem:[%s880 + $0xc40] sm:$0xff]
                %1091 = vst [vmem:[%s881 + $0x340] sm:$0xff] %v1090
                %v1092 = vld [vmem:[%s880 + $0xc48] sm:$0xff]
                %1093 = vst [vmem:[%s881 + $0x348] sm:$0xff] %v1092
                %v1094 = vld [vmem:[%s880 + $0xc50] sm:$0xff]
                %1095 = vst [vmem:[%s881 + $0x350] sm:$0xff] %v1094
                %v1096 = vld [vmem:[%s880 + $0xc58] sm:$0xff]
                %1097 = vst [vmem:[%s881 + $0x358] sm:$0xff] %v1096
                %v1098 = vld [vmem:[%s880 + $0xc60] sm:$0xff]
                %1099 = vst [vmem:[%s881 + $0x360] sm:$0xff] %v1098
                %v1100 = vld [vmem:[%s880 + $0xc68] sm:$0xff]
                %1101 = vst [vmem:[%s881 + $0x368] sm:$0xff] %v1100
                %v1102 = vld [vmem:[%s880 + $0xc70] sm:$0xff]
                %1103 = vst [vmem:[%s881 + $0x370] sm:$0xff] %v1102
                %v1104 = vld [vmem:[%s880 + $0xc78] sm:$0xff]
                %1105 = vst [vmem:[%s881 + $0x378] sm:$0xff] %v1104
                %v1106 = vld [vmem:[%s880 + $0xc80] sm:$0xff]
                %1107 = vst [vmem:[%s881 + $0x380] sm:$0xff] %v1106
                %v1108 = vld [vmem:[%s880 + $0xc88] sm:$0xff]
                %1109 = vst [vmem:[%s881 + $0x388] sm:$0xff] %v1108
                %v1110 = vld [vmem:[%s880 + $0xc90] sm:$0xff]
                %1111 = vst [vmem:[%s881 + $0x390] sm:$0xff] %v1110
                %v1112 = vld [vmem:[%s880 + $0xc98] sm:$0xff]
                %1113 = vst [vmem:[%s881 + $0x398] sm:$0xff] %v1112
                %v1114 = vld [vmem:[%s880 + $0xca0] sm:$0xff]
                %1115 = vst [vmem:[%s881 + $0x3a0] sm:$0xff] %v1114
                %v1116 = vld [vmem:[%s880 + $0xca8] sm:$0xff]
                %1117 = vst [vmem:[%s881 + $0x3a8] sm:$0xff] %v1116
                %v1118 = vld [vmem:[%s880 + $0xcb0] sm:$0xff]
                %1119 = vst [vmem:[%s881 + $0x3b0] sm:$0xff] %v1118
                %v1120 = vld [vmem:[%s880 + $0xcb8] sm:$0xff]
                %1121 = vst [vmem:[%s881 + $0x3b8] sm:$0xff] %v1120
                %v1122 = vld [vmem:[%s880 + $0xcc0] sm:$0xff]
                %1123 = vst [vmem:[%s881 + $0x3c0] sm:$0xff] %v1122
                %v1124 = vld [vmem:[%s880 + $0xcc8] sm:$0xff]
                %1125 = vst [vmem:[%s881 + $0x3c8] sm:$0xff] %v1124
                %v1126 = vld [vmem:[%s880 + $0xcd0] sm:$0xff]
                %1127 = vst [vmem:[%s881 + $0x3d0] sm:$0xff] %v1126
                %v1128 = vld [vmem:[%s880 + $0xcd8] sm:$0xff]
                %1129 = vst [vmem:[%s881 + $0x3d8] sm:$0xff] %v1128
                %v1130 = vld [vmem:[%s880 + $0xce0] sm:$0xff]
                %1131 = vst [vmem:[%s881 + $0x3e0] sm:$0xff] %v1130
                %v1132 = vld [vmem:[%s880 + $0xce8] sm:$0xff]
                %1133 = vst [vmem:[%s881 + $0x3e8] sm:$0xff] %v1132
                %v1134 = vld [vmem:[%s880 + $0xcf0] sm:$0xff]
                %1135 = vst [vmem:[%s881 + $0x3f0] sm:$0xff] %v1134
                %v1136 = vld [vmem:[%s880 + $0xcf8] sm:$0xff]
                %1137 = vst [vmem:[%s881 + $0x3f8] sm:$0xff] %v1136
              $region103: #{tpu_custom_call.1} parent=97 // loop_footer
                %s879 = sadd.s32 1, %s875
              $region104: #{tpu_custom_call.1} parent=97 // loop_footer_branch
                %874 = sbr.rel target = $region100
              $region105: #{tpu_custom_call.1} parent=97 // loop_exit
                _
            $region98: #{tpu_custom_call.1} parent=89 // pred_fallthru
              _
          $region90: #{tpu_custom_call.1} parent=85 // pred_fallthru
            _
          %1406 = vnop
        $region86: #{tpu_custom_call.1} parent=43 // pred_fallthru
          _
        // Predicated region
        $region121: #{tpu_custom_call.1} parent=43 // pred_check
          %p1407 = pneg %p88
        $region122: #{tpu_custom_call.1} parent=43 // pred_check_branch
          %1409 = sbr.rel (%p1407) target = $region124
        $region123: #{tpu_custom_call.1} parent=43 // pred_region
          %s1410 = smul.u32 32, %s16
          %p1411 = scmp.lt.s32.totalorder %s1410, 127
          %s1412 = scalar_select %p1411, %s1410, 127
          %s1413 = smul.addr %s1412, 8
          %s1414 = scalar_lea.vmem %s2, %s1413
          %s1415 = smul.u32 32, %s16
        $region124: #{tpu_custom_call.1} parent=43 // pred_fallthru
          _
      $region44: #{tpu_custom_call.1} parent=5 // pred_fallthru
        _
      %p1416 = scmp.le.s32.totalorder 1, %s16
      %p1417 = scmp.lt.s32.totalorder %s16, 5
      %p1418 = pnand %p1416, %p1417
      %p1419 = pneg %p1418
      // Predicated region
      $region125: #{tpu_custom_call.1} parent=5 // pred_check
        _
      $region126: #{tpu_custom_call.1} parent=5 // pred_check_branch
        %1421 = sbr.rel (%p1418) target = $region128
      $region127: #{tpu_custom_call.1} parent=5 // pred_region
        %s1422 = ssub.s32 %s16, 1
        %s1423 = sand.u32 %s29, 1
        %s1424 = sand.u32 %s29, 1
        %s1425 = smul.addr %s1424, 1024
        %s1426 = scalar_lea.vmem [#allocation2], %s1425
        // Predicated region
        $region129: #{tpu_custom_call.1} parent=127 // pred_check
          %p1427 = pneg %p42
        $region130: #{tpu_custom_call.1} parent=127 // pred_check_branch
          %1429 = sbr.rel (%p1427) target = $region132
        $region131: #{tpu_custom_call.1} parent=127 // pred_region
          _
        $region132: #{tpu_custom_call.1} parent=127 // pred_fallthru
          _
        %s1430 = sand.u32 %s55, 1
        %s1431 = sand.u32 %s55, 1
        %s1432 = smul.addr %s1431, 1024
        %s1433 = scalar_lea.vmem [#allocation3], %s1432
        // Predicated region
        $region133: #{tpu_custom_call.1} parent=127 // pred_check
          %p1434 = pneg %p68
        $region134: #{tpu_custom_call.1} parent=127 // pred_check_branch
          %1436 = sbr.rel (%p1434) target = $region136
        $region135: #{tpu_custom_call.1} parent=127 // pred_region
          _
        $region136: #{tpu_custom_call.1} parent=127 // pred_fallthru
          _
        %s1437 = sand.u32 %s29, 1
        %s1438 = sand.u32 %s29, 1
        %s1439 = smul.addr %s1438, 1024
        %s1440 = scalar_lea.vmem [#allocation2], %s1439
        %p1441 = pneg %p42
        %p1442 = pneg %p39
        %s1443 = sand.u32 %s55, 1
        %s1444 = sand.u32 %s55, 1
        %s1445 = smul.addr %s1444, 1024
        %s1446 = scalar_lea.vmem [#allocation3], %s1445
        %p1447 = pneg %p68
        %p1448 = pneg %p65
        %s1449 = smul.u32 32, %s21
        %p1450 = scmp.lt.s32.totalorder %s1449, 127
        %s1451 = scalar_select %p1450, %s1449, 127
        %s1452 = smul.addr %s1451, 8
        %s1453 = scalar_lea.vmem %s2, %s1452
        %p1454 = pneg %p94
        %p1455 = pneg %p91
        %p1456 = pneg %p115
        %p1457 = pneg %p112
        %p1458 = pneg %p136
        %p1459 = pneg %p133
        %p1460 = pneg %p157
        %p1461 = pneg %p154
        %p1462 = pneg %p178
        %p1463 = pneg %p175
        %p1464 = pneg %p199
        %p1465 = pneg %p196
        %p1466 = pneg %p220
        %p1467 = pneg %p217
        %p1468 = pneg %p241
        %p1469 = pneg %p238
        %p1470 = pneg %p267
        %p1471 = pneg %p264
        %s1472 = smul.u32 32, %s21
        %p1473 = scmp.lt.s32.totalorder %s1472, 127
        %s1474 = scalar_select %p1473, %s1472, 127
        %s1475 = smul.addr %s1474, 8
        %s1476 = scalar_lea.vmem %s10, %s1475
        %s1477 = smul.u32 32, %s21
        %s1478 = smul.u32 32, %s21
        %s1479 = smul.u32 32, %s21
        %p1480 = scmp.lt.s32.totalorder %s1479, 127
        %s1481 = scalar_select %p1480, %s1479, 127
        %s1482 = smul.addr %s1481, 8
        %s1483 = scalar_lea.vmem %s2, %s1482
        %s1484 = smul.u32 32, %s21
        %s1485 = smul.u32 32, %s21
        %p1486 = scmp.lt.s32.totalorder %s1485, 127
        %s1487 = scalar_select %p1486, %s1485, 127
        %s1488 = smul.addr %s1487, 8
        %s1489 = scalar_lea.vmem %s10, %s1488
        %s1490 = smul.u32 32, %s21
        %v1492 = vld [vmem:[%s1426] sm:$0xff]
        %v1493 = vld [vmem:[%s1426 + $0x8] sm:$0xff]
        %v1494 = vld [vmem:[%s1426 + $0x10] sm:$0xff]
        %v1495 = vld [vmem:[%s1426 + $0x18] sm:$0xff]
        %v1496 = vld [vmem:[%s1426 + $0x20] sm:$0xff]
        %v1497 = vld [vmem:[%s1426 + $0x28] sm:$0xff]
        %v1498 = vld [vmem:[%s1426 + $0x30] sm:$0xff]
        %v1499 = vld [vmem:[%s1426 + $0x38] sm:$0xff]
        %v1500 = vld [vmem:[%s1426 + $0x40] sm:$0xff]
        %v1501 = vld [vmem:[%s1426 + $0x48] sm:$0xff]
        %v1502 = vld [vmem:[%s1426 + $0x50] sm:$0xff]
        %v1503 = vld [vmem:[%s1426 + $0x58] sm:$0xff]
        %v1504 = vld [vmem:[%s1426 + $0x60] sm:$0xff]
        %v1505 = vld [vmem:[%s1426 + $0x68] sm:$0xff]
        %v1506 = vld [vmem:[%s1426 + $0x70] sm:$0xff]
        %v1507 = vld [vmem:[%s1426 + $0x78] sm:$0xff]
        %v1508 = vld [vmem:[%s1426 + $0x80] sm:$0xff]
        %v1509 = vld [vmem:[%s1426 + $0x88] sm:$0xff]
        %v1510 = vld [vmem:[%s1426 + $0x90] sm:$0xff]
        %v1511 = vld [vmem:[%s1426 + $0x98] sm:$0xff]
        %v1512 = vld [vmem:[%s1426 + $0xa0] sm:$0xff]
        %v1513 = vld [vmem:[%s1426 + $0xa8] sm:$0xff]
        %v1514 = vld [vmem:[%s1426 + $0xb0] sm:$0xff]
        %v1515 = vld [vmem:[%s1426 + $0xb8] sm:$0xff]
        %v1516 = vld [vmem:[%s1426 + $0xc0] sm:$0xff]
        %v1517 = vld [vmem:[%s1426 + $0xc8] sm:$0xff]
        %v1518 = vld [vmem:[%s1426 + $0xd0] sm:$0xff]
        %v1519 = vld [vmem:[%s1426 + $0xd8] sm:$0xff]
        %v1520 = vld [vmem:[%s1426 + $0xe0] sm:$0xff]
        %v1521 = vld [vmem:[%s1426 + $0xe8] sm:$0xff]
        %v1522 = vld [vmem:[%s1426 + $0xf0] sm:$0xff]
        %v1523 = vld [vmem:[%s1426 + $0xf8] sm:$0xff]
        %v1524 = vld [vmem:[%s1426 + $0x100] sm:$0xff]
        %v1525 = vld [vmem:[%s1426 + $0x108] sm:$0xff]
        %v1526 = vld [vmem:[%s1426 + $0x110] sm:$0xff]
        %v1527 = vld [vmem:[%s1426 + $0x118] sm:$0xff]
        %v1528 = vld [vmem:[%s1426 + $0x120] sm:$0xff]
        %v1529 = vld [vmem:[%s1426 + $0x128] sm:$0xff]
        %v1530 = vld [vmem:[%s1426 + $0x130] sm:$0xff]
        %v1531 = vld [vmem:[%s1426 + $0x138] sm:$0xff]
        %v1532 = vld [vmem:[%s1426 + $0x140] sm:$0xff]
        %v1533 = vld [vmem:[%s1426 + $0x148] sm:$0xff]
        %v1534 = vld [vmem:[%s1426 + $0x150] sm:$0xff]
        %v1535 = vld [vmem:[%s1426 + $0x158] sm:$0xff]
        %v1536 = vld [vmem:[%s1426 + $0x160] sm:$0xff]
        %v1537 = vld [vmem:[%s1426 + $0x168] sm:$0xff]
        %v1538 = vld [vmem:[%s1426 + $0x170] sm:$0xff]
        %v1539 = vld [vmem:[%s1426 + $0x178] sm:$0xff]
        %v1540 = vld [vmem:[%s1426 + $0x180] sm:$0xff]
        %v1541 = vld [vmem:[%s1426 + $0x188] sm:$0xff]
        %v1542 = vld [vmem:[%s1426 + $0x190] sm:$0xff]
        %v1543 = vld [vmem:[%s1426 + $0x198] sm:$0xff]
        %v1544 = vld [vmem:[%s1426 + $0x1a0] sm:$0xff]
        %v1545 = vld [vmem:[%s1426 + $0x1a8] sm:$0xff]
        %v1546 = vld [vmem:[%s1426 + $0x1b0] sm:$0xff]
        %v1547 = vld [vmem:[%s1426 + $0x1b8] sm:$0xff]
        %v1548 = vld [vmem:[%s1426 + $0x1c0] sm:$0xff]
        %v1549 = vld [vmem:[%s1426 + $0x1c8] sm:$0xff]
        %v1550 = vld [vmem:[%s1426 + $0x1d0] sm:$0xff]
        %v1551 = vld [vmem:[%s1426 + $0x1d8] sm:$0xff]
        %v1552 = vld [vmem:[%s1426 + $0x1e0] sm:$0xff]
        %v1553 = vld [vmem:[%s1426 + $0x1e8] sm:$0xff]
        %v1554 = vld [vmem:[%s1426 + $0x1f0] sm:$0xff]
        %v1555 = vld [vmem:[%s1426 + $0x1f8] sm:$0xff]
        %v1556 = vld [vmem:[%s1426 + $0x200] sm:$0xff]
        %v1557 = vld [vmem:[%s1426 + $0x208] sm:$0xff]
        %v1558 = vld [vmem:[%s1426 + $0x210] sm:$0xff]
        %v1559 = vld [vmem:[%s1426 + $0x218] sm:$0xff]
        %v1560 = vld [vmem:[%s1426 + $0x220] sm:$0xff]
        %v1561 = vld [vmem:[%s1426 + $0x228] sm:$0xff]
        %v1562 = vld [vmem:[%s1426 + $0x230] sm:$0xff]
        %v1563 = vld [vmem:[%s1426 + $0x238] sm:$0xff]
        %v1564 = vld [vmem:[%s1426 + $0x240] sm:$0xff]
        %v1565 = vld [vmem:[%s1426 + $0x248] sm:$0xff]
        %v1566 = vld [vmem:[%s1426 + $0x250] sm:$0xff]
        %v1567 = vld [vmem:[%s1426 + $0x258] sm:$0xff]
        %v1568 = vld [vmem:[%s1426 + $0x260] sm:$0xff]
        %v1569 = vld [vmem:[%s1426 + $0x268] sm:$0xff]
        %v1570 = vld [vmem:[%s1426 + $0x270] sm:$0xff]
        %v1571 = vld [vmem:[%s1426 + $0x278] sm:$0xff]
        %v1572 = vld [vmem:[%s1426 + $0x280] sm:$0xff]
        %v1573 = vld [vmem:[%s1426 + $0x288] sm:$0xff]
        %v1574 = vld [vmem:[%s1426 + $0x290] sm:$0xff]
        %v1575 = vld [vmem:[%s1426 + $0x298] sm:$0xff]
        %v1576 = vld [vmem:[%s1426 + $0x2a0] sm:$0xff]
        %v1577 = vld [vmem:[%s1426 + $0x2a8] sm:$0xff]
        %v1578 = vld [vmem:[%s1426 + $0x2b0] sm:$0xff]
        %v1579 = vld [vmem:[%s1426 + $0x2b8] sm:$0xff]
        %v1580 = vld [vmem:[%s1426 + $0x2c0] sm:$0xff]
        %v1581 = vld [vmem:[%s1426 + $0x2c8] sm:$0xff]
        %v1582 = vld [vmem:[%s1426 + $0x2d0] sm:$0xff]
        %v1583 = vld [vmem:[%s1426 + $0x2d8] sm:$0xff]
        %v1584 = vld [vmem:[%s1426 + $0x2e0] sm:$0xff]
        %v1585 = vld [vmem:[%s1426 + $0x2e8] sm:$0xff]
        %v1586 = vld [vmem:[%s1426 + $0x2f0] sm:$0xff]
        %v1587 = vld [vmem:[%s1426 + $0x2f8] sm:$0xff]
        %v1588 = vld [vmem:[%s1426 + $0x300] sm:$0xff]
        %v1589 = vld [vmem:[%s1426 + $0x308] sm:$0xff]
        %v1590 = vld [vmem:[%s1426 + $0x310] sm:$0xff]
        %v1591 = vld [vmem:[%s1426 + $0x318] sm:$0xff]
        %v1592 = vld [vmem:[%s1426 + $0x320] sm:$0xff]
        %v1593 = vld [vmem:[%s1426 + $0x328] sm:$0xff]
        %v1594 = vld [vmem:[%s1426 + $0x330] sm:$0xff]
        %v1595 = vld [vmem:[%s1426 + $0x338] sm:$0xff]
        %v1596 = vld [vmem:[%s1426 + $0x340] sm:$0xff]
        %v1597 = vld [vmem:[%s1426 + $0x348] sm:$0xff]
        %v1598 = vld [vmem:[%s1426 + $0x350] sm:$0xff]
        %v1599 = vld [vmem:[%s1426 + $0x358] sm:$0xff]
        %v1600 = vld [vmem:[%s1426 + $0x360] sm:$0xff]
        %v1601 = vld [vmem:[%s1426 + $0x368] sm:$0xff]
        %v1602 = vld [vmem:[%s1426 + $0x370] sm:$0xff]
        %v1603 = vld [vmem:[%s1426 + $0x378] sm:$0xff]
        %v1604 = vld [vmem:[%s1426 + $0x380] sm:$0xff]
        %v1605 = vld [vmem:[%s1426 + $0x388] sm:$0xff]
        %v1606 = vld [vmem:[%s1426 + $0x390] sm:$0xff]
        %v1607 = vld [vmem:[%s1426 + $0x398] sm:$0xff]
        %v1608 = vld [vmem:[%s1426 + $0x3a0] sm:$0xff]
        %v1609 = vld [vmem:[%s1426 + $0x3a8] sm:$0xff]
        %v1610 = vld [vmem:[%s1426 + $0x3b0] sm:$0xff]
        %v1611 = vld [vmem:[%s1426 + $0x3b8] sm:$0xff]
        %v1612 = vld [vmem:[%s1426 + $0x3c0] sm:$0xff]
        %v1613 = vld [vmem:[%s1426 + $0x3c8] sm:$0xff]
        %v1614 = vld [vmem:[%s1426 + $0x3d0] sm:$0xff]
        %v1615 = vld [vmem:[%s1426 + $0x3d8] sm:$0xff]
        %v1616 = vld [vmem:[%s1426 + $0x3e0] sm:$0xff]
        %v1617 = vld [vmem:[%s1426 + $0x3e8] sm:$0xff]
        %v1618 = vld [vmem:[%s1426 + $0x3f0] sm:$0xff]
        %v1619 = vld [vmem:[%s1426 + $0x3f8] sm:$0xff]
        %v1620 = vlaneseq
        %v1621 = vand.u32 %v1620, 127
        %v1622 = vadd.s32 %v1621, 128
        %1623 = vset.pattern.permute.xlu0 0
        %1624 = vperm.xlu0 %1623, %v1492
        %v1625 = vpop.permute.xlu0 %1624
        %1626 = vset.pattern.permute.xlu0 0
        %1627 = vperm.xlu0 %1626, %v1493
        %v1628 = vpop.permute.xlu0 %1627
        %1629 = vset.pattern.permute.xlu0 0
        %1630 = vperm.xlu0 %1629, %v1494
        %v1631 = vpop.permute.xlu0 %1630
        %1632 = vset.pattern.permute.xlu0 0
        %1633 = vperm.xlu0 %1632, %v1495
        %v1634 = vpop.permute.xlu0 %1633
        %1635 = vset.pattern.permute.xlu0 0
        %1636 = vperm.xlu0 %1635, %v1496
        %v1637 = vpop.permute.xlu0 %1636
        %1638 = vset.pattern.permute.xlu0 0
        %1639 = vperm.xlu0 %1638, %v1497
        %v1640 = vpop.permute.xlu0 %1639
        %1641 = vset.pattern.permute.xlu0 0
        %1642 = vperm.xlu0 %1641, %v1498
        %v1643 = vpop.permute.xlu0 %1642
        %1644 = vset.pattern.permute.xlu0 0
        %1645 = vperm.xlu0 %1644, %v1499
        %v1646 = vpop.permute.xlu0 %1645
        %1647 = vset.pattern.permute.xlu0 0
        %1648 = vperm.xlu0 %1647, %v1500
        %v1649 = vpop.permute.xlu0 %1648
        %1650 = vset.pattern.permute.xlu0 0
        %1651 = vperm.xlu0 %1650, %v1501
        %v1652 = vpop.permute.xlu0 %1651
        %1653 = vset.pattern.permute.xlu0 0
        %1654 = vperm.xlu0 %1653, %v1502
        %v1655 = vpop.permute.xlu0 %1654
        %1656 = vset.pattern.permute.xlu0 0
        %1657 = vperm.xlu0 %1656, %v1503
        %v1658 = vpop.permute.xlu0 %1657
        %1659 = vset.pattern.permute.xlu0 0
        %1660 = vperm.xlu0 %1659, %v1504
        %v1661 = vpop.permute.xlu0 %1660
        %1662 = vset.pattern.permute.xlu0 0
        %1663 = vperm.xlu0 %1662, %v1505
        %v1664 = vpop.permute.xlu0 %1663
        %1665 = vset.pattern.permute.xlu0 0
        %1666 = vperm.xlu0 %1665, %v1506
        %v1667 = vpop.permute.xlu0 %1666
        %1668 = vset.pattern.permute.xlu0 0
        %1669 = vperm.xlu0 %1668, %v1507
        %v1670 = vpop.permute.xlu0 %1669
        %1671 = vset.pattern.permute.xlu0 0
        %1672 = vperm.xlu0 %1671, %v1508
        %v1673 = vpop.permute.xlu0 %1672
        %1674 = vset.pattern.permute.xlu0 0
        %1675 = vperm.xlu0 %1674, %v1509
        %v1676 = vpop.permute.xlu0 %1675
        %1677 = vset.pattern.permute.xlu0 0
        %1678 = vperm.xlu0 %1677, %v1510
        %v1679 = vpop.permute.xlu0 %1678
        %1680 = vset.pattern.permute.xlu0 0
        %1681 = vperm.xlu0 %1680, %v1511
        %v1682 = vpop.permute.xlu0 %1681
        %1683 = vset.pattern.permute.xlu0 0
        %1684 = vperm.xlu0 %1683, %v1512
        %v1685 = vpop.permute.xlu0 %1684
        %1686 = vset.pattern.permute.xlu0 0
        %1687 = vperm.xlu0 %1686, %v1513
        %v1688 = vpop.permute.xlu0 %1687
        %1689 = vset.pattern.permute.xlu0 0
        %1690 = vperm.xlu0 %1689, %v1514
        %v1691 = vpop.permute.xlu0 %1690
        %1692 = vset.pattern.permute.xlu0 0
        %1693 = vperm.xlu0 %1692, %v1515
        %v1694 = vpop.permute.xlu0 %1693
        %1695 = vset.pattern.permute.xlu0 0
        %1696 = vperm.xlu0 %1695, %v1516
        %v1697 = vpop.permute.xlu0 %1696
        %1698 = vset.pattern.permute.xlu0 0
        %1699 = vperm.xlu0 %1698, %v1517
        %v1700 = vpop.permute.xlu0 %1699
        %1701 = vset.pattern.permute.xlu0 0
        %1702 = vperm.xlu0 %1701, %v1518
        %v1703 = vpop.permute.xlu0 %1702
        %1704 = vset.pattern.permute.xlu0 0
        %1705 = vperm.xlu0 %1704, %v1519
        %v1706 = vpop.permute.xlu0 %1705
        %1707 = vset.pattern.permute.xlu0 0
        %1708 = vperm.xlu0 %1707, %v1520
        %v1709 = vpop.permute.xlu0 %1708
        %1710 = vset.pattern.permute.xlu0 0
        %1711 = vperm.xlu0 %1710, %v1521
        %v1712 = vpop.permute.xlu0 %1711
        %1713 = vset.pattern.permute.xlu0 0
        %1714 = vperm.xlu0 %1713, %v1522
        %v1715 = vpop.permute.xlu0 %1714
        %1716 = vset.pattern.permute.xlu0 0
        %1717 = vperm.xlu0 %1716, %v1523
        %v1718 = vpop.permute.xlu0 %1717
        %1719 = vset.pattern.permute.xlu0 0
        %1720 = vperm.xlu0 %1719, %v1524
        %v1721 = vpop.permute.xlu0 %1720
        %1722 = vset.pattern.permute.xlu0 0
        %1723 = vperm.xlu0 %1722, %v1525
        %v1724 = vpop.permute.xlu0 %1723
        %1725 = vset.pattern.permute.xlu0 0
        %1726 = vperm.xlu0 %1725, %v1526
        %v1727 = vpop.permute.xlu0 %1726
        %1728 = vset.pattern.permute.xlu0 0
        %1729 = vperm.xlu0 %1728, %v1527
        %v1730 = vpop.permute.xlu0 %1729
        %1731 = vset.pattern.permute.xlu0 0
        %1732 = vperm.xlu0 %1731, %v1528
        %v1733 = vpop.permute.xlu0 %1732
        %1734 = vset.pattern.permute.xlu0 0
        %1735 = vperm.xlu0 %1734, %v1529
        %v1736 = vpop.permute.xlu0 %1735
        %1737 = vset.pattern.permute.xlu0 0
        %1738 = vperm.xlu0 %1737, %v1530
        %v1739 = vpop.permute.xlu0 %1738
        %1740 = vset.pattern.permute.xlu0 0
        %1741 = vperm.xlu0 %1740, %v1531
        %v1742 = vpop.permute.xlu0 %1741
        %1743 = vset.pattern.permute.xlu0 0
        %1744 = vperm.xlu0 %1743, %v1532
        %v1745 = vpop.permute.xlu0 %1744
        %1746 = vset.pattern.permute.xlu0 0
        %1747 = vperm.xlu0 %1746, %v1533
        %v1748 = vpop.permute.xlu0 %1747
        %1749 = vset.pattern.permute.xlu0 0
        %1750 = vperm.xlu0 %1749, %v1534
        %v1751 = vpop.permute.xlu0 %1750
        %1752 = vset.pattern.permute.xlu0 0
        %1753 = vperm.xlu0 %1752, %v1535
        %v1754 = vpop.permute.xlu0 %1753
        %1755 = vset.pattern.permute.xlu0 0
        %1756 = vperm.xlu0 %1755, %v1536
        %v1757 = vpop.permute.xlu0 %1756
        %1758 = vset.pattern.permute.xlu0 0
        %1759 = vperm.xlu0 %1758, %v1537
        %v1760 = vpop.permute.xlu0 %1759
        %1761 = vset.pattern.permute.xlu0 0
        %1762 = vperm.xlu0 %1761, %v1538
        %v1763 = vpop.permute.xlu0 %1762
        %1764 = vset.pattern.permute.xlu0 0
        %1765 = vperm.xlu0 %1764, %v1539
        %v1766 = vpop.permute.xlu0 %1765
        %1767 = vset.pattern.permute.xlu0 0
        %1768 = vperm.xlu0 %1767, %v1540
        %v1769 = vpop.permute.xlu0 %1768
        %1770 = vset.pattern.permute.xlu0 0
        %1771 = vperm.xlu0 %1770, %v1541
        %v1772 = vpop.permute.xlu0 %1771
        %1773 = vset.pattern.permute.xlu0 0
        %1774 = vperm.xlu0 %1773, %v1542
        %v1775 = vpop.permute.xlu0 %1774
        %1776 = vset.pattern.permute.xlu0 0
        %1777 = vperm.xlu0 %1776, %v1543
        %v1778 = vpop.permute.xlu0 %1777
        %1779 = vset.pattern.permute.xlu0 0
        %1780 = vperm.xlu0 %1779, %v1544
        %v1781 = vpop.permute.xlu0 %1780
        %1782 = vset.pattern.permute.xlu0 0
        %1783 = vperm.xlu0 %1782, %v1545
        %v1784 = vpop.permute.xlu0 %1783
        %1785 = vset.pattern.permute.xlu0 0
        %1786 = vperm.xlu0 %1785, %v1546
        %v1787 = vpop.permute.xlu0 %1786
        %1788 = vset.pattern.permute.xlu0 0
        %1789 = vperm.xlu0 %1788, %v1547
        %v1790 = vpop.permute.xlu0 %1789
        %1791 = vset.pattern.permute.xlu0 0
        %1792 = vperm.xlu0 %1791, %v1548
        %v1793 = vpop.permute.xlu0 %1792
        %1794 = vset.pattern.permute.xlu0 0
        %1795 = vperm.xlu0 %1794, %v1549
        %v1796 = vpop.permute.xlu0 %1795
        %1797 = vset.pattern.permute.xlu0 0
        %1798 = vperm.xlu0 %1797, %v1550
        %v1799 = vpop.permute.xlu0 %1798
        %1800 = vset.pattern.permute.xlu0 0
        %1801 = vperm.xlu0 %1800, %v1551
        %v1802 = vpop.permute.xlu0 %1801
        %1803 = vset.pattern.permute.xlu0 0
        %1804 = vperm.xlu0 %1803, %v1552
        %v1805 = vpop.permute.xlu0 %1804
        %1806 = vset.pattern.permute.xlu0 0
        %1807 = vperm.xlu0 %1806, %v1553
        %v1808 = vpop.permute.xlu0 %1807
        %1809 = vset.pattern.permute.xlu0 0
        %1810 = vperm.xlu0 %1809, %v1554
        %v1811 = vpop.permute.xlu0 %1810
        %1812 = vset.pattern.permute.xlu0 0
        %1813 = vperm.xlu0 %1812, %v1555
        %v1814 = vpop.permute.xlu0 %1813
        %1815 = vset.pattern.permute.xlu0 0
        %1816 = vperm.xlu0 %1815, %v1556
        %v1817 = vpop.permute.xlu0 %1816
        %1818 = vset.pattern.permute.xlu0 0
        %1819 = vperm.xlu0 %1818, %v1557
        %v1820 = vpop.permute.xlu0 %1819
        %1821 = vset.pattern.permute.xlu0 0
        %1822 = vperm.xlu0 %1821, %v1558
        %v1823 = vpop.permute.xlu0 %1822
        %1824 = vset.pattern.permute.xlu0 0
        %1825 = vperm.xlu0 %1824, %v1559
        %v1826 = vpop.permute.xlu0 %1825
        %1827 = vset.pattern.permute.xlu0 0
        %1828 = vperm.xlu0 %1827, %v1560
        %v1829 = vpop.permute.xlu0 %1828
        %1830 = vset.pattern.permute.xlu0 0
        %1831 = vperm.xlu0 %1830, %v1561
        %v1832 = vpop.permute.xlu0 %1831
        %1833 = vset.pattern.permute.xlu0 0
        %1834 = vperm.xlu0 %1833, %v1562
        %v1835 = vpop.permute.xlu0 %1834
        %1836 = vset.pattern.permute.xlu0 0
        %1837 = vperm.xlu0 %1836, %v1563
        %v1838 = vpop.permute.xlu0 %1837
        %1839 = vset.pattern.permute.xlu0 0
        %1840 = vperm.xlu0 %1839, %v1564
        %v1841 = vpop.permute.xlu0 %1840
        %1842 = vset.pattern.permute.xlu0 0
        %1843 = vperm.xlu0 %1842, %v1565
        %v1844 = vpop.permute.xlu0 %1843
        %1845 = vset.pattern.permute.xlu0 0
        %1846 = vperm.xlu0 %1845, %v1566
        %v1847 = vpop.permute.xlu0 %1846
        %1848 = vset.pattern.permute.xlu0 0
        %1849 = vperm.xlu0 %1848, %v1567
        %v1850 = vpop.permute.xlu0 %1849
        %1851 = vset.pattern.permute.xlu0 0
        %1852 = vperm.xlu0 %1851, %v1568
        %v1853 = vpop.permute.xlu0 %1852
        %1854 = vset.pattern.permute.xlu0 0
        %1855 = vperm.xlu0 %1854, %v1569
        %v1856 = vpop.permute.xlu0 %1855
        %1857 = vset.pattern.permute.xlu0 0
        %1858 = vperm.xlu0 %1857, %v1570
        %v1859 = vpop.permute.xlu0 %1858
        %1860 = vset.pattern.permute.xlu0 0
        %1861 = vperm.xlu0 %1860, %v1571
        %v1862 = vpop.permute.xlu0 %1861
        %1863 = vset.pattern.permute.xlu0 0
        %1864 = vperm.xlu0 %1863, %v1572
        %v1865 = vpop.permute.xlu0 %1864
        %1866 = vset.pattern.permute.xlu0 0
        %1867 = vperm.xlu0 %1866, %v1573
        %v1868 = vpop.permute.xlu0 %1867
        %1869 = vset.pattern.permute.xlu0 0
        %1870 = vperm.xlu0 %1869, %v1574
        %v1871 = vpop.permute.xlu0 %1870
        %1872 = vset.pattern.permute.xlu0 0
        %1873 = vperm.xlu0 %1872, %v1575
        %v1874 = vpop.permute.xlu0 %1873
        %1875 = vset.pattern.permute.xlu0 0
        %1876 = vperm.xlu0 %1875, %v1576
        %v1877 = vpop.permute.xlu0 %1876
        %1878 = vset.pattern.permute.xlu0 0
        %1879 = vperm.xlu0 %1878, %v1577
        %v1880 = vpop.permute.xlu0 %1879
        %1881 = vset.pattern.permute.xlu0 0
        %1882 = vperm.xlu0 %1881, %v1578
        %v1883 = vpop.permute.xlu0 %1882
        %1884 = vset.pattern.permute.xlu0 0
        %1885 = vperm.xlu0 %1884, %v1579
        %v1886 = vpop.permute.xlu0 %1885
        %1887 = vset.pattern.permute.xlu0 0
        %1888 = vperm.xlu0 %1887, %v1580
        %v1889 = vpop.permute.xlu0 %1888
        %1890 = vset.pattern.permute.xlu0 0
        %1891 = vperm.xlu0 %1890, %v1581
        %v1892 = vpop.permute.xlu0 %1891
        %1893 = vset.pattern.permute.xlu0 0
        %1894 = vperm.xlu0 %1893, %v1582
        %v1895 = vpop.permute.xlu0 %1894
        %1896 = vset.pattern.permute.xlu0 0
        %1897 = vperm.xlu0 %1896, %v1583
        %v1898 = vpop.permute.xlu0 %1897
        %1899 = vset.pattern.permute.xlu0 0
        %1900 = vperm.xlu0 %1899, %v1584
        %v1901 = vpop.permute.xlu0 %1900
        %1902 = vset.pattern.permute.xlu0 0
        %1903 = vperm.xlu0 %1902, %v1585
        %v1904 = vpop.permute.xlu0 %1903
        %1905 = vset.pattern.permute.xlu0 0
        %1906 = vperm.xlu0 %1905, %v1586
        %v1907 = vpop.permute.xlu0 %1906
        %1908 = vset.pattern.permute.xlu0 0
        %1909 = vperm.xlu0 %1908, %v1587
        %v1910 = vpop.permute.xlu0 %1909
        %1911 = vset.pattern.permute.xlu0 0
        %1912 = vperm.xlu0 %1911, %v1588
        %v1913 = vpop.permute.xlu0 %1912
        %1914 = vset.pattern.permute.xlu0 0
        %1915 = vperm.xlu0 %1914, %v1589
        %v1916 = vpop.permute.xlu0 %1915
        %1917 = vset.pattern.permute.xlu0 0
        %1918 = vperm.xlu0 %1917, %v1590
        %v1919 = vpop.permute.xlu0 %1918
        %1920 = vset.pattern.permute.xlu0 0
        %1921 = vperm.xlu0 %1920, %v1591
        %v1922 = vpop.permute.xlu0 %1921
        %1923 = vset.pattern.permute.xlu0 0
        %1924 = vperm.xlu0 %1923, %v1592
        %v1925 = vpop.permute.xlu0 %1924
        %1926 = vset.pattern.permute.xlu0 0
        %1927 = vperm.xlu0 %1926, %v1593
        %v1928 = vpop.permute.xlu0 %1927
        %1929 = vset.pattern.permute.xlu0 0
        %1930 = vperm.xlu0 %1929, %v1594
        %v1931 = vpop.permute.xlu0 %1930
        %1932 = vset.pattern.permute.xlu0 0
        %1933 = vperm.xlu0 %1932, %v1595
        %v1934 = vpop.permute.xlu0 %1933
        %1935 = vset.pattern.permute.xlu0 0
        %1936 = vperm.xlu0 %1935, %v1596
        %v1937 = vpop.permute.xlu0 %1936
        %1938 = vset.pattern.permute.xlu0 0
        %1939 = vperm.xlu0 %1938, %v1597
        %v1940 = vpop.permute.xlu0 %1939
        %1941 = vset.pattern.permute.xlu0 0
        %1942 = vperm.xlu0 %1941, %v1598
        %v1943 = vpop.permute.xlu0 %1942
        %1944 = vset.pattern.permute.xlu0 0
        %1945 = vperm.xlu0 %1944, %v1599
        %v1946 = vpop.permute.xlu0 %1945
        %1947 = vset.pattern.permute.xlu0 0
        %1948 = vperm.xlu0 %1947, %v1600
        %v1949 = vpop.permute.xlu0 %1948
        %1950 = vset.pattern.permute.xlu0 0
        %1951 = vperm.xlu0 %1950, %v1601
        %v1952 = vpop.permute.xlu0 %1951
        %1953 = vset.pattern.permute.xlu0 0
        %1954 = vperm.xlu0 %1953, %v1602
        %v1955 = vpop.permute.xlu0 %1954
        %1956 = vset.pattern.permute.xlu0 0
        %1957 = vperm.xlu0 %1956, %v1603
        %v1958 = vpop.permute.xlu0 %1957
        %1959 = vset.pattern.permute.xlu0 0
        %1960 = vperm.xlu0 %1959, %v1604
        %v1961 = vpop.permute.xlu0 %1960
        %1962 = vset.pattern.permute.xlu0 0
        %1963 = vperm.xlu0 %1962, %v1605
        %v1964 = vpop.permute.xlu0 %1963
        %1965 = vset.pattern.permute.xlu0 0
        %1966 = vperm.xlu0 %1965, %v1606
        %v1967 = vpop.permute.xlu0 %1966
        %1968 = vset.pattern.permute.xlu0 0
        %1969 = vperm.xlu0 %1968, %v1607
        %v1970 = vpop.permute.xlu0 %1969
        %1971 = vset.pattern.permute.xlu0 0
        %1972 = vperm.xlu0 %1971, %v1608
        %v1973 = vpop.permute.xlu0 %1972
        %1974 = vset.pattern.permute.xlu0 0
        %1975 = vperm.xlu0 %1974, %v1609
        %v1976 = vpop.permute.xlu0 %1975
        %1977 = vset.pattern.permute.xlu0 0
        %1978 = vperm.xlu0 %1977, %v1610
        %v1979 = vpop.permute.xlu0 %1978
        %1980 = vset.pattern.permute.xlu0 0
        %1981 = vperm.xlu0 %1980, %v1611
        %v1982 = vpop.permute.xlu0 %1981
        %1983 = vset.pattern.permute.xlu0 0
        %1984 = vperm.xlu0 %1983, %v1612
        %v1985 = vpop.permute.xlu0 %1984
        %1986 = vset.pattern.permute.xlu0 0
        %1987 = vperm.xlu0 %1986, %v1613
        %v1988 = vpop.permute.xlu0 %1987
        %1989 = vset.pattern.permute.xlu0 0
        %1990 = vperm.xlu0 %1989, %v1614
        %v1991 = vpop.permute.xlu0 %1990
        %1992 = vset.pattern.permute.xlu0 0
        %1993 = vperm.xlu0 %1992, %v1615
        %v1994 = vpop.permute.xlu0 %1993
        %1995 = vset.pattern.permute.xlu0 0
        %1996 = vperm.xlu0 %1995, %v1616
        %v1997 = vpop.permute.xlu0 %1996
        %1998 = vset.pattern.permute.xlu0 0
        %1999 = vperm.xlu0 %1998, %v1617
        %v2000 = vpop.permute.xlu0 %1999
        %2001 = vset.pattern.permute.xlu0 0
        %2002 = vperm.xlu0 %2001, %v1618
        %v2003 = vpop.permute.xlu0 %2002
        %2004 = vset.pattern.permute.xlu0 0
        %2005 = vperm.xlu0 %2004, %v1619
        %v2006 = vpop.permute.xlu0 %2005
        %vm2007 = vcmp.eq.s32.totalorder %v1621, %v1625
        %vm2008 = vcmp.eq.s32.totalorder %v1622, %v1625
        %vm2009 = vcmp.eq.s32.totalorder %v1621, %v1628
        %vm2010 = vcmp.eq.s32.totalorder %v1622, %v1628
        %vm2011 = vcmp.eq.s32.totalorder %v1621, %v1631
        %vm2012 = vcmp.eq.s32.totalorder %v1622, %v1631
        %vm2013 = vcmp.eq.s32.totalorder %v1621, %v1634
        %vm2014 = vcmp.eq.s32.totalorder %v1622, %v1634
        %vm2015 = vcmp.eq.s32.totalorder %v1621, %v1637
        %vm2016 = vcmp.eq.s32.totalorder %v1622, %v1637
        %vm2017 = vcmp.eq.s32.totalorder %v1621, %v1640
        %vm2018 = vcmp.eq.s32.totalorder %v1622, %v1640
        %vm2019 = vcmp.eq.s32.totalorder %v1621, %v1643
        %vm2020 = vcmp.eq.s32.totalorder %v1622, %v1643
        %vm2021 = vcmp.eq.s32.totalorder %v1621, %v1646
        %vm2022 = vcmp.eq.s32.totalorder %v1622, %v1646
        %vm2023 = vcmp.eq.s32.totalorder %v1621, %v1649
        %vm2024 = vcmp.eq.s32.totalorder %v1622, %v1649
        %vm2025 = vcmp.eq.s32.totalorder %v1621, %v1652
        %vm2026 = vcmp.eq.s32.totalorder %v1622, %v1652
        %vm2027 = vcmp.eq.s32.totalorder %v1621, %v1655
        %vm2028 = vcmp.eq.s32.totalorder %v1622, %v1655
        %vm2029 = vcmp.eq.s32.totalorder %v1621, %v1658
        %vm2030 = vcmp.eq.s32.totalorder %v1622, %v1658
        %vm2031 = vcmp.eq.s32.totalorder %v1621, %v1661
        %vm2032 = vcmp.eq.s32.totalorder %v1622, %v1661
        %vm2033 = vcmp.eq.s32.totalorder %v1621, %v1664
        %vm2034 = vcmp.eq.s32.totalorder %v1622, %v1664
        %vm2035 = vcmp.eq.s32.totalorder %v1621, %v1667
        %vm2036 = vcmp.eq.s32.totalorder %v1622, %v1667
        %vm2037 = vcmp.eq.s32.totalorder %v1621, %v1670
        %vm2038 = vcmp.eq.s32.totalorder %v1622, %v1670
        %vm2039 = vcmp.eq.s32.totalorder %v1621, %v1673
        %vm2040 = vcmp.eq.s32.totalorder %v1622, %v1673
        %vm2041 = vcmp.eq.s32.totalorder %v1621, %v1676
        %vm2042 = vcmp.eq.s32.totalorder %v1622, %v1676
        %vm2043 = vcmp.eq.s32.totalorder %v1621, %v1679
        %vm2044 = vcmp.eq.s32.totalorder %v1622, %v1679
        %vm2045 = vcmp.eq.s32.totalorder %v1621, %v1682
        %vm2046 = vcmp.eq.s32.totalorder %v1622, %v1682
        %vm2047 = vcmp.eq.s32.totalorder %v1621, %v1685
        %vm2048 = vcmp.eq.s32.totalorder %v1622, %v1685
        %vm2049 = vcmp.eq.s32.totalorder %v1621, %v1688
        %vm2050 = vcmp.eq.s32.totalorder %v1622, %v1688
        %vm2051 = vcmp.eq.s32.totalorder %v1621, %v1691
        %vm2052 = vcmp.eq.s32.totalorder %v1622, %v1691
        %vm2053 = vcmp.eq.s32.totalorder %v1621, %v1694
        %vm2054 = vcmp.eq.s32.totalorder %v1622, %v1694
        %vm2055 = vcmp.eq.s32.totalorder %v1621, %v1697
        %vm2056 = vcmp.eq.s32.totalorder %v1622, %v1697
        %vm2057 = vcmp.eq.s32.totalorder %v1621, %v1700
        %vm2058 = vcmp.eq.s32.totalorder %v1622, %v1700
        %vm2059 = vcmp.eq.s32.totalorder %v1621, %v1703
        %vm2060 = vcmp.eq.s32.totalorder %v1622, %v1703
        %vm2061 = vcmp.eq.s32.totalorder %v1621, %v1706
        %vm2062 = vcmp.eq.s32.totalorder %v1622, %v1706
        %vm2063 = vcmp.eq.s32.totalorder %v1621, %v1709
        %vm2064 = vcmp.eq.s32.totalorder %v1622, %v1709
        %vm2065 = vcmp.eq.s32.totalorder %v1621, %v1712
        %vm2066 = vcmp.eq.s32.totalorder %v1622, %v1712
        %vm2067 = vcmp.eq.s32.totalorder %v1621, %v1715
        %vm2068 = vcmp.eq.s32.totalorder %v1622, %v1715
        %vm2069 = vcmp.eq.s32.totalorder %v1621, %v1718
        %vm2070 = vcmp.eq.s32.totalorder %v1622, %v1718
        %vm2071 = vcmp.eq.s32.totalorder %v1621, %v1721
        %vm2072 = vcmp.eq.s32.totalorder %v1622, %v1721
        %vm2073 = vcmp.eq.s32.totalorder %v1621, %v1724
        %vm2074 = vcmp.eq.s32.totalorder %v1622, %v1724
        %vm2075 = vcmp.eq.s32.totalorder %v1621, %v1727
        %vm2076 = vcmp.eq.s32.totalorder %v1622, %v1727
        %vm2077 = vcmp.eq.s32.totalorder %v1621, %v1730
        %vm2078 = vcmp.eq.s32.totalorder %v1622, %v1730
        %vm2079 = vcmp.eq.s32.totalorder %v1621, %v1733
        %vm2080 = vcmp.eq.s32.totalorder %v1622, %v1733
        %vm2081 = vcmp.eq.s32.totalorder %v1621, %v1736
        %vm2082 = vcmp.eq.s32.totalorder %v1622, %v1736
        %vm2083 = vcmp.eq.s32.totalorder %v1621, %v1739
        %vm2084 = vcmp.eq.s32.totalorder %v1622, %v1739
        %vm2085 = vcmp.eq.s32.totalorder %v1621, %v1742
        %vm2086 = vcmp.eq.s32.totalorder %v1622, %v1742
        %vm2087 = vcmp.eq.s32.totalorder %v1621, %v1745
        %vm2088 = vcmp.eq.s32.totalorder %v1622, %v1745
        %vm2089 = vcmp.eq.s32.totalorder %v1621, %v1748
        %vm2090 = vcmp.eq.s32.totalorder %v1622, %v1748
        %vm2091 = vcmp.eq.s32.totalorder %v1621, %v1751
        %vm2092 = vcmp.eq.s32.totalorder %v1622, %v1751
        %vm2093 = vcmp.eq.s32.totalorder %v1621, %v1754
        %vm2094 = vcmp.eq.s32.totalorder %v1622, %v1754
        %vm2095 = vcmp.eq.s32.totalorder %v1621, %v1757
        %vm2096 = vcmp.eq.s32.totalorder %v1622, %v1757
        %vm2097 = vcmp.eq.s32.totalorder %v1621, %v1760
        %vm2098 = vcmp.eq.s32.totalorder %v1622, %v1760
        %vm2099 = vcmp.eq.s32.totalorder %v1621, %v1763
        %vm2100 = vcmp.eq.s32.totalorder %v1622, %v1763
        %vm2101 = vcmp.eq.s32.totalorder %v1621, %v1766
        %vm2102 = vcmp.eq.s32.totalorder %v1622, %v1766
        %vm2103 = vcmp.eq.s32.totalorder %v1621, %v1769
        %vm2104 = vcmp.eq.s32.totalorder %v1622, %v1769
        %vm2105 = vcmp.eq.s32.totalorder %v1621, %v1772
        %vm2106 = vcmp.eq.s32.totalorder %v1622, %v1772
        %vm2107 = vcmp.eq.s32.totalorder %v1621, %v1775
        %vm2108 = vcmp.eq.s32.totalorder %v1622, %v1775
        %vm2109 = vcmp.eq.s32.totalorder %v1621, %v1778
        %vm2110 = vcmp.eq.s32.totalorder %v1622, %v1778
        %vm2111 = vcmp.eq.s32.totalorder %v1621, %v1781
        %vm2112 = vcmp.eq.s32.totalorder %v1622, %v1781
        %vm2113 = vcmp.eq.s32.totalorder %v1621, %v1784
        %vm2114 = vcmp.eq.s32.totalorder %v1622, %v1784
        %vm2115 = vcmp.eq.s32.totalorder %v1621, %v1787
        %vm2116 = vcmp.eq.s32.totalorder %v1622, %v1787
        %vm2117 = vcmp.eq.s32.totalorder %v1621, %v1790
        %vm2118 = vcmp.eq.s32.totalorder %v1622, %v1790
        %vm2119 = vcmp.eq.s32.totalorder %v1621, %v1793
        %vm2120 = vcmp.eq.s32.totalorder %v1622, %v1793
        %vm2121 = vcmp.eq.s32.totalorder %v1621, %v1796
        %vm2122 = vcmp.eq.s32.totalorder %v1622, %v1796
        %vm2123 = vcmp.eq.s32.totalorder %v1621, %v1799
        %vm2124 = vcmp.eq.s32.totalorder %v1622, %v1799
        %vm2125 = vcmp.eq.s32.totalorder %v1621, %v1802
        %vm2126 = vcmp.eq.s32.totalorder %v1622, %v1802
        %vm2127 = vcmp.eq.s32.totalorder %v1621, %v1805
        %vm2128 = vcmp.eq.s32.totalorder %v1622, %v1805
        %vm2129 = vcmp.eq.s32.totalorder %v1621, %v1808
        %vm2130 = vcmp.eq.s32.totalorder %v1622, %v1808
        %vm2131 = vcmp.eq.s32.totalorder %v1621, %v1811
        %vm2132 = vcmp.eq.s32.totalorder %v1622, %v1811
        %vm2133 = vcmp.eq.s32.totalorder %v1621, %v1814
        %vm2134 = vcmp.eq.s32.totalorder %v1622, %v1814
        %vm2135 = vcmp.eq.s32.totalorder %v1621, %v1817
        %vm2136 = vcmp.eq.s32.totalorder %v1622, %v1817
        %vm2137 = vcmp.eq.s32.totalorder %v1621, %v1820
        %vm2138 = vcmp.eq.s32.totalorder %v1622, %v1820
        %vm2139 = vcmp.eq.s32.totalorder %v1621, %v1823
        %vm2140 = vcmp.eq.s32.totalorder %v1622, %v1823
        %vm2141 = vcmp.eq.s32.totalorder %v1621, %v1826
        %vm2142 = vcmp.eq.s32.totalorder %v1622, %v1826
        %vm2143 = vcmp.eq.s32.totalorder %v1621, %v1829
        %vm2144 = vcmp.eq.s32.totalorder %v1622, %v1829
        %vm2145 = vcmp.eq.s32.totalorder %v1621, %v1832
        %vm2146 = vcmp.eq.s32.totalorder %v1622, %v1832
        %vm2147 = vcmp.eq.s32.totalorder %v1621, %v1835
        %vm2148 = vcmp.eq.s32.totalorder %v1622, %v1835
        %vm2149 = vcmp.eq.s32.totalorder %v1621, %v1838
        %vm2150 = vcmp.eq.s32.totalorder %v1622, %v1838
        %vm2151 = vcmp.eq.s32.totalorder %v1621, %v1841
        %vm2152 = vcmp.eq.s32.totalorder %v1622, %v1841
        %vm2153 = vcmp.eq.s32.totalorder %v1621, %v1844
        %vm2154 = vcmp.eq.s32.totalorder %v1622, %v1844
        %vm2155 = vcmp.eq.s32.totalorder %v1621, %v1847
        %vm2156 = vcmp.eq.s32.totalorder %v1622, %v1847
        %vm2157 = vcmp.eq.s32.totalorder %v1621, %v1850
        %vm2158 = vcmp.eq.s32.totalorder %v1622, %v1850
        %vm2159 = vcmp.eq.s32.totalorder %v1621, %v1853
        %vm2160 = vcmp.eq.s32.totalorder %v1622, %v1853
        %vm2161 = vcmp.eq.s32.totalorder %v1621, %v1856
        %vm2162 = vcmp.eq.s32.totalorder %v1622, %v1856
        %vm2163 = vcmp.eq.s32.totalorder %v1621, %v1859
        %vm2164 = vcmp.eq.s32.totalorder %v1622, %v1859
        %vm2165 = vcmp.eq.s32.totalorder %v1621, %v1862
        %vm2166 = vcmp.eq.s32.totalorder %v1622, %v1862
        %vm2167 = vcmp.eq.s32.totalorder %v1621, %v1865
        %vm2168 = vcmp.eq.s32.totalorder %v1622, %v1865
        %vm2169 = vcmp.eq.s32.totalorder %v1621, %v1868
        %vm2170 = vcmp.eq.s32.totalorder %v1622, %v1868
        %vm2171 = vcmp.eq.s32.totalorder %v1621, %v1871
        %vm2172 = vcmp.eq.s32.totalorder %v1622, %v1871
        %vm2173 = vcmp.eq.s32.totalorder %v1621, %v1874
        %vm2174 = vcmp.eq.s32.totalorder %v1622, %v1874
        %vm2175 = vcmp.eq.s32.totalorder %v1621, %v1877
        %vm2176 = vcmp.eq.s32.totalorder %v1622, %v1877
        %vm2177 = vcmp.eq.s32.totalorder %v1621, %v1880
        %vm2178 = vcmp.eq.s32.totalorder %v1622, %v1880
        %vm2179 = vcmp.eq.s32.totalorder %v1621, %v1883
        %vm2180 = vcmp.eq.s32.totalorder %v1622, %v1883
        %vm2181 = vcmp.eq.s32.totalorder %v1621, %v1886
        %vm2182 = vcmp.eq.s32.totalorder %v1622, %v1886
        %vm2183 = vcmp.eq.s32.totalorder %v1621, %v1889
        %vm2184 = vcmp.eq.s32.totalorder %v1622, %v1889
        %vm2185 = vcmp.eq.s32.totalorder %v1621, %v1892
        %vm2186 = vcmp.eq.s32.totalorder %v1622, %v1892
        %vm2187 = vcmp.eq.s32.totalorder %v1621, %v1895
        %vm2188 = vcmp.eq.s32.totalorder %v1622, %v1895
        %vm2189 = vcmp.eq.s32.totalorder %v1621, %v1898
        %vm2190 = vcmp.eq.s32.totalorder %v1622, %v1898
        %vm2191 = vcmp.eq.s32.totalorder %v1621, %v1901
        %vm2192 = vcmp.eq.s32.totalorder %v1622, %v1901
        %vm2193 = vcmp.eq.s32.totalorder %v1621, %v1904
        %vm2194 = vcmp.eq.s32.totalorder %v1622, %v1904
        %vm2195 = vcmp.eq.s32.totalorder %v1621, %v1907
        %vm2196 = vcmp.eq.s32.totalorder %v1622, %v1907
        %vm2197 = vcmp.eq.s32.totalorder %v1621, %v1910
        %vm2198 = vcmp.eq.s32.totalorder %v1622, %v1910
        %vm2199 = vcmp.eq.s32.totalorder %v1621, %v1913
        %vm2200 = vcmp.eq.s32.totalorder %v1622, %v1913
        %vm2201 = vcmp.eq.s32.totalorder %v1621, %v1916
        %vm2202 = vcmp.eq.s32.totalorder %v1622, %v1916
        %vm2203 = vcmp.eq.s32.totalorder %v1621, %v1919
        %vm2204 = vcmp.eq.s32.totalorder %v1622, %v1919
        %vm2205 = vcmp.eq.s32.totalorder %v1621, %v1922
        %vm2206 = vcmp.eq.s32.totalorder %v1622, %v1922
        %vm2207 = vcmp.eq.s32.totalorder %v1621, %v1925
        %vm2208 = vcmp.eq.s32.totalorder %v1622, %v1925
        %vm2209 = vcmp.eq.s32.totalorder %v1621, %v1928
        %vm2210 = vcmp.eq.s32.totalorder %v1622, %v1928
        %vm2211 = vcmp.eq.s32.totalorder %v1621, %v1931
        %vm2212 = vcmp.eq.s32.totalorder %v1622, %v1931
        %vm2213 = vcmp.eq.s32.totalorder %v1621, %v1934
        %vm2214 = vcmp.eq.s32.totalorder %v1622, %v1934
        %vm2215 = vcmp.eq.s32.totalorder %v1621, %v1937
        %vm2216 = vcmp.eq.s32.totalorder %v1622, %v1937
        %vm2217 = vcmp.eq.s32.totalorder %v1621, %v1940
        %vm2218 = vcmp.eq.s32.totalorder %v1622, %v1940
        %vm2219 = vcmp.eq.s32.totalorder %v1621, %v1943
        %vm2220 = vcmp.eq.s32.totalorder %v1622, %v1943
        %vm2221 = vcmp.eq.s32.totalorder %v1621, %v1946
        %vm2222 = vcmp.eq.s32.totalorder %v1622, %v1946
        %vm2223 = vcmp.eq.s32.totalorder %v1621, %v1949
        %vm2224 = vcmp.eq.s32.totalorder %v1622, %v1949
        %vm2225 = vcmp.eq.s32.totalorder %v1621, %v1952
        %vm2226 = vcmp.eq.s32.totalorder %v1622, %v1952
        %vm2227 = vcmp.eq.s32.totalorder %v1621, %v1955
        %vm2228 = vcmp.eq.s32.totalorder %v1622, %v1955
        %vm2229 = vcmp.eq.s32.totalorder %v1621, %v1958
        %vm2230 = vcmp.eq.s32.totalorder %v1622, %v1958
        %vm2231 = vcmp.eq.s32.totalorder %v1621, %v1961
        %vm2232 = vcmp.eq.s32.totalorder %v1622, %v1961
        %vm2233 = vcmp.eq.s32.totalorder %v1621, %v1964
        %vm2234 = vcmp.eq.s32.totalorder %v1622, %v1964
        %vm2235 = vcmp.eq.s32.totalorder %v1621, %v1967
        %vm2236 = vcmp.eq.s32.totalorder %v1622, %v1967
        %vm2237 = vcmp.eq.s32.totalorder %v1621, %v1970
        %vm2238 = vcmp.eq.s32.totalorder %v1622, %v1970
        %vm2239 = vcmp.eq.s32.totalorder %v1621, %v1973
        %vm2240 = vcmp.eq.s32.totalorder %v1622, %v1973
        %vm2241 = vcmp.eq.s32.totalorder %v1621, %v1976
        %vm2242 = vcmp.eq.s32.totalorder %v1622, %v1976
        %vm2243 = vcmp.eq.s32.totalorder %v1621, %v1979
        %vm2244 = vcmp.eq.s32.totalorder %v1622, %v1979
        %vm2245 = vcmp.eq.s32.totalorder %v1621, %v1982
        %vm2246 = vcmp.eq.s32.totalorder %v1622, %v1982
        %vm2247 = vcmp.eq.s32.totalorder %v1621, %v1985
        %vm2248 = vcmp.eq.s32.totalorder %v1622, %v1985
        %vm2249 = vcmp.eq.s32.totalorder %v1621, %v1988
        %vm2250 = vcmp.eq.s32.totalorder %v1622, %v1988
        %vm2251 = vcmp.eq.s32.totalorder %v1621, %v1991
        %vm2252 = vcmp.eq.s32.totalorder %v1622, %v1991
        %vm2253 = vcmp.eq.s32.totalorder %v1621, %v1994
        %vm2254 = vcmp.eq.s32.totalorder %v1622, %v1994
        %vm2255 = vcmp.eq.s32.totalorder %v1621, %v1997
        %vm2256 = vcmp.eq.s32.totalorder %v1622, %v1997
        %vm2257 = vcmp.eq.s32.totalorder %v1621, %v2000
        %vm2258 = vcmp.eq.s32.totalorder %v1622, %v2000
        %vm2259 = vcmp.eq.s32.totalorder %v1621, %v2003
        %vm2260 = vcmp.eq.s32.totalorder %v1622, %v2003
        %vm2261 = vcmp.eq.s32.totalorder %v1621, %v2006
        %vm2262 = vcmp.eq.s32.totalorder %v1622, %v2006
        %v2263 = vsel %vm2007, 1.0, 0.0
        %v2264 = vsel %vm2008, 1.0, 0.0
        %v2265 = vsel %vm2009, 1.0, 0.0
        %v2266 = vsel %vm2010, 1.0, 0.0
        %v2267 = vsel %vm2011, 1.0, 0.0
        %v2268 = vsel %vm2012, 1.0, 0.0
        %v2269 = vsel %vm2013, 1.0, 0.0
        %v2270 = vsel %vm2014, 1.0, 0.0
        %v2271 = vsel %vm2015, 1.0, 0.0
        %v2272 = vsel %vm2016, 1.0, 0.0
        %v2273 = vsel %vm2017, 1.0, 0.0
        %v2274 = vsel %vm2018, 1.0, 0.0
        %v2275 = vsel %vm2019, 1.0, 0.0
        %v2276 = vsel %vm2020, 1.0, 0.0
        %v2277 = vsel %vm2021, 1.0, 0.0
        %v2278 = vsel %vm2022, 1.0, 0.0
        %v2279 = vsel %vm2023, 1.0, 0.0
        %v2280 = vsel %vm2024, 1.0, 0.0
        %v2281 = vsel %vm2025, 1.0, 0.0
        %v2282 = vsel %vm2026, 1.0, 0.0
        %v2283 = vsel %vm2027, 1.0, 0.0
        %v2284 = vsel %vm2028, 1.0, 0.0
        %v2285 = vsel %vm2029, 1.0, 0.0
        %v2286 = vsel %vm2030, 1.0, 0.0
        %v2287 = vsel %vm2031, 1.0, 0.0
        %v2288 = vsel %vm2032, 1.0, 0.0
        %v2289 = vsel %vm2033, 1.0, 0.0
        %v2290 = vsel %vm2034, 1.0, 0.0
        %v2291 = vsel %vm2035, 1.0, 0.0
        %v2292 = vsel %vm2036, 1.0, 0.0
        %v2293 = vsel %vm2037, 1.0, 0.0
        %v2294 = vsel %vm2038, 1.0, 0.0
        %v2295 = vsel %vm2039, 1.0, 0.0
        %v2296 = vsel %vm2040, 1.0, 0.0
        %v2297 = vsel %vm2041, 1.0, 0.0
        %v2298 = vsel %vm2042, 1.0, 0.0
        %v2299 = vsel %vm2043, 1.0, 0.0
        %v2300 = vsel %vm2044, 1.0, 0.0
        %v2301 = vsel %vm2045, 1.0, 0.0
        %v2302 = vsel %vm2046, 1.0, 0.0
        %v2303 = vsel %vm2047, 1.0, 0.0
        %v2304 = vsel %vm2048, 1.0, 0.0
        %v2305 = vsel %vm2049, 1.0, 0.0
        %v2306 = vsel %vm2050, 1.0, 0.0
        %v2307 = vsel %vm2051, 1.0, 0.0
        %v2308 = vsel %vm2052, 1.0, 0.0
        %v2309 = vsel %vm2053, 1.0, 0.0
        %v2310 = vsel %vm2054, 1.0, 0.0
        %v2311 = vsel %vm2055, 1.0, 0.0
        %v2312 = vsel %vm2056, 1.0, 0.0
        %v2313 = vsel %vm2057, 1.0, 0.0
        %v2314 = vsel %vm2058, 1.0, 0.0
        %v2315 = vsel %vm2059, 1.0, 0.0
        %v2316 = vsel %vm2060, 1.0, 0.0
        %v2317 = vsel %vm2061, 1.0, 0.0
        %v2318 = vsel %vm2062, 1.0, 0.0
        %v2319 = vsel %vm2063, 1.0, 0.0
        %v2320 = vsel %vm2064, 1.0, 0.0
        %v2321 = vsel %vm2065, 1.0, 0.0
        %v2322 = vsel %vm2066, 1.0, 0.0
        %v2323 = vsel %vm2067, 1.0, 0.0
        %v2324 = vsel %vm2068, 1.0, 0.0
        %v2325 = vsel %vm2069, 1.0, 0.0
        %v2326 = vsel %vm2070, 1.0, 0.0
        %v2327 = vsel %vm2071, 1.0, 0.0
        %v2328 = vsel %vm2072, 1.0, 0.0
        %v2329 = vsel %vm2073, 1.0, 0.0
        %v2330 = vsel %vm2074, 1.0, 0.0
        %v2331 = vsel %vm2075, 1.0, 0.0
        %v2332 = vsel %vm2076, 1.0, 0.0
        %v2333 = vsel %vm2077, 1.0, 0.0
        %v2334 = vsel %vm2078, 1.0, 0.0
        %v2335 = vsel %vm2079, 1.0, 0.0
        %v2336 = vsel %vm2080, 1.0, 0.0
        %v2337 = vsel %vm2081, 1.0, 0.0
        %v2338 = vsel %vm2082, 1.0, 0.0
        %v2339 = vsel %vm2083, 1.0, 0.0
        %v2340 = vsel %vm2084, 1.0, 0.0
        %v2341 = vsel %vm2085, 1.0, 0.0
        %v2342 = vsel %vm2086, 1.0, 0.0
        %v2343 = vsel %vm2087, 1.0, 0.0
        %v2344 = vsel %vm2088, 1.0, 0.0
        %v2345 = vsel %vm2089, 1.0, 0.0
        %v2346 = vsel %vm2090, 1.0, 0.0
        %v2347 = vsel %vm2091, 1.0, 0.0
        %v2348 = vsel %vm2092, 1.0, 0.0
        %v2349 = vsel %vm2093, 1.0, 0.0
        %v2350 = vsel %vm2094, 1.0, 0.0
        %v2351 = vsel %vm2095, 1.0, 0.0
        %v2352 = vsel %vm2096, 1.0, 0.0
        %v2353 = vsel %vm2097, 1.0, 0.0
        %v2354 = vsel %vm2098, 1.0, 0.0
        %v2355 = vsel %vm2099, 1.0, 0.0
        %v2356 = vsel %vm2100, 1.0, 0.0
        %v2357 = vsel %vm2101, 1.0, 0.0
        %v2358 = vsel %vm2102, 1.0, 0.0
        %v2359 = vsel %vm2103, 1.0, 0.0
        %v2360 = vsel %vm2104, 1.0, 0.0
        %v2361 = vsel %vm2105, 1.0, 0.0
        %v2362 = vsel %vm2106, 1.0, 0.0
        %v2363 = vsel %vm2107, 1.0, 0.0
        %v2364 = vsel %vm2108, 1.0, 0.0
        %v2365 = vsel %vm2109, 1.0, 0.0
        %v2366 = vsel %vm2110, 1.0, 0.0
        %v2367 = vsel %vm2111, 1.0, 0.0
        %v2368 = vsel %vm2112, 1.0, 0.0
        %v2369 = vsel %vm2113, 1.0, 0.0
        %v2370 = vsel %vm2114, 1.0, 0.0
        %v2371 = vsel %vm2115, 1.0, 0.0
        %v2372 = vsel %vm2116, 1.0, 0.0
        %v2373 = vsel %vm2117, 1.0, 0.0
        %v2374 = vsel %vm2118, 1.0, 0.0
        %v2375 = vsel %vm2119, 1.0, 0.0
        %v2376 = vsel %vm2120, 1.0, 0.0
        %v2377 = vsel %vm2121, 1.0, 0.0
        %v2378 = vsel %vm2122, 1.0, 0.0
        %v2379 = vsel %vm2123, 1.0, 0.0
        %v2380 = vsel %vm2124, 1.0, 0.0
        %v2381 = vsel %vm2125, 1.0, 0.0
        %v2382 = vsel %vm2126, 1.0, 0.0
        %v2383 = vsel %vm2127, 1.0, 0.0
        %v2384 = vsel %vm2128, 1.0, 0.0
        %v2385 = vsel %vm2129, 1.0, 0.0
        %v2386 = vsel %vm2130, 1.0, 0.0
        %v2387 = vsel %vm2131, 1.0, 0.0
        %v2388 = vsel %vm2132, 1.0, 0.0
        %v2389 = vsel %vm2133, 1.0, 0.0
        %v2390 = vsel %vm2134, 1.0, 0.0
        %v2391 = vsel %vm2135, 1.0, 0.0
        %v2392 = vsel %vm2136, 1.0, 0.0
        %v2393 = vsel %vm2137, 1.0, 0.0
        %v2394 = vsel %vm2138, 1.0, 0.0
        %v2395 = vsel %vm2139, 1.0, 0.0
        %v2396 = vsel %vm2140, 1.0, 0.0
        %v2397 = vsel %vm2141, 1.0, 0.0
        %v2398 = vsel %vm2142, 1.0, 0.0
        %v2399 = vsel %vm2143, 1.0, 0.0
        %v2400 = vsel %vm2144, 1.0, 0.0
        %v2401 = vsel %vm2145, 1.0, 0.0
        %v2402 = vsel %vm2146, 1.0, 0.0
        %v2403 = vsel %vm2147, 1.0, 0.0
        %v2404 = vsel %vm2148, 1.0, 0.0
        %v2405 = vsel %vm2149, 1.0, 0.0
        %v2406 = vsel %vm2150, 1.0, 0.0
        %v2407 = vsel %vm2151, 1.0, 0.0
        %v2408 = vsel %vm2152, 1.0, 0.0
        %v2409 = vsel %vm2153, 1.0, 0.0
        %v2410 = vsel %vm2154, 1.0, 0.0
        %v2411 = vsel %vm2155, 1.0, 0.0
        %v2412 = vsel %vm2156, 1.0, 0.0
        %v2413 = vsel %vm2157, 1.0, 0.0
        %v2414 = vsel %vm2158, 1.0, 0.0
        %v2415 = vsel %vm2159, 1.0, 0.0
        %v2416 = vsel %vm2160, 1.0, 0.0
        %v2417 = vsel %vm2161, 1.0, 0.0
        %v2418 = vsel %vm2162, 1.0, 0.0
        %v2419 = vsel %vm2163, 1.0, 0.0
        %v2420 = vsel %vm2164, 1.0, 0.0
        %v2421 = vsel %vm2165, 1.0, 0.0
        %v2422 = vsel %vm2166, 1.0, 0.0
        %v2423 = vsel %vm2167, 1.0, 0.0
        %v2424 = vsel %vm2168, 1.0, 0.0
        %v2425 = vsel %vm2169, 1.0, 0.0
        %v2426 = vsel %vm2170, 1.0, 0.0
        %v2427 = vsel %vm2171, 1.0, 0.0
        %v2428 = vsel %vm2172, 1.0, 0.0
        %v2429 = vsel %vm2173, 1.0, 0.0
        %v2430 = vsel %vm2174, 1.0, 0.0
        %v2431 = vsel %vm2175, 1.0, 0.0
        %v2432 = vsel %vm2176, 1.0, 0.0
        %v2433 = vsel %vm2177, 1.0, 0.0
        %v2434 = vsel %vm2178, 1.0, 0.0
        %v2435 = vsel %vm2179, 1.0, 0.0
        %v2436 = vsel %vm2180, 1.0, 0.0
        %v2437 = vsel %vm2181, 1.0, 0.0
        %v2438 = vsel %vm2182, 1.0, 0.0
        %v2439 = vsel %vm2183, 1.0, 0.0
        %v2440 = vsel %vm2184, 1.0, 0.0
        %v2441 = vsel %vm2185, 1.0, 0.0
        %v2442 = vsel %vm2186, 1.0, 0.0
        %v2443 = vsel %vm2187, 1.0, 0.0
        %v2444 = vsel %vm2188, 1.0, 0.0
        %v2445 = vsel %vm2189, 1.0, 0.0
        %v2446 = vsel %vm2190, 1.0, 0.0
        %v2447 = vsel %vm2191, 1.0, 0.0
        %v2448 = vsel %vm2192, 1.0, 0.0
        %v2449 = vsel %vm2193, 1.0, 0.0
        %v2450 = vsel %vm2194, 1.0, 0.0
        %v2451 = vsel %vm2195, 1.0, 0.0
        %v2452 = vsel %vm2196, 1.0, 0.0
        %v2453 = vsel %vm2197, 1.0, 0.0
        %v2454 = vsel %vm2198, 1.0, 0.0
        %v2455 = vsel %vm2199, 1.0, 0.0
        %v2456 = vsel %vm2200, 1.0, 0.0
        %v2457 = vsel %vm2201, 1.0, 0.0
        %v2458 = vsel %vm2202, 1.0, 0.0
        %v2459 = vsel %vm2203, 1.0, 0.0
        %v2460 = vsel %vm2204, 1.0, 0.0
        %v2461 = vsel %vm2205, 1.0, 0.0
        %v2462 = vsel %vm2206, 1.0, 0.0
        %v2463 = vsel %vm2207, 1.0, 0.0
        %v2464 = vsel %vm2208, 1.0, 0.0
        %v2465 = vsel %vm2209, 1.0, 0.0
        %v2466 = vsel %vm2210, 1.0, 0.0
        %v2467 = vsel %vm2211, 1.0, 0.0
        %v2468 = vsel %vm2212, 1.0, 0.0
        %v2469 = vsel %vm2213, 1.0, 0.0
        %v2470 = vsel %vm2214, 1.0, 0.0
        %v2471 = vsel %vm2215, 1.0, 0.0
        %v2472 = vsel %vm2216, 1.0, 0.0
        %v2473 = vsel %vm2217, 1.0, 0.0
        %v2474 = vsel %vm2218, 1.0, 0.0
        %v2475 = vsel %vm2219, 1.0, 0.0
        %v2476 = vsel %vm2220, 1.0, 0.0
        %v2477 = vsel %vm2221, 1.0, 0.0
        %v2478 = vsel %vm2222, 1.0, 0.0
        %v2479 = vsel %vm2223, 1.0, 0.0
        %v2480 = vsel %vm2224, 1.0, 0.0
        %v2481 = vsel %vm2225, 1.0, 0.0
        %v2482 = vsel %vm2226, 1.0, 0.0
        %v2483 = vsel %vm2227, 1.0, 0.0
        %v2484 = vsel %vm2228, 1.0, 0.0
        %v2485 = vsel %vm2229, 1.0, 0.0
        %v2486 = vsel %vm2230, 1.0, 0.0
        %v2487 = vsel %vm2231, 1.0, 0.0
        %v2488 = vsel %vm2232, 1.0, 0.0
        %v2489 = vsel %vm2233, 1.0, 0.0
        %v2490 = vsel %vm2234, 1.0, 0.0
        %v2491 = vsel %vm2235, 1.0, 0.0
        %v2492 = vsel %vm2236, 1.0, 0.0
        %v2493 = vsel %vm2237, 1.0, 0.0
        %v2494 = vsel %vm2238, 1.0, 0.0
        %v2495 = vsel %vm2239, 1.0, 0.0
        %v2496 = vsel %vm2240, 1.0, 0.0
        %v2497 = vsel %vm2241, 1.0, 0.0
        %v2498 = vsel %vm2242, 1.0, 0.0
        %v2499 = vsel %vm2243, 1.0, 0.0
        %v2500 = vsel %vm2244, 1.0, 0.0
        %v2501 = vsel %vm2245, 1.0, 0.0
        %v2502 = vsel %vm2246, 1.0, 0.0
        %v2503 = vsel %vm2247, 1.0, 0.0
        %v2504 = vsel %vm2248, 1.0, 0.0
        %v2505 = vsel %vm2249, 1.0, 0.0
        %v2506 = vsel %vm2250, 1.0, 0.0
        %v2507 = vsel %vm2251, 1.0, 0.0
        %v2508 = vsel %vm2252, 1.0, 0.0
        %v2509 = vsel %vm2253, 1.0, 0.0
        %v2510 = vsel %vm2254, 1.0, 0.0
        %v2511 = vsel %vm2255, 1.0, 0.0
        %v2512 = vsel %vm2256, 1.0, 0.0
        %v2513 = vsel %vm2257, 1.0, 0.0
        %v2514 = vsel %vm2258, 1.0, 0.0
        %v2515 = vsel %vm2259, 1.0, 0.0
        %v2516 = vsel %vm2260, 1.0, 0.0
        %v2517 = vsel %vm2261, 1.0, 0.0
        %v2518 = vsel %vm2262, 1.0, 0.0
        %v2519 = vpack.c.bf16 %v2265, %v2263
        %v2520 = vpack.c.bf16 %v2266, %v2264
        %v2521 = vpack.c.bf16 %v2269, %v2267
        %v2522 = vpack.c.bf16 %v2270, %v2268
        %v2523 = vpack.c.bf16 %v2273, %v2271
        %v2524 = vpack.c.bf16 %v2274, %v2272
        %v2525 = vpack.c.bf16 %v2277, %v2275
        %v2526 = vpack.c.bf16 %v2278, %v2276
        %v2527 = vpack.c.bf16 %v2281, %v2279
        %v2528 = vpack.c.bf16 %v2282, %v2280
        %v2529 = vpack.c.bf16 %v2285, %v2283
        %v2530 = vpack.c.bf16 %v2286, %v2284
        %v2531 = vpack.c.bf16 %v2289, %v2287
        %v2532 = vpack.c.bf16 %v2290, %v2288
        %v2533 = vpack.c.bf16 %v2293, %v2291
        %v2534 = vpack.c.bf16 %v2294, %v2292
        %v2535 = vpack.c.bf16 %v2297, %v2295
        %v2536 = vpack.c.bf16 %v2298, %v2296
        %v2537 = vpack.c.bf16 %v2301, %v2299
        %v2538 = vpack.c.bf16 %v2302, %v2300
        %v2539 = vpack.c.bf16 %v2305, %v2303
        %v2540 = vpack.c.bf16 %v2306, %v2304
        %v2541 = vpack.c.bf16 %v2309, %v2307
        %v2542 = vpack.c.bf16 %v2310, %v2308
        %v2543 = vpack.c.bf16 %v2313, %v2311
        %v2544 = vpack.c.bf16 %v2314, %v2312
        %v2545 = vpack.c.bf16 %v2317, %v2315
        %v2546 = vpack.c.bf16 %v2318, %v2316
        %v2547 = vpack.c.bf16 %v2321, %v2319
        %v2548 = vpack.c.bf16 %v2322, %v2320
        %v2549 = vpack.c.bf16 %v2325, %v2323
        %v2550 = vpack.c.bf16 %v2326, %v2324
        %v2551 = vpack.c.bf16 %v2329, %v2327
        %v2552 = vpack.c.bf16 %v2330, %v2328
        %v2553 = vpack.c.bf16 %v2333, %v2331
        %v2554 = vpack.c.bf16 %v2334, %v2332
        %v2555 = vpack.c.bf16 %v2337, %v2335
        %v2556 = vpack.c.bf16 %v2338, %v2336
        %v2557 = vpack.c.bf16 %v2341, %v2339
        %v2558 = vpack.c.bf16 %v2342, %v2340
        %v2559 = vpack.c.bf16 %v2345, %v2343
        %v2560 = vpack.c.bf16 %v2346, %v2344
        %v2561 = vpack.c.bf16 %v2349, %v2347
        %v2562 = vpack.c.bf16 %v2350, %v2348
        %v2563 = vpack.c.bf16 %v2353, %v2351
        %v2564 = vpack.c.bf16 %v2354, %v2352
        %v2565 = vpack.c.bf16 %v2357, %v2355
        %v2566 = vpack.c.bf16 %v2358, %v2356
        %v2567 = vpack.c.bf16 %v2361, %v2359
        %v2568 = vpack.c.bf16 %v2362, %v2360
        %v2569 = vpack.c.bf16 %v2365, %v2363
        %v2570 = vpack.c.bf16 %v2366, %v2364
        %v2571 = vpack.c.bf16 %v2369, %v2367
        %v2572 = vpack.c.bf16 %v2370, %v2368
        %v2573 = vpack.c.bf16 %v2373, %v2371
        %v2574 = vpack.c.bf16 %v2374, %v2372
        %v2575 = vpack.c.bf16 %v2377, %v2375
        %v2576 = vpack.c.bf16 %v2378, %v2376
        %v2577 = vpack.c.bf16 %v2381, %v2379
        %v2578 = vpack.c.bf16 %v2382, %v2380
        %v2579 = vpack.c.bf16 %v2385, %v2383
        %v2580 = vpack.c.bf16 %v2386, %v2384
        %v2581 = vpack.c.bf16 %v2389, %v2387
        %v2582 = vpack.c.bf16 %v2390, %v2388
        %v2583 = vpack.c.bf16 %v2393, %v2391
        %v2584 = vpack.c.bf16 %v2394, %v2392
        %v2585 = vpack.c.bf16 %v2397, %v2395
        %v2586 = vpack.c.bf16 %v2398, %v2396
        %v2587 = vpack.c.bf16 %v2401, %v2399
        %v2588 = vpack.c.bf16 %v2402, %v2400
        %v2589 = vpack.c.bf16 %v2405, %v2403
        %v2590 = vpack.c.bf16 %v2406, %v2404
        %v2591 = vpack.c.bf16 %v2409, %v2407
        %v2592 = vpack.c.bf16 %v2410, %v2408
        %v2593 = vpack.c.bf16 %v2413, %v2411
        %v2594 = vpack.c.bf16 %v2414, %v2412
        %v2595 = vpack.c.bf16 %v2417, %v2415
        %v2596 = vpack.c.bf16 %v2418, %v2416
        %v2597 = vpack.c.bf16 %v2421, %v2419
        %v2598 = vpack.c.bf16 %v2422, %v2420
        %v2599 = vpack.c.bf16 %v2425, %v2423
        %v2600 = vpack.c.bf16 %v2426, %v2424
        %v2601 = vpack.c.bf16 %v2429, %v2427
        %v2602 = vpack.c.bf16 %v2430, %v2428
        %v2603 = vpack.c.bf16 %v2433, %v2431
        %v2604 = vpack.c.bf16 %v2434, %v2432
        %v2605 = vpack.c.bf16 %v2437, %v2435
        %v2606 = vpack.c.bf16 %v2438, %v2436
        %v2607 = vpack.c.bf16 %v2441, %v2439
        %v2608 = vpack.c.bf16 %v2442, %v2440
        %v2609 = vpack.c.bf16 %v2445, %v2443
        %v2610 = vpack.c.bf16 %v2446, %v2444
        %v2611 = vpack.c.bf16 %v2449, %v2447
        %v2612 = vpack.c.bf16 %v2450, %v2448
        %v2613 = vpack.c.bf16 %v2453, %v2451
        %v2614 = vpack.c.bf16 %v2454, %v2452
        %v2615 = vpack.c.bf16 %v2457, %v2455
        %v2616 = vpack.c.bf16 %v2458, %v2456
        %v2617 = vpack.c.bf16 %v2461, %v2459
        %v2618 = vpack.c.bf16 %v2462, %v2460
        %v2619 = vpack.c.bf16 %v2465, %v2463
        %v2620 = vpack.c.bf16 %v2466, %v2464
        %v2621 = vpack.c.bf16 %v2469, %v2467
        %v2622 = vpack.c.bf16 %v2470, %v2468
        %v2623 = vpack.c.bf16 %v2473, %v2471
        %v2624 = vpack.c.bf16 %v2474, %v2472
        %v2625 = vpack.c.bf16 %v2477, %v2475
        %v2626 = vpack.c.bf16 %v2478, %v2476
        %v2627 = vpack.c.bf16 %v2481, %v2479
        %v2628 = vpack.c.bf16 %v2482, %v2480
        %v2629 = vpack.c.bf16 %v2485, %v2483
        %v2630 = vpack.c.bf16 %v2486, %v2484
        %v2631 = vpack.c.bf16 %v2489, %v2487
        %v2632 = vpack.c.bf16 %v2490, %v2488
        %v2633 = vpack.c.bf16 %v2493, %v2491
        %v2634 = vpack.c.bf16 %v2494, %v2492
        %v2635 = vpack.c.bf16 %v2497, %v2495
        %v2636 = vpack.c.bf16 %v2498, %v2496
        %v2637 = vpack.c.bf16 %v2501, %v2499
        %v2638 = vpack.c.bf16 %v2502, %v2500
        %v2639 = vpack.c.bf16 %v2505, %v2503
        %v2640 = vpack.c.bf16 %v2506, %v2504
        %v2641 = vpack.c.bf16 %v2509, %v2507
        %v2642 = vpack.c.bf16 %v2510, %v2508
        %v2643 = vpack.c.bf16 %v2513, %v2511
        %v2644 = vpack.c.bf16 %v2514, %v2512
        %v2645 = vpack.c.bf16 %v2517, %v2515
        %v2646 = vpack.c.bf16 %v2518, %v2516
        %v2647 = vld [vmem:[%s3] sm:$0xf]
        %v2648 = vld [vmem:[%s3 + $0x4] sm:$0xf]
        %v2649 = vld [vmem:[%s3 + $0x8] sm:$0xf]
        %v2650 = vld [vmem:[%s3 + $0xc] sm:$0xf]
        %v2651 = vld [vmem:[%s3 + $0x10] sm:$0xf]
        %v2652 = vld [vmem:[%s3 + $0x14] sm:$0xf]
        %v2653 = vld [vmem:[%s3 + $0x18] sm:$0xf]
        %v2654 = vld [vmem:[%s3 + $0x1c] sm:$0xf]
        %v2655 = vld [vmem:[%s3 + $0x20] sm:$0xf]
        %v2656 = vld [vmem:[%s3 + $0x24] sm:$0xf]
        %v2657 = vld [vmem:[%s3 + $0x28] sm:$0xf]
        %v2658 = vld [vmem:[%s3 + $0x2c] sm:$0xf]
        %v2659 = vld [vmem:[%s3 + $0x30] sm:$0xf]
        %v2660 = vld [vmem:[%s3 + $0x34] sm:$0xf]
        %v2661 = vld [vmem:[%s3 + $0x38] sm:$0xf]
        %v2662 = vld [vmem:[%s3 + $0x3c] sm:$0xf]
        %v2663 = vld [vmem:[%s3 + $0x40] sm:$0xf]
        %v2664 = vld [vmem:[%s3 + $0x44] sm:$0xf]
        %v2665 = vld [vmem:[%s3 + $0x48] sm:$0xf]
        %v2666 = vld [vmem:[%s3 + $0x4c] sm:$0xf]
        %v2667 = vld [vmem:[%s3 + $0x50] sm:$0xf]
        %v2668 = vld [vmem:[%s3 + $0x54] sm:$0xf]
        %v2669 = vld [vmem:[%s3 + $0x58] sm:$0xf]
        %v2670 = vld [vmem:[%s3 + $0x5c] sm:$0xf]
        %v2671 = vld [vmem:[%s3 + $0x60] sm:$0xf]
        %v2672 = vld [vmem:[%s3 + $0x64] sm:$0xf]
        %v2673 = vld [vmem:[%s3 + $0x68] sm:$0xf]
        %v2674 = vld [vmem:[%s3 + $0x6c] sm:$0xf]
        %v2675 = vld [vmem:[%s3 + $0x70] sm:$0xf]
        %v2676 = vld [vmem:[%s3 + $0x74] sm:$0xf]
        %v2677 = vld [vmem:[%s3 + $0x78] sm:$0xf]
        %v2678 = vld [vmem:[%s3 + $0x7c] sm:$0xf]
        %v2679 = vld [vmem:[%s1433] sm:$0xff]
        %v2680 = vld [vmem:[%s1433 + $0x8] sm:$0xff]
        %v2681 = vld [vmem:[%s1433 + $0x10] sm:$0xff]
        %v2682 = vld [vmem:[%s1433 + $0x18] sm:$0xff]
        %v2683 = vld [vmem:[%s1433 + $0x20] sm:$0xff]
        %v2684 = vld [vmem:[%s1433 + $0x28] sm:$0xff]
        %v2685 = vld [vmem:[%s1433 + $0x30] sm:$0xff]
        %v2686 = vld [vmem:[%s1433 + $0x38] sm:$0xff]
        %v2687 = vld [vmem:[%s1433 + $0x40] sm:$0xff]
        %v2688 = vld [vmem:[%s1433 + $0x48] sm:$0xff]
        %v2689 = vld [vmem:[%s1433 + $0x50] sm:$0xff]
        %v2690 = vld [vmem:[%s1433 + $0x58] sm:$0xff]
        %v2691 = vld [vmem:[%s1433 + $0x60] sm:$0xff]
        %v2692 = vld [vmem:[%s1433 + $0x68] sm:$0xff]
        %v2693 = vld [vmem:[%s1433 + $0x70] sm:$0xff]
        %v2694 = vld [vmem:[%s1433 + $0x78] sm:$0xff]
        %v2695 = vld [vmem:[%s1433 + $0x80] sm:$0xff]
        %v2696 = vld [vmem:[%s1433 + $0x88] sm:$0xff]
        %v2697 = vld [vmem:[%s1433 + $0x90] sm:$0xff]
        %v2698 = vld [vmem:[%s1433 + $0x98] sm:$0xff]
        %v2699 = vld [vmem:[%s1433 + $0xa0] sm:$0xff]
        %v2700 = vld [vmem:[%s1433 + $0xa8] sm:$0xff]
        %v2701 = vld [vmem:[%s1433 + $0xb0] sm:$0xff]
        %v2702 = vld [vmem:[%s1433 + $0xb8] sm:$0xff]
        %v2703 = vld [vmem:[%s1433 + $0xc0] sm:$0xff]
        %v2704 = vld [vmem:[%s1433 + $0xc8] sm:$0xff]
        %v2705 = vld [vmem:[%s1433 + $0xd0] sm:$0xff]
        %v2706 = vld [vmem:[%s1433 + $0xd8] sm:$0xff]
        %v2707 = vld [vmem:[%s1433 + $0xe0] sm:$0xff]
        %v2708 = vld [vmem:[%s1433 + $0xe8] sm:$0xff]
        %v2709 = vld [vmem:[%s1433 + $0xf0] sm:$0xff]
        %v2710 = vld [vmem:[%s1433 + $0xf8] sm:$0xff]
        %v2711 = vld [vmem:[%s1433 + $0x100] sm:$0xff]
        %v2712 = vld [vmem:[%s1433 + $0x108] sm:$0xff]
        %v2713 = vld [vmem:[%s1433 + $0x110] sm:$0xff]
        %v2714 = vld [vmem:[%s1433 + $0x118] sm:$0xff]
        %v2715 = vld [vmem:[%s1433 + $0x120] sm:$0xff]
        %v2716 = vld [vmem:[%s1433 + $0x128] sm:$0xff]
        %v2717 = vld [vmem:[%s1433 + $0x130] sm:$0xff]
        %v2718 = vld [vmem:[%s1433 + $0x138] sm:$0xff]
        %v2719 = vld [vmem:[%s1433 + $0x140] sm:$0xff]
        %v2720 = vld [vmem:[%s1433 + $0x148] sm:$0xff]
        %v2721 = vld [vmem:[%s1433 + $0x150] sm:$0xff]
        %v2722 = vld [vmem:[%s1433 + $0x158] sm:$0xff]
        %v2723 = vld [vmem:[%s1433 + $0x160] sm:$0xff]
        %v2724 = vld [vmem:[%s1433 + $0x168] sm:$0xff]
        %v2725 = vld [vmem:[%s1433 + $0x170] sm:$0xff]
        %v2726 = vld [vmem:[%s1433 + $0x178] sm:$0xff]
        %v2727 = vld [vmem:[%s1433 + $0x180] sm:$0xff]
        %v2728 = vld [vmem:[%s1433 + $0x188] sm:$0xff]
        %v2729 = vld [vmem:[%s1433 + $0x190] sm:$0xff]
        %v2730 = vld [vmem:[%s1433 + $0x198] sm:$0xff]
        %v2731 = vld [vmem:[%s1433 + $0x1a0] sm:$0xff]
        %v2732 = vld [vmem:[%s1433 + $0x1a8] sm:$0xff]
        %v2733 = vld [vmem:[%s1433 + $0x1b0] sm:$0xff]
        %v2734 = vld [vmem:[%s1433 + $0x1b8] sm:$0xff]
        %v2735 = vld [vmem:[%s1433 + $0x1c0] sm:$0xff]
        %v2736 = vld [vmem:[%s1433 + $0x1c8] sm:$0xff]
        %v2737 = vld [vmem:[%s1433 + $0x1d0] sm:$0xff]
        %v2738 = vld [vmem:[%s1433 + $0x1d8] sm:$0xff]
        %v2739 = vld [vmem:[%s1433 + $0x1e0] sm:$0xff]
        %v2740 = vld [vmem:[%s1433 + $0x1e8] sm:$0xff]
        %v2741 = vld [vmem:[%s1433 + $0x1f0] sm:$0xff]
        %v2742 = vld [vmem:[%s1433 + $0x1f8] sm:$0xff]
        %v2743 = vld [vmem:[%s1433 + $0x200] sm:$0xff]
        %v2744 = vld [vmem:[%s1433 + $0x208] sm:$0xff]
        %v2745 = vld [vmem:[%s1433 + $0x210] sm:$0xff]
        %v2746 = vld [vmem:[%s1433 + $0x218] sm:$0xff]
        %v2747 = vld [vmem:[%s1433 + $0x220] sm:$0xff]
        %v2748 = vld [vmem:[%s1433 + $0x228] sm:$0xff]
        %v2749 = vld [vmem:[%s1433 + $0x230] sm:$0xff]
        %v2750 = vld [vmem:[%s1433 + $0x238] sm:$0xff]
        %v2751 = vld [vmem:[%s1433 + $0x240] sm:$0xff]
        %v2752 = vld [vmem:[%s1433 + $0x248] sm:$0xff]
        %v2753 = vld [vmem:[%s1433 + $0x250] sm:$0xff]
        %v2754 = vld [vmem:[%s1433 + $0x258] sm:$0xff]
        %v2755 = vld [vmem:[%s1433 + $0x260] sm:$0xff]
        %v2756 = vld [vmem:[%s1433 + $0x268] sm:$0xff]
        %v2757 = vld [vmem:[%s1433 + $0x270] sm:$0xff]
        %v2758 = vld [vmem:[%s1433 + $0x278] sm:$0xff]
        %v2759 = vld [vmem:[%s1433 + $0x280] sm:$0xff]
        %v2760 = vld [vmem:[%s1433 + $0x288] sm:$0xff]
        %v2761 = vld [vmem:[%s1433 + $0x290] sm:$0xff]
        %v2762 = vld [vmem:[%s1433 + $0x298] sm:$0xff]
        %v2763 = vld [vmem:[%s1433 + $0x2a0] sm:$0xff]
        %v2764 = vld [vmem:[%s1433 + $0x2a8] sm:$0xff]
        %v2765 = vld [vmem:[%s1433 + $0x2b0] sm:$0xff]
        %v2766 = vld [vmem:[%s1433 + $0x2b8] sm:$0xff]
        %v2767 = vld [vmem:[%s1433 + $0x2c0] sm:$0xff]
        %v2768 = vld [vmem:[%s1433 + $0x2c8] sm:$0xff]
        %v2769 = vld [vmem:[%s1433 + $0x2d0] sm:$0xff]
        %v2770 = vld [vmem:[%s1433 + $0x2d8] sm:$0xff]
        %v2771 = vld [vmem:[%s1433 + $0x2e0] sm:$0xff]
        %v2772 = vld [vmem:[%s1433 + $0x2e8] sm:$0xff]
        %v2773 = vld [vmem:[%s1433 + $0x2f0] sm:$0xff]
        %v2774 = vld [vmem:[%s1433 + $0x2f8] sm:$0xff]
        %v2775 = vld [vmem:[%s1433 + $0x300] sm:$0xff]
        %v2776 = vld [vmem:[%s1433 + $0x308] sm:$0xff]
        %v2777 = vld [vmem:[%s1433 + $0x310] sm:$0xff]
        %v2778 = vld [vmem:[%s1433 + $0x318] sm:$0xff]
        %v2779 = vld [vmem:[%s1433 + $0x320] sm:$0xff]
        %v2780 = vld [vmem:[%s1433 + $0x328] sm:$0xff]
        %v2781 = vld [vmem:[%s1433 + $0x330] sm:$0xff]
        %v2782 = vld [vmem:[%s1433 + $0x338] sm:$0xff]
        %v2783 = vld [vmem:[%s1433 + $0x340] sm:$0xff]
        %v2784 = vld [vmem:[%s1433 + $0x348] sm:$0xff]
        %v2785 = vld [vmem:[%s1433 + $0x350] sm:$0xff]
        %v2786 = vld [vmem:[%s1433 + $0x358] sm:$0xff]
        %v2787 = vld [vmem:[%s1433 + $0x360] sm:$0xff]
        %v2788 = vld [vmem:[%s1433 + $0x368] sm:$0xff]
        %v2789 = vld [vmem:[%s1433 + $0x370] sm:$0xff]
        %v2790 = vld [vmem:[%s1433 + $0x378] sm:$0xff]
        %v2791 = vld [vmem:[%s1433 + $0x380] sm:$0xff]
        %v2792 = vld [vmem:[%s1433 + $0x388] sm:$0xff]
        %v2793 = vld [vmem:[%s1433 + $0x390] sm:$0xff]
        %v2794 = vld [vmem:[%s1433 + $0x398] sm:$0xff]
        %v2795 = vld [vmem:[%s1433 + $0x3a0] sm:$0xff]
        %v2796 = vld [vmem:[%s1433 + $0x3a8] sm:$0xff]
        %v2797 = vld [vmem:[%s1433 + $0x3b0] sm:$0xff]
        %v2798 = vld [vmem:[%s1433 + $0x3b8] sm:$0xff]
        %v2799 = vld [vmem:[%s1433 + $0x3c0] sm:$0xff]
        %v2800 = vld [vmem:[%s1433 + $0x3c8] sm:$0xff]
        %v2801 = vld [vmem:[%s1433 + $0x3d0] sm:$0xff]
        %v2802 = vld [vmem:[%s1433 + $0x3d8] sm:$0xff]
        %v2803 = vld [vmem:[%s1433 + $0x3e0] sm:$0xff]
        %v2804 = vld [vmem:[%s1433 + $0x3e8] sm:$0xff]
        %v2805 = vld [vmem:[%s1433 + $0x3f0] sm:$0xff]
        %v2806 = vld [vmem:[%s1433 + $0x3f8] sm:$0xff]
        %v2807 = vld [vmem:[%s4] sm:$0xf]
        %2809 = vset.pattern.permute.xlu0 0
        %2810 = vperm.xlu0 %2809, %v2679
        %v2811 = vpop.permute.xlu0 %2810
        %2814 = vset.pattern.permute.xlu0 0
        %2815 = vperm.xlu0 %2814, %v2680
        %v2816 = vpop.permute.xlu0 %2815
        %2819 = vset.pattern.permute.xlu0 0
        %2820 = vperm.xlu0 %2819, %v2681
        %v2821 = vpop.permute.xlu0 %2820
        %2824 = vset.pattern.permute.xlu0 0
        %2825 = vperm.xlu0 %2824, %v2682
        %v2826 = vpop.permute.xlu0 %2825
        %2829 = vset.pattern.permute.xlu0 0
        %2830 = vperm.xlu0 %2829, %v2683
        %v2831 = vpop.permute.xlu0 %2830
        %2834 = vset.pattern.permute.xlu0 0
        %2835 = vperm.xlu0 %2834, %v2684
        %v2836 = vpop.permute.xlu0 %2835
        %2839 = vset.pattern.permute.xlu0 0
        %2840 = vperm.xlu0 %2839, %v2685
        %v2841 = vpop.permute.xlu0 %2840
        %2844 = vset.pattern.permute.xlu0 0
        %2845 = vperm.xlu0 %2844, %v2686
        %v2846 = vpop.permute.xlu0 %2845
        %2849 = vset.pattern.permute.xlu0 0
        %2850 = vperm.xlu0 %2849, %v2687
        %v2851 = vpop.permute.xlu0 %2850
        %2854 = vset.pattern.permute.xlu0 0
        %2855 = vperm.xlu0 %2854, %v2688
        %v2856 = vpop.permute.xlu0 %2855
        %2859 = vset.pattern.permute.xlu0 0
        %2860 = vperm.xlu0 %2859, %v2689
        %v2861 = vpop.permute.xlu0 %2860
        %2864 = vset.pattern.permute.xlu0 0
        %2865 = vperm.xlu0 %2864, %v2690
        %v2866 = vpop.permute.xlu0 %2865
        %2869 = vset.pattern.permute.xlu0 0
        %2870 = vperm.xlu0 %2869, %v2691
        %v2871 = vpop.permute.xlu0 %2870
        %2874 = vset.pattern.permute.xlu0 0
        %2875 = vperm.xlu0 %2874, %v2692
        %v2876 = vpop.permute.xlu0 %2875
        %2879 = vset.pattern.permute.xlu0 0
        %2880 = vperm.xlu0 %2879, %v2693
        %v2881 = vpop.permute.xlu0 %2880
        %2884 = vset.pattern.permute.xlu0 0
        %2885 = vperm.xlu0 %2884, %v2694
        %v2886 = vpop.permute.xlu0 %2885
        %2889 = vset.pattern.permute.xlu0 0
        %2890 = vperm.xlu0 %2889, %v2695
        %v2891 = vpop.permute.xlu0 %2890
        %2894 = vset.pattern.permute.xlu0 0
        %2895 = vperm.xlu0 %2894, %v2696
        %v2896 = vpop.permute.xlu0 %2895
        %2899 = vset.pattern.permute.xlu0 0
        %2900 = vperm.xlu0 %2899, %v2697
        %v2901 = vpop.permute.xlu0 %2900
        %2904 = vset.pattern.permute.xlu0 0
        %2905 = vperm.xlu0 %2904, %v2698
        %v2906 = vpop.permute.xlu0 %2905
        %2909 = vset.pattern.permute.xlu0 0
        %2910 = vperm.xlu0 %2909, %v2699
        %v2911 = vpop.permute.xlu0 %2910
        %2914 = vset.pattern.permute.xlu0 0
        %2915 = vperm.xlu0 %2914, %v2700
        %v2916 = vpop.permute.xlu0 %2915
        %2919 = vset.pattern.permute.xlu0 0
        %2920 = vperm.xlu0 %2919, %v2701
        %v2921 = vpop.permute.xlu0 %2920
        %2924 = vset.pattern.permute.xlu0 0
        %2925 = vperm.xlu0 %2924, %v2702
        %v2926 = vpop.permute.xlu0 %2925
        %2929 = vset.pattern.permute.xlu0 0
        %2930 = vperm.xlu0 %2929, %v2703
        %v2931 = vpop.permute.xlu0 %2930
        %2934 = vset.pattern.permute.xlu0 0
        %2935 = vperm.xlu0 %2934, %v2704
        %v2936 = vpop.permute.xlu0 %2935
        %2939 = vset.pattern.permute.xlu0 0
        %2940 = vperm.xlu0 %2939, %v2705
        %v2941 = vpop.permute.xlu0 %2940
        %2944 = vset.pattern.permute.xlu0 0
        %2945 = vperm.xlu0 %2944, %v2706
        %v2946 = vpop.permute.xlu0 %2945
        %2949 = vset.pattern.permute.xlu0 0
        %2950 = vperm.xlu0 %2949, %v2707
        %v2951 = vpop.permute.xlu0 %2950
        %2954 = vset.pattern.permute.xlu0 0
        %2955 = vperm.xlu0 %2954, %v2708
        %v2956 = vpop.permute.xlu0 %2955
        %2959 = vset.pattern.permute.xlu0 0
        %2960 = vperm.xlu0 %2959, %v2709
        %v2961 = vpop.permute.xlu0 %2960
        %2964 = vset.pattern.permute.xlu0 0
        %2965 = vperm.xlu0 %2964, %v2710
        %v2966 = vpop.permute.xlu0 %2965
        %2969 = vset.pattern.permute.xlu0 0
        %2970 = vperm.xlu0 %2969, %v2711
        %v2971 = vpop.permute.xlu0 %2970
        %2974 = vset.pattern.permute.xlu0 0
        %2975 = vperm.xlu0 %2974, %v2712
        %v2976 = vpop.permute.xlu0 %2975
        %2979 = vset.pattern.permute.xlu0 0
        %2980 = vperm.xlu0 %2979, %v2713
        %v2981 = vpop.permute.xlu0 %2980
        %2984 = vset.pattern.permute.xlu0 0
        %2985 = vperm.xlu0 %2984, %v2714
        %v2986 = vpop.permute.xlu0 %2985
        %2989 = vset.pattern.permute.xlu0 0
        %2990 = vperm.xlu0 %2989, %v2715
        %v2991 = vpop.permute.xlu0 %2990
        %2994 = vset.pattern.permute.xlu0 0
        %2995 = vperm.xlu0 %2994, %v2716
        %v2996 = vpop.permute.xlu0 %2995
        %2999 = vset.pattern.permute.xlu0 0
        %3000 = vperm.xlu0 %2999, %v2717
        %v3001 = vpop.permute.xlu0 %3000
        %3004 = vset.pattern.permute.xlu0 0
        %3005 = vperm.xlu0 %3004, %v2718
        %v3006 = vpop.permute.xlu0 %3005
        %3009 = vset.pattern.permute.xlu0 0
        %3010 = vperm.xlu0 %3009, %v2719
        %v3011 = vpop.permute.xlu0 %3010
        %3014 = vset.pattern.permute.xlu0 0
        %3015 = vperm.xlu0 %3014, %v2720
        %v3016 = vpop.permute.xlu0 %3015
        %3019 = vset.pattern.permute.xlu0 0
        %3020 = vperm.xlu0 %3019, %v2721
        %v3021 = vpop.permute.xlu0 %3020
        %3024 = vset.pattern.permute.xlu0 0
        %3025 = vperm.xlu0 %3024, %v2722
        %v3026 = vpop.permute.xlu0 %3025
        %3029 = vset.pattern.permute.xlu0 0
        %3030 = vperm.xlu0 %3029, %v2723
        %v3031 = vpop.permute.xlu0 %3030
        %3034 = vset.pattern.permute.xlu0 0
        %3035 = vperm.xlu0 %3034, %v2724
        %v3036 = vpop.permute.xlu0 %3035
        %3039 = vset.pattern.permute.xlu0 0
        %3040 = vperm.xlu0 %3039, %v2725
        %v3041 = vpop.permute.xlu0 %3040
        %3044 = vset.pattern.permute.xlu0 0
        %3045 = vperm.xlu0 %3044, %v2726
        %v3046 = vpop.permute.xlu0 %3045
        %3049 = vset.pattern.permute.xlu0 0
        %3050 = vperm.xlu0 %3049, %v2727
        %v3051 = vpop.permute.xlu0 %3050
        %3054 = vset.pattern.permute.xlu0 0
        %3055 = vperm.xlu0 %3054, %v2728
        %v3056 = vpop.permute.xlu0 %3055
        %3059 = vset.pattern.permute.xlu0 0
        %3060 = vperm.xlu0 %3059, %v2729
        %v3061 = vpop.permute.xlu0 %3060
        %3064 = vset.pattern.permute.xlu0 0
        %3065 = vperm.xlu0 %3064, %v2730
        %v3066 = vpop.permute.xlu0 %3065
        %3069 = vset.pattern.permute.xlu0 0
        %3070 = vperm.xlu0 %3069, %v2731
        %v3071 = vpop.permute.xlu0 %3070
        %3074 = vset.pattern.permute.xlu0 0
        %3075 = vperm.xlu0 %3074, %v2732
        %v3076 = vpop.permute.xlu0 %3075
        %3079 = vset.pattern.permute.xlu0 0
        %3080 = vperm.xlu0 %3079, %v2733
        %v3081 = vpop.permute.xlu0 %3080
        %3084 = vset.pattern.permute.xlu0 0
        %3085 = vperm.xlu0 %3084, %v2734
        %v3086 = vpop.permute.xlu0 %3085
        %3089 = vset.pattern.permute.xlu0 0
        %3090 = vperm.xlu0 %3089, %v2735
        %v3091 = vpop.permute.xlu0 %3090
        %3094 = vset.pattern.permute.xlu0 0
        %3095 = vperm.xlu0 %3094, %v2736
        %v3096 = vpop.permute.xlu0 %3095
        %3099 = vset.pattern.permute.xlu0 0
        %3100 = vperm.xlu0 %3099, %v2737
        %v3101 = vpop.permute.xlu0 %3100
        %3104 = vset.pattern.permute.xlu0 0
        %3105 = vperm.xlu0 %3104, %v2738
        %v3106 = vpop.permute.xlu0 %3105
        %3109 = vset.pattern.permute.xlu0 0
        %3110 = vperm.xlu0 %3109, %v2739
        %v3111 = vpop.permute.xlu0 %3110
        %3114 = vset.pattern.permute.xlu0 0
        %3115 = vperm.xlu0 %3114, %v2740
        %v3116 = vpop.permute.xlu0 %3115
        %3119 = vset.pattern.permute.xlu0 0
        %3120 = vperm.xlu0 %3119, %v2741
        %v3121 = vpop.permute.xlu0 %3120
        %3124 = vset.pattern.permute.xlu0 0
        %3125 = vperm.xlu0 %3124, %v2742
        %v3126 = vpop.permute.xlu0 %3125
        %3129 = vset.pattern.permute.xlu0 0
        %3130 = vperm.xlu0 %3129, %v2743
        %v3131 = vpop.permute.xlu0 %3130
        %3134 = vset.pattern.permute.xlu0 0
        %3135 = vperm.xlu0 %3134, %v2744
        %v3136 = vpop.permute.xlu0 %3135
        %3139 = vset.pattern.permute.xlu0 0
        %3140 = vperm.xlu0 %3139, %v2745
        %v3141 = vpop.permute.xlu0 %3140
        %3144 = vset.pattern.permute.xlu0 0
        %3145 = vperm.xlu0 %3144, %v2746
        %v3146 = vpop.permute.xlu0 %3145
        %3149 = vset.pattern.permute.xlu0 0
        %3150 = vperm.xlu0 %3149, %v2747
        %v3151 = vpop.permute.xlu0 %3150
        %3154 = vset.pattern.permute.xlu0 0
        %3155 = vperm.xlu0 %3154, %v2748
        %v3156 = vpop.permute.xlu0 %3155
        %3159 = vset.pattern.permute.xlu0 0
        %3160 = vperm.xlu0 %3159, %v2749
        %v3161 = vpop.permute.xlu0 %3160
        %3164 = vset.pattern.permute.xlu0 0
        %3165 = vperm.xlu0 %3164, %v2750
        %v3166 = vpop.permute.xlu0 %3165
        %3169 = vset.pattern.permute.xlu0 0
        %3170 = vperm.xlu0 %3169, %v2751
        %v3171 = vpop.permute.xlu0 %3170
        %3174 = vset.pattern.permute.xlu0 0
        %3175 = vperm.xlu0 %3174, %v2752
        %v3176 = vpop.permute.xlu0 %3175
        %3179 = vset.pattern.permute.xlu0 0
        %3180 = vperm.xlu0 %3179, %v2753
        %v3181 = vpop.permute.xlu0 %3180
        %3184 = vset.pattern.permute.xlu0 0
        %3185 = vperm.xlu0 %3184, %v2754
        %v3186 = vpop.permute.xlu0 %3185
        %3189 = vset.pattern.permute.xlu0 0
        %3190 = vperm.xlu0 %3189, %v2755
        %v3191 = vpop.permute.xlu0 %3190
        %3194 = vset.pattern.permute.xlu0 0
        %3195 = vperm.xlu0 %3194, %v2756
        %v3196 = vpop.permute.xlu0 %3195
        %3199 = vset.pattern.permute.xlu0 0
        %3200 = vperm.xlu0 %3199, %v2757
        %v3201 = vpop.permute.xlu0 %3200
        %3204 = vset.pattern.permute.xlu0 0
        %3205 = vperm.xlu0 %3204, %v2758
        %v3206 = vpop.permute.xlu0 %3205
        %3209 = vset.pattern.permute.xlu0 0
        %3210 = vperm.xlu0 %3209, %v2759
        %v3211 = vpop.permute.xlu0 %3210
        %3214 = vset.pattern.permute.xlu0 0
        %3215 = vperm.xlu0 %3214, %v2760
        %v3216 = vpop.permute.xlu0 %3215
        %3219 = vset.pattern.permute.xlu0 0
        %3220 = vperm.xlu0 %3219, %v2761
        %v3221 = vpop.permute.xlu0 %3220
        %3224 = vset.pattern.permute.xlu0 0
        %3225 = vperm.xlu0 %3224, %v2762
        %v3226 = vpop.permute.xlu0 %3225
        %3229 = vset.pattern.permute.xlu0 0
        %3230 = vperm.xlu0 %3229, %v2763
        %v3231 = vpop.permute.xlu0 %3230
        %3234 = vset.pattern.permute.xlu0 0
        %3235 = vperm.xlu0 %3234, %v2764
        %v3236 = vpop.permute.xlu0 %3235
        %3239 = vset.pattern.permute.xlu0 0
        %3240 = vperm.xlu0 %3239, %v2765
        %v3241 = vpop.permute.xlu0 %3240
        %3244 = vset.pattern.permute.xlu0 0
        %3245 = vperm.xlu0 %3244, %v2766
        %v3246 = vpop.permute.xlu0 %3245
        %3249 = vset.pattern.permute.xlu0 0
        %3250 = vperm.xlu0 %3249, %v2767
        %v3251 = vpop.permute.xlu0 %3250
        %3254 = vset.pattern.permute.xlu0 0
        %3255 = vperm.xlu0 %3254, %v2768
        %v3256 = vpop.permute.xlu0 %3255
        %3259 = vset.pattern.permute.xlu0 0
        %3260 = vperm.xlu0 %3259, %v2769
        %v3261 = vpop.permute.xlu0 %3260
        %3264 = vset.pattern.permute.xlu0 0
        %3265 = vperm.xlu0 %3264, %v2770
        %v3266 = vpop.permute.xlu0 %3265
        %3269 = vset.pattern.permute.xlu0 0
        %3270 = vperm.xlu0 %3269, %v2771
        %v3271 = vpop.permute.xlu0 %3270
        %3274 = vset.pattern.permute.xlu0 0
        %3275 = vperm.xlu0 %3274, %v2772
        %v3276 = vpop.permute.xlu0 %3275
        %3279 = vset.pattern.permute.xlu0 0
        %3280 = vperm.xlu0 %3279, %v2773
        %v3281 = vpop.permute.xlu0 %3280
        %3284 = vset.pattern.permute.xlu0 0
        %3285 = vperm.xlu0 %3284, %v2774
        %v3286 = vpop.permute.xlu0 %3285
        %3289 = vset.pattern.permute.xlu0 0
        %3290 = vperm.xlu0 %3289, %v2775
        %v3291 = vpop.permute.xlu0 %3290
        %3294 = vset.pattern.permute.xlu0 0
        %3295 = vperm.xlu0 %3294, %v2776
        %v3296 = vpop.permute.xlu0 %3295
        %3299 = vset.pattern.permute.xlu0 0
        %3300 = vperm.xlu0 %3299, %v2777
        %v3301 = vpop.permute.xlu0 %3300
        %3304 = vset.pattern.permute.xlu0 0
        %3305 = vperm.xlu0 %3304, %v2778
        %v3306 = vpop.permute.xlu0 %3305
        %3309 = vset.pattern.permute.xlu0 0
        %3310 = vperm.xlu0 %3309, %v2779
        %v3311 = vpop.permute.xlu0 %3310
        %3314 = vset.pattern.permute.xlu0 0
        %3315 = vperm.xlu0 %3314, %v2780
        %v3316 = vpop.permute.xlu0 %3315
        %3319 = vset.pattern.permute.xlu0 0
        %3320 = vperm.xlu0 %3319, %v2781
        %v3321 = vpop.permute.xlu0 %3320
        %3324 = vset.pattern.permute.xlu0 0
        %3325 = vperm.xlu0 %3324, %v2782
        %v3326 = vpop.permute.xlu0 %3325
        %3329 = vset.pattern.permute.xlu0 0
        %3330 = vperm.xlu0 %3329, %v2783
        %v3331 = vpop.permute.xlu0 %3330
        %3334 = vset.pattern.permute.xlu0 0
        %3335 = vperm.xlu0 %3334, %v2784
        %v3336 = vpop.permute.xlu0 %3335
        %3339 = vset.pattern.permute.xlu0 0
        %3340 = vperm.xlu0 %3339, %v2785
        %v3341 = vpop.permute.xlu0 %3340
        %3344 = vset.pattern.permute.xlu0 0
        %3345 = vperm.xlu0 %3344, %v2786
        %v3346 = vpop.permute.xlu0 %3345
        %3349 = vset.pattern.permute.xlu0 0
        %3350 = vperm.xlu0 %3349, %v2787
        %v3351 = vpop.permute.xlu0 %3350
        %3354 = vset.pattern.permute.xlu0 0
        %3355 = vperm.xlu0 %3354, %v2788
        %v3356 = vpop.permute.xlu0 %3355
        %3359 = vset.pattern.permute.xlu0 0
        %3360 = vperm.xlu0 %3359, %v2789
        %v3361 = vpop.permute.xlu0 %3360
        %3364 = vset.pattern.permute.xlu0 0
        %3365 = vperm.xlu0 %3364, %v2790
        %v3366 = vpop.permute.xlu0 %3365
        %3369 = vset.pattern.permute.xlu0 0
        %3370 = vperm.xlu0 %3369, %v2791
        %v3371 = vpop.permute.xlu0 %3370
        %3374 = vset.pattern.permute.xlu0 0
        %3375 = vperm.xlu0 %3374, %v2792
        %v3376 = vpop.permute.xlu0 %3375
        %3379 = vset.pattern.permute.xlu0 0
        %3380 = vperm.xlu0 %3379, %v2793
        %v3381 = vpop.permute.xlu0 %3380
        %3384 = vset.pattern.permute.xlu0 0
        %3385 = vperm.xlu0 %3384, %v2794
        %v3386 = vpop.permute.xlu0 %3385
        %3389 = vset.pattern.permute.xlu0 0
        %3390 = vperm.xlu0 %3389, %v2795
        %v3391 = vpop.permute.xlu0 %3390
        %3394 = vset.pattern.permute.xlu0 0
        %3395 = vperm.xlu0 %3394, %v2796
        %v3396 = vpop.permute.xlu0 %3395
        %3399 = vset.pattern.permute.xlu0 0
        %3400 = vperm.xlu0 %3399, %v2797
        %v3401 = vpop.permute.xlu0 %3400
        %3404 = vset.pattern.permute.xlu0 0
        %3405 = vperm.xlu0 %3404, %v2798
        %v3406 = vpop.permute.xlu0 %3405
        %3409 = vset.pattern.permute.xlu0 0
        %3410 = vperm.xlu0 %3409, %v2799
        %v3411 = vpop.permute.xlu0 %3410
        %3414 = vset.pattern.permute.xlu0 0
        %3415 = vperm.xlu0 %3414, %v2800
        %v3416 = vpop.permute.xlu0 %3415
        %3419 = vset.pattern.permute.xlu0 0
        %3420 = vperm.xlu0 %3419, %v2801
        %v3421 = vpop.permute.xlu0 %3420
        %3424 = vset.pattern.permute.xlu0 0
        %3425 = vperm.xlu0 %3424, %v2802
        %v3426 = vpop.permute.xlu0 %3425
        %3429 = vset.pattern.permute.xlu0 0
        %3430 = vperm.xlu0 %3429, %v2803
        %v3431 = vpop.permute.xlu0 %3430
        %3434 = vset.pattern.permute.xlu0 0
        %3435 = vperm.xlu0 %3434, %v2804
        %v3436 = vpop.permute.xlu0 %3435
        %3439 = vset.pattern.permute.xlu0 0
        %3440 = vperm.xlu0 %3439, %v2805
        %v3441 = vpop.permute.xlu0 %3440
        %3444 = vset.pattern.permute.xlu0 0
        %3445 = vperm.xlu0 %3444, %v2806
        %v3446 = vpop.permute.xlu0 %3445
        %v3448 = vlaneseq
        %v3449 = vshrl.u32 %v3448, 7
        %v3450 = vsub.s32 0, %v3449
        %v3451 = vrot.slane %v2807, %v3450
        %v3452 = vmul.f32 %v2811, %v3451
        %v3453 = vmul.f32 %v2816, %v3451
        %v3454 = vmul.f32 %v2821, %v3451
        %v3455 = vmul.f32 %v2826, %v3451
        %v3456 = vmul.f32 %v2831, %v3451
        %v3457 = vmul.f32 %v2836, %v3451
        %v3458 = vmul.f32 %v2841, %v3451
        %v3459 = vmul.f32 %v2846, %v3451
        %v3460 = vmul.f32 %v2851, %v3451
        %v3461 = vmul.f32 %v2856, %v3451
        %v3462 = vmul.f32 %v2861, %v3451
        %v3463 = vmul.f32 %v2866, %v3451
        %v3464 = vmul.f32 %v2871, %v3451
        %v3465 = vmul.f32 %v2876, %v3451
        %v3466 = vmul.f32 %v2881, %v3451
        %v3467 = vmul.f32 %v2886, %v3451
        %v3468 = vmul.f32 %v2891, %v3451
        %v3469 = vmul.f32 %v2896, %v3451
        %v3470 = vmul.f32 %v2901, %v3451
        %v3471 = vmul.f32 %v2906, %v3451
        %v3472 = vmul.f32 %v2911, %v3451
        %v3473 = vmul.f32 %v2916, %v3451
        %v3474 = vmul.f32 %v2921, %v3451
        %v3475 = vmul.f32 %v2926, %v3451
        %v3476 = vmul.f32 %v2931, %v3451
        %v3477 = vmul.f32 %v2936, %v3451
        %v3478 = vmul.f32 %v2941, %v3451
        %v3479 = vmul.f32 %v2946, %v3451
        %v3480 = vmul.f32 %v2951, %v3451
        %v3481 = vmul.f32 %v2956, %v3451
        %v3482 = vmul.f32 %v2961, %v3451
        %v3483 = vmul.f32 %v2966, %v3451
        %v3484 = vmul.f32 %v2971, %v3451
        %v3485 = vmul.f32 %v2976, %v3451
        %v3486 = vmul.f32 %v2981, %v3451
        %v3487 = vmul.f32 %v2986, %v3451
        %v3488 = vmul.f32 %v2991, %v3451
        %v3489 = vmul.f32 %v2996, %v3451
        %v3490 = vmul.f32 %v3001, %v3451
        %v3491 = vmul.f32 %v3006, %v3451
        %v3492 = vmul.f32 %v3011, %v3451
        %v3493 = vmul.f32 %v3016, %v3451
        %v3494 = vmul.f32 %v3021, %v3451
        %v3495 = vmul.f32 %v3026, %v3451
        %v3496 = vmul.f32 %v3031, %v3451
        %v3497 = vmul.f32 %v3036, %v3451
        %v3498 = vmul.f32 %v3041, %v3451
        %v3499 = vmul.f32 %v3046, %v3451
        %v3500 = vmul.f32 %v3051, %v3451
        %v3501 = vmul.f32 %v3056, %v3451
        %v3502 = vmul.f32 %v3061, %v3451
        %v3503 = vmul.f32 %v3066, %v3451
        %v3504 = vmul.f32 %v3071, %v3451
        %v3505 = vmul.f32 %v3076, %v3451
        %v3506 = vmul.f32 %v3081, %v3451
        %v3507 = vmul.f32 %v3086, %v3451
        %v3508 = vmul.f32 %v3091, %v3451
        %v3509 = vmul.f32 %v3096, %v3451
        %v3510 = vmul.f32 %v3101, %v3451
        %v3511 = vmul.f32 %v3106, %v3451
        %v3512 = vmul.f32 %v3111, %v3451
        %v3513 = vmul.f32 %v3116, %v3451
        %v3514 = vmul.f32 %v3121, %v3451
        %v3515 = vmul.f32 %v3126, %v3451
        %v3516 = vmul.f32 %v3131, %v3451
        %v3517 = vmul.f32 %v3136, %v3451
        %v3518 = vmul.f32 %v3141, %v3451
        %v3519 = vmul.f32 %v3146, %v3451
        %v3520 = vmul.f32 %v3151, %v3451
        %v3521 = vmul.f32 %v3156, %v3451
        %v3522 = vmul.f32 %v3161, %v3451
        %v3523 = vmul.f32 %v3166, %v3451
        %v3524 = vmul.f32 %v3171, %v3451
        %v3525 = vmul.f32 %v3176, %v3451
        %v3526 = vmul.f32 %v3181, %v3451
        %v3527 = vmul.f32 %v3186, %v3451
        %v3528 = vmul.f32 %v3191, %v3451
        %v3529 = vmul.f32 %v3196, %v3451
        %v3530 = vmul.f32 %v3201, %v3451
        %v3531 = vmul.f32 %v3206, %v3451
        %v3532 = vmul.f32 %v3211, %v3451
        %v3533 = vmul.f32 %v3216, %v3451
        %v3534 = vmul.f32 %v3221, %v3451
        %v3535 = vmul.f32 %v3226, %v3451
        %v3536 = vmul.f32 %v3231, %v3451
        %v3537 = vmul.f32 %v3236, %v3451
        %v3538 = vmul.f32 %v3241, %v3451
        %v3539 = vmul.f32 %v3246, %v3451
        %v3540 = vmul.f32 %v3251, %v3451
        %v3541 = vmul.f32 %v3256, %v3451
        %v3542 = vmul.f32 %v3261, %v3451
        %v3543 = vmul.f32 %v3266, %v3451
        %v3544 = vmul.f32 %v3271, %v3451
        %v3545 = vmul.f32 %v3276, %v3451
        %v3546 = vmul.f32 %v3281, %v3451
        %v3547 = vmul.f32 %v3286, %v3451
        %v3548 = vmul.f32 %v3291, %v3451
        %v3549 = vmul.f32 %v3296, %v3451
        %v3550 = vmul.f32 %v3301, %v3451
        %v3551 = vmul.f32 %v3306, %v3451
        %v3552 = vmul.f32 %v3311, %v3451
        %v3553 = vmul.f32 %v3316, %v3451
        %v3554 = vmul.f32 %v3321, %v3451
        %v3555 = vmul.f32 %v3326, %v3451
        %v3556 = vmul.f32 %v3331, %v3451
        %v3557 = vmul.f32 %v3336, %v3451
        %v3558 = vmul.f32 %v3341, %v3451
        %v3559 = vmul.f32 %v3346, %v3451
        %v3560 = vmul.f32 %v3351, %v3451
        %v3561 = vmul.f32 %v3356, %v3451
        %v3562 = vmul.f32 %v3361, %v3451
        %v3563 = vmul.f32 %v3366, %v3451
        %v3564 = vmul.f32 %v3371, %v3451
        %v3565 = vmul.f32 %v3376, %v3451
        %v3566 = vmul.f32 %v3381, %v3451
        %v3567 = vmul.f32 %v3386, %v3451
        %v3568 = vmul.f32 %v3391, %v3451
        %v3569 = vmul.f32 %v3396, %v3451
        %v3570 = vmul.f32 %v3401, %v3451
        %v3571 = vmul.f32 %v3406, %v3451
        %v3572 = vmul.f32 %v3411, %v3451
        %v3573 = vmul.f32 %v3416, %v3451
        %v3574 = vmul.f32 %v3421, %v3451
        %v3575 = vmul.f32 %v3426, %v3451
        %v3576 = vmul.f32 %v3431, %v3451
        %v3577 = vmul.f32 %v3436, %v3451
        %v3578 = vmul.f32 %v3441, %v3451
        %v3579 = vmul.f32 %v3446, %v3451
        %3580 = vset.pattern.permute.xlu0 1
        %3581 = vperm.xlu0 %3580, %v2679
        %v3582 = vpop.permute.xlu0 %3581
        %3584 = vset.pattern.permute.xlu0 1
        %3585 = vperm.xlu0 %3584, %v2680
        %v3586 = vpop.permute.xlu0 %3585
        %3588 = vset.pattern.permute.xlu0 1
        %3589 = vperm.xlu0 %3588, %v2681
        %v3590 = vpop.permute.xlu0 %3589
        %3592 = vset.pattern.permute.xlu0 1
        %3593 = vperm.xlu0 %3592, %v2682
        %v3594 = vpop.permute.xlu0 %3593
        %3596 = vset.pattern.permute.xlu0 1
        %3597 = vperm.xlu0 %3596, %v2683
        %v3598 = vpop.permute.xlu0 %3597
        %3600 = vset.pattern.permute.xlu0 1
        %3601 = vperm.xlu0 %3600, %v2684
        %v3602 = vpop.permute.xlu0 %3601
        %3604 = vset.pattern.permute.xlu0 1
        %3605 = vperm.xlu0 %3604, %v2685
        %v3606 = vpop.permute.xlu0 %3605
        %3608 = vset.pattern.permute.xlu0 1
        %3609 = vperm.xlu0 %3608, %v2686
        %v3610 = vpop.permute.xlu0 %3609
        %3612 = vset.pattern.permute.xlu0 1
        %3613 = vperm.xlu0 %3612, %v2687
        %v3614 = vpop.permute.xlu0 %3613
        %3616 = vset.pattern.permute.xlu0 1
        %3617 = vperm.xlu0 %3616, %v2688
        %v3618 = vpop.permute.xlu0 %3617
        %3620 = vset.pattern.permute.xlu0 1
        %3621 = vperm.xlu0 %3620, %v2689
        %v3622 = vpop.permute.xlu0 %3621
        %3624 = vset.pattern.permute.xlu0 1
        %3625 = vperm.xlu0 %3624, %v2690
        %v3626 = vpop.permute.xlu0 %3625
        %3628 = vset.pattern.permute.xlu0 1
        %3629 = vperm.xlu0 %3628, %v2691
        %v3630 = vpop.permute.xlu0 %3629
        %3632 = vset.pattern.permute.xlu0 1
        %3633 = vperm.xlu0 %3632, %v2692
        %v3634 = vpop.permute.xlu0 %3633
        %3636 = vset.pattern.permute.xlu0 1
        %3637 = vperm.xlu0 %3636, %v2693
        %v3638 = vpop.permute.xlu0 %3637
        %3640 = vset.pattern.permute.xlu0 1
        %3641 = vperm.xlu0 %3640, %v2694
        %v3642 = vpop.permute.xlu0 %3641
        %3644 = vset.pattern.permute.xlu0 1
        %3645 = vperm.xlu0 %3644, %v2695
        %v3646 = vpop.permute.xlu0 %3645
        %3648 = vset.pattern.permute.xlu0 1
        %3649 = vperm.xlu0 %3648, %v2696
        %v3650 = vpop.permute.xlu0 %3649
        %3652 = vset.pattern.permute.xlu0 1
        %3653 = vperm.xlu0 %3652, %v2697
        %v3654 = vpop.permute.xlu0 %3653
        %3656 = vset.pattern.permute.xlu0 1
        %3657 = vperm.xlu0 %3656, %v2698
        %v3658 = vpop.permute.xlu0 %3657
        %3660 = vset.pattern.permute.xlu0 1
        %3661 = vperm.xlu0 %3660, %v2699
        %v3662 = vpop.permute.xlu0 %3661
        %3664 = vset.pattern.permute.xlu0 1
        %3665 = vperm.xlu0 %3664, %v2700
        %v3666 = vpop.permute.xlu0 %3665
        %3668 = vset.pattern.permute.xlu0 1
        %3669 = vperm.xlu0 %3668, %v2701
        %v3670 = vpop.permute.xlu0 %3669
        %3672 = vset.pattern.permute.xlu0 1
        %3673 = vperm.xlu0 %3672, %v2702
        %v3674 = vpop.permute.xlu0 %3673
        %3676 = vset.pattern.permute.xlu0 1
        %3677 = vperm.xlu0 %3676, %v2703
        %v3678 = vpop.permute.xlu0 %3677
        %3680 = vset.pattern.permute.xlu0 1
        %3681 = vperm.xlu0 %3680, %v2704
        %v3682 = vpop.permute.xlu0 %3681
        %3684 = vset.pattern.permute.xlu0 1
        %3685 = vperm.xlu0 %3684, %v2705
        %v3686 = vpop.permute.xlu0 %3685
        %3688 = vset.pattern.permute.xlu0 1
        %3689 = vperm.xlu0 %3688, %v2706
        %v3690 = vpop.permute.xlu0 %3689
        %3692 = vset.pattern.permute.xlu0 1
        %3693 = vperm.xlu0 %3692, %v2707
        %v3694 = vpop.permute.xlu0 %3693
        %3696 = vset.pattern.permute.xlu0 1
        %3697 = vperm.xlu0 %3696, %v2708
        %v3698 = vpop.permute.xlu0 %3697
        %3700 = vset.pattern.permute.xlu0 1
        %3701 = vperm.xlu0 %3700, %v2709
        %v3702 = vpop.permute.xlu0 %3701
        %3704 = vset.pattern.permute.xlu0 1
        %3705 = vperm.xlu0 %3704, %v2710
        %v3706 = vpop.permute.xlu0 %3705
        %3708 = vset.pattern.permute.xlu0 1
        %3709 = vperm.xlu0 %3708, %v2711
        %v3710 = vpop.permute.xlu0 %3709
        %3712 = vset.pattern.permute.xlu0 1
        %3713 = vperm.xlu0 %3712, %v2712
        %v3714 = vpop.permute.xlu0 %3713
        %3716 = vset.pattern.permute.xlu0 1
        %3717 = vperm.xlu0 %3716, %v2713
        %v3718 = vpop.permute.xlu0 %3717
        %3720 = vset.pattern.permute.xlu0 1
        %3721 = vperm.xlu0 %3720, %v2714
        %v3722 = vpop.permute.xlu0 %3721
        %3724 = vset.pattern.permute.xlu0 1
        %3725 = vperm.xlu0 %3724, %v2715
        %v3726 = vpop.permute.xlu0 %3725
        %3728 = vset.pattern.permute.xlu0 1
        %3729 = vperm.xlu0 %3728, %v2716
        %v3730 = vpop.permute.xlu0 %3729
        %3732 = vset.pattern.permute.xlu0 1
        %3733 = vperm.xlu0 %3732, %v2717
        %v3734 = vpop.permute.xlu0 %3733
        %3736 = vset.pattern.permute.xlu0 1
        %3737 = vperm.xlu0 %3736, %v2718
        %v3738 = vpop.permute.xlu0 %3737
        %3740 = vset.pattern.permute.xlu0 1
        %3741 = vperm.xlu0 %3740, %v2719
        %v3742 = vpop.permute.xlu0 %3741
        %3744 = vset.pattern.permute.xlu0 1
        %3745 = vperm.xlu0 %3744, %v2720
        %v3746 = vpop.permute.xlu0 %3745
        %3748 = vset.pattern.permute.xlu0 1
        %3749 = vperm.xlu0 %3748, %v2721
        %v3750 = vpop.permute.xlu0 %3749
        %3752 = vset.pattern.permute.xlu0 1
        %3753 = vperm.xlu0 %3752, %v2722
        %v3754 = vpop.permute.xlu0 %3753
        %3756 = vset.pattern.permute.xlu0 1
        %3757 = vperm.xlu0 %3756, %v2723
        %v3758 = vpop.permute.xlu0 %3757
        %3760 = vset.pattern.permute.xlu0 1
        %3761 = vperm.xlu0 %3760, %v2724
        %v3762 = vpop.permute.xlu0 %3761
        %3764 = vset.pattern.permute.xlu0 1
        %3765 = vperm.xlu0 %3764, %v2725
        %v3766 = vpop.permute.xlu0 %3765
        %3768 = vset.pattern.permute.xlu0 1
        %3769 = vperm.xlu0 %3768, %v2726
        %v3770 = vpop.permute.xlu0 %3769
        %3772 = vset.pattern.permute.xlu0 1
        %3773 = vperm.xlu0 %3772, %v2727
        %v3774 = vpop.permute.xlu0 %3773
        %3776 = vset.pattern.permute.xlu0 1
        %3777 = vperm.xlu0 %3776, %v2728
        %v3778 = vpop.permute.xlu0 %3777
        %3780 = vset.pattern.permute.xlu0 1
        %3781 = vperm.xlu0 %3780, %v2729
        %v3782 = vpop.permute.xlu0 %3781
        %3784 = vset.pattern.permute.xlu0 1
        %3785 = vperm.xlu0 %3784, %v2730
        %v3786 = vpop.permute.xlu0 %3785
        %3788 = vset.pattern.permute.xlu0 1
        %3789 = vperm.xlu0 %3788, %v2731
        %v3790 = vpop.permute.xlu0 %3789
        %3792 = vset.pattern.permute.xlu0 1
        %3793 = vperm.xlu0 %3792, %v2732
        %v3794 = vpop.permute.xlu0 %3793
        %3796 = vset.pattern.permute.xlu0 1
        %3797 = vperm.xlu0 %3796, %v2733
        %v3798 = vpop.permute.xlu0 %3797
        %3800 = vset.pattern.permute.xlu0 1
        %3801 = vperm.xlu0 %3800, %v2734
        %v3802 = vpop.permute.xlu0 %3801
        %3804 = vset.pattern.permute.xlu0 1
        %3805 = vperm.xlu0 %3804, %v2735
        %v3806 = vpop.permute.xlu0 %3805
        %3808 = vset.pattern.permute.xlu0 1
        %3809 = vperm.xlu0 %3808, %v2736
        %v3810 = vpop.permute.xlu0 %3809
        %3812 = vset.pattern.permute.xlu0 1
        %3813 = vperm.xlu0 %3812, %v2737
        %v3814 = vpop.permute.xlu0 %3813
        %3816 = vset.pattern.permute.xlu0 1
        %3817 = vperm.xlu0 %3816, %v2738
        %v3818 = vpop.permute.xlu0 %3817
        %3820 = vset.pattern.permute.xlu0 1
        %3821 = vperm.xlu0 %3820, %v2739
        %v3822 = vpop.permute.xlu0 %3821
        %3824 = vset.pattern.permute.xlu0 1
        %3825 = vperm.xlu0 %3824, %v2740
        %v3826 = vpop.permute.xlu0 %3825
        %3828 = vset.pattern.permute.xlu0 1
        %3829 = vperm.xlu0 %3828, %v2741
        %v3830 = vpop.permute.xlu0 %3829
        %3832 = vset.pattern.permute.xlu0 1
        %3833 = vperm.xlu0 %3832, %v2742
        %v3834 = vpop.permute.xlu0 %3833
        %3836 = vset.pattern.permute.xlu0 1
        %3837 = vperm.xlu0 %3836, %v2743
        %v3838 = vpop.permute.xlu0 %3837
        %3840 = vset.pattern.permute.xlu0 1
        %3841 = vperm.xlu0 %3840, %v2744
        %v3842 = vpop.permute.xlu0 %3841
        %3844 = vset.pattern.permute.xlu0 1
        %3845 = vperm.xlu0 %3844, %v2745
        %v3846 = vpop.permute.xlu0 %3845
        %3848 = vset.pattern.permute.xlu0 1
        %3849 = vperm.xlu0 %3848, %v2746
        %v3850 = vpop.permute.xlu0 %3849
        %3852 = vset.pattern.permute.xlu0 1
        %3853 = vperm.xlu0 %3852, %v2747
        %v3854 = vpop.permute.xlu0 %3853
        %3856 = vset.pattern.permute.xlu0 1
        %3857 = vperm.xlu0 %3856, %v2748
        %v3858 = vpop.permute.xlu0 %3857
        %3860 = vset.pattern.permute.xlu0 1
        %3861 = vperm.xlu0 %3860, %v2749
        %v3862 = vpop.permute.xlu0 %3861
        %3864 = vset.pattern.permute.xlu0 1
        %3865 = vperm.xlu0 %3864, %v2750
        %v3866 = vpop.permute.xlu0 %3865
        %3868 = vset.pattern.permute.xlu0 1
        %3869 = vperm.xlu0 %3868, %v2751
        %v3870 = vpop.permute.xlu0 %3869
        %3872 = vset.pattern.permute.xlu0 1
        %3873 = vperm.xlu0 %3872, %v2752
        %v3874 = vpop.permute.xlu0 %3873
        %3876 = vset.pattern.permute.xlu0 1
        %3877 = vperm.xlu0 %3876, %v2753
        %v3878 = vpop.permute.xlu0 %3877
        %3880 = vset.pattern.permute.xlu0 1
        %3881 = vperm.xlu0 %3880, %v2754
        %v3882 = vpop.permute.xlu0 %3881
        %3884 = vset.pattern.permute.xlu0 1
        %3885 = vperm.xlu0 %3884, %v2755
        %v3886 = vpop.permute.xlu0 %3885
        %3888 = vset.pattern.permute.xlu0 1
        %3889 = vperm.xlu0 %3888, %v2756
        %v3890 = vpop.permute.xlu0 %3889
        %3892 = vset.pattern.permute.xlu0 1
        %3893 = vperm.xlu0 %3892, %v2757
        %v3894 = vpop.permute.xlu0 %3893
        %3896 = vset.pattern.permute.xlu0 1
        %3897 = vperm.xlu0 %3896, %v2758
        %v3898 = vpop.permute.xlu0 %3897
        %3900 = vset.pattern.permute.xlu0 1
        %3901 = vperm.xlu0 %3900, %v2759
        %v3902 = vpop.permute.xlu0 %3901
        %3904 = vset.pattern.permute.xlu0 1
        %3905 = vperm.xlu0 %3904, %v2760
        %v3906 = vpop.permute.xlu0 %3905
        %3908 = vset.pattern.permute.xlu0 1
        %3909 = vperm.xlu0 %3908, %v2761
        %v3910 = vpop.permute.xlu0 %3909
        %3912 = vset.pattern.permute.xlu0 1
        %3913 = vperm.xlu0 %3912, %v2762
        %v3914 = vpop.permute.xlu0 %3913
        %3916 = vset.pattern.permute.xlu0 1
        %3917 = vperm.xlu0 %3916, %v2763
        %v3918 = vpop.permute.xlu0 %3917
        %3920 = vset.pattern.permute.xlu0 1
        %3921 = vperm.xlu0 %3920, %v2764
        %v3922 = vpop.permute.xlu0 %3921
        %3924 = vset.pattern.permute.xlu0 1
        %3925 = vperm.xlu0 %3924, %v2765
        %v3926 = vpop.permute.xlu0 %3925
        %3928 = vset.pattern.permute.xlu0 1
        %3929 = vperm.xlu0 %3928, %v2766
        %v3930 = vpop.permute.xlu0 %3929
        %3932 = vset.pattern.permute.xlu0 1
        %3933 = vperm.xlu0 %3932, %v2767
        %v3934 = vpop.permute.xlu0 %3933
        %3936 = vset.pattern.permute.xlu0 1
        %3937 = vperm.xlu0 %3936, %v2768
        %v3938 = vpop.permute.xlu0 %3937
        %3940 = vset.pattern.permute.xlu0 1
        %3941 = vperm.xlu0 %3940, %v2769
        %v3942 = vpop.permute.xlu0 %3941
        %3944 = vset.pattern.permute.xlu0 1
        %3945 = vperm.xlu0 %3944, %v2770
        %v3946 = vpop.permute.xlu0 %3945
        %3948 = vset.pattern.permute.xlu0 1
        %3949 = vperm.xlu0 %3948, %v2771
        %v3950 = vpop.permute.xlu0 %3949
        %3952 = vset.pattern.permute.xlu0 1
        %3953 = vperm.xlu0 %3952, %v2772
        %v3954 = vpop.permute.xlu0 %3953
        %3956 = vset.pattern.permute.xlu0 1
        %3957 = vperm.xlu0 %3956, %v2773
        %v3958 = vpop.permute.xlu0 %3957
        %3960 = vset.pattern.permute.xlu0 1
        %3961 = vperm.xlu0 %3960, %v2774
        %v3962 = vpop.permute.xlu0 %3961
        %3964 = vset.pattern.permute.xlu0 1
        %3965 = vperm.xlu0 %3964, %v2775
        %v3966 = vpop.permute.xlu0 %3965
        %3968 = vset.pattern.permute.xlu0 1
        %3969 = vperm.xlu0 %3968, %v2776
        %v3970 = vpop.permute.xlu0 %3969
        %3972 = vset.pattern.permute.xlu0 1
        %3973 = vperm.xlu0 %3972, %v2777
        %v3974 = vpop.permute.xlu0 %3973
        %3976 = vset.pattern.permute.xlu0 1
        %3977 = vperm.xlu0 %3976, %v2778
        %v3978 = vpop.permute.xlu0 %3977
        %3980 = vset.pattern.permute.xlu0 1
        %3981 = vperm.xlu0 %3980, %v2779
        %v3982 = vpop.permute.xlu0 %3981
        %3984 = vset.pattern.permute.xlu0 1
        %3985 = vperm.xlu0 %3984, %v2780
        %v3986 = vpop.permute.xlu0 %3985
        %3988 = vset.pattern.permute.xlu0 1
        %3989 = vperm.xlu0 %3988, %v2781
        %v3990 = vpop.permute.xlu0 %3989
        %3992 = vset.pattern.permute.xlu0 1
        %3993 = vperm.xlu0 %3992, %v2782
        %v3994 = vpop.permute.xlu0 %3993
        %3996 = vset.pattern.permute.xlu0 1
        %3997 = vperm.xlu0 %3996, %v2783
        %v3998 = vpop.permute.xlu0 %3997
        %4000 = vset.pattern.permute.xlu0 1
        %4001 = vperm.xlu0 %4000, %v2784
        %v4002 = vpop.permute.xlu0 %4001
        %4004 = vset.pattern.permute.xlu0 1
        %4005 = vperm.xlu0 %4004, %v2785
        %v4006 = vpop.permute.xlu0 %4005
        %4008 = vset.pattern.permute.xlu0 1
        %4009 = vperm.xlu0 %4008, %v2786
        %v4010 = vpop.permute.xlu0 %4009
        %4012 = vset.pattern.permute.xlu0 1
        %4013 = vperm.xlu0 %4012, %v2787
        %v4014 = vpop.permute.xlu0 %4013
        %4016 = vset.pattern.permute.xlu0 1
        %4017 = vperm.xlu0 %4016, %v2788
        %v4018 = vpop.permute.xlu0 %4017
        %4020 = vset.pattern.permute.xlu0 1
        %4021 = vperm.xlu0 %4020, %v2789
        %v4022 = vpop.permute.xlu0 %4021
        %4024 = vset.pattern.permute.xlu0 1
        %4025 = vperm.xlu0 %4024, %v2790
        %v4026 = vpop.permute.xlu0 %4025
        %4028 = vset.pattern.permute.xlu0 1
        %4029 = vperm.xlu0 %4028, %v2791
        %v4030 = vpop.permute.xlu0 %4029
        %4032 = vset.pattern.permute.xlu0 1
        %4033 = vperm.xlu0 %4032, %v2792
        %v4034 = vpop.permute.xlu0 %4033
        %4036 = vset.pattern.permute.xlu0 1
        %4037 = vperm.xlu0 %4036, %v2793
        %v4038 = vpop.permute.xlu0 %4037
        %4040 = vset.pattern.permute.xlu0 1
        %4041 = vperm.xlu0 %4040, %v2794
        %v4042 = vpop.permute.xlu0 %4041
        %4044 = vset.pattern.permute.xlu0 1
        %4045 = vperm.xlu0 %4044, %v2795
        %v4046 = vpop.permute.xlu0 %4045
        %4048 = vset.pattern.permute.xlu0 1
        %4049 = vperm.xlu0 %4048, %v2796
        %v4050 = vpop.permute.xlu0 %4049
        %4052 = vset.pattern.permute.xlu0 1
        %4053 = vperm.xlu0 %4052, %v2797
        %v4054 = vpop.permute.xlu0 %4053
        %4056 = vset.pattern.permute.xlu0 1
        %4057 = vperm.xlu0 %4056, %v2798
        %v4058 = vpop.permute.xlu0 %4057
        %4060 = vset.pattern.permute.xlu0 1
        %4061 = vperm.xlu0 %4060, %v2799
        %v4062 = vpop.permute.xlu0 %4061
        %4064 = vset.pattern.permute.xlu0 1
        %4065 = vperm.xlu0 %4064, %v2800
        %v4066 = vpop.permute.xlu0 %4065
        %4068 = vset.pattern.permute.xlu0 1
        %4069 = vperm.xlu0 %4068, %v2801
        %v4070 = vpop.permute.xlu0 %4069
        %4072 = vset.pattern.permute.xlu0 1
        %4073 = vperm.xlu0 %4072, %v2802
        %v4074 = vpop.permute.xlu0 %4073
        %4076 = vset.pattern.permute.xlu0 1
        %4077 = vperm.xlu0 %4076, %v2803
        %v4078 = vpop.permute.xlu0 %4077
        %4080 = vset.pattern.permute.xlu0 1
        %4081 = vperm.xlu0 %4080, %v2804
        %v4082 = vpop.permute.xlu0 %4081
        %4084 = vset.pattern.permute.xlu0 1
        %4085 = vperm.xlu0 %4084, %v2805
        %v4086 = vpop.permute.xlu0 %4085
        %4088 = vset.pattern.permute.xlu0 1
        %4089 = vperm.xlu0 %4088, %v2806
        %v4090 = vpop.permute.xlu0 %4089
        %v4092 = vlaneseq
        %v4093 = vshrl.u32 %v4092, 7
        %v4094 = vsub.s32 1, %v4093
        %v4095 = vrot.slane %v2807, %v4094
        %v4096 = vmul.f32 %v3582, %v4095
        %v4097 = vmul.f32 %v3586, %v4095
        %v4098 = vmul.f32 %v3590, %v4095
        %v4099 = vmul.f32 %v3594, %v4095
        %v4100 = vmul.f32 %v3598, %v4095
        %v4101 = vmul.f32 %v3602, %v4095
        %v4102 = vmul.f32 %v3606, %v4095
        %v4103 = vmul.f32 %v3610, %v4095
        %v4104 = vmul.f32 %v3614, %v4095
        %v4105 = vmul.f32 %v3618, %v4095
        %v4106 = vmul.f32 %v3622, %v4095
        %v4107 = vmul.f32 %v3626, %v4095
        %v4108 = vmul.f32 %v3630, %v4095
        %v4109 = vmul.f32 %v3634, %v4095
        %v4110 = vmul.f32 %v3638, %v4095
        %v4111 = vmul.f32 %v3642, %v4095
        %v4112 = vmul.f32 %v3646, %v4095
        %v4113 = vmul.f32 %v3650, %v4095
        %v4114 = vmul.f32 %v3654, %v4095
        %v4115 = vmul.f32 %v3658, %v4095
        %v4116 = vmul.f32 %v3662, %v4095
        %v4117 = vmul.f32 %v3666, %v4095
        %v4118 = vmul.f32 %v3670, %v4095
        %v4119 = vmul.f32 %v3674, %v4095
        %v4120 = vmul.f32 %v3678, %v4095
        %v4121 = vmul.f32 %v3682, %v4095
        %v4122 = vmul.f32 %v3686, %v4095
        %v4123 = vmul.f32 %v3690, %v4095
        %v4124 = vmul.f32 %v3694, %v4095
        %v4125 = vmul.f32 %v3698, %v4095
        %v4126 = vmul.f32 %v3702, %v4095
        %v4127 = vmul.f32 %v3706, %v4095
        %v4128 = vmul.f32 %v3710, %v4095
        %v4129 = vmul.f32 %v3714, %v4095
        %v4130 = vmul.f32 %v3718, %v4095
        %v4131 = vmul.f32 %v3722, %v4095
        %v4132 = vmul.f32 %v3726, %v4095
        %v4133 = vmul.f32 %v3730, %v4095
        %v4134 = vmul.f32 %v3734, %v4095
        %v4135 = vmul.f32 %v3738, %v4095
        %v4136 = vmul.f32 %v3742, %v4095
        %v4137 = vmul.f32 %v3746, %v4095
        %v4138 = vmul.f32 %v3750, %v4095
        %v4139 = vmul.f32 %v3754, %v4095
        %v4140 = vmul.f32 %v3758, %v4095
        %v4141 = vmul.f32 %v3762, %v4095
        %v4142 = vmul.f32 %v3766, %v4095
        %v4143 = vmul.f32 %v3770, %v4095
        %v4144 = vmul.f32 %v3774, %v4095
        %v4145 = vmul.f32 %v3778, %v4095
        %v4146 = vmul.f32 %v3782, %v4095
        %v4147 = vmul.f32 %v3786, %v4095
        %v4148 = vmul.f32 %v3790, %v4095
        %v4149 = vmul.f32 %v3794, %v4095
        %v4150 = vmul.f32 %v3798, %v4095
        %v4151 = vmul.f32 %v3802, %v4095
        %v4152 = vmul.f32 %v3806, %v4095
        %v4153 = vmul.f32 %v3810, %v4095
        %v4154 = vmul.f32 %v3814, %v4095
        %v4155 = vmul.f32 %v3818, %v4095
        %v4156 = vmul.f32 %v3822, %v4095
        %v4157 = vmul.f32 %v3826, %v4095
        %v4158 = vmul.f32 %v3830, %v4095
        %v4159 = vmul.f32 %v3834, %v4095
        %v4160 = vmul.f32 %v3838, %v4095
        %v4161 = vmul.f32 %v3842, %v4095
        %v4162 = vmul.f32 %v3846, %v4095
        %v4163 = vmul.f32 %v3850, %v4095
        %v4164 = vmul.f32 %v3854, %v4095
        %v4165 = vmul.f32 %v3858, %v4095
        %v4166 = vmul.f32 %v3862, %v4095
        %v4167 = vmul.f32 %v3866, %v4095
        %v4168 = vmul.f32 %v3870, %v4095
        %v4169 = vmul.f32 %v3874, %v4095
        %v4170 = vmul.f32 %v3878, %v4095
        %v4171 = vmul.f32 %v3882, %v4095
        %v4172 = vmul.f32 %v3886, %v4095
        %v4173 = vmul.f32 %v3890, %v4095
        %v4174 = vmul.f32 %v3894, %v4095
        %v4175 = vmul.f32 %v3898, %v4095
        %v4176 = vmul.f32 %v3902, %v4095
        %v4177 = vmul.f32 %v3906, %v4095
        %v4178 = vmul.f32 %v3910, %v4095
        %v4179 = vmul.f32 %v3914, %v4095
        %v4180 = vmul.f32 %v3918, %v4095
        %v4181 = vmul.f32 %v3922, %v4095
        %v4182 = vmul.f32 %v3926, %v4095
        %v4183 = vmul.f32 %v3930, %v4095
        %v4184 = vmul.f32 %v3934, %v4095
        %v4185 = vmul.f32 %v3938, %v4095
        %v4186 = vmul.f32 %v3942, %v4095
        %v4187 = vmul.f32 %v3946, %v4095
        %v4188 = vmul.f32 %v3950, %v4095
        %v4189 = vmul.f32 %v3954, %v4095
        %v4190 = vmul.f32 %v3958, %v4095
        %v4191 = vmul.f32 %v3962, %v4095
        %v4192 = vmul.f32 %v3966, %v4095
        %v4193 = vmul.f32 %v3970, %v4095
        %v4194 = vmul.f32 %v3974, %v4095
        %v4195 = vmul.f32 %v3978, %v4095
        %v4196 = vmul.f32 %v3982, %v4095
        %v4197 = vmul.f32 %v3986, %v4095
        %v4198 = vmul.f32 %v3990, %v4095
        %v4199 = vmul.f32 %v3994, %v4095
        %v4200 = vmul.f32 %v3998, %v4095
        %v4201 = vmul.f32 %v4002, %v4095
        %v4202 = vmul.f32 %v4006, %v4095
        %v4203 = vmul.f32 %v4010, %v4095
        %v4204 = vmul.f32 %v4014, %v4095
        %v4205 = vmul.f32 %v4018, %v4095
        %v4206 = vmul.f32 %v4022, %v4095
        %v4207 = vmul.f32 %v4026, %v4095
        %v4208 = vmul.f32 %v4030, %v4095
        %v4209 = vmul.f32 %v4034, %v4095
        %v4210 = vmul.f32 %v4038, %v4095
        %v4211 = vmul.f32 %v4042, %v4095
        %v4212 = vmul.f32 %v4046, %v4095
        %v4213 = vmul.f32 %v4050, %v4095
        %v4214 = vmul.f32 %v4054, %v4095
        %v4215 = vmul.f32 %v4058, %v4095
        %v4216 = vmul.f32 %v4062, %v4095
        %v4217 = vmul.f32 %v4066, %v4095
        %v4218 = vmul.f32 %v4070, %v4095
        %v4219 = vmul.f32 %v4074, %v4095
        %v4220 = vmul.f32 %v4078, %v4095
        %v4221 = vmul.f32 %v4082, %v4095
        %v4222 = vmul.f32 %v4086, %v4095
        %v4223 = vmul.f32 %v4090, %v4095
        %v4224 = vadd.f32 %v3452, %v4096
        %v4225 = vadd.f32 %v3453, %v4097
        %v4226 = vadd.f32 %v3454, %v4098
        %v4227 = vadd.f32 %v3455, %v4099
        %v4228 = vadd.f32 %v3456, %v4100
        %v4229 = vadd.f32 %v3457, %v4101
        %v4230 = vadd.f32 %v3458, %v4102
        %v4231 = vadd.f32 %v3459, %v4103
        %v4232 = vadd.f32 %v3460, %v4104
        %v4233 = vadd.f32 %v3461, %v4105
        %v4234 = vadd.f32 %v3462, %v4106
        %v4235 = vadd.f32 %v3463, %v4107
        %v4236 = vadd.f32 %v3464, %v4108
        %v4237 = vadd.f32 %v3465, %v4109
        %v4238 = vadd.f32 %v3466, %v4110
        %v4239 = vadd.f32 %v3467, %v4111
        %v4240 = vadd.f32 %v3468, %v4112
        %v4241 = vadd.f32 %v3469, %v4113
        %v4242 = vadd.f32 %v3470, %v4114
        %v4243 = vadd.f32 %v3471, %v4115
        %v4244 = vadd.f32 %v3472, %v4116
        %v4245 = vadd.f32 %v3473, %v4117
        %v4246 = vadd.f32 %v3474, %v4118
        %v4247 = vadd.f32 %v3475, %v4119
        %v4248 = vadd.f32 %v3476, %v4120
        %v4249 = vadd.f32 %v3477, %v4121
        %v4250 = vadd.f32 %v3478, %v4122
        %v4251 = vadd.f32 %v3479, %v4123
        %v4252 = vadd.f32 %v3480, %v4124
        %v4253 = vadd.f32 %v3481, %v4125
        %v4254 = vadd.f32 %v3482, %v4126
        %v4255 = vadd.f32 %v3483, %v4127
        %v4256 = vadd.f32 %v3484, %v4128
        %v4257 = vadd.f32 %v3485, %v4129
        %v4258 = vadd.f32 %v3486, %v4130
        %v4259 = vadd.f32 %v3487, %v4131
        %v4260 = vadd.f32 %v3488, %v4132
        %v4261 = vadd.f32 %v3489, %v4133
        %v4262 = vadd.f32 %v3490, %v4134
        %v4263 = vadd.f32 %v3491, %v4135
        %v4264 = vadd.f32 %v3492, %v4136
        %v4265 = vadd.f32 %v3493, %v4137
        %v4266 = vadd.f32 %v3494, %v4138
        %v4267 = vadd.f32 %v3495, %v4139
        %v4268 = vadd.f32 %v3496, %v4140
        %v4269 = vadd.f32 %v3497, %v4141
        %v4270 = vadd.f32 %v3498, %v4142
        %v4271 = vadd.f32 %v3499, %v4143
        %v4272 = vadd.f32 %v3500, %v4144
        %v4273 = vadd.f32 %v3501, %v4145
        %v4274 = vadd.f32 %v3502, %v4146
        %v4275 = vadd.f32 %v3503, %v4147
        %v4276 = vadd.f32 %v3504, %v4148
        %v4277 = vadd.f32 %v3505, %v4149
        %v4278 = vadd.f32 %v3506, %v4150
        %v4279 = vadd.f32 %v3507, %v4151
        %v4280 = vadd.f32 %v3508, %v4152
        %v4281 = vadd.f32 %v3509, %v4153
        %v4282 = vadd.f32 %v3510, %v4154
        %v4283 = vadd.f32 %v3511, %v4155
        %v4284 = vadd.f32 %v3512, %v4156
        %v4285 = vadd.f32 %v3513, %v4157
        %v4286 = vadd.f32 %v3514, %v4158
        %v4287 = vadd.f32 %v3515, %v4159
        %v4288 = vadd.f32 %v3516, %v4160
        %v4289 = vadd.f32 %v3517, %v4161
        %v4290 = vadd.f32 %v3518, %v4162
        %v4291 = vadd.f32 %v3519, %v4163
        %v4292 = vadd.f32 %v3520, %v4164
        %v4293 = vadd.f32 %v3521, %v4165
        %v4294 = vadd.f32 %v3522, %v4166
        %v4295 = vadd.f32 %v3523, %v4167
        %v4296 = vadd.f32 %v3524, %v4168
        %v4297 = vadd.f32 %v3525, %v4169
        %v4298 = vadd.f32 %v3526, %v4170
        %v4299 = vadd.f32 %v3527, %v4171
        %v4300 = vadd.f32 %v3528, %v4172
        %v4301 = vadd.f32 %v3529, %v4173
        %v4302 = vadd.f32 %v3530, %v4174
        %v4303 = vadd.f32 %v3531, %v4175
        %v4304 = vadd.f32 %v3532, %v4176
        %v4305 = vadd.f32 %v3533, %v4177
        %v4306 = vadd.f32 %v3534, %v4178
        %v4307 = vadd.f32 %v3535, %v4179
        %v4308 = vadd.f32 %v3536, %v4180
        %v4309 = vadd.f32 %v3537, %v4181
        %v4310 = vadd.f32 %v3538, %v4182
        %v4311 = vadd.f32 %v3539, %v4183
        %v4312 = vadd.f32 %v3540, %v4184
        %v4313 = vadd.f32 %v3541, %v4185
        %v4314 = vadd.f32 %v3542, %v4186
        %v4315 = vadd.f32 %v3543, %v4187
        %v4316 = vadd.f32 %v3544, %v4188
        %v4317 = vadd.f32 %v3545, %v4189
        %v4318 = vadd.f32 %v3546, %v4190
        %v4319 = vadd.f32 %v3547, %v4191
        %v4320 = vadd.f32 %v3548, %v4192
        %v4321 = vadd.f32 %v3549, %v4193
        %v4322 = vadd.f32 %v3550, %v4194
        %v4323 = vadd.f32 %v3551, %v4195
        %v4324 = vadd.f32 %v3552, %v4196
        %v4325 = vadd.f32 %v3553, %v4197
        %v4326 = vadd.f32 %v3554, %v4198
        %v4327 = vadd.f32 %v3555, %v4199
        %v4328 = vadd.f32 %v3556, %v4200
        %v4329 = vadd.f32 %v3557, %v4201
        %v4330 = vadd.f32 %v3558, %v4202
        %v4331 = vadd.f32 %v3559, %v4203
        %v4332 = vadd.f32 %v3560, %v4204
        %v4333 = vadd.f32 %v3561, %v4205
        %v4334 = vadd.f32 %v3562, %v4206
        %v4335 = vadd.f32 %v3563, %v4207
        %v4336 = vadd.f32 %v3564, %v4208
        %v4337 = vadd.f32 %v3565, %v4209
        %v4338 = vadd.f32 %v3566, %v4210
        %v4339 = vadd.f32 %v3567, %v4211
        %v4340 = vadd.f32 %v3568, %v4212
        %v4341 = vadd.f32 %v3569, %v4213
        %v4342 = vadd.f32 %v3570, %v4214
        %v4343 = vadd.f32 %v3571, %v4215
        %v4344 = vadd.f32 %v3572, %v4216
        %v4345 = vadd.f32 %v3573, %v4217
        %v4346 = vadd.f32 %v3574, %v4218
        %v4347 = vadd.f32 %v3575, %v4219
        %v4348 = vadd.f32 %v3576, %v4220
        %v4349 = vadd.f32 %v3577, %v4221
        %v4350 = vadd.f32 %v3578, %v4222
        %v4351 = vadd.f32 %v3579, %v4223
        %4352 = vset.pattern.permute.xlu0 2
        %4353 = vperm.xlu0 %4352, %v2679
        %v4354 = vpop.permute.xlu0 %4353
        %4356 = vset.pattern.permute.xlu0 2
        %4357 = vperm.xlu0 %4356, %v2680
        %v4358 = vpop.permute.xlu0 %4357
        %4360 = vset.pattern.permute.xlu0 2
        %4361 = vperm.xlu0 %4360, %v2681
        %v4362 = vpop.permute.xlu0 %4361
        %4364 = vset.pattern.permute.xlu0 2
        %4365 = vperm.xlu0 %4364, %v2682
        %v4366 = vpop.permute.xlu0 %4365
        %4368 = vset.pattern.permute.xlu0 2
        %4369 = vperm.xlu0 %4368, %v2683
        %v4370 = vpop.permute.xlu0 %4369
        %4372 = vset.pattern.permute.xlu0 2
        %4373 = vperm.xlu0 %4372, %v2684
        %v4374 = vpop.permute.xlu0 %4373
        %4376 = vset.pattern.permute.xlu0 2
        %4377 = vperm.xlu0 %4376, %v2685
        %v4378 = vpop.permute.xlu0 %4377
        %4380 = vset.pattern.permute.xlu0 2
        %4381 = vperm.xlu0 %4380, %v2686
        %v4382 = vpop.permute.xlu0 %4381
        %4384 = vset.pattern.permute.xlu0 2
        %4385 = vperm.xlu0 %4384, %v2687
        %v4386 = vpop.permute.xlu0 %4385
        %4388 = vset.pattern.permute.xlu0 2
        %4389 = vperm.xlu0 %4388, %v2688
        %v4390 = vpop.permute.xlu0 %4389
        %4392 = vset.pattern.permute.xlu0 2
        %4393 = vperm.xlu0 %4392, %v2689
        %v4394 = vpop.permute.xlu0 %4393
        %4396 = vset.pattern.permute.xlu0 2
        %4397 = vperm.xlu0 %4396, %v2690
        %v4398 = vpop.permute.xlu0 %4397
        %4400 = vset.pattern.permute.xlu0 2
        %4401 = vperm.xlu0 %4400, %v2691
        %v4402 = vpop.permute.xlu0 %4401
        %4404 = vset.pattern.permute.xlu0 2
        %4405 = vperm.xlu0 %4404, %v2692
        %v4406 = vpop.permute.xlu0 %4405
        %4408 = vset.pattern.permute.xlu0 2
        %4409 = vperm.xlu0 %4408, %v2693
        %v4410 = vpop.permute.xlu0 %4409
        %4412 = vset.pattern.permute.xlu0 2
        %4413 = vperm.xlu0 %4412, %v2694
        %v4414 = vpop.permute.xlu0 %4413
        %4416 = vset.pattern.permute.xlu0 2
        %4417 = vperm.xlu0 %4416, %v2695
        %v4418 = vpop.permute.xlu0 %4417
        %4420 = vset.pattern.permute.xlu0 2
        %4421 = vperm.xlu0 %4420, %v2696
        %v4422 = vpop.permute.xlu0 %4421
        %4424 = vset.pattern.permute.xlu0 2
        %4425 = vperm.xlu0 %4424, %v2697
        %v4426 = vpop.permute.xlu0 %4425
        %4428 = vset.pattern.permute.xlu0 2
        %4429 = vperm.xlu0 %4428, %v2698
        %v4430 = vpop.permute.xlu0 %4429
        %4432 = vset.pattern.permute.xlu0 2
        %4433 = vperm.xlu0 %4432, %v2699
        %v4434 = vpop.permute.xlu0 %4433
        %4436 = vset.pattern.permute.xlu0 2
        %4437 = vperm.xlu0 %4436, %v2700
        %v4438 = vpop.permute.xlu0 %4437
        %4440 = vset.pattern.permute.xlu0 2
        %4441 = vperm.xlu0 %4440, %v2701
        %v4442 = vpop.permute.xlu0 %4441
        %4444 = vset.pattern.permute.xlu0 2
        %4445 = vperm.xlu0 %4444, %v2702
        %v4446 = vpop.permute.xlu0 %4445
        %4448 = vset.pattern.permute.xlu0 2
        %4449 = vperm.xlu0 %4448, %v2703
        %v4450 = vpop.permute.xlu0 %4449
        %4452 = vset.pattern.permute.xlu0 2
        %4453 = vperm.xlu0 %4452, %v2704
        %v4454 = vpop.permute.xlu0 %4453
        %4456 = vset.pattern.permute.xlu0 2
        %4457 = vperm.xlu0 %4456, %v2705
        %v4458 = vpop.permute.xlu0 %4457
        %4460 = vset.pattern.permute.xlu0 2
        %4461 = vperm.xlu0 %4460, %v2706
        %v4462 = vpop.permute.xlu0 %4461
        %4464 = vset.pattern.permute.xlu0 2
        %4465 = vperm.xlu0 %4464, %v2707
        %v4466 = vpop.permute.xlu0 %4465
        %4468 = vset.pattern.permute.xlu0 2
        %4469 = vperm.xlu0 %4468, %v2708
        %v4470 = vpop.permute.xlu0 %4469
        %4472 = vset.pattern.permute.xlu0 2
        %4473 = vperm.xlu0 %4472, %v2709
        %v4474 = vpop.permute.xlu0 %4473
        %4476 = vset.pattern.permute.xlu0 2
        %4477 = vperm.xlu0 %4476, %v2710
        %v4478 = vpop.permute.xlu0 %4477
        %4480 = vset.pattern.permute.xlu0 2
        %4481 = vperm.xlu0 %4480, %v2711
        %v4482 = vpop.permute.xlu0 %4481
        %4484 = vset.pattern.permute.xlu0 2
        %4485 = vperm.xlu0 %4484, %v2712
        %v4486 = vpop.permute.xlu0 %4485
        %4488 = vset.pattern.permute.xlu0 2
        %4489 = vperm.xlu0 %4488, %v2713
        %v4490 = vpop.permute.xlu0 %4489
        %4492 = vset.pattern.permute.xlu0 2
        %4493 = vperm.xlu0 %4492, %v2714
        %v4494 = vpop.permute.xlu0 %4493
        %4496 = vset.pattern.permute.xlu0 2
        %4497 = vperm.xlu0 %4496, %v2715
        %v4498 = vpop.permute.xlu0 %4497
        %4500 = vset.pattern.permute.xlu0 2
        %4501 = vperm.xlu0 %4500, %v2716
        %v4502 = vpop.permute.xlu0 %4501
        %4504 = vset.pattern.permute.xlu0 2
        %4505 = vperm.xlu0 %4504, %v2717
        %v4506 = vpop.permute.xlu0 %4505
        %4508 = vset.pattern.permute.xlu0 2
        %4509 = vperm.xlu0 %4508, %v2718
        %v4510 = vpop.permute.xlu0 %4509
        %4512 = vset.pattern.permute.xlu0 2
        %4513 = vperm.xlu0 %4512, %v2719
        %v4514 = vpop.permute.xlu0 %4513
        %4516 = vset.pattern.permute.xlu0 2
        %4517 = vperm.xlu0 %4516, %v2720
        %v4518 = vpop.permute.xlu0 %4517
        %4520 = vset.pattern.permute.xlu0 2
        %4521 = vperm.xlu0 %4520, %v2721
        %v4522 = vpop.permute.xlu0 %4521
        %4524 = vset.pattern.permute.xlu0 2
        %4525 = vperm.xlu0 %4524, %v2722
        %v4526 = vpop.permute.xlu0 %4525
        %4528 = vset.pattern.permute.xlu0 2
        %4529 = vperm.xlu0 %4528, %v2723
        %v4530 = vpop.permute.xlu0 %4529
        %4532 = vset.pattern.permute.xlu0 2
        %4533 = vperm.xlu0 %4532, %v2724
        %v4534 = vpop.permute.xlu0 %4533
        %4536 = vset.pattern.permute.xlu0 2
        %4537 = vperm.xlu0 %4536, %v2725
        %v4538 = vpop.permute.xlu0 %4537
        %4540 = vset.pattern.permute.xlu0 2
        %4541 = vperm.xlu0 %4540, %v2726
        %v4542 = vpop.permute.xlu0 %4541
        %4544 = vset.pattern.permute.xlu0 2
        %4545 = vperm.xlu0 %4544, %v2727
        %v4546 = vpop.permute.xlu0 %4545
        %4548 = vset.pattern.permute.xlu0 2
        %4549 = vperm.xlu0 %4548, %v2728
        %v4550 = vpop.permute.xlu0 %4549
        %4552 = vset.pattern.permute.xlu0 2
        %4553 = vperm.xlu0 %4552, %v2729
        %v4554 = vpop.permute.xlu0 %4553
        %4556 = vset.pattern.permute.xlu0 2
        %4557 = vperm.xlu0 %4556, %v2730
        %v4558 = vpop.permute.xlu0 %4557
        %4560 = vset.pattern.permute.xlu0 2
        %4561 = vperm.xlu0 %4560, %v2731
        %v4562 = vpop.permute.xlu0 %4561
        %4564 = vset.pattern.permute.xlu0 2
        %4565 = vperm.xlu0 %4564, %v2732
        %v4566 = vpop.permute.xlu0 %4565
        %4568 = vset.pattern.permute.xlu0 2
        %4569 = vperm.xlu0 %4568, %v2733
        %v4570 = vpop.permute.xlu0 %4569
        %4572 = vset.pattern.permute.xlu0 2
        %4573 = vperm.xlu0 %4572, %v2734
        %v4574 = vpop.permute.xlu0 %4573
        %4576 = vset.pattern.permute.xlu0 2
        %4577 = vperm.xlu0 %4576, %v2735
        %v4578 = vpop.permute.xlu0 %4577
        %4580 = vset.pattern.permute.xlu0 2
        %4581 = vperm.xlu0 %4580, %v2736
        %v4582 = vpop.permute.xlu0 %4581
        %4584 = vset.pattern.permute.xlu0 2
        %4585 = vperm.xlu0 %4584, %v2737
        %v4586 = vpop.permute.xlu0 %4585
        %4588 = vset.pattern.permute.xlu0 2
        %4589 = vperm.xlu0 %4588, %v2738
        %v4590 = vpop.permute.xlu0 %4589
        %4592 = vset.pattern.permute.xlu0 2
        %4593 = vperm.xlu0 %4592, %v2739
        %v4594 = vpop.permute.xlu0 %4593
        %4596 = vset.pattern.permute.xlu0 2
        %4597 = vperm.xlu0 %4596, %v2740
        %v4598 = vpop.permute.xlu0 %4597
        %4600 = vset.pattern.permute.xlu0 2
        %4601 = vperm.xlu0 %4600, %v2741
        %v4602 = vpop.permute.xlu0 %4601
        %4604 = vset.pattern.permute.xlu0 2
        %4605 = vperm.xlu0 %4604, %v2742
        %v4606 = vpop.permute.xlu0 %4605
        %4608 = vset.pattern.permute.xlu0 2
        %4609 = vperm.xlu0 %4608, %v2743
        %v4610 = vpop.permute.xlu0 %4609
        %4612 = vset.pattern.permute.xlu0 2
        %4613 = vperm.xlu0 %4612, %v2744
        %v4614 = vpop.permute.xlu0 %4613
        %4616 = vset.pattern.permute.xlu0 2
        %4617 = vperm.xlu0 %4616, %v2745
        %v4618 = vpop.permute.xlu0 %4617
        %4620 = vset.pattern.permute.xlu0 2
        %4621 = vperm.xlu0 %4620, %v2746
        %v4622 = vpop.permute.xlu0 %4621
        %4624 = vset.pattern.permute.xlu0 2
        %4625 = vperm.xlu0 %4624, %v2747
        %v4626 = vpop.permute.xlu0 %4625
        %4628 = vset.pattern.permute.xlu0 2
        %4629 = vperm.xlu0 %4628, %v2748
        %v4630 = vpop.permute.xlu0 %4629
        %4632 = vset.pattern.permute.xlu0 2
        %4633 = vperm.xlu0 %4632, %v2749
        %v4634 = vpop.permute.xlu0 %4633
        %4636 = vset.pattern.permute.xlu0 2
        %4637 = vperm.xlu0 %4636, %v2750
        %v4638 = vpop.permute.xlu0 %4637
        %4640 = vset.pattern.permute.xlu0 2
        %4641 = vperm.xlu0 %4640, %v2751
        %v4642 = vpop.permute.xlu0 %4641
        %4644 = vset.pattern.permute.xlu0 2
        %4645 = vperm.xlu0 %4644, %v2752
        %v4646 = vpop.permute.xlu0 %4645
        %4648 = vset.pattern.permute.xlu0 2
        %4649 = vperm.xlu0 %4648, %v2753
        %v4650 = vpop.permute.xlu0 %4649
        %4652 = vset.pattern.permute.xlu0 2
        %4653 = vperm.xlu0 %4652, %v2754
        %v4654 = vpop.permute.xlu0 %4653
        %4656 = vset.pattern.permute.xlu0 2
        %4657 = vperm.xlu0 %4656, %v2755
        %v4658 = vpop.permute.xlu0 %4657
        %4660 = vset.pattern.permute.xlu0 2
        %4661 = vperm.xlu0 %4660, %v2756
        %v4662 = vpop.permute.xlu0 %4661
        %4664 = vset.pattern.permute.xlu0 2
        %4665 = vperm.xlu0 %4664, %v2757
        %v4666 = vpop.permute.xlu0 %4665
        %4668 = vset.pattern.permute.xlu0 2
        %4669 = vperm.xlu0 %4668, %v2758
        %v4670 = vpop.permute.xlu0 %4669
        %4672 = vset.pattern.permute.xlu0 2
        %4673 = vperm.xlu0 %4672, %v2759
        %v4674 = vpop.permute.xlu0 %4673
        %4676 = vset.pattern.permute.xlu0 2
        %4677 = vperm.xlu0 %4676, %v2760
        %v4678 = vpop.permute.xlu0 %4677
        %4680 = vset.pattern.permute.xlu0 2
        %4681 = vperm.xlu0 %4680, %v2761
        %v4682 = vpop.permute.xlu0 %4681
        %4684 = vset.pattern.permute.xlu0 2
        %4685 = vperm.xlu0 %4684, %v2762
        %v4686 = vpop.permute.xlu0 %4685
        %4688 = vset.pattern.permute.xlu0 2
        %4689 = vperm.xlu0 %4688, %v2763
        %v4690 = vpop.permute.xlu0 %4689
        %4692 = vset.pattern.permute.xlu0 2
        %4693 = vperm.xlu0 %4692, %v2764
        %v4694 = vpop.permute.xlu0 %4693
        %4696 = vset.pattern.permute.xlu0 2
        %4697 = vperm.xlu0 %4696, %v2765
        %v4698 = vpop.permute.xlu0 %4697
        %4700 = vset.pattern.permute.xlu0 2
        %4701 = vperm.xlu0 %4700, %v2766
        %v4702 = vpop.permute.xlu0 %4701
        %4704 = vset.pattern.permute.xlu0 2
        %4705 = vperm.xlu0 %4704, %v2767
        %v4706 = vpop.permute.xlu0 %4705
        %4708 = vset.pattern.permute.xlu0 2
        %4709 = vperm.xlu0 %4708, %v2768
        %v4710 = vpop.permute.xlu0 %4709
        %4712 = vset.pattern.permute.xlu0 2
        %4713 = vperm.xlu0 %4712, %v2769
        %v4714 = vpop.permute.xlu0 %4713
        %4716 = vset.pattern.permute.xlu0 2
        %4717 = vperm.xlu0 %4716, %v2770
        %v4718 = vpop.permute.xlu0 %4717
        %4720 = vset.pattern.permute.xlu0 2
        %4721 = vperm.xlu0 %4720, %v2771
        %v4722 = vpop.permute.xlu0 %4721
        %4724 = vset.pattern.permute.xlu0 2
        %4725 = vperm.xlu0 %4724, %v2772
        %v4726 = vpop.permute.xlu0 %4725
        %4728 = vset.pattern.permute.xlu0 2
        %4729 = vperm.xlu0 %4728, %v2773
        %v4730 = vpop.permute.xlu0 %4729
        %4732 = vset.pattern.permute.xlu0 2
        %4733 = vperm.xlu0 %4732, %v2774
        %v4734 = vpop.permute.xlu0 %4733
        %4736 = vset.pattern.permute.xlu0 2
        %4737 = vperm.xlu0 %4736, %v2775
        %v4738 = vpop.permute.xlu0 %4737
        %4740 = vset.pattern.permute.xlu0 2
        %4741 = vperm.xlu0 %4740, %v2776
        %v4742 = vpop.permute.xlu0 %4741
        %4744 = vset.pattern.permute.xlu0 2
        %4745 = vperm.xlu0 %4744, %v2777
        %v4746 = vpop.permute.xlu0 %4745
        %4748 = vset.pattern.permute.xlu0 2
        %4749 = vperm.xlu0 %4748, %v2778
        %v4750 = vpop.permute.xlu0 %4749
        %4752 = vset.pattern.permute.xlu0 2
        %4753 = vperm.xlu0 %4752, %v2779
        %v4754 = vpop.permute.xlu0 %4753
        %4756 = vset.pattern.permute.xlu0 2
        %4757 = vperm.xlu0 %4756, %v2780
        %v4758 = vpop.permute.xlu0 %4757
        %4760 = vset.pattern.permute.xlu0 2
        %4761 = vperm.xlu0 %4760, %v2781
        %v4762 = vpop.permute.xlu0 %4761
        %4764 = vset.pattern.permute.xlu0 2
        %4765 = vperm.xlu0 %4764, %v2782
        %v4766 = vpop.permute.xlu0 %4765
        %4768 = vset.pattern.permute.xlu0 2
        %4769 = vperm.xlu0 %4768, %v2783
        %v4770 = vpop.permute.xlu0 %4769
        %4772 = vset.pattern.permute.xlu0 2
        %4773 = vperm.xlu0 %4772, %v2784
        %v4774 = vpop.permute.xlu0 %4773
        %4776 = vset.pattern.permute.xlu0 2
        %4777 = vperm.xlu0 %4776, %v2785
        %v4778 = vpop.permute.xlu0 %4777
        %4780 = vset.pattern.permute.xlu0 2
        %4781 = vperm.xlu0 %4780, %v2786
        %v4782 = vpop.permute.xlu0 %4781
        %4784 = vset.pattern.permute.xlu0 2
        %4785 = vperm.xlu0 %4784, %v2787
        %v4786 = vpop.permute.xlu0 %4785
        %4788 = vset.pattern.permute.xlu0 2
        %4789 = vperm.xlu0 %4788, %v2788
        %v4790 = vpop.permute.xlu0 %4789
        %4792 = vset.pattern.permute.xlu0 2
        %4793 = vperm.xlu0 %4792, %v2789
        %v4794 = vpop.permute.xlu0 %4793
        %4796 = vset.pattern.permute.xlu0 2
        %4797 = vperm.xlu0 %4796, %v2790
        %v4798 = vpop.permute.xlu0 %4797
        %4800 = vset.pattern.permute.xlu0 2
        %4801 = vperm.xlu0 %4800, %v2791
        %v4802 = vpop.permute.xlu0 %4801
        %4804 = vset.pattern.permute.xlu0 2
        %4805 = vperm.xlu0 %4804, %v2792
        %v4806 = vpop.permute.xlu0 %4805
        %4808 = vset.pattern.permute.xlu0 2
        %4809 = vperm.xlu0 %4808, %v2793
        %v4810 = vpop.permute.xlu0 %4809
        %4812 = vset.pattern.permute.xlu0 2
        %4813 = vperm.xlu0 %4812, %v2794
        %v4814 = vpop.permute.xlu0 %4813
        %4816 = vset.pattern.permute.xlu0 2
        %4817 = vperm.xlu0 %4816, %v2795
        %v4818 = vpop.permute.xlu0 %4817
        %4820 = vset.pattern.permute.xlu0 2
        %4821 = vperm.xlu0 %4820, %v2796
        %v4822 = vpop.permute.xlu0 %4821
        %4824 = vset.pattern.permute.xlu0 2
        %4825 = vperm.xlu0 %4824, %v2797
        %v4826 = vpop.permute.xlu0 %4825
        %4828 = vset.pattern.permute.xlu0 2
        %4829 = vperm.xlu0 %4828, %v2798
        %v4830 = vpop.permute.xlu0 %4829
        %4832 = vset.pattern.permute.xlu0 2
        %4833 = vperm.xlu0 %4832, %v2799
        %v4834 = vpop.permute.xlu0 %4833
        %4836 = vset.pattern.permute.xlu0 2
        %4837 = vperm.xlu0 %4836, %v2800
        %v4838 = vpop.permute.xlu0 %4837
        %4840 = vset.pattern.permute.xlu0 2
        %4841 = vperm.xlu0 %4840, %v2801
        %v4842 = vpop.permute.xlu0 %4841
        %4844 = vset.pattern.permute.xlu0 2
        %4845 = vperm.xlu0 %4844, %v2802
        %v4846 = vpop.permute.xlu0 %4845
        %4848 = vset.pattern.permute.xlu0 2
        %4849 = vperm.xlu0 %4848, %v2803
        %v4850 = vpop.permute.xlu0 %4849
        %4852 = vset.pattern.permute.xlu0 2
        %4853 = vperm.xlu0 %4852, %v2804
        %v4854 = vpop.permute.xlu0 %4853
        %4856 = vset.pattern.permute.xlu0 2
        %4857 = vperm.xlu0 %4856, %v2805
        %v4858 = vpop.permute.xlu0 %4857
        %4860 = vset.pattern.permute.xlu0 2
        %4861 = vperm.xlu0 %4860, %v2806
        %v4862 = vpop.permute.xlu0 %4861
        %v4864 = vlaneseq
        %v4865 = vshrl.u32 %v4864, 7
        %v4866 = vsub.s32 2, %v4865
        %v4867 = vrot.slane %v2807, %v4866
        %v4868 = vmul.f32 %v4354, %v4867
        %v4869 = vmul.f32 %v4358, %v4867
        %v4870 = vmul.f32 %v4362, %v4867
        %v4871 = vmul.f32 %v4366, %v4867
        %v4872 = vmul.f32 %v4370, %v4867
        %v4873 = vmul.f32 %v4374, %v4867
        %v4874 = vmul.f32 %v4378, %v4867
        %v4875 = vmul.f32 %v4382, %v4867
        %v4876 = vmul.f32 %v4386, %v4867
        %v4877 = vmul.f32 %v4390, %v4867
        %v4878 = vmul.f32 %v4394, %v4867
        %v4879 = vmul.f32 %v4398, %v4867
        %v4880 = vmul.f32 %v4402, %v4867
        %v4881 = vmul.f32 %v4406, %v4867
        %v4882 = vmul.f32 %v4410, %v4867
        %v4883 = vmul.f32 %v4414, %v4867
        %v4884 = vmul.f32 %v4418, %v4867
        %v4885 = vmul.f32 %v4422, %v4867
        %v4886 = vmul.f32 %v4426, %v4867
        %v4887 = vmul.f32 %v4430, %v4867
        %v4888 = vmul.f32 %v4434, %v4867
        %v4889 = vmul.f32 %v4438, %v4867
        %v4890 = vmul.f32 %v4442, %v4867
        %v4891 = vmul.f32 %v4446, %v4867
        %v4892 = vmul.f32 %v4450, %v4867
        %v4893 = vmul.f32 %v4454, %v4867
        %v4894 = vmul.f32 %v4458, %v4867
        %v4895 = vmul.f32 %v4462, %v4867
        %v4896 = vmul.f32 %v4466, %v4867
        %v4897 = vmul.f32 %v4470, %v4867
        %v4898 = vmul.f32 %v4474, %v4867
        %v4899 = vmul.f32 %v4478, %v4867
        %v4900 = vmul.f32 %v4482, %v4867
        %v4901 = vmul.f32 %v4486, %v4867
        %v4902 = vmul.f32 %v4490, %v4867
        %v4903 = vmul.f32 %v4494, %v4867
        %v4904 = vmul.f32 %v4498, %v4867
        %v4905 = vmul.f32 %v4502, %v4867
        %v4906 = vmul.f32 %v4506, %v4867
        %v4907 = vmul.f32 %v4510, %v4867
        %v4908 = vmul.f32 %v4514, %v4867
        %v4909 = vmul.f32 %v4518, %v4867
        %v4910 = vmul.f32 %v4522, %v4867
        %v4911 = vmul.f32 %v4526, %v4867
        %v4912 = vmul.f32 %v4530, %v4867
        %v4913 = vmul.f32 %v4534, %v4867
        %v4914 = vmul.f32 %v4538, %v4867
        %v4915 = vmul.f32 %v4542, %v4867
        %v4916 = vmul.f32 %v4546, %v4867
        %v4917 = vmul.f32 %v4550, %v4867
        %v4918 = vmul.f32 %v4554, %v4867
        %v4919 = vmul.f32 %v4558, %v4867
        %v4920 = vmul.f32 %v4562, %v4867
        %v4921 = vmul.f32 %v4566, %v4867
        %v4922 = vmul.f32 %v4570, %v4867
        %v4923 = vmul.f32 %v4574, %v4867
        %v4924 = vmul.f32 %v4578, %v4867
        %v4925 = vmul.f32 %v4582, %v4867
        %v4926 = vmul.f32 %v4586, %v4867
        %v4927 = vmul.f32 %v4590, %v4867
        %v4928 = vmul.f32 %v4594, %v4867
        %v4929 = vmul.f32 %v4598, %v4867
        %v4930 = vmul.f32 %v4602, %v4867
        %v4931 = vmul.f32 %v4606, %v4867
        %v4932 = vmul.f32 %v4610, %v4867
        %v4933 = vmul.f32 %v4614, %v4867
        %v4934 = vmul.f32 %v4618, %v4867
        %v4935 = vmul.f32 %v4622, %v4867
        %v4936 = vmul.f32 %v4626, %v4867
        %v4937 = vmul.f32 %v4630, %v4867
        %v4938 = vmul.f32 %v4634, %v4867
        %v4939 = vmul.f32 %v4638, %v4867
        %v4940 = vmul.f32 %v4642, %v4867
        %v4941 = vmul.f32 %v4646, %v4867
        %v4942 = vmul.f32 %v4650, %v4867
        %v4943 = vmul.f32 %v4654, %v4867
        %v4944 = vmul.f32 %v4658, %v4867
        %v4945 = vmul.f32 %v4662, %v4867
        %v4946 = vmul.f32 %v4666, %v4867
        %v4947 = vmul.f32 %v4670, %v4867
        %v4948 = vmul.f32 %v4674, %v4867
        %v4949 = vmul.f32 %v4678, %v4867
        %v4950 = vmul.f32 %v4682, %v4867
        %v4951 = vmul.f32 %v4686, %v4867
        %v4952 = vmul.f32 %v4690, %v4867
        %v4953 = vmul.f32 %v4694, %v4867
        %v4954 = vmul.f32 %v4698, %v4867
        %v4955 = vmul.f32 %v4702, %v4867
        %v4956 = vmul.f32 %v4706, %v4867
        %v4957 = vmul.f32 %v4710, %v4867
        %v4958 = vmul.f32 %v4714, %v4867
        %v4959 = vmul.f32 %v4718, %v4867
        %v4960 = vmul.f32 %v4722, %v4867
        %v4961 = vmul.f32 %v4726, %v4867
        %v4962 = vmul.f32 %v4730, %v4867
        %v4963 = vmul.f32 %v4734, %v4867
        %v4964 = vmul.f32 %v4738, %v4867
        %v4965 = vmul.f32 %v4742, %v4867
        %v4966 = vmul.f32 %v4746, %v4867
        %v4967 = vmul.f32 %v4750, %v4867
        %v4968 = vmul.f32 %v4754, %v4867
        %v4969 = vmul.f32 %v4758, %v4867
        %v4970 = vmul.f32 %v4762, %v4867
        %v4971 = vmul.f32 %v4766, %v4867
        %v4972 = vmul.f32 %v4770, %v4867
        %v4973 = vmul.f32 %v4774, %v4867
        %v4974 = vmul.f32 %v4778, %v4867
        %v4975 = vmul.f32 %v4782, %v4867
        %v4976 = vmul.f32 %v4786, %v4867
        %v4977 = vmul.f32 %v4790, %v4867
        %v4978 = vmul.f32 %v4794, %v4867
        %v4979 = vmul.f32 %v4798, %v4867
        %v4980 = vmul.f32 %v4802, %v4867
        %v4981 = vmul.f32 %v4806, %v4867
        %v4982 = vmul.f32 %v4810, %v4867
        %v4983 = vmul.f32 %v4814, %v4867
        %v4984 = vmul.f32 %v4818, %v4867
        %v4985 = vmul.f32 %v4822, %v4867
        %v4986 = vmul.f32 %v4826, %v4867
        %v4987 = vmul.f32 %v4830, %v4867
        %v4988 = vmul.f32 %v4834, %v4867
        %v4989 = vmul.f32 %v4838, %v4867
        %v4990 = vmul.f32 %v4842, %v4867
        %v4991 = vmul.f32 %v4846, %v4867
        %v4992 = vmul.f32 %v4850, %v4867
        %v4993 = vmul.f32 %v4854, %v4867
        %v4994 = vmul.f32 %v4858, %v4867
        %v4995 = vmul.f32 %v4862, %v4867
        %v4996 = vadd.f32 %v4224, %v4868
        %v4997 = vadd.f32 %v4225, %v4869
        %v4998 = vadd.f32 %v4226, %v4870
        %v4999 = vadd.f32 %v4227, %v4871
        %v5000 = vadd.f32 %v4228, %v4872
        %v5001 = vadd.f32 %v4229, %v4873
        %v5002 = vadd.f32 %v4230, %v4874
        %v5003 = vadd.f32 %v4231, %v4875
        %v5004 = vadd.f32 %v4232, %v4876
        %v5005 = vadd.f32 %v4233, %v4877
        %v5006 = vadd.f32 %v4234, %v4878
        %v5007 = vadd.f32 %v4235, %v4879
        %v5008 = vadd.f32 %v4236, %v4880
        %v5009 = vadd.f32 %v4237, %v4881
        %v5010 = vadd.f32 %v4238, %v4882
        %v5011 = vadd.f32 %v4239, %v4883
        %v5012 = vadd.f32 %v4240, %v4884
        %v5013 = vadd.f32 %v4241, %v4885
        %v5014 = vadd.f32 %v4242, %v4886
        %v5015 = vadd.f32 %v4243, %v4887
        %v5016 = vadd.f32 %v4244, %v4888
        %v5017 = vadd.f32 %v4245, %v4889
        %v5018 = vadd.f32 %v4246, %v4890
        %v5019 = vadd.f32 %v4247, %v4891
        %v5020 = vadd.f32 %v4248, %v4892
        %v5021 = vadd.f32 %v4249, %v4893
        %v5022 = vadd.f32 %v4250, %v4894
        %v5023 = vadd.f32 %v4251, %v4895
        %v5024 = vadd.f32 %v4252, %v4896
        %v5025 = vadd.f32 %v4253, %v4897
        %v5026 = vadd.f32 %v4254, %v4898
        %v5027 = vadd.f32 %v4255, %v4899
        %v5028 = vadd.f32 %v4256, %v4900
        %v5029 = vadd.f32 %v4257, %v4901
        %v5030 = vadd.f32 %v4258, %v4902
        %v5031 = vadd.f32 %v4259, %v4903
        %v5032 = vadd.f32 %v4260, %v4904
        %v5033 = vadd.f32 %v4261, %v4905
        %v5034 = vadd.f32 %v4262, %v4906
        %v5035 = vadd.f32 %v4263, %v4907
        %v5036 = vadd.f32 %v4264, %v4908
        %v5037 = vadd.f32 %v4265, %v4909
        %v5038 = vadd.f32 %v4266, %v4910
        %v5039 = vadd.f32 %v4267, %v4911
        %v5040 = vadd.f32 %v4268, %v4912
        %v5041 = vadd.f32 %v4269, %v4913
        %v5042 = vadd.f32 %v4270, %v4914
        %v5043 = vadd.f32 %v4271, %v4915
        %v5044 = vadd.f32 %v4272, %v4916
        %v5045 = vadd.f32 %v4273, %v4917
        %v5046 = vadd.f32 %v4274, %v4918
        %v5047 = vadd.f32 %v4275, %v4919
        %v5048 = vadd.f32 %v4276, %v4920
        %v5049 = vadd.f32 %v4277, %v4921
        %v5050 = vadd.f32 %v4278, %v4922
        %v5051 = vadd.f32 %v4279, %v4923
        %v5052 = vadd.f32 %v4280, %v4924
        %v5053 = vadd.f32 %v4281, %v4925
        %v5054 = vadd.f32 %v4282, %v4926
        %v5055 = vadd.f32 %v4283, %v4927
        %v5056 = vadd.f32 %v4284, %v4928
        %v5057 = vadd.f32 %v4285, %v4929
        %v5058 = vadd.f32 %v4286, %v4930
        %v5059 = vadd.f32 %v4287, %v4931
        %v5060 = vadd.f32 %v4288, %v4932
        %v5061 = vadd.f32 %v4289, %v4933
        %v5062 = vadd.f32 %v4290, %v4934
        %v5063 = vadd.f32 %v4291, %v4935
        %v5064 = vadd.f32 %v4292, %v4936
        %v5065 = vadd.f32 %v4293, %v4937
        %v5066 = vadd.f32 %v4294, %v4938
        %v5067 = vadd.f32 %v4295, %v4939
        %v5068 = vadd.f32 %v4296, %v4940
        %v5069 = vadd.f32 %v4297, %v4941
        %v5070 = vadd.f32 %v4298, %v4942
        %v5071 = vadd.f32 %v4299, %v4943
        %v5072 = vadd.f32 %v4300, %v4944
        %v5073 = vadd.f32 %v4301, %v4945
        %v5074 = vadd.f32 %v4302, %v4946
        %v5075 = vadd.f32 %v4303, %v4947
        %v5076 = vadd.f32 %v4304, %v4948
        %v5077 = vadd.f32 %v4305, %v4949
        %v5078 = vadd.f32 %v4306, %v4950
        %v5079 = vadd.f32 %v4307, %v4951
        %v5080 = vadd.f32 %v4308, %v4952
        %v5081 = vadd.f32 %v4309, %v4953
        %v5082 = vadd.f32 %v4310, %v4954
        %v5083 = vadd.f32 %v4311, %v4955
        %v5084 = vadd.f32 %v4312, %v4956
        %v5085 = vadd.f32 %v4313, %v4957
        %v5086 = vadd.f32 %v4314, %v4958
        %v5087 = vadd.f32 %v4315, %v4959
        %v5088 = vadd.f32 %v4316, %v4960
        %v5089 = vadd.f32 %v4317, %v4961
        %v5090 = vadd.f32 %v4318, %v4962
        %v5091 = vadd.f32 %v4319, %v4963
        %v5092 = vadd.f32 %v4320, %v4964
        %v5093 = vadd.f32 %v4321, %v4965
        %v5094 = vadd.f32 %v4322, %v4966
        %v5095 = vadd.f32 %v4323, %v4967
        %v5096 = vadd.f32 %v4324, %v4968
        %v5097 = vadd.f32 %v4325, %v4969
        %v5098 = vadd.f32 %v4326, %v4970
        %v5099 = vadd.f32 %v4327, %v4971
        %v5100 = vadd.f32 %v4328, %v4972
        %v5101 = vadd.f32 %v4329, %v4973
        %v5102 = vadd.f32 %v4330, %v4974
        %v5103 = vadd.f32 %v4331, %v4975
        %v5104 = vadd.f32 %v4332, %v4976
        %v5105 = vadd.f32 %v4333, %v4977
        %v5106 = vadd.f32 %v4334, %v4978
        %v5107 = vadd.f32 %v4335, %v4979
        %v5108 = vadd.f32 %v4336, %v4980
        %v5109 = vadd.f32 %v4337, %v4981
        %v5110 = vadd.f32 %v4338, %v4982
        %v5111 = vadd.f32 %v4339, %v4983
        %v5112 = vadd.f32 %v4340, %v4984
        %v5113 = vadd.f32 %v4341, %v4985
        %v5114 = vadd.f32 %v4342, %v4986
        %v5115 = vadd.f32 %v4343, %v4987
        %v5116 = vadd.f32 %v4344, %v4988
        %v5117 = vadd.f32 %v4345, %v4989
        %v5118 = vadd.f32 %v4346, %v4990
        %v5119 = vadd.f32 %v4347, %v4991
        %v5120 = vadd.f32 %v4348, %v4992
        %v5121 = vadd.f32 %v4349, %v4993
        %v5122 = vadd.f32 %v4350, %v4994
        %v5123 = vadd.f32 %v4351, %v4995
        %5124 = vset.pattern.permute.xlu0 3
        %5125 = vperm.xlu0 %5124, %v2679
        %v5126 = vpop.permute.xlu0 %5125
        %5128 = vset.pattern.permute.xlu0 3
        %5129 = vperm.xlu0 %5128, %v2680
        %v5130 = vpop.permute.xlu0 %5129
        %5132 = vset.pattern.permute.xlu0 3
        %5133 = vperm.xlu0 %5132, %v2681
        %v5134 = vpop.permute.xlu0 %5133
        %5136 = vset.pattern.permute.xlu0 3
        %5137 = vperm.xlu0 %5136, %v2682
        %v5138 = vpop.permute.xlu0 %5137
        %5140 = vset.pattern.permute.xlu0 3
        %5141 = vperm.xlu0 %5140, %v2683
        %v5142 = vpop.permute.xlu0 %5141
        %5144 = vset.pattern.permute.xlu0 3
        %5145 = vperm.xlu0 %5144, %v2684
        %v5146 = vpop.permute.xlu0 %5145
        %5148 = vset.pattern.permute.xlu0 3
        %5149 = vperm.xlu0 %5148, %v2685
        %v5150 = vpop.permute.xlu0 %5149
        %5152 = vset.pattern.permute.xlu0 3
        %5153 = vperm.xlu0 %5152, %v2686
        %v5154 = vpop.permute.xlu0 %5153
        %5156 = vset.pattern.permute.xlu0 3
        %5157 = vperm.xlu0 %5156, %v2687
        %v5158 = vpop.permute.xlu0 %5157
        %5160 = vset.pattern.permute.xlu0 3
        %5161 = vperm.xlu0 %5160, %v2688
        %v5162 = vpop.permute.xlu0 %5161
        %5164 = vset.pattern.permute.xlu0 3
        %5165 = vperm.xlu0 %5164, %v2689
        %v5166 = vpop.permute.xlu0 %5165
        %5168 = vset.pattern.permute.xlu0 3
        %5169 = vperm.xlu0 %5168, %v2690
        %v5170 = vpop.permute.xlu0 %5169
        %5172 = vset.pattern.permute.xlu0 3
        %5173 = vperm.xlu0 %5172, %v2691
        %v5174 = vpop.permute.xlu0 %5173
        %5176 = vset.pattern.permute.xlu0 3
        %5177 = vperm.xlu0 %5176, %v2692
        %v5178 = vpop.permute.xlu0 %5177
        %5180 = vset.pattern.permute.xlu0 3
        %5181 = vperm.xlu0 %5180, %v2693
        %v5182 = vpop.permute.xlu0 %5181
        %5184 = vset.pattern.permute.xlu0 3
        %5185 = vperm.xlu0 %5184, %v2694
        %v5186 = vpop.permute.xlu0 %5185
        %5188 = vset.pattern.permute.xlu0 3
        %5189 = vperm.xlu0 %5188, %v2695
        %v5190 = vpop.permute.xlu0 %5189
        %5192 = vset.pattern.permute.xlu0 3
        %5193 = vperm.xlu0 %5192, %v2696
        %v5194 = vpop.permute.xlu0 %5193
        %5196 = vset.pattern.permute.xlu0 3
        %5197 = vperm.xlu0 %5196, %v2697
        %v5198 = vpop.permute.xlu0 %5197
        %5200 = vset.pattern.permute.xlu0 3
        %5201 = vperm.xlu0 %5200, %v2698
        %v5202 = vpop.permute.xlu0 %5201
        %5204 = vset.pattern.permute.xlu0 3
        %5205 = vperm.xlu0 %5204, %v2699
        %v5206 = vpop.permute.xlu0 %5205
        %5208 = vset.pattern.permute.xlu0 3
        %5209 = vperm.xlu0 %5208, %v2700
        %v5210 = vpop.permute.xlu0 %5209
        %5212 = vset.pattern.permute.xlu0 3
        %5213 = vperm.xlu0 %5212, %v2701
        %v5214 = vpop.permute.xlu0 %5213
        %5216 = vset.pattern.permute.xlu0 3
        %5217 = vperm.xlu0 %5216, %v2702
        %v5218 = vpop.permute.xlu0 %5217
        %5220 = vset.pattern.permute.xlu0 3
        %5221 = vperm.xlu0 %5220, %v2703
        %v5222 = vpop.permute.xlu0 %5221
        %5224 = vset.pattern.permute.xlu0 3
        %5225 = vperm.xlu0 %5224, %v2704
        %v5226 = vpop.permute.xlu0 %5225
        %5228 = vset.pattern.permute.xlu0 3
        %5229 = vperm.xlu0 %5228, %v2705
        %v5230 = vpop.permute.xlu0 %5229
        %5232 = vset.pattern.permute.xlu0 3
        %5233 = vperm.xlu0 %5232, %v2706
        %v5234 = vpop.permute.xlu0 %5233
        %5236 = vset.pattern.permute.xlu0 3
        %5237 = vperm.xlu0 %5236, %v2707
        %v5238 = vpop.permute.xlu0 %5237
        %5240 = vset.pattern.permute.xlu0 3
        %5241 = vperm.xlu0 %5240, %v2708
        %v5242 = vpop.permute.xlu0 %5241
        %5244 = vset.pattern.permute.xlu0 3
        %5245 = vperm.xlu0 %5244, %v2709
        %v5246 = vpop.permute.xlu0 %5245
        %5248 = vset.pattern.permute.xlu0 3
        %5249 = vperm.xlu0 %5248, %v2710
        %v5250 = vpop.permute.xlu0 %5249
        %5252 = vset.pattern.permute.xlu0 3
        %5253 = vperm.xlu0 %5252, %v2711
        %v5254 = vpop.permute.xlu0 %5253
        %5256 = vset.pattern.permute.xlu0 3
        %5257 = vperm.xlu0 %5256, %v2712
        %v5258 = vpop.permute.xlu0 %5257
        %5260 = vset.pattern.permute.xlu0 3
        %5261 = vperm.xlu0 %5260, %v2713
        %v5262 = vpop.permute.xlu0 %5261
        %5264 = vset.pattern.permute.xlu0 3
        %5265 = vperm.xlu0 %5264, %v2714
        %v5266 = vpop.permute.xlu0 %5265
        %5268 = vset.pattern.permute.xlu0 3
        %5269 = vperm.xlu0 %5268, %v2715
        %v5270 = vpop.permute.xlu0 %5269
        %5272 = vset.pattern.permute.xlu0 3
        %5273 = vperm.xlu0 %5272, %v2716
        %v5274 = vpop.permute.xlu0 %5273
        %5276 = vset.pattern.permute.xlu0 3
        %5277 = vperm.xlu0 %5276, %v2717
        %v5278 = vpop.permute.xlu0 %5277
        %5280 = vset.pattern.permute.xlu0 3
        %5281 = vperm.xlu0 %5280, %v2718
        %v5282 = vpop.permute.xlu0 %5281
        %5284 = vset.pattern.permute.xlu0 3
        %5285 = vperm.xlu0 %5284, %v2719
        %v5286 = vpop.permute.xlu0 %5285
        %5288 = vset.pattern.permute.xlu0 3
        %5289 = vperm.xlu0 %5288, %v2720
        %v5290 = vpop.permute.xlu0 %5289
        %5292 = vset.pattern.permute.xlu0 3
        %5293 = vperm.xlu0 %5292, %v2721
        %v5294 = vpop.permute.xlu0 %5293
        %5296 = vset.pattern.permute.xlu0 3
        %5297 = vperm.xlu0 %5296, %v2722
        %v5298 = vpop.permute.xlu0 %5297
        %5300 = vset.pattern.permute.xlu0 3
        %5301 = vperm.xlu0 %5300, %v2723
        %v5302 = vpop.permute.xlu0 %5301
        %5304 = vset.pattern.permute.xlu0 3
        %5305 = vperm.xlu0 %5304, %v2724
        %v5306 = vpop.permute.xlu0 %5305
        %5308 = vset.pattern.permute.xlu0 3
        %5309 = vperm.xlu0 %5308, %v2725
        %v5310 = vpop.permute.xlu0 %5309
        %5312 = vset.pattern.permute.xlu0 3
        %5313 = vperm.xlu0 %5312, %v2726
        %v5314 = vpop.permute.xlu0 %5313
        %5316 = vset.pattern.permute.xlu0 3
        %5317 = vperm.xlu0 %5316, %v2727
        %v5318 = vpop.permute.xlu0 %5317
        %5320 = vset.pattern.permute.xlu0 3
        %5321 = vperm.xlu0 %5320, %v2728
        %v5322 = vpop.permute.xlu0 %5321
        %5324 = vset.pattern.permute.xlu0 3
        %5325 = vperm.xlu0 %5324, %v2729
        %v5326 = vpop.permute.xlu0 %5325
        %5328 = vset.pattern.permute.xlu0 3
        %5329 = vperm.xlu0 %5328, %v2730
        %v5330 = vpop.permute.xlu0 %5329
        %5332 = vset.pattern.permute.xlu0 3
        %5333 = vperm.xlu0 %5332, %v2731
        %v5334 = vpop.permute.xlu0 %5333
        %5336 = vset.pattern.permute.xlu0 3
        %5337 = vperm.xlu0 %5336, %v2732
        %v5338 = vpop.permute.xlu0 %5337
        %5340 = vset.pattern.permute.xlu0 3
        %5341 = vperm.xlu0 %5340, %v2733
        %v5342 = vpop.permute.xlu0 %5341
        %5344 = vset.pattern.permute.xlu0 3
        %5345 = vperm.xlu0 %5344, %v2734
        %v5346 = vpop.permute.xlu0 %5345
        %5348 = vset.pattern.permute.xlu0 3
        %5349 = vperm.xlu0 %5348, %v2735
        %v5350 = vpop.permute.xlu0 %5349
        %5352 = vset.pattern.permute.xlu0 3
        %5353 = vperm.xlu0 %5352, %v2736
        %v5354 = vpop.permute.xlu0 %5353
        %5356 = vset.pattern.permute.xlu0 3
        %5357 = vperm.xlu0 %5356, %v2737
        %v5358 = vpop.permute.xlu0 %5357
        %5360 = vset.pattern.permute.xlu0 3
        %5361 = vperm.xlu0 %5360, %v2738
        %v5362 = vpop.permute.xlu0 %5361
        %5364 = vset.pattern.permute.xlu0 3
        %5365 = vperm.xlu0 %5364, %v2739
        %v5366 = vpop.permute.xlu0 %5365
        %5368 = vset.pattern.permute.xlu0 3
        %5369 = vperm.xlu0 %5368, %v2740
        %v5370 = vpop.permute.xlu0 %5369
        %5372 = vset.pattern.permute.xlu0 3
        %5373 = vperm.xlu0 %5372, %v2741
        %v5374 = vpop.permute.xlu0 %5373
        %5376 = vset.pattern.permute.xlu0 3
        %5377 = vperm.xlu0 %5376, %v2742
        %v5378 = vpop.permute.xlu0 %5377
        %5380 = vset.pattern.permute.xlu0 3
        %5381 = vperm.xlu0 %5380, %v2743
        %v5382 = vpop.permute.xlu0 %5381
        %5384 = vset.pattern.permute.xlu0 3
        %5385 = vperm.xlu0 %5384, %v2744
        %v5386 = vpop.permute.xlu0 %5385
        %5388 = vset.pattern.permute.xlu0 3
        %5389 = vperm.xlu0 %5388, %v2745
        %v5390 = vpop.permute.xlu0 %5389
        %5392 = vset.pattern.permute.xlu0 3
        %5393 = vperm.xlu0 %5392, %v2746
        %v5394 = vpop.permute.xlu0 %5393
        %5396 = vset.pattern.permute.xlu0 3
        %5397 = vperm.xlu0 %5396, %v2747
        %v5398 = vpop.permute.xlu0 %5397
        %5400 = vset.pattern.permute.xlu0 3
        %5401 = vperm.xlu0 %5400, %v2748
        %v5402 = vpop.permute.xlu0 %5401
        %5404 = vset.pattern.permute.xlu0 3
        %5405 = vperm.xlu0 %5404, %v2749
        %v5406 = vpop.permute.xlu0 %5405
        %5408 = vset.pattern.permute.xlu0 3
        %5409 = vperm.xlu0 %5408, %v2750
        %v5410 = vpop.permute.xlu0 %5409
        %5412 = vset.pattern.permute.xlu0 3
        %5413 = vperm.xlu0 %5412, %v2751
        %v5414 = vpop.permute.xlu0 %5413
        %5416 = vset.pattern.permute.xlu0 3
        %5417 = vperm.xlu0 %5416, %v2752
        %v5418 = vpop.permute.xlu0 %5417
        %5420 = vset.pattern.permute.xlu0 3
        %5421 = vperm.xlu0 %5420, %v2753
        %v5422 = vpop.permute.xlu0 %5421
        %5424 = vset.pattern.permute.xlu0 3
        %5425 = vperm.xlu0 %5424, %v2754
        %v5426 = vpop.permute.xlu0 %5425
        %5428 = vset.pattern.permute.xlu0 3
        %5429 = vperm.xlu0 %5428, %v2755
        %v5430 = vpop.permute.xlu0 %5429
        %5432 = vset.pattern.permute.xlu0 3
        %5433 = vperm.xlu0 %5432, %v2756
        %v5434 = vpop.permute.xlu0 %5433
        %5436 = vset.pattern.permute.xlu0 3
        %5437 = vperm.xlu0 %5436, %v2757
        %v5438 = vpop.permute.xlu0 %5437
        %5440 = vset.pattern.permute.xlu0 3
        %5441 = vperm.xlu0 %5440, %v2758
        %v5442 = vpop.permute.xlu0 %5441
        %5444 = vset.pattern.permute.xlu0 3
        %5445 = vperm.xlu0 %5444, %v2759
        %v5446 = vpop.permute.xlu0 %5445
        %5448 = vset.pattern.permute.xlu0 3
        %5449 = vperm.xlu0 %5448, %v2760
        %v5450 = vpop.permute.xlu0 %5449
        %5452 = vset.pattern.permute.xlu0 3
        %5453 = vperm.xlu0 %5452, %v2761
        %v5454 = vpop.permute.xlu0 %5453
        %5456 = vset.pattern.permute.xlu0 3
        %5457 = vperm.xlu0 %5456, %v2762
        %v5458 = vpop.permute.xlu0 %5457
        %5460 = vset.pattern.permute.xlu0 3
        %5461 = vperm.xlu0 %5460, %v2763
        %v5462 = vpop.permute.xlu0 %5461
        %5464 = vset.pattern.permute.xlu0 3
        %5465 = vperm.xlu0 %5464, %v2764
        %v5466 = vpop.permute.xlu0 %5465
        %5468 = vset.pattern.permute.xlu0 3
        %5469 = vperm.xlu0 %5468, %v2765
        %v5470 = vpop.permute.xlu0 %5469
        %5472 = vset.pattern.permute.xlu0 3
        %5473 = vperm.xlu0 %5472, %v2766
        %v5474 = vpop.permute.xlu0 %5473
        %5476 = vset.pattern.permute.xlu0 3
        %5477 = vperm.xlu0 %5476, %v2767
        %v5478 = vpop.permute.xlu0 %5477
        %5480 = vset.pattern.permute.xlu0 3
        %5481 = vperm.xlu0 %5480, %v2768
        %v5482 = vpop.permute.xlu0 %5481
        %5484 = vset.pattern.permute.xlu0 3
        %5485 = vperm.xlu0 %5484, %v2769
        %v5486 = vpop.permute.xlu0 %5485
        %5488 = vset.pattern.permute.xlu0 3
        %5489 = vperm.xlu0 %5488, %v2770
        %v5490 = vpop.permute.xlu0 %5489
        %5492 = vset.pattern.permute.xlu0 3
        %5493 = vperm.xlu0 %5492, %v2771
        %v5494 = vpop.permute.xlu0 %5493
        %5496 = vset.pattern.permute.xlu0 3
        %5497 = vperm.xlu0 %5496, %v2772
        %v5498 = vpop.permute.xlu0 %5497
        %5500 = vset.pattern.permute.xlu0 3
        %5501 = vperm.xlu0 %5500, %v2773
        %v5502 = vpop.permute.xlu0 %5501
        %5504 = vset.pattern.permute.xlu0 3
        %5505 = vperm.xlu0 %5504, %v2774
        %v5506 = vpop.permute.xlu0 %5505
        %5508 = vset.pattern.permute.xlu0 3
        %5509 = vperm.xlu0 %5508, %v2775
        %v5510 = vpop.permute.xlu0 %5509
        %5512 = vset.pattern.permute.xlu0 3
        %5513 = vperm.xlu0 %5512, %v2776
        %v5514 = vpop.permute.xlu0 %5513
        %5516 = vset.pattern.permute.xlu0 3
        %5517 = vperm.xlu0 %5516, %v2777
        %v5518 = vpop.permute.xlu0 %5517
        %5520 = vset.pattern.permute.xlu0 3
        %5521 = vperm.xlu0 %5520, %v2778
        %v5522 = vpop.permute.xlu0 %5521
        %5524 = vset.pattern.permute.xlu0 3
        %5525 = vperm.xlu0 %5524, %v2779
        %v5526 = vpop.permute.xlu0 %5525
        %5528 = vset.pattern.permute.xlu0 3
        %5529 = vperm.xlu0 %5528, %v2780
        %v5530 = vpop.permute.xlu0 %5529
        %5532 = vset.pattern.permute.xlu0 3
        %5533 = vperm.xlu0 %5532, %v2781
        %v5534 = vpop.permute.xlu0 %5533
        %5536 = vset.pattern.permute.xlu0 3
        %5537 = vperm.xlu0 %5536, %v2782
        %v5538 = vpop.permute.xlu0 %5537
        %5540 = vset.pattern.permute.xlu0 3
        %5541 = vperm.xlu0 %5540, %v2783
        %v5542 = vpop.permute.xlu0 %5541
        %5544 = vset.pattern.permute.xlu0 3
        %5545 = vperm.xlu0 %5544, %v2784
        %v5546 = vpop.permute.xlu0 %5545
        %5548 = vset.pattern.permute.xlu0 3
        %5549 = vperm.xlu0 %5548, %v2785
        %v5550 = vpop.permute.xlu0 %5549
        %5552 = vset.pattern.permute.xlu0 3
        %5553 = vperm.xlu0 %5552, %v2786
        %v5554 = vpop.permute.xlu0 %5553
        %5556 = vset.pattern.permute.xlu0 3
        %5557 = vperm.xlu0 %5556, %v2787
        %v5558 = vpop.permute.xlu0 %5557
        %5560 = vset.pattern.permute.xlu0 3
        %5561 = vperm.xlu0 %5560, %v2788
        %v5562 = vpop.permute.xlu0 %5561
        %5564 = vset.pattern.permute.xlu0 3
        %5565 = vperm.xlu0 %5564, %v2789
        %v5566 = vpop.permute.xlu0 %5565
        %5568 = vset.pattern.permute.xlu0 3
        %5569 = vperm.xlu0 %5568, %v2790
        %v5570 = vpop.permute.xlu0 %5569
        %5572 = vset.pattern.permute.xlu0 3
        %5573 = vperm.xlu0 %5572, %v2791
        %v5574 = vpop.permute.xlu0 %5573
        %5576 = vset.pattern.permute.xlu0 3
        %5577 = vperm.xlu0 %5576, %v2792
        %v5578 = vpop.permute.xlu0 %5577
        %5580 = vset.pattern.permute.xlu0 3
        %5581 = vperm.xlu0 %5580, %v2793
        %v5582 = vpop.permute.xlu0 %5581
        %5584 = vset.pattern.permute.xlu0 3
        %5585 = vperm.xlu0 %5584, %v2794
        %v5586 = vpop.permute.xlu0 %5585
        %5588 = vset.pattern.permute.xlu0 3
        %5589 = vperm.xlu0 %5588, %v2795
        %v5590 = vpop.permute.xlu0 %5589
        %5592 = vset.pattern.permute.xlu0 3
        %5593 = vperm.xlu0 %5592, %v2796
        %v5594 = vpop.permute.xlu0 %5593
        %5596 = vset.pattern.permute.xlu0 3
        %5597 = vperm.xlu0 %5596, %v2797
        %v5598 = vpop.permute.xlu0 %5597
        %5600 = vset.pattern.permute.xlu0 3
        %5601 = vperm.xlu0 %5600, %v2798
        %v5602 = vpop.permute.xlu0 %5601
        %5604 = vset.pattern.permute.xlu0 3
        %5605 = vperm.xlu0 %5604, %v2799
        %v5606 = vpop.permute.xlu0 %5605
        %5608 = vset.pattern.permute.xlu0 3
        %5609 = vperm.xlu0 %5608, %v2800
        %v5610 = vpop.permute.xlu0 %5609
        %5612 = vset.pattern.permute.xlu0 3
        %5613 = vperm.xlu0 %5612, %v2801
        %v5614 = vpop.permute.xlu0 %5613
        %5616 = vset.pattern.permute.xlu0 3
        %5617 = vperm.xlu0 %5616, %v2802
        %v5618 = vpop.permute.xlu0 %5617
        %5620 = vset.pattern.permute.xlu0 3
        %5621 = vperm.xlu0 %5620, %v2803
        %v5622 = vpop.permute.xlu0 %5621
        %5624 = vset.pattern.permute.xlu0 3
        %5625 = vperm.xlu0 %5624, %v2804
        %v5626 = vpop.permute.xlu0 %5625
        %5628 = vset.pattern.permute.xlu0 3
        %5629 = vperm.xlu0 %5628, %v2805
        %v5630 = vpop.permute.xlu0 %5629
        %5632 = vset.pattern.permute.xlu0 3
        %5633 = vperm.xlu0 %5632, %v2806
        %v5634 = vpop.permute.xlu0 %5633
        %v5636 = vlaneseq
        %v5637 = vshrl.u32 %v5636, 7
        %v5638 = vsub.s32 3, %v5637
        %v5639 = vrot.slane %v2807, %v5638
        %v5640 = vmul.f32 %v5126, %v5639
        %v5641 = vmul.f32 %v5130, %v5639
        %v5642 = vmul.f32 %v5134, %v5639
        %v5643 = vmul.f32 %v5138, %v5639
        %v5644 = vmul.f32 %v5142, %v5639
        %v5645 = vmul.f32 %v5146, %v5639
        %v5646 = vmul.f32 %v5150, %v5639
        %v5647 = vmul.f32 %v5154, %v5639
        %v5648 = vmul.f32 %v5158, %v5639
        %v5649 = vmul.f32 %v5162, %v5639
        %v5650 = vmul.f32 %v5166, %v5639
        %v5651 = vmul.f32 %v5170, %v5639
        %v5652 = vmul.f32 %v5174, %v5639
        %v5653 = vmul.f32 %v5178, %v5639
        %v5654 = vmul.f32 %v5182, %v5639
        %v5655 = vmul.f32 %v5186, %v5639
        %v5656 = vmul.f32 %v5190, %v5639
        %v5657 = vmul.f32 %v5194, %v5639
        %v5658 = vmul.f32 %v5198, %v5639
        %v5659 = vmul.f32 %v5202, %v5639
        %v5660 = vmul.f32 %v5206, %v5639
        %v5661 = vmul.f32 %v5210, %v5639
        %v5662 = vmul.f32 %v5214, %v5639
        %v5663 = vmul.f32 %v5218, %v5639
        %v5664 = vmul.f32 %v5222, %v5639
        %v5665 = vmul.f32 %v5226, %v5639
        %v5666 = vmul.f32 %v5230, %v5639
        %v5667 = vmul.f32 %v5234, %v5639
        %v5668 = vmul.f32 %v5238, %v5639
        %v5669 = vmul.f32 %v5242, %v5639
        %v5670 = vmul.f32 %v5246, %v5639
        %v5671 = vmul.f32 %v5250, %v5639
        %v5672 = vmul.f32 %v5254, %v5639
        %v5673 = vmul.f32 %v5258, %v5639
        %v5674 = vmul.f32 %v5262, %v5639
        %v5675 = vmul.f32 %v5266, %v5639
        %v5676 = vmul.f32 %v5270, %v5639
        %v5677 = vmul.f32 %v5274, %v5639
        %v5678 = vmul.f32 %v5278, %v5639
        %v5679 = vmul.f32 %v5282, %v5639
        %v5680 = vmul.f32 %v5286, %v5639
        %v5681 = vmul.f32 %v5290, %v5639
        %v5682 = vmul.f32 %v5294, %v5639
        %v5683 = vmul.f32 %v5298, %v5639
        %v5684 = vmul.f32 %v5302, %v5639
        %v5685 = vmul.f32 %v5306, %v5639
        %v5686 = vmul.f32 %v5310, %v5639
        %v5687 = vmul.f32 %v5314, %v5639
        %v5688 = vmul.f32 %v5318, %v5639
        %v5689 = vmul.f32 %v5322, %v5639
        %v5690 = vmul.f32 %v5326, %v5639
        %v5691 = vmul.f32 %v5330, %v5639
        %v5692 = vmul.f32 %v5334, %v5639
        %v5693 = vmul.f32 %v5338, %v5639
        %v5694 = vmul.f32 %v5342, %v5639
        %v5695 = vmul.f32 %v5346, %v5639
        %v5696 = vmul.f32 %v5350, %v5639
        %v5697 = vmul.f32 %v5354, %v5639
        %v5698 = vmul.f32 %v5358, %v5639
        %v5699 = vmul.f32 %v5362, %v5639
        %v5700 = vmul.f32 %v5366, %v5639
        %v5701 = vmul.f32 %v5370, %v5639
        %v5702 = vmul.f32 %v5374, %v5639
        %v5703 = vmul.f32 %v5378, %v5639
        %v5704 = vmul.f32 %v5382, %v5639
        %v5705 = vmul.f32 %v5386, %v5639
        %v5706 = vmul.f32 %v5390, %v5639
        %v5707 = vmul.f32 %v5394, %v5639
        %v5708 = vmul.f32 %v5398, %v5639
        %v5709 = vmul.f32 %v5402, %v5639
        %v5710 = vmul.f32 %v5406, %v5639
        %v5711 = vmul.f32 %v5410, %v5639
        %v5712 = vmul.f32 %v5414, %v5639
        %v5713 = vmul.f32 %v5418, %v5639
        %v5714 = vmul.f32 %v5422, %v5639
        %v5715 = vmul.f32 %v5426, %v5639
        %v5716 = vmul.f32 %v5430, %v5639
        %v5717 = vmul.f32 %v5434, %v5639
        %v5718 = vmul.f32 %v5438, %v5639
        %v5719 = vmul.f32 %v5442, %v5639
        %v5720 = vmul.f32 %v5446, %v5639
        %v5721 = vmul.f32 %v5450, %v5639
        %v5722 = vmul.f32 %v5454, %v5639
        %v5723 = vmul.f32 %v5458, %v5639
        %v5724 = vmul.f32 %v5462, %v5639
        %v5725 = vmul.f32 %v5466, %v5639
        %v5726 = vmul.f32 %v5470, %v5639
        %v5727 = vmul.f32 %v5474, %v5639
        %v5728 = vmul.f32 %v5478, %v5639
        %v5729 = vmul.f32 %v5482, %v5639
        %v5730 = vmul.f32 %v5486, %v5639
        %v5731 = vmul.f32 %v5490, %v5639
        %v5732 = vmul.f32 %v5494, %v5639
        %v5733 = vmul.f32 %v5498, %v5639
        %v5734 = vmul.f32 %v5502, %v5639
        %v5735 = vmul.f32 %v5506, %v5639
        %v5736 = vmul.f32 %v5510, %v5639
        %v5737 = vmul.f32 %v5514, %v5639
        %v5738 = vmul.f32 %v5518, %v5639
        %v5739 = vmul.f32 %v5522, %v5639
        %v5740 = vmul.f32 %v5526, %v5639
        %v5741 = vmul.f32 %v5530, %v5639
        %v5742 = vmul.f32 %v5534, %v5639
        %v5743 = vmul.f32 %v5538, %v5639
        %v5744 = vmul.f32 %v5542, %v5639
        %v5745 = vmul.f32 %v5546, %v5639
        %v5746 = vmul.f32 %v5550, %v5639
        %v5747 = vmul.f32 %v5554, %v5639
        %v5748 = vmul.f32 %v5558, %v5639
        %v5749 = vmul.f32 %v5562, %v5639
        %v5750 = vmul.f32 %v5566, %v5639
        %v5751 = vmul.f32 %v5570, %v5639
        %v5752 = vmul.f32 %v5574, %v5639
        %v5753 = vmul.f32 %v5578, %v5639
        %v5754 = vmul.f32 %v5582, %v5639
        %v5755 = vmul.f32 %v5586, %v5639
        %v5756 = vmul.f32 %v5590, %v5639
        %v5757 = vmul.f32 %v5594, %v5639
        %v5758 = vmul.f32 %v5598, %v5639
        %v5759 = vmul.f32 %v5602, %v5639
        %v5760 = vmul.f32 %v5606, %v5639
        %v5761 = vmul.f32 %v5610, %v5639
        %v5762 = vmul.f32 %v5614, %v5639
        %v5763 = vmul.f32 %v5618, %v5639
        %v5764 = vmul.f32 %v5622, %v5639
        %v5765 = vmul.f32 %v5626, %v5639
        %v5766 = vmul.f32 %v5630, %v5639
        %v5767 = vmul.f32 %v5634, %v5639
        %v5768 = vadd.f32 %v4996, %v5640
        %v5769 = vadd.f32 %v4997, %v5641
        %v5770 = vadd.f32 %v4998, %v5642
        %v5771 = vadd.f32 %v4999, %v5643
        %v5772 = vadd.f32 %v5000, %v5644
        %v5773 = vadd.f32 %v5001, %v5645
        %v5774 = vadd.f32 %v5002, %v5646
        %v5775 = vadd.f32 %v5003, %v5647
        %v5776 = vadd.f32 %v5004, %v5648
        %v5777 = vadd.f32 %v5005, %v5649
        %v5778 = vadd.f32 %v5006, %v5650
        %v5779 = vadd.f32 %v5007, %v5651
        %v5780 = vadd.f32 %v5008, %v5652
        %v5781 = vadd.f32 %v5009, %v5653
        %v5782 = vadd.f32 %v5010, %v5654
        %v5783 = vadd.f32 %v5011, %v5655
        %v5784 = vadd.f32 %v5012, %v5656
        %v5785 = vadd.f32 %v5013, %v5657
        %v5786 = vadd.f32 %v5014, %v5658
        %v5787 = vadd.f32 %v5015, %v5659
        %v5788 = vadd.f32 %v5016, %v5660
        %v5789 = vadd.f32 %v5017, %v5661
        %v5790 = vadd.f32 %v5018, %v5662
        %v5791 = vadd.f32 %v5019, %v5663
        %v5792 = vadd.f32 %v5020, %v5664
        %v5793 = vadd.f32 %v5021, %v5665
        %v5794 = vadd.f32 %v5022, %v5666
        %v5795 = vadd.f32 %v5023, %v5667
        %v5796 = vadd.f32 %v5024, %v5668
        %v5797 = vadd.f32 %v5025, %v5669
        %v5798 = vadd.f32 %v5026, %v5670
        %v5799 = vadd.f32 %v5027, %v5671
        %v5800 = vadd.f32 %v5028, %v5672
        %v5801 = vadd.f32 %v5029, %v5673
        %v5802 = vadd.f32 %v5030, %v5674
        %v5803 = vadd.f32 %v5031, %v5675
        %v5804 = vadd.f32 %v5032, %v5676
        %v5805 = vadd.f32 %v5033, %v5677
        %v5806 = vadd.f32 %v5034, %v5678
        %v5807 = vadd.f32 %v5035, %v5679
        %v5808 = vadd.f32 %v5036, %v5680
        %v5809 = vadd.f32 %v5037, %v5681
        %v5810 = vadd.f32 %v5038, %v5682
        %v5811 = vadd.f32 %v5039, %v5683
        %v5812 = vadd.f32 %v5040, %v5684
        %v5813 = vadd.f32 %v5041, %v5685
        %v5814 = vadd.f32 %v5042, %v5686
        %v5815 = vadd.f32 %v5043, %v5687
        %v5816 = vadd.f32 %v5044, %v5688
        %v5817 = vadd.f32 %v5045, %v5689
        %v5818 = vadd.f32 %v5046, %v5690
        %v5819 = vadd.f32 %v5047, %v5691
        %v5820 = vadd.f32 %v5048, %v5692
        %v5821 = vadd.f32 %v5049, %v5693
        %v5822 = vadd.f32 %v5050, %v5694
        %v5823 = vadd.f32 %v5051, %v5695
        %v5824 = vadd.f32 %v5052, %v5696
        %v5825 = vadd.f32 %v5053, %v5697
        %v5826 = vadd.f32 %v5054, %v5698
        %v5827 = vadd.f32 %v5055, %v5699
        %v5828 = vadd.f32 %v5056, %v5700
        %v5829 = vadd.f32 %v5057, %v5701
        %v5830 = vadd.f32 %v5058, %v5702
        %v5831 = vadd.f32 %v5059, %v5703
        %v5832 = vadd.f32 %v5060, %v5704
        %v5833 = vadd.f32 %v5061, %v5705
        %v5834 = vadd.f32 %v5062, %v5706
        %v5835 = vadd.f32 %v5063, %v5707
        %v5836 = vadd.f32 %v5064, %v5708
        %v5837 = vadd.f32 %v5065, %v5709
        %v5838 = vadd.f32 %v5066, %v5710
        %v5839 = vadd.f32 %v5067, %v5711
        %v5840 = vadd.f32 %v5068, %v5712
        %v5841 = vadd.f32 %v5069, %v5713
        %v5842 = vadd.f32 %v5070, %v5714
        %v5843 = vadd.f32 %v5071, %v5715
        %v5844 = vadd.f32 %v5072, %v5716
        %v5845 = vadd.f32 %v5073, %v5717
        %v5846 = vadd.f32 %v5074, %v5718
        %v5847 = vadd.f32 %v5075, %v5719
        %v5848 = vadd.f32 %v5076, %v5720
        %v5849 = vadd.f32 %v5077, %v5721
        %v5850 = vadd.f32 %v5078, %v5722
        %v5851 = vadd.f32 %v5079, %v5723
        %v5852 = vadd.f32 %v5080, %v5724
        %v5853 = vadd.f32 %v5081, %v5725
        %v5854 = vadd.f32 %v5082, %v5726
        %v5855 = vadd.f32 %v5083, %v5727
        %v5856 = vadd.f32 %v5084, %v5728
        %v5857 = vadd.f32 %v5085, %v5729
        %v5858 = vadd.f32 %v5086, %v5730
        %v5859 = vadd.f32 %v5087, %v5731
        %v5860 = vadd.f32 %v5088, %v5732
        %v5861 = vadd.f32 %v5089, %v5733
        %v5862 = vadd.f32 %v5090, %v5734
        %v5863 = vadd.f32 %v5091, %v5735
        %v5864 = vadd.f32 %v5092, %v5736
        %v5865 = vadd.f32 %v5093, %v5737
        %v5866 = vadd.f32 %v5094, %v5738
        %v5867 = vadd.f32 %v5095, %v5739
        %v5868 = vadd.f32 %v5096, %v5740
        %v5869 = vadd.f32 %v5097, %v5741
        %v5870 = vadd.f32 %v5098, %v5742
        %v5871 = vadd.f32 %v5099, %v5743
        %v5872 = vadd.f32 %v5100, %v5744
        %v5873 = vadd.f32 %v5101, %v5745
        %v5874 = vadd.f32 %v5102, %v5746
        %v5875 = vadd.f32 %v5103, %v5747
        %v5876 = vadd.f32 %v5104, %v5748
        %v5877 = vadd.f32 %v5105, %v5749
        %v5878 = vadd.f32 %v5106, %v5750
        %v5879 = vadd.f32 %v5107, %v5751
        %v5880 = vadd.f32 %v5108, %v5752
        %v5881 = vadd.f32 %v5109, %v5753
        %v5882 = vadd.f32 %v5110, %v5754
        %v5883 = vadd.f32 %v5111, %v5755
        %v5884 = vadd.f32 %v5112, %v5756
        %v5885 = vadd.f32 %v5113, %v5757
        %v5886 = vadd.f32 %v5114, %v5758
        %v5887 = vadd.f32 %v5115, %v5759
        %v5888 = vadd.f32 %v5116, %v5760
        %v5889 = vadd.f32 %v5117, %v5761
        %v5890 = vadd.f32 %v5118, %v5762
        %v5891 = vadd.f32 %v5119, %v5763
        %v5892 = vadd.f32 %v5120, %v5764
        %v5893 = vadd.f32 %v5121, %v5765
        %v5894 = vadd.f32 %v5122, %v5766
        %v5895 = vadd.f32 %v5123, %v5767
        %v5928 = vunpack.c.l.b16 %v2647
        %v5929 = vunpack.c.l.b16 %v2648
        %v5930 = vunpack.c.l.b16 %v2649
        %v5931 = vunpack.c.l.b16 %v2650
        %v5932 = vunpack.c.l.b16 %v2651
        %v5933 = vunpack.c.l.b16 %v2652
        %v5934 = vunpack.c.l.b16 %v2653
        %v5935 = vunpack.c.l.b16 %v2654
        %v5936 = vunpack.c.l.b16 %v2655
        %v5937 = vunpack.c.l.b16 %v2656
        %v5938 = vunpack.c.l.b16 %v2657
        %v5939 = vunpack.c.l.b16 %v2658
        %v5940 = vunpack.c.l.b16 %v2659
        %v5941 = vunpack.c.l.b16 %v2660
        %v5942 = vunpack.c.l.b16 %v2661
        %v5943 = vunpack.c.l.b16 %v2662
        %v5944 = vunpack.c.l.b16 %v2663
        %v5945 = vunpack.c.l.b16 %v2664
        %v5946 = vunpack.c.l.b16 %v2665
        %v5947 = vunpack.c.l.b16 %v2666
        %v5948 = vunpack.c.l.b16 %v2667
        %v5949 = vunpack.c.l.b16 %v2668
        %v5950 = vunpack.c.l.b16 %v2669
        %v5951 = vunpack.c.l.b16 %v2670
        %v5952 = vunpack.c.l.b16 %v2671
        %v5953 = vunpack.c.l.b16 %v2672
        %v5954 = vunpack.c.l.b16 %v2673
        %v5955 = vunpack.c.l.b16 %v2674
        %v5956 = vunpack.c.l.b16 %v2675
        %v5957 = vunpack.c.l.b16 %v2676
        %v5958 = vunpack.c.l.b16 %v2677
        %v5959 = vunpack.c.l.b16 %v2678
        %v5960 = vpack.c.b16 %v5929, %v5928
        %v5961 = vpack.c.b16 %v5931, %v5930
        %v5962 = vpack.c.b16 %v5933, %v5932
        %v5963 = vpack.c.b16 %v5935, %v5934
        %v5964 = vpack.c.b16 %v5937, %v5936
        %v5965 = vpack.c.b16 %v5939, %v5938
        %v5966 = vpack.c.b16 %v5941, %v5940
        %v5967 = vpack.c.b16 %v5943, %v5942
        %v5968 = vpack.c.b16 %v5945, %v5944
        %v5969 = vpack.c.b16 %v5947, %v5946
        %v5970 = vpack.c.b16 %v5949, %v5948
        %v5971 = vpack.c.b16 %v5951, %v5950
        %v5972 = vpack.c.b16 %v5953, %v5952
        %v5973 = vpack.c.b16 %v5955, %v5954
        %v5974 = vpack.c.b16 %v5957, %v5956
        %v5975 = vpack.c.b16 %v5959, %v5958
        %5992 = vmatprep.subr.bf16.mxu0 0
        %5993 = vmatpush1.bf16.msra.mxu0 %v5960
        %5994 = vmatprep.subr.bf16.mxu0 0
        %5995 = vmatpush1.bf16.msra.mxu0 %v5961
        %5996 = vmatprep.subr.bf16.mxu0 0
        %5997 = vmatpush1.bf16.msra.mxu0 %v5962
        %5998 = vmatprep.subr.bf16.mxu0 0
        %5999 = vmatpush1.bf16.msra.mxu0 %v5963
        %6000 = vmatprep.subr.bf16.mxu0 0
        %6001 = vmatpush1.bf16.msra.mxu0 %v5964
        %6002 = vmatprep.subr.bf16.mxu0 0
        %6003 = vmatpush1.bf16.msra.mxu0 %v5965
        %6004 = vmatprep.subr.bf16.mxu0 0
        %6005 = vmatpush1.bf16.msra.mxu0 %v5966
        %6006 = vmatprep.subr.bf16.mxu0 0
        %6007 = vmatpush1.bf16.msra.mxu0 %v5967
        %6008 = vmatprep.subr.bf16.mxu0 0
        %6009 = vmatpush1.bf16.msra.mxu0 %v5968
        %6010 = vmatprep.subr.bf16.mxu0 0
        %6011 = vmatpush1.bf16.msra.mxu0 %v5969
        %6012 = vmatprep.subr.bf16.mxu0 0
        %6013 = vmatpush1.bf16.msra.mxu0 %v5970
        %6014 = vmatprep.subr.bf16.mxu0 0
        %6015 = vmatpush1.bf16.msra.mxu0 %v5971
        %6016 = vmatprep.subr.bf16.mxu0 0
        %6017 = vmatpush1.bf16.msra.mxu0 %v5972
        %6018 = vmatprep.subr.bf16.mxu0 0
        %6019 = vmatpush1.bf16.msra.mxu0 %v5973
        %6020 = vmatprep.subr.bf16.mxu0 0
        %6021 = vmatpush1.bf16.msra.mxu0 %v5974
        %6022 = vmatprep.subr.bf16.mxu0 0
        %6023 = vmatpush1.bf16.msra.mxu0 %v5975
        %6024 = vmatprep.mubr.bf16.mxu0 %v2520
        %6025 = vmatmul.mubr.bf16.gmra.mrb[0].mxu0 %v2519
        %v6026 = vpop.f32.mrb[0].mxu0
        %v6027 = vadd.f32 %v5768, %v6026
        %v6028 = vpop.f32.mrb[0].mxu0
        %v6029 = vpop.f32.mrb[0].mxu0
        %v6030 = vadd.f32 %v5769, %v6029
        %v6031 = vpop.f32.mrb[0].mxu0
        %6032 = vmatprep.mubr.bf16.mxu0 %v2522
        %6033 = vmatmul.mubr.bf16.gmra.mrb[0].mxu0 %v2521
        %v6034 = vpop.f32.mrb[0].mxu0
        %v6035 = vadd.f32 %v5770, %v6034
        %v6036 = vpop.f32.mrb[0].mxu0
        %v6037 = vpop.f32.mrb[0].mxu0
        %v6038 = vadd.f32 %v5771, %v6037
        %v6039 = vpop.f32.mrb[0].mxu0
        %6040 = vmatprep.mubr.bf16.mxu0 %v2524
        %6041 = vmatmul.mubr.bf16.gmra.mrb[0].mxu0 %v2523
        %v6042 = vpop.f32.mrb[0].mxu0
        %v6043 = vadd.f32 %v5772, %v6042
        %v6044 = vpop.f32.mrb[0].mxu0
        %v6045 = vpop.f32.mrb[0].mxu0
        %v6046 = vadd.f32 %v5773, %v6045
        %v6047 = vpop.f32.mrb[0].mxu0
        %6048 = vmatprep.mubr.bf16.mxu0 %v2526
        %6049 = vmatmul.mubr.bf16.gmra.mrb[0].mxu0 %v2525
        %v6050 = vpop.f32.mrb[0].mxu0
        %v6051 = vadd.f32 %v5774, %v6050
        %v6052 = vpop.f32.mrb[0].mxu0
        %v6053 = vpop.f32.mrb[0].mxu0
        %v6054 = vadd.f32 %v5775, %v6053
        %v6055 = vpop.f32.mrb[0].mxu0
        %6056 = vmatprep.mubr.bf16.mxu0 %v2528
        %6057 = vmatmul.mubr.bf16.gmra.mrb[0].mxu0 %v2527
        %v6058 = vpop.f32.mrb[0].mxu0
        %v6059 = vadd.f32 %v5776, %v6058
        %v6060 = vpop.f32.mrb[0].mxu0
        %v6061 = vpop.f32.mrb[0].mxu0
        %v6062 = vadd.f32 %v5777, %v6061
        %v6063 = vpop.f32.mrb[0].mxu0
        %6064 = vmatprep.mubr.bf16.mxu0 %v2530
        %6065 = vmatmul.mubr.bf16.gmra.mrb[0].mxu0 %v2529
        %v6066 = vpop.f32.mrb[0].mxu0
        %v6067 = vadd.f32 %v5778, %v6066
        %v6068 = vpop.f32.mrb[0].mxu0
        %v6069 = vpop.f32.mrb[0].mxu0
        %v6070 = vadd.f32 %v5779, %v6069
        %v6071 = vpop.f32.mrb[0].mxu0
        %6072 = vmatprep.mubr.bf16.mxu0 %v2532
        %6073 = vmatmul.mubr.bf16.gmra.mrb[0].mxu0 %v2531
        %v6074 = vpop.f32.mrb[0].mxu0
        %v6075 = vadd.f32 %v5780, %v6074
        %v6076 = vpop.f32.mrb[0].mxu0
        %v6077 = vpop.f32.mrb[0].mxu0
        %v6078 = vadd.f32 %v5781, %v6077
        %v6079 = vpop.f32.mrb[0].mxu0
        %6080 = vmatprep.mubr.bf16.mxu0 %v2534
        %6081 = vmatmul.mubr.bf16.gmra.mrb[0].mxu0 %v2533
        %v6082 = vpop.f32.mrb[0].mxu0
        %v6083 = vadd.f32 %v5782, %v6082
        %v6084 = vpop.f32.mrb[0].mxu0
        %v6085 = vpop.f32.mrb[0].mxu0
        %v6086 = vadd.f32 %v5783, %v6085
        %v6087 = vpop.f32.mrb[0].mxu0
        %6088 = vmatprep.mubr.bf16.mxu0 %v2536
        %6089 = vmatmul.mubr.bf16.gmra.mrb[0].mxu0 %v2535
        %v6090 = vpop.f32.mrb[0].mxu0
        %v6091 = vadd.f32 %v5784, %v6090
        %v6092 = vpop.f32.mrb[0].mxu0
        %v6093 = vpop.f32.mrb[0].mxu0
        %v6094 = vadd.f32 %v5785, %v6093
        %v6095 = vpop.f32.mrb[0].mxu0
        %6096 = vmatprep.mubr.bf16.mxu0 %v2538
        %6097 = vmatmul.mubr.bf16.gmra.mrb[0].mxu0 %v2537
        %v6098 = vpop.f32.mrb[0].mxu0
        %v6099 = vadd.f32 %v5786, %v6098
        %v6100 = vpop.f32.mrb[0].mxu0
        %v6101 = vpop.f32.mrb[0].mxu0
        %v6102 = vadd.f32 %v5787, %v6101
        %v6103 = vpop.f32.mrb[0].mxu0
        %6104 = vmatprep.mubr.bf16.mxu0 %v2540
        %6105 = vmatmul.mubr.bf16.gmra.mrb[0].mxu0 %v2539
        %v6106 = vpop.f32.mrb[0].mxu0
        %v6107 = vadd.f32 %v5788, %v6106
        %v6108 = vpop.f32.mrb[0].mxu0
        %v6109 = vpop.f32.mrb[0].mxu0
        %v6110 = vadd.f32 %v5789, %v6109
        %v6111 = vpop.f32.mrb[0].mxu0
        %6112 = vmatprep.mubr.bf16.mxu0 %v2542
        %6113 = vmatmul.mubr.bf16.gmra.mrb[0].mxu0 %v2541
        %v6114 = vpop.f32.mrb[0].mxu0
        %v6115 = vadd.f32 %v5790, %v6114
        %v6116 = vpop.f32.mrb[0].mxu0
        %v6117 = vpop.f32.mrb[0].mxu0
        %v6118 = vadd.f32 %v5791, %v6117
        %v6119 = vpop.f32.mrb[0].mxu0
        %6120 = vmatprep.mubr.bf16.mxu0 %v2544
        %6121 = vmatmul.mubr.bf16.gmra.mrb[0].mxu0 %v2543
        %v6122 = vpop.f32.mrb[0].mxu0
        %v6123 = vadd.f32 %v5792, %v6122
        %v6124 = vpop.f32.mrb[0].mxu0
        %v6125 = vpop.f32.mrb[0].mxu0
        %v6126 = vadd.f32 %v5793, %v6125
        %v6127 = vpop.f32.mrb[0].mxu0
        %6128 = vmatprep.mubr.bf16.mxu0 %v2546
        %6129 = vmatmul.mubr.bf16.gmra.mrb[0].mxu0 %v2545
        %v6130 = vpop.f32.mrb[0].mxu0
        %v6131 = vadd.f32 %v5794, %v6130
        %v6132 = vpop.f32.mrb[0].mxu0
        %v6133 = vpop.f32.mrb[0].mxu0
        %v6134 = vadd.f32 %v5795, %v6133
        %v6135 = vpop.f32.mrb[0].mxu0
        %6136 = vmatprep.mubr.bf16.mxu0 %v2548
        %6137 = vmatmul.mubr.bf16.gmra.mrb[0].mxu0 %v2547
        %v6138 = vpop.f32.mrb[0].mxu0
        %v6139 = vadd.f32 %v5796, %v6138
        %v6140 = vpop.f32.mrb[0].mxu0
        %v6141 = vpop.f32.mrb[0].mxu0
        %v6142 = vadd.f32 %v5797, %v6141
        %v6143 = vpop.f32.mrb[0].mxu0
        %6144 = vmatprep.mubr.bf16.mxu0 %v2550
        %6145 = vmatmul.mubr.bf16.gmra.mrb[0].mxu0 %v2549
        %v6146 = vpop.f32.mrb[0].mxu0
        %v6147 = vadd.f32 %v5798, %v6146
        %v6148 = vpop.f32.mrb[0].mxu0
        %v6149 = vpop.f32.mrb[0].mxu0
        %v6150 = vadd.f32 %v5799, %v6149
        %v6151 = vpop.f32.mrb[0].mxu0
        %6152 = vmatprep.mubr.bf16.mxu0 %v2552
        %6153 = vmatmul.mubr.bf16.gmra.mrb[0].mxu0 %v2551
        %v6154 = vpop.f32.mrb[0].mxu0
        %v6155 = vadd.f32 %v5800, %v6154
        %v6156 = vpop.f32.mrb[0].mxu0
        %v6157 = vpop.f32.mrb[0].mxu0
        %v6158 = vadd.f32 %v5801, %v6157
        %v6159 = vpop.f32.mrb[0].mxu0
        %6160 = vmatprep.mubr.bf16.mxu0 %v2554
        %6161 = vmatmul.mubr.bf16.gmra.mrb[0].mxu0 %v2553
        %v6162 = vpop.f32.mrb[0].mxu0
        %v6163 = vadd.f32 %v5802, %v6162
        %v6164 = vpop.f32.mrb[0].mxu0
        %v6165 = vpop.f32.mrb[0].mxu0
        %v6166 = vadd.f32 %v5803, %v6165
        %v6167 = vpop.f32.mrb[0].mxu0
        %6168 = vmatprep.mubr.bf16.mxu0 %v2556
        %6169 = vmatmul.mubr.bf16.gmra.mrb[0].mxu0 %v2555
        %v6170 = vpop.f32.mrb[0].mxu0
        %v6171 = vadd.f32 %v5804, %v6170
        %v6172 = vpop.f32.mrb[0].mxu0
        %v6173 = vpop.f32.mrb[0].mxu0
        %v6174 = vadd.f32 %v5805, %v6173
        %v6175 = vpop.f32.mrb[0].mxu0
        %6176 = vmatprep.mubr.bf16.mxu0 %v2558
        %6177 = vmatmul.mubr.bf16.gmra.mrb[0].mxu0 %v2557
        %v6178 = vpop.f32.mrb[0].mxu0
        %v6179 = vadd.f32 %v5806, %v6178
        %v6180 = vpop.f32.mrb[0].mxu0
        %v6181 = vpop.f32.mrb[0].mxu0
        %v6182 = vadd.f32 %v5807, %v6181
        %v6183 = vpop.f32.mrb[0].mxu0
        %6184 = vmatprep.mubr.bf16.mxu0 %v2560
        %6185 = vmatmul.mubr.bf16.gmra.mrb[0].mxu0 %v2559
        %v6186 = vpop.f32.mrb[0].mxu0
        %v6187 = vadd.f32 %v5808, %v6186
        %v6188 = vpop.f32.mrb[0].mxu0
        %v6189 = vpop.f32.mrb[0].mxu0
        %v6190 = vadd.f32 %v5809, %v6189
        %v6191 = vpop.f32.mrb[0].mxu0
        %6192 = vmatprep.mubr.bf16.mxu0 %v2562
        %6193 = vmatmul.mubr.bf16.gmra.mrb[0].mxu0 %v2561
        %v6194 = vpop.f32.mrb[0].mxu0
        %v6195 = vadd.f32 %v5810, %v6194
        %v6196 = vpop.f32.mrb[0].mxu0
        %v6197 = vpop.f32.mrb[0].mxu0
        %v6198 = vadd.f32 %v5811, %v6197
        %v6199 = vpop.f32.mrb[0].mxu0
        %6200 = vmatprep.mubr.bf16.mxu0 %v2564
        %6201 = vmatmul.mubr.bf16.gmra.mrb[0].mxu0 %v2563
        %v6202 = vpop.f32.mrb[0].mxu0
        %v6203 = vadd.f32 %v5812, %v6202
        %v6204 = vpop.f32.mrb[0].mxu0
        %v6205 = vpop.f32.mrb[0].mxu0
        %v6206 = vadd.f32 %v5813, %v6205
        %v6207 = vpop.f32.mrb[0].mxu0
        %6208 = vmatprep.mubr.bf16.mxu0 %v2566
        %6209 = vmatmul.mubr.bf16.gmra.mrb[0].mxu0 %v2565
        %v6210 = vpop.f32.mrb[0].mxu0
        %v6211 = vadd.f32 %v5814, %v6210
        %v6212 = vpop.f32.mrb[0].mxu0
        %v6213 = vpop.f32.mrb[0].mxu0
        %v6214 = vadd.f32 %v5815, %v6213
        %v6215 = vpop.f32.mrb[0].mxu0
        %6216 = vmatprep.mubr.bf16.mxu0 %v2568
        %6217 = vmatmul.mubr.bf16.gmra.mrb[0].mxu0 %v2567
        %v6218 = vpop.f32.mrb[0].mxu0
        %v6219 = vadd.f32 %v5816, %v6218
        %v6220 = vpop.f32.mrb[0].mxu0
        %v6221 = vpop.f32.mrb[0].mxu0
        %v6222 = vadd.f32 %v5817, %v6221
        %v6223 = vpop.f32.mrb[0].mxu0
        %6224 = vmatprep.mubr.bf16.mxu0 %v2570
        %6225 = vmatmul.mubr.bf16.gmra.mrb[0].mxu0 %v2569
        %v6226 = vpop.f32.mrb[0].mxu0
        %v6227 = vadd.f32 %v5818, %v6226
        %v6228 = vpop.f32.mrb[0].mxu0
        %v6229 = vpop.f32.mrb[0].mxu0
        %v6230 = vadd.f32 %v5819, %v6229
        %v6231 = vpop.f32.mrb[0].mxu0
        %6232 = vmatprep.mubr.bf16.mxu0 %v2572
        %6233 = vmatmul.mubr.bf16.gmra.mrb[0].mxu0 %v2571
        %v6234 = vpop.f32.mrb[0].mxu0
        %v6235 = vadd.f32 %v5820, %v6234
        %v6236 = vpop.f32.mrb[0].mxu0
        %v6237 = vpop.f32.mrb[0].mxu0
        %v6238 = vadd.f32 %v5821, %v6237
        %v6239 = vpop.f32.mrb[0].mxu0
        %6240 = vmatprep.mubr.bf16.mxu0 %v2574
        %6241 = vmatmul.mubr.bf16.gmra.mrb[0].mxu0 %v2573
        %v6242 = vpop.f32.mrb[0].mxu0
        %v6243 = vadd.f32 %v5822, %v6242
        %v6244 = vpop.f32.mrb[0].mxu0
        %v6245 = vpop.f32.mrb[0].mxu0
        %v6246 = vadd.f32 %v5823, %v6245
        %v6247 = vpop.f32.mrb[0].mxu0
        %6248 = vmatprep.mubr.bf16.mxu0 %v2576
        %6249 = vmatmul.mubr.bf16.gmra.mrb[0].mxu0 %v2575
        %v6250 = vpop.f32.mrb[0].mxu0
        %v6251 = vadd.f32 %v5824, %v6250
        %v6252 = vpop.f32.mrb[0].mxu0
        %v6253 = vpop.f32.mrb[0].mxu0
        %v6254 = vadd.f32 %v5825, %v6253
        %v6255 = vpop.f32.mrb[0].mxu0
        %6256 = vmatprep.mubr.bf16.mxu0 %v2578
        %6257 = vmatmul.mubr.bf16.gmra.mrb[0].mxu0 %v2577
        %v6258 = vpop.f32.mrb[0].mxu0
        %v6259 = vadd.f32 %v5826, %v6258
        %v6260 = vpop.f32.mrb[0].mxu0
        %v6261 = vpop.f32.mrb[0].mxu0
        %v6262 = vadd.f32 %v5827, %v6261
        %v6263 = vpop.f32.mrb[0].mxu0
        %6264 = vmatprep.mubr.bf16.mxu0 %v2580
        %6265 = vmatmul.mubr.bf16.gmra.mrb[0].mxu0 %v2579
        %v6266 = vpop.f32.mrb[0].mxu0
        %v6267 = vadd.f32 %v5828, %v6266
        %v6268 = vpop.f32.mrb[0].mxu0
        %v6269 = vpop.f32.mrb[0].mxu0
        %v6270 = vadd.f32 %v5829, %v6269
        %v6271 = vpop.f32.mrb[0].mxu0
        %6272 = vmatprep.mubr.bf16.mxu0 %v2582
        %6273 = vmatmul.mubr.bf16.gmra.mrb[0].mxu0 %v2581
        %v6274 = vpop.f32.mrb[0].mxu0
        %v6275 = vadd.f32 %v5830, %v6274
        %v6276 = vpop.f32.mrb[0].mxu0
        %v6277 = vpop.f32.mrb[0].mxu0
        %v6278 = vadd.f32 %v5831, %v6277
        %v6279 = vpop.f32.mrb[0].mxu0
        %6280 = vmatprep.mubr.bf16.mxu0 %v2584
        %6281 = vmatmul.mubr.bf16.gmra.mrb[0].mxu0 %v2583
        %v6282 = vpop.f32.mrb[0].mxu0
        %v6283 = vadd.f32 %v5832, %v6282
        %v6284 = vpop.f32.mrb[0].mxu0
        %v6285 = vpop.f32.mrb[0].mxu0
        %v6286 = vadd.f32 %v5833, %v6285
        %v6287 = vpop.f32.mrb[0].mxu0
        %6288 = vmatprep.mubr.bf16.mxu0 %v2586
        %6289 = vmatmul.mubr.bf16.gmra.mrb[0].mxu0 %v2585
        %v6290 = vpop.f32.mrb[0].mxu0
        %v6291 = vadd.f32 %v5834, %v6290
        %v6292 = vpop.f32.mrb[0].mxu0
        %v6293 = vpop.f32.mrb[0].mxu0
        %v6294 = vadd.f32 %v5835, %v6293
        %v6295 = vpop.f32.mrb[0].mxu0
        %6296 = vmatprep.mubr.bf16.mxu0 %v2588
        %6297 = vmatmul.mubr.bf16.gmra.mrb[0].mxu0 %v2587
        %v6298 = vpop.f32.mrb[0].mxu0
        %v6299 = vadd.f32 %v5836, %v6298
        %v6300 = vpop.f32.mrb[0].mxu0
        %v6301 = vpop.f32.mrb[0].mxu0
        %v6302 = vadd.f32 %v5837, %v6301
        %v6303 = vpop.f32.mrb[0].mxu0
        %6304 = vmatprep.mubr.bf16.mxu0 %v2590
        %6305 = vmatmul.mubr.bf16.gmra.mrb[0].mxu0 %v2589
        %v6306 = vpop.f32.mrb[0].mxu0
        %v6307 = vadd.f32 %v5838, %v6306
        %v6308 = vpop.f32.mrb[0].mxu0
        %v6309 = vpop.f32.mrb[0].mxu0
        %v6310 = vadd.f32 %v5839, %v6309
        %v6311 = vpop.f32.mrb[0].mxu0
        %6312 = vmatprep.mubr.bf16.mxu0 %v2592
        %6313 = vmatmul.mubr.bf16.gmra.mrb[0].mxu0 %v2591
        %v6314 = vpop.f32.mrb[0].mxu0
        %v6315 = vadd.f32 %v5840, %v6314
        %v6316 = vpop.f32.mrb[0].mxu0
        %v6317 = vpop.f32.mrb[0].mxu0
        %v6318 = vadd.f32 %v5841, %v6317
        %v6319 = vpop.f32.mrb[0].mxu0
        %6320 = vmatprep.mubr.bf16.mxu0 %v2594
        %6321 = vmatmul.mubr.bf16.gmra.mrb[0].mxu0 %v2593
        %v6322 = vpop.f32.mrb[0].mxu0
        %v6323 = vadd.f32 %v5842, %v6322
        %v6324 = vpop.f32.mrb[0].mxu0
        %v6325 = vpop.f32.mrb[0].mxu0
        %v6326 = vadd.f32 %v5843, %v6325
        %v6327 = vpop.f32.mrb[0].mxu0
        %6328 = vmatprep.mubr.bf16.mxu0 %v2596
        %6329 = vmatmul.mubr.bf16.gmra.mrb[0].mxu0 %v2595
        %v6330 = vpop.f32.mrb[0].mxu0
        %v6331 = vadd.f32 %v5844, %v6330
        %v6332 = vpop.f32.mrb[0].mxu0
        %v6333 = vpop.f32.mrb[0].mxu0
        %v6334 = vadd.f32 %v5845, %v6333
        %v6335 = vpop.f32.mrb[0].mxu0
        %6336 = vmatprep.mubr.bf16.mxu0 %v2598
        %6337 = vmatmul.mubr.bf16.gmra.mrb[0].mxu0 %v2597
        %v6338 = vpop.f32.mrb[0].mxu0
        %v6339 = vadd.f32 %v5846, %v6338
        %v6340 = vpop.f32.mrb[0].mxu0
        %v6341 = vpop.f32.mrb[0].mxu0
        %v6342 = vadd.f32 %v5847, %v6341
        %v6343 = vpop.f32.mrb[0].mxu0
        %6344 = vmatprep.mubr.bf16.mxu0 %v2600
        %6345 = vmatmul.mubr.bf16.gmra.mrb[0].mxu0 %v2599
        %v6346 = vpop.f32.mrb[0].mxu0
        %v6347 = vadd.f32 %v5848, %v6346
        %v6348 = vpop.f32.mrb[0].mxu0
        %v6349 = vpop.f32.mrb[0].mxu0
        %v6350 = vadd.f32 %v5849, %v6349
        %v6351 = vpop.f32.mrb[0].mxu0
        %6352 = vmatprep.mubr.bf16.mxu0 %v2602
        %6353 = vmatmul.mubr.bf16.gmra.mrb[0].mxu0 %v2601
        %v6354 = vpop.f32.mrb[0].mxu0
        %v6355 = vadd.f32 %v5850, %v6354
        %v6356 = vpop.f32.mrb[0].mxu0
        %v6357 = vpop.f32.mrb[0].mxu0
        %v6358 = vadd.f32 %v5851, %v6357
        %v6359 = vpop.f32.mrb[0].mxu0
        %6360 = vmatprep.mubr.bf16.mxu0 %v2604
        %6361 = vmatmul.mubr.bf16.gmra.mrb[0].mxu0 %v2603
        %v6362 = vpop.f32.mrb[0].mxu0
        %v6363 = vadd.f32 %v5852, %v6362
        %v6364 = vpop.f32.mrb[0].mxu0
        %v6365 = vpop.f32.mrb[0].mxu0
        %v6366 = vadd.f32 %v5853, %v6365
        %v6367 = vpop.f32.mrb[0].mxu0
        %6368 = vmatprep.mubr.bf16.mxu0 %v2606
        %6369 = vmatmul.mubr.bf16.gmra.mrb[0].mxu0 %v2605
        %v6370 = vpop.f32.mrb[0].mxu0
        %v6371 = vadd.f32 %v5854, %v6370
        %v6372 = vpop.f32.mrb[0].mxu0
        %v6373 = vpop.f32.mrb[0].mxu0
        %v6374 = vadd.f32 %v5855, %v6373
        %v6375 = vpop.f32.mrb[0].mxu0
        %6376 = vmatprep.mubr.bf16.mxu0 %v2608
        %6377 = vmatmul.mubr.bf16.gmra.mrb[0].mxu0 %v2607
        %v6378 = vpop.f32.mrb[0].mxu0
        %v6379 = vadd.f32 %v5856, %v6378
        %v6380 = vpop.f32.mrb[0].mxu0
        %v6381 = vpop.f32.mrb[0].mxu0
        %v6382 = vadd.f32 %v5857, %v6381
        %v6383 = vpop.f32.mrb[0].mxu0
        %6384 = vmatprep.mubr.bf16.mxu0 %v2610
        %6385 = vmatmul.mubr.bf16.gmra.mrb[0].mxu0 %v2609
        %v6386 = vpop.f32.mrb[0].mxu0
        %v6387 = vadd.f32 %v5858, %v6386
        %v6388 = vpop.f32.mrb[0].mxu0
        %v6389 = vpop.f32.mrb[0].mxu0
        %v6390 = vadd.f32 %v5859, %v6389
        %v6391 = vpop.f32.mrb[0].mxu0
        %6392 = vmatprep.mubr.bf16.mxu0 %v2612
        %6393 = vmatmul.mubr.bf16.gmra.mrb[0].mxu0 %v2611
        %v6394 = vpop.f32.mrb[0].mxu0
        %v6395 = vadd.f32 %v5860, %v6394
        %v6396 = vpop.f32.mrb[0].mxu0
        %v6397 = vpop.f32.mrb[0].mxu0
        %v6398 = vadd.f32 %v5861, %v6397
        %v6399 = vpop.f32.mrb[0].mxu0
        %6400 = vmatprep.mubr.bf16.mxu0 %v2614
        %6401 = vmatmul.mubr.bf16.gmra.mrb[0].mxu0 %v2613
        %v6402 = vpop.f32.mrb[0].mxu0
        %v6403 = vadd.f32 %v5862, %v6402
        %v6404 = vpop.f32.mrb[0].mxu0
        %v6405 = vpop.f32.mrb[0].mxu0
        %v6406 = vadd.f32 %v5863, %v6405
        %v6407 = vpop.f32.mrb[0].mxu0
        %6408 = vmatprep.mubr.bf16.mxu0 %v2616
        %6409 = vmatmul.mubr.bf16.gmra.mrb[0].mxu0 %v2615
        %v6410 = vpop.f32.mrb[0].mxu0
        %v6411 = vadd.f32 %v5864, %v6410
        %v6412 = vpop.f32.mrb[0].mxu0
        %v6413 = vpop.f32.mrb[0].mxu0
        %v6414 = vadd.f32 %v5865, %v6413
        %v6415 = vpop.f32.mrb[0].mxu0
        %6416 = vmatprep.mubr.bf16.mxu0 %v2618
        %6417 = vmatmul.mubr.bf16.gmra.mrb[0].mxu0 %v2617
        %v6418 = vpop.f32.mrb[0].mxu0
        %v6419 = vadd.f32 %v5866, %v6418
        %v6420 = vpop.f32.mrb[0].mxu0
        %v6421 = vpop.f32.mrb[0].mxu0
        %v6422 = vadd.f32 %v5867, %v6421
        %v6423 = vpop.f32.mrb[0].mxu0
        %6424 = vmatprep.mubr.bf16.mxu0 %v2620
        %6425 = vmatmul.mubr.bf16.gmra.mrb[0].mxu0 %v2619
        %v6426 = vpop.f32.mrb[0].mxu0
        %v6427 = vadd.f32 %v5868, %v6426
        %v6428 = vpop.f32.mrb[0].mxu0
        %v6429 = vpop.f32.mrb[0].mxu0
        %v6430 = vadd.f32 %v5869, %v6429
        %v6431 = vpop.f32.mrb[0].mxu0
        %6432 = vmatprep.mubr.bf16.mxu0 %v2622
        %6433 = vmatmul.mubr.bf16.gmra.mrb[0].mxu0 %v2621
        %v6434 = vpop.f32.mrb[0].mxu0
        %v6435 = vadd.f32 %v5870, %v6434
        %v6436 = vpop.f32.mrb[0].mxu0
        %v6437 = vpop.f32.mrb[0].mxu0
        %v6438 = vadd.f32 %v5871, %v6437
        %v6439 = vpop.f32.mrb[0].mxu0
        %6440 = vmatprep.mubr.bf16.mxu0 %v2624
        %6441 = vmatmul.mubr.bf16.gmra.mrb[0].mxu0 %v2623
        %v6442 = vpop.f32.mrb[0].mxu0
        %v6443 = vadd.f32 %v5872, %v6442
        %v6444 = vpop.f32.mrb[0].mxu0
        %v6445 = vpop.f32.mrb[0].mxu0
        %v6446 = vadd.f32 %v5873, %v6445
        %v6447 = vpop.f32.mrb[0].mxu0
        %6448 = vmatprep.mubr.bf16.mxu0 %v2626
        %6449 = vmatmul.mubr.bf16.gmra.mrb[0].mxu0 %v2625
        %v6450 = vpop.f32.mrb[0].mxu0
        %v6451 = vadd.f32 %v5874, %v6450
        %v6452 = vpop.f32.mrb[0].mxu0
        %v6453 = vpop.f32.mrb[0].mxu0
        %v6454 = vadd.f32 %v5875, %v6453
        %v6455 = vpop.f32.mrb[0].mxu0
        %6456 = vmatprep.mubr.bf16.mxu0 %v2628
        %6457 = vmatmul.mubr.bf16.gmra.mrb[0].mxu0 %v2627
        %v6458 = vpop.f32.mrb[0].mxu0
        %v6459 = vadd.f32 %v5876, %v6458
        %v6460 = vpop.f32.mrb[0].mxu0
        %v6461 = vpop.f32.mrb[0].mxu0
        %v6462 = vadd.f32 %v5877, %v6461
        %v6463 = vpop.f32.mrb[0].mxu0
        %6464 = vmatprep.mubr.bf16.mxu0 %v2630
        %6465 = vmatmul.mubr.bf16.gmra.mrb[0].mxu0 %v2629
        %v6466 = vpop.f32.mrb[0].mxu0
        %v6467 = vadd.f32 %v5878, %v6466
        %v6468 = vpop.f32.mrb[0].mxu0
        %v6469 = vpop.f32.mrb[0].mxu0
        %v6470 = vadd.f32 %v5879, %v6469
        %v6471 = vpop.f32.mrb[0].mxu0
        %6472 = vmatprep.mubr.bf16.mxu0 %v2632
        %6473 = vmatmul.mubr.bf16.gmra.mrb[0].mxu0 %v2631
        %v6474 = vpop.f32.mrb[0].mxu0
        %v6475 = vadd.f32 %v5880, %v6474
        %v6476 = vpop.f32.mrb[0].mxu0
        %v6477 = vpop.f32.mrb[0].mxu0
        %v6478 = vadd.f32 %v5881, %v6477
        %v6479 = vpop.f32.mrb[0].mxu0
        %6480 = vmatprep.mubr.bf16.mxu0 %v2634
        %6481 = vmatmul.mubr.bf16.gmra.mrb[0].mxu0 %v2633
        %v6482 = vpop.f32.mrb[0].mxu0
        %v6483 = vadd.f32 %v5882, %v6482
        %v6484 = vpop.f32.mrb[0].mxu0
        %v6485 = vpop.f32.mrb[0].mxu0
        %v6486 = vadd.f32 %v5883, %v6485
        %v6487 = vpop.f32.mrb[0].mxu0
        %6488 = vmatprep.mubr.bf16.mxu0 %v2636
        %6489 = vmatmul.mubr.bf16.gmra.mrb[0].mxu0 %v2635
        %v6490 = vpop.f32.mrb[0].mxu0
        %v6491 = vadd.f32 %v5884, %v6490
        %v6492 = vpop.f32.mrb[0].mxu0
        %v6493 = vpop.f32.mrb[0].mxu0
        %v6494 = vadd.f32 %v5885, %v6493
        %v6495 = vpop.f32.mrb[0].mxu0
        %6496 = vmatprep.mubr.bf16.mxu0 %v2638
        %6497 = vmatmul.mubr.bf16.gmra.mrb[0].mxu0 %v2637
        %v6498 = vpop.f32.mrb[0].mxu0
        %v6499 = vadd.f32 %v5886, %v6498
        %v6500 = vpop.f32.mrb[0].mxu0
        %v6501 = vpop.f32.mrb[0].mxu0
        %v6502 = vadd.f32 %v5887, %v6501
        %v6503 = vpop.f32.mrb[0].mxu0
        %6504 = vmatprep.mubr.bf16.mxu0 %v2640
        %6505 = vmatmul.mubr.bf16.gmra.mrb[0].mxu0 %v2639
        %v6506 = vpop.f32.mrb[0].mxu0
        %v6507 = vadd.f32 %v5888, %v6506
        %v6508 = vpop.f32.mrb[0].mxu0
        %v6509 = vpop.f32.mrb[0].mxu0
        %v6510 = vadd.f32 %v5889, %v6509
        %v6511 = vpop.f32.mrb[0].mxu0
        %6512 = vmatprep.mubr.bf16.mxu0 %v2642
        %6513 = vmatmul.mubr.bf16.gmra.mrb[0].mxu0 %v2641
        %v6514 = vpop.f32.mrb[0].mxu0
        %v6515 = vadd.f32 %v5890, %v6514
        %v6516 = vpop.f32.mrb[0].mxu0
        %v6517 = vpop.f32.mrb[0].mxu0
        %v6518 = vadd.f32 %v5891, %v6517
        %v6519 = vpop.f32.mrb[0].mxu0
        %6520 = vmatprep.mubr.bf16.mxu0 %v2644
        %6521 = vmatmul.mubr.bf16.gmra.mrb[0].mxu0 %v2643
        %v6522 = vpop.f32.mrb[0].mxu0
        %v6523 = vadd.f32 %v5892, %v6522
        %v6524 = vpop.f32.mrb[0].mxu0
        %v6525 = vpop.f32.mrb[0].mxu0
        %v6526 = vadd.f32 %v5893, %v6525
        %v6527 = vpop.f32.mrb[0].mxu0
        %6528 = vmatprep.mubr.bf16.mxu0 %v2646
        %6529 = vmatmul.mubr.bf16.gmra.mrb[0].mxu0 %v2645
        %v6530 = vpop.f32.mrb[0].mxu0
        %v6531 = vadd.f32 %v5894, %v6530
        %v6532 = vpop.f32.mrb[0].mxu0
        %v6533 = vpop.f32.mrb[0].mxu0
        %v6534 = vadd.f32 %v5895, %v6533
        %v6535 = vpop.f32.mrb[0].mxu0
        %6536 = vdwg.mxu0
        %v6537 = vpack.c.bf16 %v6030, %v6027
        %v6538 = vpack.c.bf16 %v6038, %v6035
        %v6539 = vpack.c.bf16 %v6046, %v6043
        %v6540 = vpack.c.bf16 %v6054, %v6051
        %v6541 = vpack.c.bf16 %v6062, %v6059
        %v6542 = vpack.c.bf16 %v6070, %v6067
        %v6543 = vpack.c.bf16 %v6078, %v6075
        %v6544 = vpack.c.bf16 %v6086, %v6083
        %v6545 = vpack.c.bf16 %v6094, %v6091
        %v6546 = vpack.c.bf16 %v6102, %v6099
        %v6547 = vpack.c.bf16 %v6110, %v6107
        %v6548 = vpack.c.bf16 %v6118, %v6115
        %v6549 = vpack.c.bf16 %v6126, %v6123
        %v6550 = vpack.c.bf16 %v6134, %v6131
        %v6551 = vpack.c.bf16 %v6142, %v6139
        %v6552 = vpack.c.bf16 %v6150, %v6147
        %v6553 = vpack.c.bf16 %v6158, %v6155
        %v6554 = vpack.c.bf16 %v6166, %v6163
        %v6555 = vpack.c.bf16 %v6174, %v6171
        %v6556 = vpack.c.bf16 %v6182, %v6179
        %v6557 = vpack.c.bf16 %v6190, %v6187
        %v6558 = vpack.c.bf16 %v6198, %v6195
        %v6559 = vpack.c.bf16 %v6206, %v6203
        %v6560 = vpack.c.bf16 %v6214, %v6211
        %v6561 = vpack.c.bf16 %v6222, %v6219
        %v6562 = vpack.c.bf16 %v6230, %v6227
        %v6563 = vpack.c.bf16 %v6238, %v6235
        %v6564 = vpack.c.bf16 %v6246, %v6243
        %v6565 = vpack.c.bf16 %v6254, %v6251
        %v6566 = vpack.c.bf16 %v6262, %v6259
        %v6567 = vpack.c.bf16 %v6270, %v6267
        %v6568 = vpack.c.bf16 %v6278, %v6275
        %v6569 = vpack.c.bf16 %v6286, %v6283
        %v6570 = vpack.c.bf16 %v6294, %v6291
        %v6571 = vpack.c.bf16 %v6302, %v6299
        %v6572 = vpack.c.bf16 %v6310, %v6307
        %v6573 = vpack.c.bf16 %v6318, %v6315
        %v6574 = vpack.c.bf16 %v6326, %v6323
        %v6575 = vpack.c.bf16 %v6334, %v6331
        %v6576 = vpack.c.bf16 %v6342, %v6339
        %v6577 = vpack.c.bf16 %v6350, %v6347
        %v6578 = vpack.c.bf16 %v6358, %v6355
        %v6579 = vpack.c.bf16 %v6366, %v6363
        %v6580 = vpack.c.bf16 %v6374, %v6371
        %v6581 = vpack.c.bf16 %v6382, %v6379
        %v6582 = vpack.c.bf16 %v6390, %v6387
        %v6583 = vpack.c.bf16 %v6398, %v6395
        %v6584 = vpack.c.bf16 %v6406, %v6403
        %v6585 = vpack.c.bf16 %v6414, %v6411
        %v6586 = vpack.c.bf16 %v6422, %v6419
        %v6587 = vpack.c.bf16 %v6430, %v6427
        %v6588 = vpack.c.bf16 %v6438, %v6435
        %v6589 = vpack.c.bf16 %v6446, %v6443
        %v6590 = vpack.c.bf16 %v6454, %v6451
        %v6591 = vpack.c.bf16 %v6462, %v6459
        %v6592 = vpack.c.bf16 %v6470, %v6467
        %v6593 = vpack.c.bf16 %v6478, %v6475
        %v6594 = vpack.c.bf16 %v6486, %v6483
        %v6595 = vpack.c.bf16 %v6494, %v6491
        %v6596 = vpack.c.bf16 %v6502, %v6499
        %v6597 = vpack.c.bf16 %v6510, %v6507
        %v6598 = vpack.c.bf16 %v6518, %v6515
        %v6599 = vpack.c.bf16 %v6526, %v6523
        %v6600 = vpack.c.bf16 %v6534, %v6531
        %v6601 = vmax.bf16 %v6537, 0
        %v6602 = vmax.bf16 %v6538, 0
        %v6603 = vmax.bf16 %v6539, 0
        %v6604 = vmax.bf16 %v6540, 0
        %v6605 = vmax.bf16 %v6541, 0
        %v6606 = vmax.bf16 %v6542, 0
        %v6607 = vmax.bf16 %v6543, 0
        %v6608 = vmax.bf16 %v6544, 0
        %v6609 = vmax.bf16 %v6545, 0
        %v6610 = vmax.bf16 %v6546, 0
        %v6611 = vmax.bf16 %v6547, 0
        %v6612 = vmax.bf16 %v6548, 0
        %v6613 = vmax.bf16 %v6549, 0
        %v6614 = vmax.bf16 %v6550, 0
        %v6615 = vmax.bf16 %v6551, 0
        %v6616 = vmax.bf16 %v6552, 0
        %v6617 = vmax.bf16 %v6553, 0
        %v6618 = vmax.bf16 %v6554, 0
        %v6619 = vmax.bf16 %v6555, 0
        %v6620 = vmax.bf16 %v6556, 0
        %v6621 = vmax.bf16 %v6557, 0
        %v6622 = vmax.bf16 %v6558, 0
        %v6623 = vmax.bf16 %v6559, 0
        %v6624 = vmax.bf16 %v6560, 0
        %v6625 = vmax.bf16 %v6561, 0
        %v6626 = vmax.bf16 %v6562, 0
        %v6627 = vmax.bf16 %v6563, 0
        %v6628 = vmax.bf16 %v6564, 0
        %v6629 = vmax.bf16 %v6565, 0
        %v6630 = vmax.bf16 %v6566, 0
        %v6631 = vmax.bf16 %v6567, 0
        %v6632 = vmax.bf16 %v6568, 0
        %v6633 = vmax.bf16 %v6569, 0
        %v6634 = vmax.bf16 %v6570, 0
        %v6635 = vmax.bf16 %v6571, 0
        %v6636 = vmax.bf16 %v6572, 0
        %v6637 = vmax.bf16 %v6573, 0
        %v6638 = vmax.bf16 %v6574, 0
        %v6639 = vmax.bf16 %v6575, 0
        %v6640 = vmax.bf16 %v6576, 0
        %v6641 = vmax.bf16 %v6577, 0
        %v6642 = vmax.bf16 %v6578, 0
        %v6643 = vmax.bf16 %v6579, 0
        %v6644 = vmax.bf16 %v6580, 0
        %v6645 = vmax.bf16 %v6581, 0
        %v6646 = vmax.bf16 %v6582, 0
        %v6647 = vmax.bf16 %v6583, 0
        %v6648 = vmax.bf16 %v6584, 0
        %v6649 = vmax.bf16 %v6585, 0
        %v6650 = vmax.bf16 %v6586, 0
        %v6651 = vmax.bf16 %v6587, 0
        %v6652 = vmax.bf16 %v6588, 0
        %v6653 = vmax.bf16 %v6589, 0
        %v6654 = vmax.bf16 %v6590, 0
        %v6655 = vmax.bf16 %v6591, 0
        %v6656 = vmax.bf16 %v6592, 0
        %v6657 = vmax.bf16 %v6593, 0
        %v6658 = vmax.bf16 %v6594, 0
        %v6659 = vmax.bf16 %v6595, 0
        %v6660 = vmax.bf16 %v6596, 0
        %v6661 = vmax.bf16 %v6597, 0
        %v6662 = vmax.bf16 %v6598, 0
        %v6663 = vmax.bf16 %v6599, 0
        %v6664 = vmax.bf16 %v6600, 0
        %v6665 = vld [vmem:[%s5] sm:$0xf]
        %v6666 = vld [vmem:[%s5 + $0x4] sm:$0xf]
        %v6667 = vld [vmem:[%s5 + $0x8] sm:$0xf]
        %v6668 = vld [vmem:[%s5 + $0xc] sm:$0xf]
        %v6669 = vld [vmem:[%s5 + $0x10] sm:$0xf]
        %v6670 = vld [vmem:[%s5 + $0x14] sm:$0xf]
        %v6671 = vld [vmem:[%s5 + $0x18] sm:$0xf]
        %v6672 = vld [vmem:[%s5 + $0x1c] sm:$0xf]
        %v6673 = vld [vmem:[%s5 + $0x20] sm:$0xf]
        %v6674 = vld [vmem:[%s5 + $0x24] sm:$0xf]
        %v6675 = vld [vmem:[%s5 + $0x28] sm:$0xf]
        %v6676 = vld [vmem:[%s5 + $0x2c] sm:$0xf]
        %v6677 = vld [vmem:[%s5 + $0x30] sm:$0xf]
        %v6678 = vld [vmem:[%s5 + $0x34] sm:$0xf]
        %v6679 = vld [vmem:[%s5 + $0x38] sm:$0xf]
        %v6680 = vld [vmem:[%s5 + $0x3c] sm:$0xf]
        %v6681 = vld [vmem:[%s6] sm:$0x1]
        %v6683 = vlaneseq
        %v6684 = vshrl.u32 %v6683, 7
        %v6685 = vsub.s32 0, %v6684
        %v6686 = vrot.slane %v6681, %v6685
        %v6704 = vunpack.c.l.b16 %v6665
        %v6705 = vunpack.c.l.b16 %v6666
        %v6706 = vunpack.c.l.b16 %v6667
        %v6707 = vunpack.c.l.b16 %v6668
        %v6708 = vunpack.c.l.b16 %v6669
        %v6709 = vunpack.c.l.b16 %v6670
        %v6710 = vunpack.c.l.b16 %v6671
        %v6711 = vunpack.c.l.b16 %v6672
        %v6712 = vunpack.c.l.b16 %v6673
        %v6713 = vunpack.c.l.b16 %v6674
        %v6714 = vunpack.c.l.b16 %v6675
        %v6715 = vunpack.c.l.b16 %v6676
        %v6716 = vunpack.c.l.b16 %v6677
        %v6717 = vunpack.c.l.b16 %v6678
        %v6718 = vunpack.c.l.b16 %v6679
        %v6719 = vunpack.c.l.b16 %v6680
        %v6720 = vpack.c.b16 %v6705, %v6704
        %v6721 = vpack.c.b16 %v6707, %v6706
        %v6722 = vpack.c.b16 %v6709, %v6708
        %v6723 = vpack.c.b16 %v6711, %v6710
        %v6724 = vpack.c.b16 %v6713, %v6712
        %v6725 = vpack.c.b16 %v6715, %v6714
        %v6726 = vpack.c.b16 %v6717, %v6716
        %v6727 = vpack.c.b16 %v6719, %v6718
        %6736 = vmatprep.subr.bf16.mxu0 0
        %6737 = vmatpush1.bf16.msra.mxu0 %v6720
        %6738 = vmatprep.subr.bf16.mxu0 0
        %6739 = vmatpush1.bf16.msra.mxu0 %v6721
        %6740 = vmatprep.subr.bf16.mxu0 0
        %6741 = vmatpush1.bf16.msra.mxu0 %v6722
        %6742 = vmatprep.subr.bf16.mxu0 0
        %6743 = vmatpush1.bf16.msra.mxu0 %v6723
        %6744 = vmatprep.subr.bf16.mxu0 0
        %6745 = vmatpush1.bf16.msra.mxu0 %v6724
        %6746 = vmatprep.subr.bf16.mxu0 0
        %6747 = vmatpush1.bf16.msra.mxu0 %v6725
        %6748 = vmatprep.subr.bf16.mxu0 0
        %6749 = vmatpush1.bf16.msra.mxu0 %v6726
        %6750 = vmatprep.subr.bf16.mxu0 0
        %6751 = vmatpush1.bf16.msra.mxu0 %v6727
        %6752 = vmatprep.subr.bf16.mxu0 0
        %6753 = vmatpush1.bf16.msra.mxu0 0
        %6754 = vmatprep.subr.bf16.mxu0 0
        %6755 = vmatpush1.bf16.msra.mxu0 0
        %6756 = vmatprep.subr.bf16.mxu0 0
        %6757 = vmatpush1.bf16.msra.mxu0 0
        %6758 = vmatprep.subr.bf16.mxu0 0
        %6759 = vmatpush1.bf16.msra.mxu0 0
        %6760 = vmatprep.subr.bf16.mxu0 0
        %6761 = vmatpush1.bf16.msra.mxu0 0
        %6762 = vmatprep.subr.bf16.mxu0 0
        %6763 = vmatpush1.bf16.msra.mxu0 0
        %6764 = vmatprep.subr.bf16.mxu0 0
        %6765 = vmatpush1.bf16.msra.mxu0 0
        %6766 = vmatprep.subr.bf16.mxu0 0
        %6767 = vmatpush1.bf16.msra.mxu0 0
        %6768 = vmatprep.mubr.bf16.mxu0 0
        %6769 = vmatmul.mubr.bf16.gmra.mrb[0].mxu0 %v6601
        %v6770 = vpop.f32.mrb[0].mxu0
        %v6771 = vadd.f32 %v6686, %v6770
        %v6772 = vpop.f32.mrb[0].mxu0
        %v6773 = vpop.f32.mrb[0].mxu0
        %v6774 = vadd.f32 %v6686, %v6773
        %v6775 = vpop.f32.mrb[0].mxu0
        %6776 = vmatprep.mubr.bf16.mxu0 0
        %6777 = vmatmul.mubr.bf16.gmra.mrb[0].mxu0 %v6602
        %v6778 = vpop.f32.mrb[0].mxu0
        %v6779 = vadd.f32 %v6686, %v6778
        %v6780 = vpop.f32.mrb[0].mxu0
        %v6781 = vpop.f32.mrb[0].mxu0
        %v6782 = vadd.f32 %v6686, %v6781
        %v6783 = vpop.f32.mrb[0].mxu0
        %6784 = vmatprep.mubr.bf16.mxu0 0
        %6785 = vmatmul.mubr.bf16.gmra.mrb[0].mxu0 %v6603
        %v6786 = vpop.f32.mrb[0].mxu0
        %v6787 = vadd.f32 %v6686, %v6786
        %v6788 = vpop.f32.mrb[0].mxu0
        %v6789 = vpop.f32.mrb[0].mxu0
        %v6790 = vadd.f32 %v6686, %v6789
        %v6791 = vpop.f32.mrb[0].mxu0
        %6792 = vmatprep.mubr.bf16.mxu0 0
        %6793 = vmatmul.mubr.bf16.gmra.mrb[0].mxu0 %v6604
        %v6794 = vpop.f32.mrb[0].mxu0
        %v6795 = vadd.f32 %v6686, %v6794
        %v6796 = vpop.f32.mrb[0].mxu0
        %v6797 = vpop.f32.mrb[0].mxu0
        %v6798 = vadd.f32 %v6686, %v6797
        %v6799 = vpop.f32.mrb[0].mxu0
        %6800 = vmatprep.mubr.bf16.mxu0 0
        %6801 = vmatmul.mubr.bf16.gmra.mrb[0].mxu0 %v6605
        %v6802 = vpop.f32.mrb[0].mxu0
        %v6803 = vadd.f32 %v6686, %v6802
        %v6804 = vpop.f32.mrb[0].mxu0
        %v6805 = vpop.f32.mrb[0].mxu0
        %v6806 = vadd.f32 %v6686, %v6805
        %v6807 = vpop.f32.mrb[0].mxu0
        %6808 = vmatprep.mubr.bf16.mxu0 0
        %6809 = vmatmul.mubr.bf16.gmra.mrb[0].mxu0 %v6606
        %v6810 = vpop.f32.mrb[0].mxu0
        %v6811 = vadd.f32 %v6686, %v6810
        %v6812 = vpop.f32.mrb[0].mxu0
        %v6813 = vpop.f32.mrb[0].mxu0
        %v6814 = vadd.f32 %v6686, %v6813
        %v6815 = vpop.f32.mrb[0].mxu0
        %6816 = vmatprep.mubr.bf16.mxu0 0
        %6817 = vmatmul.mubr.bf16.gmra.mrb[0].mxu0 %v6607
        %v6818 = vpop.f32.mrb[0].mxu0
        %v6819 = vadd.f32 %v6686, %v6818
        %v6820 = vpop.f32.mrb[0].mxu0
        %v6821 = vpop.f32.mrb[0].mxu0
        %v6822 = vadd.f32 %v6686, %v6821
        %v6823 = vpop.f32.mrb[0].mxu0
        %6824 = vmatprep.mubr.bf16.mxu0 0
        %6825 = vmatmul.mubr.bf16.gmra.mrb[0].mxu0 %v6608
        %v6826 = vpop.f32.mrb[0].mxu0
        %v6827 = vadd.f32 %v6686, %v6826
        %v6828 = vpop.f32.mrb[0].mxu0
        %v6829 = vpop.f32.mrb[0].mxu0
        %v6830 = vadd.f32 %v6686, %v6829
        %v6831 = vpop.f32.mrb[0].mxu0
        %6832 = vmatprep.mubr.bf16.mxu0 0
        %6833 = vmatmul.mubr.bf16.gmra.mrb[0].mxu0 %v6609
        %v6834 = vpop.f32.mrb[0].mxu0
        %v6835 = vadd.f32 %v6686, %v6834
        %v6836 = vpop.f32.mrb[0].mxu0
        %v6837 = vpop.f32.mrb[0].mxu0
        %v6838 = vadd.f32 %v6686, %v6837
        %v6839 = vpop.f32.mrb[0].mxu0
        %6840 = vmatprep.mubr.bf16.mxu0 0
        %6841 = vmatmul.mubr.bf16.gmra.mrb[0].mxu0 %v6610
        %v6842 = vpop.f32.mrb[0].mxu0
        %v6843 = vadd.f32 %v6686, %v6842
        %v6844 = vpop.f32.mrb[0].mxu0
        %v6845 = vpop.f32.mrb[0].mxu0
        %v6846 = vadd.f32 %v6686, %v6845
        %v6847 = vpop.f32.mrb[0].mxu0
        %6848 = vmatprep.mubr.bf16.mxu0 0
        %6849 = vmatmul.mubr.bf16.gmra.mrb[0].mxu0 %v6611
        %v6850 = vpop.f32.mrb[0].mxu0
        %v6851 = vadd.f32 %v6686, %v6850
        %v6852 = vpop.f32.mrb[0].mxu0
        %v6853 = vpop.f32.mrb[0].mxu0
        %v6854 = vadd.f32 %v6686, %v6853
        %v6855 = vpop.f32.mrb[0].mxu0
        %6856 = vmatprep.mubr.bf16.mxu0 0
        %6857 = vmatmul.mubr.bf16.gmra.mrb[0].mxu0 %v6612
        %v6858 = vpop.f32.mrb[0].mxu0
        %v6859 = vadd.f32 %v6686, %v6858
        %v6860 = vpop.f32.mrb[0].mxu0
        %v6861 = vpop.f32.mrb[0].mxu0
        %v6862 = vadd.f32 %v6686, %v6861
        %v6863 = vpop.f32.mrb[0].mxu0
        %6864 = vmatprep.mubr.bf16.mxu0 0
        %6865 = vmatmul.mubr.bf16.gmra.mrb[0].mxu0 %v6613
        %v6866 = vpop.f32.mrb[0].mxu0
        %v6867 = vadd.f32 %v6686, %v6866
        %v6868 = vpop.f32.mrb[0].mxu0
        %v6869 = vpop.f32.mrb[0].mxu0
        %v6870 = vadd.f32 %v6686, %v6869
        %v6871 = vpop.f32.mrb[0].mxu0
        %6872 = vmatprep.mubr.bf16.mxu0 0
        %6873 = vmatmul.mubr.bf16.gmra.mrb[0].mxu0 %v6614
        %v6874 = vpop.f32.mrb[0].mxu0
        %v6875 = vadd.f32 %v6686, %v6874
        %v6876 = vpop.f32.mrb[0].mxu0
        %v6877 = vpop.f32.mrb[0].mxu0
        %v6878 = vadd.f32 %v6686, %v6877
        %v6879 = vpop.f32.mrb[0].mxu0
        %6880 = vmatprep.mubr.bf16.mxu0 0
        %6881 = vmatmul.mubr.bf16.gmra.mrb[0].mxu0 %v6615
        %v6882 = vpop.f32.mrb[0].mxu0
        %v6883 = vadd.f32 %v6686, %v6882
        %v6884 = vpop.f32.mrb[0].mxu0
        %v6885 = vpop.f32.mrb[0].mxu0
        %v6886 = vadd.f32 %v6686, %v6885
        %v6887 = vpop.f32.mrb[0].mxu0
        %6888 = vmatprep.mubr.bf16.mxu0 0
        %6889 = vmatmul.mubr.bf16.gmra.mrb[0].mxu0 %v6616
        %v6890 = vpop.f32.mrb[0].mxu0
        %v6891 = vadd.f32 %v6686, %v6890
        %v6892 = vpop.f32.mrb[0].mxu0
        %v6893 = vpop.f32.mrb[0].mxu0
        %v6894 = vadd.f32 %v6686, %v6893
        %v6895 = vpop.f32.mrb[0].mxu0
        %6896 = vmatprep.mubr.bf16.mxu0 0
        %6897 = vmatmul.mubr.bf16.gmra.mrb[0].mxu0 %v6617
        %v6898 = vpop.f32.mrb[0].mxu0
        %v6899 = vadd.f32 %v6686, %v6898
        %v6900 = vpop.f32.mrb[0].mxu0
        %v6901 = vpop.f32.mrb[0].mxu0
        %v6902 = vadd.f32 %v6686, %v6901
        %v6903 = vpop.f32.mrb[0].mxu0
        %6904 = vmatprep.mubr.bf16.mxu0 0
        %6905 = vmatmul.mubr.bf16.gmra.mrb[0].mxu0 %v6618
        %v6906 = vpop.f32.mrb[0].mxu0
        %v6907 = vadd.f32 %v6686, %v6906
        %v6908 = vpop.f32.mrb[0].mxu0
        %v6909 = vpop.f32.mrb[0].mxu0
        %v6910 = vadd.f32 %v6686, %v6909
        %v6911 = vpop.f32.mrb[0].mxu0
        %6912 = vmatprep.mubr.bf16.mxu0 0
        %6913 = vmatmul.mubr.bf16.gmra.mrb[0].mxu0 %v6619
        %v6914 = vpop.f32.mrb[0].mxu0
        %v6915 = vadd.f32 %v6686, %v6914
        %v6916 = vpop.f32.mrb[0].mxu0
        %v6917 = vpop.f32.mrb[0].mxu0
        %v6918 = vadd.f32 %v6686, %v6917
        %v6919 = vpop.f32.mrb[0].mxu0
        %6920 = vmatprep.mubr.bf16.mxu0 0
        %6921 = vmatmul.mubr.bf16.gmra.mrb[0].mxu0 %v6620
        %v6922 = vpop.f32.mrb[0].mxu0
        %v6923 = vadd.f32 %v6686, %v6922
        %v6924 = vpop.f32.mrb[0].mxu0
        %v6925 = vpop.f32.mrb[0].mxu0
        %v6926 = vadd.f32 %v6686, %v6925
        %v6927 = vpop.f32.mrb[0].mxu0
        %6928 = vmatprep.mubr.bf16.mxu0 0
        %6929 = vmatmul.mubr.bf16.gmra.mrb[0].mxu0 %v6621
        %v6930 = vpop.f32.mrb[0].mxu0
        %v6931 = vadd.f32 %v6686, %v6930
        %v6932 = vpop.f32.mrb[0].mxu0
        %v6933 = vpop.f32.mrb[0].mxu0
        %v6934 = vadd.f32 %v6686, %v6933
        %v6935 = vpop.f32.mrb[0].mxu0
        %6936 = vmatprep.mubr.bf16.mxu0 0
        %6937 = vmatmul.mubr.bf16.gmra.mrb[0].mxu0 %v6622
        %v6938 = vpop.f32.mrb[0].mxu0
        %v6939 = vadd.f32 %v6686, %v6938
        %v6940 = vpop.f32.mrb[0].mxu0
        %v6941 = vpop.f32.mrb[0].mxu0
        %v6942 = vadd.f32 %v6686, %v6941
        %v6943 = vpop.f32.mrb[0].mxu0
        %6944 = vmatprep.mubr.bf16.mxu0 0
        %6945 = vmatmul.mubr.bf16.gmra.mrb[0].mxu0 %v6623
        %v6946 = vpop.f32.mrb[0].mxu0
        %v6947 = vadd.f32 %v6686, %v6946
        %v6948 = vpop.f32.mrb[0].mxu0
        %v6949 = vpop.f32.mrb[0].mxu0
        %v6950 = vadd.f32 %v6686, %v6949
        %v6951 = vpop.f32.mrb[0].mxu0
        %6952 = vmatprep.mubr.bf16.mxu0 0
        %6953 = vmatmul.mubr.bf16.gmra.mrb[0].mxu0 %v6624
        %v6954 = vpop.f32.mrb[0].mxu0
        %v6955 = vadd.f32 %v6686, %v6954
        %v6956 = vpop.f32.mrb[0].mxu0
        %v6957 = vpop.f32.mrb[0].mxu0
        %v6958 = vadd.f32 %v6686, %v6957
        %v6959 = vpop.f32.mrb[0].mxu0
        %6960 = vmatprep.mubr.bf16.mxu0 0
        %6961 = vmatmul.mubr.bf16.gmra.mrb[0].mxu0 %v6625
        %v6962 = vpop.f32.mrb[0].mxu0
        %v6963 = vadd.f32 %v6686, %v6962
        %v6964 = vpop.f32.mrb[0].mxu0
        %v6965 = vpop.f32.mrb[0].mxu0
        %v6966 = vadd.f32 %v6686, %v6965
        %v6967 = vpop.f32.mrb[0].mxu0
        %6968 = vmatprep.mubr.bf16.mxu0 0
        %6969 = vmatmul.mubr.bf16.gmra.mrb[0].mxu0 %v6626
        %v6970 = vpop.f32.mrb[0].mxu0
        %v6971 = vadd.f32 %v6686, %v6970
        %v6972 = vpop.f32.mrb[0].mxu0
        %v6973 = vpop.f32.mrb[0].mxu0
        %v6974 = vadd.f32 %v6686, %v6973
        %v6975 = vpop.f32.mrb[0].mxu0
        %6976 = vmatprep.mubr.bf16.mxu0 0
        %6977 = vmatmul.mubr.bf16.gmra.mrb[0].mxu0 %v6627
        %v6978 = vpop.f32.mrb[0].mxu0
        %v6979 = vadd.f32 %v6686, %v6978
        %v6980 = vpop.f32.mrb[0].mxu0
        %v6981 = vpop.f32.mrb[0].mxu0
        %v6982 = vadd.f32 %v6686, %v6981
        %v6983 = vpop.f32.mrb[0].mxu0
        %6984 = vmatprep.mubr.bf16.mxu0 0
        %6985 = vmatmul.mubr.bf16.gmra.mrb[0].mxu0 %v6628
        %v6986 = vpop.f32.mrb[0].mxu0
        %v6987 = vadd.f32 %v6686, %v6986
        %v6988 = vpop.f32.mrb[0].mxu0
        %v6989 = vpop.f32.mrb[0].mxu0
        %v6990 = vadd.f32 %v6686, %v6989
        %v6991 = vpop.f32.mrb[0].mxu0
        %6992 = vmatprep.mubr.bf16.mxu0 0
        %6993 = vmatmul.mubr.bf16.gmra.mrb[0].mxu0 %v6629
        %v6994 = vpop.f32.mrb[0].mxu0
        %v6995 = vadd.f32 %v6686, %v6994
        %v6996 = vpop.f32.mrb[0].mxu0
        %v6997 = vpop.f32.mrb[0].mxu0
        %v6998 = vadd.f32 %v6686, %v6997
        %v6999 = vpop.f32.mrb[0].mxu0
        %7000 = vmatprep.mubr.bf16.mxu0 0
        %7001 = vmatmul.mubr.bf16.gmra.mrb[0].mxu0 %v6630
        %v7002 = vpop.f32.mrb[0].mxu0
        %v7003 = vadd.f32 %v6686, %v7002
        %v7004 = vpop.f32.mrb[0].mxu0
        %v7005 = vpop.f32.mrb[0].mxu0
        %v7006 = vadd.f32 %v6686, %v7005
        %v7007 = vpop.f32.mrb[0].mxu0
        %7008 = vmatprep.mubr.bf16.mxu0 0
        %7009 = vmatmul.mubr.bf16.gmra.mrb[0].mxu0 %v6631
        %v7010 = vpop.f32.mrb[0].mxu0
        %v7011 = vadd.f32 %v6686, %v7010
        %v7012 = vpop.f32.mrb[0].mxu0
        %v7013 = vpop.f32.mrb[0].mxu0
        %v7014 = vadd.f32 %v6686, %v7013
        %v7015 = vpop.f32.mrb[0].mxu0
        %7016 = vmatprep.mubr.bf16.mxu0 0
        %7017 = vmatmul.mubr.bf16.gmra.mrb[0].mxu0 %v6632
        %v7018 = vpop.f32.mrb[0].mxu0
        %v7019 = vadd.f32 %v6686, %v7018
        %v7020 = vpop.f32.mrb[0].mxu0
        %v7021 = vpop.f32.mrb[0].mxu0
        %v7022 = vadd.f32 %v6686, %v7021
        %v7023 = vpop.f32.mrb[0].mxu0
        %7024 = vmatprep.mubr.bf16.mxu0 0
        %7025 = vmatmul.mubr.bf16.gmra.mrb[0].mxu0 %v6633
        %v7026 = vpop.f32.mrb[0].mxu0
        %v7027 = vadd.f32 %v6686, %v7026
        %v7028 = vpop.f32.mrb[0].mxu0
        %v7029 = vpop.f32.mrb[0].mxu0
        %v7030 = vadd.f32 %v6686, %v7029
        %v7031 = vpop.f32.mrb[0].mxu0
        %7032 = vmatprep.mubr.bf16.mxu0 0
        %7033 = vmatmul.mubr.bf16.gmra.mrb[0].mxu0 %v6634
        %v7034 = vpop.f32.mrb[0].mxu0
        %v7035 = vadd.f32 %v6686, %v7034
        %v7036 = vpop.f32.mrb[0].mxu0
        %v7037 = vpop.f32.mrb[0].mxu0
        %v7038 = vadd.f32 %v6686, %v7037
        %v7039 = vpop.f32.mrb[0].mxu0
        %7040 = vmatprep.mubr.bf16.mxu0 0
        %7041 = vmatmul.mubr.bf16.gmra.mrb[0].mxu0 %v6635
        %v7042 = vpop.f32.mrb[0].mxu0
        %v7043 = vadd.f32 %v6686, %v7042
        %v7044 = vpop.f32.mrb[0].mxu0
        %v7045 = vpop.f32.mrb[0].mxu0
        %v7046 = vadd.f32 %v6686, %v7045
        %v7047 = vpop.f32.mrb[0].mxu0
        %7048 = vmatprep.mubr.bf16.mxu0 0
        %7049 = vmatmul.mubr.bf16.gmra.mrb[0].mxu0 %v6636
        %v7050 = vpop.f32.mrb[0].mxu0
        %v7051 = vadd.f32 %v6686, %v7050
        %v7052 = vpop.f32.mrb[0].mxu0
        %v7053 = vpop.f32.mrb[0].mxu0
        %v7054 = vadd.f32 %v6686, %v7053
        %v7055 = vpop.f32.mrb[0].mxu0
        %7056 = vmatprep.mubr.bf16.mxu0 0
        %7057 = vmatmul.mubr.bf16.gmra.mrb[0].mxu0 %v6637
        %v7058 = vpop.f32.mrb[0].mxu0
        %v7059 = vadd.f32 %v6686, %v7058
        %v7060 = vpop.f32.mrb[0].mxu0
        %v7061 = vpop.f32.mrb[0].mxu0
        %v7062 = vadd.f32 %v6686, %v7061
        %v7063 = vpop.f32.mrb[0].mxu0
        %7064 = vmatprep.mubr.bf16.mxu0 0
        %7065 = vmatmul.mubr.bf16.gmra.mrb[0].mxu0 %v6638
        %v7066 = vpop.f32.mrb[0].mxu0
        %v7067 = vadd.f32 %v6686, %v7066
        %v7068 = vpop.f32.mrb[0].mxu0
        %v7069 = vpop.f32.mrb[0].mxu0
        %v7070 = vadd.f32 %v6686, %v7069
        %v7071 = vpop.f32.mrb[0].mxu0
        %7072 = vmatprep.mubr.bf16.mxu0 0
        %7073 = vmatmul.mubr.bf16.gmra.mrb[0].mxu0 %v6639
        %v7074 = vpop.f32.mrb[0].mxu0
        %v7075 = vadd.f32 %v6686, %v7074
        %v7076 = vpop.f32.mrb[0].mxu0
        %v7077 = vpop.f32.mrb[0].mxu0
        %v7078 = vadd.f32 %v6686, %v7077
        %v7079 = vpop.f32.mrb[0].mxu0
        %7080 = vmatprep.mubr.bf16.mxu0 0
        %7081 = vmatmul.mubr.bf16.gmra.mrb[0].mxu0 %v6640
        %v7082 = vpop.f32.mrb[0].mxu0
        %v7083 = vadd.f32 %v6686, %v7082
        %v7084 = vpop.f32.mrb[0].mxu0
        %v7085 = vpop.f32.mrb[0].mxu0
        %v7086 = vadd.f32 %v6686, %v7085
        %v7087 = vpop.f32.mrb[0].mxu0
        %7088 = vmatprep.mubr.bf16.mxu0 0
        %7089 = vmatmul.mubr.bf16.gmra.mrb[0].mxu0 %v6641
        %v7090 = vpop.f32.mrb[0].mxu0
        %v7091 = vadd.f32 %v6686, %v7090
        %v7092 = vpop.f32.mrb[0].mxu0
        %v7093 = vpop.f32.mrb[0].mxu0
        %v7094 = vadd.f32 %v6686, %v7093
        %v7095 = vpop.f32.mrb[0].mxu0
        %7096 = vmatprep.mubr.bf16.mxu0 0
        %7097 = vmatmul.mubr.bf16.gmra.mrb[0].mxu0 %v6642
        %v7098 = vpop.f32.mrb[0].mxu0
        %v7099 = vadd.f32 %v6686, %v7098
        %v7100 = vpop.f32.mrb[0].mxu0
        %v7101 = vpop.f32.mrb[0].mxu0
        %v7102 = vadd.f32 %v6686, %v7101
        %v7103 = vpop.f32.mrb[0].mxu0
        %7104 = vmatprep.mubr.bf16.mxu0 0
        %7105 = vmatmul.mubr.bf16.gmra.mrb[0].mxu0 %v6643
        %v7106 = vpop.f32.mrb[0].mxu0
        %v7107 = vadd.f32 %v6686, %v7106
        %v7108 = vpop.f32.mrb[0].mxu0
        %v7109 = vpop.f32.mrb[0].mxu0
        %v7110 = vadd.f32 %v6686, %v7109
        %v7111 = vpop.f32.mrb[0].mxu0
        %7112 = vmatprep.mubr.bf16.mxu0 0
        %7113 = vmatmul.mubr.bf16.gmra.mrb[0].mxu0 %v6644
        %v7114 = vpop.f32.mrb[0].mxu0
        %v7115 = vadd.f32 %v6686, %v7114
        %v7116 = vpop.f32.mrb[0].mxu0
        %v7117 = vpop.f32.mrb[0].mxu0
        %v7118 = vadd.f32 %v6686, %v7117
        %v7119 = vpop.f32.mrb[0].mxu0
        %7120 = vmatprep.mubr.bf16.mxu0 0
        %7121 = vmatmul.mubr.bf16.gmra.mrb[0].mxu0 %v6645
        %v7122 = vpop.f32.mrb[0].mxu0
        %v7123 = vadd.f32 %v6686, %v7122
        %v7124 = vpop.f32.mrb[0].mxu0
        %v7125 = vpop.f32.mrb[0].mxu0
        %v7126 = vadd.f32 %v6686, %v7125
        %v7127 = vpop.f32.mrb[0].mxu0
        %7128 = vmatprep.mubr.bf16.mxu0 0
        %7129 = vmatmul.mubr.bf16.gmra.mrb[0].mxu0 %v6646
        %v7130 = vpop.f32.mrb[0].mxu0
        %v7131 = vadd.f32 %v6686, %v7130
        %v7132 = vpop.f32.mrb[0].mxu0
        %v7133 = vpop.f32.mrb[0].mxu0
        %v7134 = vadd.f32 %v6686, %v7133
        %v7135 = vpop.f32.mrb[0].mxu0
        %7136 = vmatprep.mubr.bf16.mxu0 0
        %7137 = vmatmul.mubr.bf16.gmra.mrb[0].mxu0 %v6647
        %v7138 = vpop.f32.mrb[0].mxu0
        %v7139 = vadd.f32 %v6686, %v7138
        %v7140 = vpop.f32.mrb[0].mxu0
        %v7141 = vpop.f32.mrb[0].mxu0
        %v7142 = vadd.f32 %v6686, %v7141
        %v7143 = vpop.f32.mrb[0].mxu0
        %7144 = vmatprep.mubr.bf16.mxu0 0
        %7145 = vmatmul.mubr.bf16.gmra.mrb[0].mxu0 %v6648
        %v7146 = vpop.f32.mrb[0].mxu0
        %v7147 = vadd.f32 %v6686, %v7146
        %v7148 = vpop.f32.mrb[0].mxu0
        %v7149 = vpop.f32.mrb[0].mxu0
        %v7150 = vadd.f32 %v6686, %v7149
        %v7151 = vpop.f32.mrb[0].mxu0
        %7152 = vmatprep.mubr.bf16.mxu0 0
        %7153 = vmatmul.mubr.bf16.gmra.mrb[0].mxu0 %v6649
        %v7154 = vpop.f32.mrb[0].mxu0
        %v7155 = vadd.f32 %v6686, %v7154
        %v7156 = vpop.f32.mrb[0].mxu0
        %v7157 = vpop.f32.mrb[0].mxu0
        %v7158 = vadd.f32 %v6686, %v7157
        %v7159 = vpop.f32.mrb[0].mxu0
        %7160 = vmatprep.mubr.bf16.mxu0 0
        %7161 = vmatmul.mubr.bf16.gmra.mrb[0].mxu0 %v6650
        %v7162 = vpop.f32.mrb[0].mxu0
        %v7163 = vadd.f32 %v6686, %v7162
        %v7164 = vpop.f32.mrb[0].mxu0
        %v7165 = vpop.f32.mrb[0].mxu0
        %v7166 = vadd.f32 %v6686, %v7165
        %v7167 = vpop.f32.mrb[0].mxu0
        %7168 = vmatprep.mubr.bf16.mxu0 0
        %7169 = vmatmul.mubr.bf16.gmra.mrb[0].mxu0 %v6651
        %v7170 = vpop.f32.mrb[0].mxu0
        %v7171 = vadd.f32 %v6686, %v7170
        %v7172 = vpop.f32.mrb[0].mxu0
        %v7173 = vpop.f32.mrb[0].mxu0
        %v7174 = vadd.f32 %v6686, %v7173
        %v7175 = vpop.f32.mrb[0].mxu0
        %7176 = vmatprep.mubr.bf16.mxu0 0
        %7177 = vmatmul.mubr.bf16.gmra.mrb[0].mxu0 %v6652
        %v7178 = vpop.f32.mrb[0].mxu0
        %v7179 = vadd.f32 %v6686, %v7178
        %v7180 = vpop.f32.mrb[0].mxu0
        %v7181 = vpop.f32.mrb[0].mxu0
        %v7182 = vadd.f32 %v6686, %v7181
        %v7183 = vpop.f32.mrb[0].mxu0
        %7184 = vmatprep.mubr.bf16.mxu0 0
        %7185 = vmatmul.mubr.bf16.gmra.mrb[0].mxu0 %v6653
        %v7186 = vpop.f32.mrb[0].mxu0
        %v7187 = vadd.f32 %v6686, %v7186
        %v7188 = vpop.f32.mrb[0].mxu0
        %v7189 = vpop.f32.mrb[0].mxu0
        %v7190 = vadd.f32 %v6686, %v7189
        %v7191 = vpop.f32.mrb[0].mxu0
        %7192 = vmatprep.mubr.bf16.mxu0 0
        %7193 = vmatmul.mubr.bf16.gmra.mrb[0].mxu0 %v6654
        %v7194 = vpop.f32.mrb[0].mxu0
        %v7195 = vadd.f32 %v6686, %v7194
        %v7196 = vpop.f32.mrb[0].mxu0
        %v7197 = vpop.f32.mrb[0].mxu0
        %v7198 = vadd.f32 %v6686, %v7197
        %v7199 = vpop.f32.mrb[0].mxu0
        %7200 = vmatprep.mubr.bf16.mxu0 0
        %7201 = vmatmul.mubr.bf16.gmra.mrb[0].mxu0 %v6655
        %v7202 = vpop.f32.mrb[0].mxu0
        %v7203 = vadd.f32 %v6686, %v7202
        %v7204 = vpop.f32.mrb[0].mxu0
        %v7205 = vpop.f32.mrb[0].mxu0
        %v7206 = vadd.f32 %v6686, %v7205
        %v7207 = vpop.f32.mrb[0].mxu0
        %7208 = vmatprep.mubr.bf16.mxu0 0
        %7209 = vmatmul.mubr.bf16.gmra.mrb[0].mxu0 %v6656
        %v7210 = vpop.f32.mrb[0].mxu0
        %v7211 = vadd.f32 %v6686, %v7210
        %v7212 = vpop.f32.mrb[0].mxu0
        %v7213 = vpop.f32.mrb[0].mxu0
        %v7214 = vadd.f32 %v6686, %v7213
        %v7215 = vpop.f32.mrb[0].mxu0
        %7216 = vmatprep.mubr.bf16.mxu0 0
        %7217 = vmatmul.mubr.bf16.gmra.mrb[0].mxu0 %v6657
        %v7218 = vpop.f32.mrb[0].mxu0
        %v7219 = vadd.f32 %v6686, %v7218
        %v7220 = vpop.f32.mrb[0].mxu0
        %v7221 = vpop.f32.mrb[0].mxu0
        %v7222 = vadd.f32 %v6686, %v7221
        %v7223 = vpop.f32.mrb[0].mxu0
        %7224 = vmatprep.mubr.bf16.mxu0 0
        %7225 = vmatmul.mubr.bf16.gmra.mrb[0].mxu0 %v6658
        %v7226 = vpop.f32.mrb[0].mxu0
        %v7227 = vadd.f32 %v6686, %v7226
        %v7228 = vpop.f32.mrb[0].mxu0
        %v7229 = vpop.f32.mrb[0].mxu0
        %v7230 = vadd.f32 %v6686, %v7229
        %v7231 = vpop.f32.mrb[0].mxu0
        %7232 = vmatprep.mubr.bf16.mxu0 0
        %7233 = vmatmul.mubr.bf16.gmra.mrb[0].mxu0 %v6659
        %v7234 = vpop.f32.mrb[0].mxu0
        %v7235 = vadd.f32 %v6686, %v7234
        %v7236 = vpop.f32.mrb[0].mxu0
        %v7237 = vpop.f32.mrb[0].mxu0
        %v7238 = vadd.f32 %v6686, %v7237
        %v7239 = vpop.f32.mrb[0].mxu0
        %7240 = vmatprep.mubr.bf16.mxu0 0
        %7241 = vmatmul.mubr.bf16.gmra.mrb[0].mxu0 %v6660
        %v7242 = vpop.f32.mrb[0].mxu0
        %v7243 = vadd.f32 %v6686, %v7242
        %v7244 = vpop.f32.mrb[0].mxu0
        %v7245 = vpop.f32.mrb[0].mxu0
        %v7246 = vadd.f32 %v6686, %v7245
        %v7247 = vpop.f32.mrb[0].mxu0
        %7248 = vmatprep.mubr.bf16.mxu0 0
        %7249 = vmatmul.mubr.bf16.gmra.mrb[0].mxu0 %v6661
        %v7250 = vpop.f32.mrb[0].mxu0
        %v7251 = vadd.f32 %v6686, %v7250
        %v7252 = vpop.f32.mrb[0].mxu0
        %v7253 = vpop.f32.mrb[0].mxu0
        %v7254 = vadd.f32 %v6686, %v7253
        %v7255 = vpop.f32.mrb[0].mxu0
        %7256 = vmatprep.mubr.bf16.mxu0 0
        %7257 = vmatmul.mubr.bf16.gmra.mrb[0].mxu0 %v6662
        %v7258 = vpop.f32.mrb[0].mxu0
        %v7259 = vadd.f32 %v6686, %v7258
        %v7260 = vpop.f32.mrb[0].mxu0
        %v7261 = vpop.f32.mrb[0].mxu0
        %v7262 = vadd.f32 %v6686, %v7261
        %v7263 = vpop.f32.mrb[0].mxu0
        %7264 = vmatprep.mubr.bf16.mxu0 0
        %7265 = vmatmul.mubr.bf16.gmra.mrb[0].mxu0 %v6663
        %v7266 = vpop.f32.mrb[0].mxu0
        %v7267 = vadd.f32 %v6686, %v7266
        %v7268 = vpop.f32.mrb[0].mxu0
        %v7269 = vpop.f32.mrb[0].mxu0
        %v7270 = vadd.f32 %v6686, %v7269
        %v7271 = vpop.f32.mrb[0].mxu0
        %7272 = vmatprep.mubr.bf16.mxu0 0
        %7273 = vmatmul.mubr.bf16.gmra.mrb[0].mxu0 %v6664
        %v7274 = vpop.f32.mrb[0].mxu0
        %v7275 = vadd.f32 %v6686, %v7274
        %v7276 = vpop.f32.mrb[0].mxu0
        %v7277 = vpop.f32.mrb[0].mxu0
        %v7278 = vadd.f32 %v6686, %v7277
        %v7279 = vpop.f32.mrb[0].mxu0
        %7280 = vdwg.mxu0
        %v7281 = vpack.c.bf16 %v6774, %v6771
        %v7282 = vpack.c.bf16 %v6782, %v6779
        %v7283 = vpack.c.bf16 %v6790, %v6787
        %v7284 = vpack.c.bf16 %v6798, %v6795
        %v7285 = vpack.c.bf16 %v6806, %v6803
        %v7286 = vpack.c.bf16 %v6814, %v6811
        %v7287 = vpack.c.bf16 %v6822, %v6819
        %v7288 = vpack.c.bf16 %v6830, %v6827
        %v7289 = vpack.c.bf16 %v6838, %v6835
        %v7290 = vpack.c.bf16 %v6846, %v6843
        %v7291 = vpack.c.bf16 %v6854, %v6851
        %v7292 = vpack.c.bf16 %v6862, %v6859
        %v7293 = vpack.c.bf16 %v6870, %v6867
        %v7294 = vpack.c.bf16 %v6878, %v6875
        %v7295 = vpack.c.bf16 %v6886, %v6883
        %v7296 = vpack.c.bf16 %v6894, %v6891
        %v7297 = vpack.c.bf16 %v6902, %v6899
        %v7298 = vpack.c.bf16 %v6910, %v6907
        %v7299 = vpack.c.bf16 %v6918, %v6915
        %v7300 = vpack.c.bf16 %v6926, %v6923
        %v7301 = vpack.c.bf16 %v6934, %v6931
        %v7302 = vpack.c.bf16 %v6942, %v6939
        %v7303 = vpack.c.bf16 %v6950, %v6947
        %v7304 = vpack.c.bf16 %v6958, %v6955
        %v7305 = vpack.c.bf16 %v6966, %v6963
        %v7306 = vpack.c.bf16 %v6974, %v6971
        %v7307 = vpack.c.bf16 %v6982, %v6979
        %v7308 = vpack.c.bf16 %v6990, %v6987
        %v7309 = vpack.c.bf16 %v6998, %v6995
        %v7310 = vpack.c.bf16 %v7006, %v7003
        %v7311 = vpack.c.bf16 %v7014, %v7011
        %v7312 = vpack.c.bf16 %v7022, %v7019
        %v7313 = vpack.c.bf16 %v7030, %v7027
        %v7314 = vpack.c.bf16 %v7038, %v7035
        %v7315 = vpack.c.bf16 %v7046, %v7043
        %v7316 = vpack.c.bf16 %v7054, %v7051
        %v7317 = vpack.c.bf16 %v7062, %v7059
        %v7318 = vpack.c.bf16 %v7070, %v7067
        %v7319 = vpack.c.bf16 %v7078, %v7075
        %v7320 = vpack.c.bf16 %v7086, %v7083
        %v7321 = vpack.c.bf16 %v7094, %v7091
        %v7322 = vpack.c.bf16 %v7102, %v7099
        %v7323 = vpack.c.bf16 %v7110, %v7107
        %v7324 = vpack.c.bf16 %v7118, %v7115
        %v7325 = vpack.c.bf16 %v7126, %v7123
        %v7326 = vpack.c.bf16 %v7134, %v7131
        %v7327 = vpack.c.bf16 %v7142, %v7139
        %v7328 = vpack.c.bf16 %v7150, %v7147
        %v7329 = vpack.c.bf16 %v7158, %v7155
        %v7330 = vpack.c.bf16 %v7166, %v7163
        %v7331 = vpack.c.bf16 %v7174, %v7171
        %v7332 = vpack.c.bf16 %v7182, %v7179
        %v7333 = vpack.c.bf16 %v7190, %v7187
        %v7334 = vpack.c.bf16 %v7198, %v7195
        %v7335 = vpack.c.bf16 %v7206, %v7203
        %v7336 = vpack.c.bf16 %v7214, %v7211
        %v7337 = vpack.c.bf16 %v7222, %v7219
        %v7338 = vpack.c.bf16 %v7230, %v7227
        %v7339 = vpack.c.bf16 %v7238, %v7235
        %v7340 = vpack.c.bf16 %v7246, %v7243
        %v7341 = vpack.c.bf16 %v7254, %v7251
        %v7342 = vpack.c.bf16 %v7262, %v7259
        %v7343 = vpack.c.bf16 %v7270, %v7267
        %v7344 = vpack.c.bf16 %v7278, %v7275
        %v7345 = vmax.bf16 %v7281, 0
        %v7346 = vmax.bf16 %v7282, 0
        %v7347 = vmax.bf16 %v7283, 0
        %v7348 = vmax.bf16 %v7284, 0
        %v7349 = vmax.bf16 %v7285, 0
        %v7350 = vmax.bf16 %v7286, 0
        %v7351 = vmax.bf16 %v7287, 0
        %v7352 = vmax.bf16 %v7288, 0
        %v7353 = vmax.bf16 %v7289, 0
        %v7354 = vmax.bf16 %v7290, 0
        %v7355 = vmax.bf16 %v7291, 0
        %v7356 = vmax.bf16 %v7292, 0
        %v7357 = vmax.bf16 %v7293, 0
        %v7358 = vmax.bf16 %v7294, 0
        %v7359 = vmax.bf16 %v7295, 0
        %v7360 = vmax.bf16 %v7296, 0
        %v7361 = vmax.bf16 %v7297, 0
        %v7362 = vmax.bf16 %v7298, 0
        %v7363 = vmax.bf16 %v7299, 0
        %v7364 = vmax.bf16 %v7300, 0
        %v7365 = vmax.bf16 %v7301, 0
        %v7366 = vmax.bf16 %v7302, 0
        %v7367 = vmax.bf16 %v7303, 0
        %v7368 = vmax.bf16 %v7304, 0
        %v7369 = vmax.bf16 %v7305, 0
        %v7370 = vmax.bf16 %v7306, 0
        %v7371 = vmax.bf16 %v7307, 0
        %v7372 = vmax.bf16 %v7308, 0
        %v7373 = vmax.bf16 %v7309, 0
        %v7374 = vmax.bf16 %v7310, 0
        %v7375 = vmax.bf16 %v7311, 0
        %v7376 = vmax.bf16 %v7312, 0
        %v7377 = vmax.bf16 %v7313, 0
        %v7378 = vmax.bf16 %v7314, 0
        %v7379 = vmax.bf16 %v7315, 0
        %v7380 = vmax.bf16 %v7316, 0
        %v7381 = vmax.bf16 %v7317, 0
        %v7382 = vmax.bf16 %v7318, 0
        %v7383 = vmax.bf16 %v7319, 0
        %v7384 = vmax.bf16 %v7320, 0
        %v7385 = vmax.bf16 %v7321, 0
        %v7386 = vmax.bf16 %v7322, 0
        %v7387 = vmax.bf16 %v7323, 0
        %v7388 = vmax.bf16 %v7324, 0
        %v7389 = vmax.bf16 %v7325, 0
        %v7390 = vmax.bf16 %v7326, 0
        %v7391 = vmax.bf16 %v7327, 0
        %v7392 = vmax.bf16 %v7328, 0
        %v7393 = vmax.bf16 %v7329, 0
        %v7394 = vmax.bf16 %v7330, 0
        %v7395 = vmax.bf16 %v7331, 0
        %v7396 = vmax.bf16 %v7332, 0
        %v7397 = vmax.bf16 %v7333, 0
        %v7398 = vmax.bf16 %v7334, 0
        %v7399 = vmax.bf16 %v7335, 0
        %v7400 = vmax.bf16 %v7336, 0
        %v7401 = vmax.bf16 %v7337, 0
        %v7402 = vmax.bf16 %v7338, 0
        %v7403 = vmax.bf16 %v7339, 0
        %v7404 = vmax.bf16 %v7340, 0
        %v7405 = vmax.bf16 %v7341, 0
        %v7406 = vmax.bf16 %v7342, 0
        %v7407 = vmax.bf16 %v7343, 0
        %v7408 = vmax.bf16 %v7344, 0
        %v7409 = vld [vmem:[%s7] sm:$0xf]
        %v7410 = vld [vmem:[%s7 + $0x4] sm:$0xf]
        %v7411 = vld [vmem:[%s7 + $0x8] sm:$0xf]
        %v7412 = vld [vmem:[%s7 + $0xc] sm:$0xf]
        %v7413 = vld [vmem:[%s7 + $0x10] sm:$0xf]
        %v7414 = vld [vmem:[%s7 + $0x14] sm:$0xf]
        %v7415 = vld [vmem:[%s7 + $0x18] sm:$0xf]
        %v7416 = vld [vmem:[%s7 + $0x1c] sm:$0xf]
        %v7417 = vld [vmem:[%s7 + $0x20] sm:$0xf]
        %v7418 = vld [vmem:[%s7 + $0x24] sm:$0xf]
        %v7419 = vld [vmem:[%s7 + $0x28] sm:$0xf]
        %v7420 = vld [vmem:[%s7 + $0x2c] sm:$0xf]
        %v7421 = vld [vmem:[%s7 + $0x30] sm:$0xf]
        %v7422 = vld [vmem:[%s7 + $0x34] sm:$0xf]
        %v7423 = vld [vmem:[%s7 + $0x38] sm:$0xf]
        %v7424 = vld [vmem:[%s7 + $0x3c] sm:$0xf]
        %v7425 = vld [vmem:[%s8] sm:$0x1]
        %v7427 = vlaneseq
        %v7428 = vshrl.u32 %v7427, 7
        %v7429 = vsub.s32 0, %v7428
        %v7430 = vrot.slane %v7425, %v7429
        %v7448 = vunpack.c.l.b16 %v7409
        %v7449 = vunpack.c.l.b16 %v7410
        %v7450 = vunpack.c.l.b16 %v7411
        %v7451 = vunpack.c.l.b16 %v7412
        %v7452 = vunpack.c.l.b16 %v7413
        %v7453 = vunpack.c.l.b16 %v7414
        %v7454 = vunpack.c.l.b16 %v7415
        %v7455 = vunpack.c.l.b16 %v7416
        %v7456 = vunpack.c.l.b16 %v7417
        %v7457 = vunpack.c.l.b16 %v7418
        %v7458 = vunpack.c.l.b16 %v7419
        %v7459 = vunpack.c.l.b16 %v7420
        %v7460 = vunpack.c.l.b16 %v7421
        %v7461 = vunpack.c.l.b16 %v7422
        %v7462 = vunpack.c.l.b16 %v7423
        %v7463 = vunpack.c.l.b16 %v7424
        %v7464 = vpack.c.b16 %v7449, %v7448
        %v7465 = vpack.c.b16 %v7451, %v7450
        %v7466 = vpack.c.b16 %v7453, %v7452
        %v7467 = vpack.c.b16 %v7455, %v7454
        %v7468 = vpack.c.b16 %v7457, %v7456
        %v7469 = vpack.c.b16 %v7459, %v7458
        %v7470 = vpack.c.b16 %v7461, %v7460
        %v7471 = vpack.c.b16 %v7463, %v7462
        %7480 = vmatprep.subr.bf16.mxu0 0
        %7481 = vmatpush1.bf16.msra.mxu0 %v7464
        %7482 = vmatprep.subr.bf16.mxu0 0
        %7483 = vmatpush1.bf16.msra.mxu0 %v7465
        %7484 = vmatprep.subr.bf16.mxu0 0
        %7485 = vmatpush1.bf16.msra.mxu0 %v7466
        %7486 = vmatprep.subr.bf16.mxu0 0
        %7487 = vmatpush1.bf16.msra.mxu0 %v7467
        %7488 = vmatprep.subr.bf16.mxu0 0
        %7489 = vmatpush1.bf16.msra.mxu0 %v7468
        %7490 = vmatprep.subr.bf16.mxu0 0
        %7491 = vmatpush1.bf16.msra.mxu0 %v7469
        %7492 = vmatprep.subr.bf16.mxu0 0
        %7493 = vmatpush1.bf16.msra.mxu0 %v7470
        %7494 = vmatprep.subr.bf16.mxu0 0
        %7495 = vmatpush1.bf16.msra.mxu0 %v7471
        %7496 = vmatprep.subr.bf16.mxu0 0
        %7497 = vmatpush1.bf16.msra.mxu0 0
        %7498 = vmatprep.subr.bf16.mxu0 0
        %7499 = vmatpush1.bf16.msra.mxu0 0
        %7500 = vmatprep.subr.bf16.mxu0 0
        %7501 = vmatpush1.bf16.msra.mxu0 0
        %7502 = vmatprep.subr.bf16.mxu0 0
        %7503 = vmatpush1.bf16.msra.mxu0 0
        %7504 = vmatprep.subr.bf16.mxu0 0
        %7505 = vmatpush1.bf16.msra.mxu0 0
        %7506 = vmatprep.subr.bf16.mxu0 0
        %7507 = vmatpush1.bf16.msra.mxu0 0
        %7508 = vmatprep.subr.bf16.mxu0 0
        %7509 = vmatpush1.bf16.msra.mxu0 0
        %7510 = vmatprep.subr.bf16.mxu0 0
        %7511 = vmatpush1.bf16.msra.mxu0 0
        %7512 = vmatprep.mubr.bf16.mxu0 0
        %7513 = vmatmul.mubr.bf16.gmra.mrb[0].mxu0 %v7345
        %v7514 = vpop.f32.mrb[0].mxu0
        %v7515 = vadd.f32 %v7430, %v7514
        %v7516 = vpop.f32.mrb[0].mxu0
        %v7517 = vpop.f32.mrb[0].mxu0
        %v7518 = vadd.f32 %v7430, %v7517
        %v7519 = vpop.f32.mrb[0].mxu0
        %7520 = vmatprep.mubr.bf16.mxu0 0
        %7521 = vmatmul.mubr.bf16.gmra.mrb[0].mxu0 %v7346
        %v7522 = vpop.f32.mrb[0].mxu0
        %v7523 = vadd.f32 %v7430, %v7522
        %v7524 = vpop.f32.mrb[0].mxu0
        %v7525 = vpop.f32.mrb[0].mxu0
        %v7526 = vadd.f32 %v7430, %v7525
        %v7527 = vpop.f32.mrb[0].mxu0
        %7528 = vmatprep.mubr.bf16.mxu0 0
        %7529 = vmatmul.mubr.bf16.gmra.mrb[0].mxu0 %v7347
        %v7530 = vpop.f32.mrb[0].mxu0
        %v7531 = vadd.f32 %v7430, %v7530
        %v7532 = vpop.f32.mrb[0].mxu0
        %v7533 = vpop.f32.mrb[0].mxu0
        %v7534 = vadd.f32 %v7430, %v7533
        %v7535 = vpop.f32.mrb[0].mxu0
        %7536 = vmatprep.mubr.bf16.mxu0 0
        %7537 = vmatmul.mubr.bf16.gmra.mrb[0].mxu0 %v7348
        %v7538 = vpop.f32.mrb[0].mxu0
        %v7539 = vadd.f32 %v7430, %v7538
        %v7540 = vpop.f32.mrb[0].mxu0
        %v7541 = vpop.f32.mrb[0].mxu0
        %v7542 = vadd.f32 %v7430, %v7541
        %v7543 = vpop.f32.mrb[0].mxu0
        %7544 = vmatprep.mubr.bf16.mxu0 0
        %7545 = vmatmul.mubr.bf16.gmra.mrb[0].mxu0 %v7349
        %v7546 = vpop.f32.mrb[0].mxu0
        %v7547 = vadd.f32 %v7430, %v7546
        %v7548 = vpop.f32.mrb[0].mxu0
        %v7549 = vpop.f32.mrb[0].mxu0
        %v7550 = vadd.f32 %v7430, %v7549
        %v7551 = vpop.f32.mrb[0].mxu0
        %7552 = vmatprep.mubr.bf16.mxu0 0
        %7553 = vmatmul.mubr.bf16.gmra.mrb[0].mxu0 %v7350
        %v7554 = vpop.f32.mrb[0].mxu0
        %v7555 = vadd.f32 %v7430, %v7554
        %v7556 = vpop.f32.mrb[0].mxu0
        %v7557 = vpop.f32.mrb[0].mxu0
        %v7558 = vadd.f32 %v7430, %v7557
        %v7559 = vpop.f32.mrb[0].mxu0
        %7560 = vmatprep.mubr.bf16.mxu0 0
        %7561 = vmatmul.mubr.bf16.gmra.mrb[0].mxu0 %v7351
        %v7562 = vpop.f32.mrb[0].mxu0
        %v7563 = vadd.f32 %v7430, %v7562
        %v7564 = vpop.f32.mrb[0].mxu0
        %v7565 = vpop.f32.mrb[0].mxu0
        %v7566 = vadd.f32 %v7430, %v7565
        %v7567 = vpop.f32.mrb[0].mxu0
        %7568 = vmatprep.mubr.bf16.mxu0 0
        %7569 = vmatmul.mubr.bf16.gmra.mrb[0].mxu0 %v7352
        %v7570 = vpop.f32.mrb[0].mxu0
        %v7571 = vadd.f32 %v7430, %v7570
        %v7572 = vpop.f32.mrb[0].mxu0
        %v7573 = vpop.f32.mrb[0].mxu0
        %v7574 = vadd.f32 %v7430, %v7573
        %v7575 = vpop.f32.mrb[0].mxu0
        %7576 = vmatprep.mubr.bf16.mxu0 0
        %7577 = vmatmul.mubr.bf16.gmra.mrb[0].mxu0 %v7353
        %v7578 = vpop.f32.mrb[0].mxu0
        %v7579 = vadd.f32 %v7430, %v7578
        %v7580 = vpop.f32.mrb[0].mxu0
        %v7581 = vpop.f32.mrb[0].mxu0
        %v7582 = vadd.f32 %v7430, %v7581
        %v7583 = vpop.f32.mrb[0].mxu0
        %7584 = vmatprep.mubr.bf16.mxu0 0
        %7585 = vmatmul.mubr.bf16.gmra.mrb[0].mxu0 %v7354
        %v7586 = vpop.f32.mrb[0].mxu0
        %v7587 = vadd.f32 %v7430, %v7586
        %v7588 = vpop.f32.mrb[0].mxu0
        %v7589 = vpop.f32.mrb[0].mxu0
        %v7590 = vadd.f32 %v7430, %v7589
        %v7591 = vpop.f32.mrb[0].mxu0
        %7592 = vmatprep.mubr.bf16.mxu0 0
        %7593 = vmatmul.mubr.bf16.gmra.mrb[0].mxu0 %v7355
        %v7594 = vpop.f32.mrb[0].mxu0
        %v7595 = vadd.f32 %v7430, %v7594
        %v7596 = vpop.f32.mrb[0].mxu0
        %v7597 = vpop.f32.mrb[0].mxu0
        %v7598 = vadd.f32 %v7430, %v7597
        %v7599 = vpop.f32.mrb[0].mxu0
        %7600 = vmatprep.mubr.bf16.mxu0 0
        %7601 = vmatmul.mubr.bf16.gmra.mrb[0].mxu0 %v7356
        %v7602 = vpop.f32.mrb[0].mxu0
        %v7603 = vadd.f32 %v7430, %v7602
        %v7604 = vpop.f32.mrb[0].mxu0
        %v7605 = vpop.f32.mrb[0].mxu0
        %v7606 = vadd.f32 %v7430, %v7605
        %v7607 = vpop.f32.mrb[0].mxu0
        %7608 = vmatprep.mubr.bf16.mxu0 0
        %7609 = vmatmul.mubr.bf16.gmra.mrb[0].mxu0 %v7357
        %v7610 = vpop.f32.mrb[0].mxu0
        %v7611 = vadd.f32 %v7430, %v7610
        %v7612 = vpop.f32.mrb[0].mxu0
        %v7613 = vpop.f32.mrb[0].mxu0
        %v7614 = vadd.f32 %v7430, %v7613
        %v7615 = vpop.f32.mrb[0].mxu0
        %7616 = vmatprep.mubr.bf16.mxu0 0
        %7617 = vmatmul.mubr.bf16.gmra.mrb[0].mxu0 %v7358
        %v7618 = vpop.f32.mrb[0].mxu0
        %v7619 = vadd.f32 %v7430, %v7618
        %v7620 = vpop.f32.mrb[0].mxu0
        %v7621 = vpop.f32.mrb[0].mxu0
        %v7622 = vadd.f32 %v7430, %v7621
        %v7623 = vpop.f32.mrb[0].mxu0
        %7624 = vmatprep.mubr.bf16.mxu0 0
        %7625 = vmatmul.mubr.bf16.gmra.mrb[0].mxu0 %v7359
        %v7626 = vpop.f32.mrb[0].mxu0
        %v7627 = vadd.f32 %v7430, %v7626
        %v7628 = vpop.f32.mrb[0].mxu0
        %v7629 = vpop.f32.mrb[0].mxu0
        %v7630 = vadd.f32 %v7430, %v7629
        %v7631 = vpop.f32.mrb[0].mxu0
        %7632 = vmatprep.mubr.bf16.mxu0 0
        %7633 = vmatmul.mubr.bf16.gmra.mrb[0].mxu0 %v7360
        %v7634 = vpop.f32.mrb[0].mxu0
        %v7635 = vadd.f32 %v7430, %v7634
        %v7636 = vpop.f32.mrb[0].mxu0
        %v7637 = vpop.f32.mrb[0].mxu0
        %v7638 = vadd.f32 %v7430, %v7637
        %v7639 = vpop.f32.mrb[0].mxu0
        %7640 = vmatprep.mubr.bf16.mxu0 0
        %7641 = vmatmul.mubr.bf16.gmra.mrb[0].mxu0 %v7361
        %v7642 = vpop.f32.mrb[0].mxu0
        %v7643 = vadd.f32 %v7430, %v7642
        %v7644 = vpop.f32.mrb[0].mxu0
        %v7645 = vpop.f32.mrb[0].mxu0
        %v7646 = vadd.f32 %v7430, %v7645
        %v7647 = vpop.f32.mrb[0].mxu0
        %7648 = vmatprep.mubr.bf16.mxu0 0
        %7649 = vmatmul.mubr.bf16.gmra.mrb[0].mxu0 %v7362
        %v7650 = vpop.f32.mrb[0].mxu0
        %v7651 = vadd.f32 %v7430, %v7650
        %v7652 = vpop.f32.mrb[0].mxu0
        %v7653 = vpop.f32.mrb[0].mxu0
        %v7654 = vadd.f32 %v7430, %v7653
        %v7655 = vpop.f32.mrb[0].mxu0
        %7656 = vmatprep.mubr.bf16.mxu0 0
        %7657 = vmatmul.mubr.bf16.gmra.mrb[0].mxu0 %v7363
        %v7658 = vpop.f32.mrb[0].mxu0
        %v7659 = vadd.f32 %v7430, %v7658
        %v7660 = vpop.f32.mrb[0].mxu0
        %v7661 = vpop.f32.mrb[0].mxu0
        %v7662 = vadd.f32 %v7430, %v7661
        %v7663 = vpop.f32.mrb[0].mxu0
        %7664 = vmatprep.mubr.bf16.mxu0 0
        %7665 = vmatmul.mubr.bf16.gmra.mrb[0].mxu0 %v7364
        %v7666 = vpop.f32.mrb[0].mxu0
        %v7667 = vadd.f32 %v7430, %v7666
        %v7668 = vpop.f32.mrb[0].mxu0
        %v7669 = vpop.f32.mrb[0].mxu0
        %v7670 = vadd.f32 %v7430, %v7669
        %v7671 = vpop.f32.mrb[0].mxu0
        %7672 = vmatprep.mubr.bf16.mxu0 0
        %7673 = vmatmul.mubr.bf16.gmra.mrb[0].mxu0 %v7365
        %v7674 = vpop.f32.mrb[0].mxu0
        %v7675 = vadd.f32 %v7430, %v7674
        %v7676 = vpop.f32.mrb[0].mxu0
        %v7677 = vpop.f32.mrb[0].mxu0
        %v7678 = vadd.f32 %v7430, %v7677
        %v7679 = vpop.f32.mrb[0].mxu0
        %7680 = vmatprep.mubr.bf16.mxu0 0
        %7681 = vmatmul.mubr.bf16.gmra.mrb[0].mxu0 %v7366
        %v7682 = vpop.f32.mrb[0].mxu0
        %v7683 = vadd.f32 %v7430, %v7682
        %v7684 = vpop.f32.mrb[0].mxu0
        %v7685 = vpop.f32.mrb[0].mxu0
        %v7686 = vadd.f32 %v7430, %v7685
        %v7687 = vpop.f32.mrb[0].mxu0
        %7688 = vmatprep.mubr.bf16.mxu0 0
        %7689 = vmatmul.mubr.bf16.gmra.mrb[0].mxu0 %v7367
        %v7690 = vpop.f32.mrb[0].mxu0
        %v7691 = vadd.f32 %v7430, %v7690
        %v7692 = vpop.f32.mrb[0].mxu0
        %v7693 = vpop.f32.mrb[0].mxu0
        %v7694 = vadd.f32 %v7430, %v7693
        %v7695 = vpop.f32.mrb[0].mxu0
        %7696 = vmatprep.mubr.bf16.mxu0 0
        %7697 = vmatmul.mubr.bf16.gmra.mrb[0].mxu0 %v7368
        %v7698 = vpop.f32.mrb[0].mxu0
        %v7699 = vadd.f32 %v7430, %v7698
        %v7700 = vpop.f32.mrb[0].mxu0
        %v7701 = vpop.f32.mrb[0].mxu0
        %v7702 = vadd.f32 %v7430, %v7701
        %v7703 = vpop.f32.mrb[0].mxu0
        %7704 = vmatprep.mubr.bf16.mxu0 0
        %7705 = vmatmul.mubr.bf16.gmra.mrb[0].mxu0 %v7369
        %v7706 = vpop.f32.mrb[0].mxu0
        %v7707 = vadd.f32 %v7430, %v7706
        %v7708 = vpop.f32.mrb[0].mxu0
        %v7709 = vpop.f32.mrb[0].mxu0
        %v7710 = vadd.f32 %v7430, %v7709
        %v7711 = vpop.f32.mrb[0].mxu0
        %7712 = vmatprep.mubr.bf16.mxu0 0
        %7713 = vmatmul.mubr.bf16.gmra.mrb[0].mxu0 %v7370
        %v7714 = vpop.f32.mrb[0].mxu0
        %v7715 = vadd.f32 %v7430, %v7714
        %v7716 = vpop.f32.mrb[0].mxu0
        %v7717 = vpop.f32.mrb[0].mxu0
        %v7718 = vadd.f32 %v7430, %v7717
        %v7719 = vpop.f32.mrb[0].mxu0
        %7720 = vmatprep.mubr.bf16.mxu0 0
        %7721 = vmatmul.mubr.bf16.gmra.mrb[0].mxu0 %v7371
        %v7722 = vpop.f32.mrb[0].mxu0
        %v7723 = vadd.f32 %v7430, %v7722
        %v7724 = vpop.f32.mrb[0].mxu0
        %v7725 = vpop.f32.mrb[0].mxu0
        %v7726 = vadd.f32 %v7430, %v7725
        %v7727 = vpop.f32.mrb[0].mxu0
        %7728 = vmatprep.mubr.bf16.mxu0 0
        %7729 = vmatmul.mubr.bf16.gmra.mrb[0].mxu0 %v7372
        %v7730 = vpop.f32.mrb[0].mxu0
        %v7731 = vadd.f32 %v7430, %v7730
        %v7732 = vpop.f32.mrb[0].mxu0
        %v7733 = vpop.f32.mrb[0].mxu0
        %v7734 = vadd.f32 %v7430, %v7733
        %v7735 = vpop.f32.mrb[0].mxu0
        %7736 = vmatprep.mubr.bf16.mxu0 0
        %7737 = vmatmul.mubr.bf16.gmra.mrb[0].mxu0 %v7373
        %v7738 = vpop.f32.mrb[0].mxu0
        %v7739 = vadd.f32 %v7430, %v7738
        %v7740 = vpop.f32.mrb[0].mxu0
        %v7741 = vpop.f32.mrb[0].mxu0
        %v7742 = vadd.f32 %v7430, %v7741
        %v7743 = vpop.f32.mrb[0].mxu0
        %7744 = vmatprep.mubr.bf16.mxu0 0
        %7745 = vmatmul.mubr.bf16.gmra.mrb[0].mxu0 %v7374
        %v7746 = vpop.f32.mrb[0].mxu0
        %v7747 = vadd.f32 %v7430, %v7746
        %v7748 = vpop.f32.mrb[0].mxu0
        %v7749 = vpop.f32.mrb[0].mxu0
        %v7750 = vadd.f32 %v7430, %v7749
        %v7751 = vpop.f32.mrb[0].mxu0
        %7752 = vmatprep.mubr.bf16.mxu0 0
        %7753 = vmatmul.mubr.bf16.gmra.mrb[0].mxu0 %v7375
        %v7754 = vpop.f32.mrb[0].mxu0
        %v7755 = vadd.f32 %v7430, %v7754
        %v7756 = vpop.f32.mrb[0].mxu0
        %v7757 = vpop.f32.mrb[0].mxu0
        %v7758 = vadd.f32 %v7430, %v7757
        %v7759 = vpop.f32.mrb[0].mxu0
        %7760 = vmatprep.mubr.bf16.mxu0 0
        %7761 = vmatmul.mubr.bf16.gmra.mrb[0].mxu0 %v7376
        %v7762 = vpop.f32.mrb[0].mxu0
        %v7763 = vadd.f32 %v7430, %v7762
        %v7764 = vpop.f32.mrb[0].mxu0
        %v7765 = vpop.f32.mrb[0].mxu0
        %v7766 = vadd.f32 %v7430, %v7765
        %v7767 = vpop.f32.mrb[0].mxu0
        %7768 = vmatprep.mubr.bf16.mxu0 0
        %7769 = vmatmul.mubr.bf16.gmra.mrb[0].mxu0 %v7377
        %v7770 = vpop.f32.mrb[0].mxu0
        %v7771 = vadd.f32 %v7430, %v7770
        %v7772 = vpop.f32.mrb[0].mxu0
        %v7773 = vpop.f32.mrb[0].mxu0
        %v7774 = vadd.f32 %v7430, %v7773
        %v7775 = vpop.f32.mrb[0].mxu0
        %7776 = vmatprep.mubr.bf16.mxu0 0
        %7777 = vmatmul.mubr.bf16.gmra.mrb[0].mxu0 %v7378
        %v7778 = vpop.f32.mrb[0].mxu0
        %v7779 = vadd.f32 %v7430, %v7778
        %v7780 = vpop.f32.mrb[0].mxu0
        %v7781 = vpop.f32.mrb[0].mxu0
        %v7782 = vadd.f32 %v7430, %v7781
        %v7783 = vpop.f32.mrb[0].mxu0
        %7784 = vmatprep.mubr.bf16.mxu0 0
        %7785 = vmatmul.mubr.bf16.gmra.mrb[0].mxu0 %v7379
        %v7786 = vpop.f32.mrb[0].mxu0
        %v7787 = vadd.f32 %v7430, %v7786
        %v7788 = vpop.f32.mrb[0].mxu0
        %v7789 = vpop.f32.mrb[0].mxu0
        %v7790 = vadd.f32 %v7430, %v7789
        %v7791 = vpop.f32.mrb[0].mxu0
        %7792 = vmatprep.mubr.bf16.mxu0 0
        %7793 = vmatmul.mubr.bf16.gmra.mrb[0].mxu0 %v7380
        %v7794 = vpop.f32.mrb[0].mxu0
        %v7795 = vadd.f32 %v7430, %v7794
        %v7796 = vpop.f32.mrb[0].mxu0
        %v7797 = vpop.f32.mrb[0].mxu0
        %v7798 = vadd.f32 %v7430, %v7797
        %v7799 = vpop.f32.mrb[0].mxu0
        %7800 = vmatprep.mubr.bf16.mxu0 0
        %7801 = vmatmul.mubr.bf16.gmra.mrb[0].mxu0 %v7381
        %v7802 = vpop.f32.mrb[0].mxu0
        %v7803 = vadd.f32 %v7430, %v7802
        %v7804 = vpop.f32.mrb[0].mxu0
        %v7805 = vpop.f32.mrb[0].mxu0
        %v7806 = vadd.f32 %v7430, %v7805
        %v7807 = vpop.f32.mrb[0].mxu0
        %7808 = vmatprep.mubr.bf16.mxu0 0
        %7809 = vmatmul.mubr.bf16.gmra.mrb[0].mxu0 %v7382
        %v7810 = vpop.f32.mrb[0].mxu0
        %v7811 = vadd.f32 %v7430, %v7810
        %v7812 = vpop.f32.mrb[0].mxu0
        %v7813 = vpop.f32.mrb[0].mxu0
        %v7814 = vadd.f32 %v7430, %v7813
        %v7815 = vpop.f32.mrb[0].mxu0
        %7816 = vmatprep.mubr.bf16.mxu0 0
        %7817 = vmatmul.mubr.bf16.gmra.mrb[0].mxu0 %v7383
        %v7818 = vpop.f32.mrb[0].mxu0
        %v7819 = vadd.f32 %v7430, %v7818
        %v7820 = vpop.f32.mrb[0].mxu0
        %v7821 = vpop.f32.mrb[0].mxu0
        %v7822 = vadd.f32 %v7430, %v7821
        %v7823 = vpop.f32.mrb[0].mxu0
        %7824 = vmatprep.mubr.bf16.mxu0 0
        %7825 = vmatmul.mubr.bf16.gmra.mrb[0].mxu0 %v7384
        %v7826 = vpop.f32.mrb[0].mxu0
        %v7827 = vadd.f32 %v7430, %v7826
        %v7828 = vpop.f32.mrb[0].mxu0
        %v7829 = vpop.f32.mrb[0].mxu0
        %v7830 = vadd.f32 %v7430, %v7829
        %v7831 = vpop.f32.mrb[0].mxu0
        %7832 = vmatprep.mubr.bf16.mxu0 0
        %7833 = vmatmul.mubr.bf16.gmra.mrb[0].mxu0 %v7385
        %v7834 = vpop.f32.mrb[0].mxu0
        %v7835 = vadd.f32 %v7430, %v7834
        %v7836 = vpop.f32.mrb[0].mxu0
        %v7837 = vpop.f32.mrb[0].mxu0
        %v7838 = vadd.f32 %v7430, %v7837
        %v7839 = vpop.f32.mrb[0].mxu0
        %7840 = vmatprep.mubr.bf16.mxu0 0
        %7841 = vmatmul.mubr.bf16.gmra.mrb[0].mxu0 %v7386
        %v7842 = vpop.f32.mrb[0].mxu0
        %v7843 = vadd.f32 %v7430, %v7842
        %v7844 = vpop.f32.mrb[0].mxu0
        %v7845 = vpop.f32.mrb[0].mxu0
        %v7846 = vadd.f32 %v7430, %v7845
        %v7847 = vpop.f32.mrb[0].mxu0
        %7848 = vmatprep.mubr.bf16.mxu0 0
        %7849 = vmatmul.mubr.bf16.gmra.mrb[0].mxu0 %v7387
        %v7850 = vpop.f32.mrb[0].mxu0
        %v7851 = vadd.f32 %v7430, %v7850
        %v7852 = vpop.f32.mrb[0].mxu0
        %v7853 = vpop.f32.mrb[0].mxu0
        %v7854 = vadd.f32 %v7430, %v7853
        %v7855 = vpop.f32.mrb[0].mxu0
        %7856 = vmatprep.mubr.bf16.mxu0 0
        %7857 = vmatmul.mubr.bf16.gmra.mrb[0].mxu0 %v7388
        %v7858 = vpop.f32.mrb[0].mxu0
        %v7859 = vadd.f32 %v7430, %v7858
        %v7860 = vpop.f32.mrb[0].mxu0
        %v7861 = vpop.f32.mrb[0].mxu0
        %v7862 = vadd.f32 %v7430, %v7861
        %v7863 = vpop.f32.mrb[0].mxu0
        %7864 = vmatprep.mubr.bf16.mxu0 0
        %7865 = vmatmul.mubr.bf16.gmra.mrb[0].mxu0 %v7389
        %v7866 = vpop.f32.mrb[0].mxu0
        %v7867 = vadd.f32 %v7430, %v7866
        %v7868 = vpop.f32.mrb[0].mxu0
        %v7869 = vpop.f32.mrb[0].mxu0
        %v7870 = vadd.f32 %v7430, %v7869
        %v7871 = vpop.f32.mrb[0].mxu0
        %7872 = vmatprep.mubr.bf16.mxu0 0
        %7873 = vmatmul.mubr.bf16.gmra.mrb[0].mxu0 %v7390
        %v7874 = vpop.f32.mrb[0].mxu0
        %v7875 = vadd.f32 %v7430, %v7874
        %v7876 = vpop.f32.mrb[0].mxu0
        %v7877 = vpop.f32.mrb[0].mxu0
        %v7878 = vadd.f32 %v7430, %v7877
        %v7879 = vpop.f32.mrb[0].mxu0
        %7880 = vmatprep.mubr.bf16.mxu0 0
        %7881 = vmatmul.mubr.bf16.gmra.mrb[0].mxu0 %v7391
        %v7882 = vpop.f32.mrb[0].mxu0
        %v7883 = vadd.f32 %v7430, %v7882
        %v7884 = vpop.f32.mrb[0].mxu0
        %v7885 = vpop.f32.mrb[0].mxu0
        %v7886 = vadd.f32 %v7430, %v7885
        %v7887 = vpop.f32.mrb[0].mxu0
        %7888 = vmatprep.mubr.bf16.mxu0 0
        %7889 = vmatmul.mubr.bf16.gmra.mrb[0].mxu0 %v7392
        %v7890 = vpop.f32.mrb[0].mxu0
        %v7891 = vadd.f32 %v7430, %v7890
        %v7892 = vpop.f32.mrb[0].mxu0
        %v7893 = vpop.f32.mrb[0].mxu0
        %v7894 = vadd.f32 %v7430, %v7893
        %v7895 = vpop.f32.mrb[0].mxu0
        %7896 = vmatprep.mubr.bf16.mxu0 0
        %7897 = vmatmul.mubr.bf16.gmra.mrb[0].mxu0 %v7393
        %v7898 = vpop.f32.mrb[0].mxu0
        %v7899 = vadd.f32 %v7430, %v7898
        %v7900 = vpop.f32.mrb[0].mxu0
        %v7901 = vpop.f32.mrb[0].mxu0
        %v7902 = vadd.f32 %v7430, %v7901
        %v7903 = vpop.f32.mrb[0].mxu0
        %7904 = vmatprep.mubr.bf16.mxu0 0
        %7905 = vmatmul.mubr.bf16.gmra.mrb[0].mxu0 %v7394
        %v7906 = vpop.f32.mrb[0].mxu0
        %v7907 = vadd.f32 %v7430, %v7906
        %v7908 = vpop.f32.mrb[0].mxu0
        %v7909 = vpop.f32.mrb[0].mxu0
        %v7910 = vadd.f32 %v7430, %v7909
        %v7911 = vpop.f32.mrb[0].mxu0
        %7912 = vmatprep.mubr.bf16.mxu0 0
        %7913 = vmatmul.mubr.bf16.gmra.mrb[0].mxu0 %v7395
        %v7914 = vpop.f32.mrb[0].mxu0
        %v7915 = vadd.f32 %v7430, %v7914
        %v7916 = vpop.f32.mrb[0].mxu0
        %v7917 = vpop.f32.mrb[0].mxu0
        %v7918 = vadd.f32 %v7430, %v7917
        %v7919 = vpop.f32.mrb[0].mxu0
        %7920 = vmatprep.mubr.bf16.mxu0 0
        %7921 = vmatmul.mubr.bf16.gmra.mrb[0].mxu0 %v7396
        %v7922 = vpop.f32.mrb[0].mxu0
        %v7923 = vadd.f32 %v7430, %v7922
        %v7924 = vpop.f32.mrb[0].mxu0
        %v7925 = vpop.f32.mrb[0].mxu0
        %v7926 = vadd.f32 %v7430, %v7925
        %v7927 = vpop.f32.mrb[0].mxu0
        %7928 = vmatprep.mubr.bf16.mxu0 0
        %7929 = vmatmul.mubr.bf16.gmra.mrb[0].mxu0 %v7397
        %v7930 = vpop.f32.mrb[0].mxu0
        %v7931 = vadd.f32 %v7430, %v7930
        %v7932 = vpop.f32.mrb[0].mxu0
        %v7933 = vpop.f32.mrb[0].mxu0
        %v7934 = vadd.f32 %v7430, %v7933
        %v7935 = vpop.f32.mrb[0].mxu0
        %7936 = vmatprep.mubr.bf16.mxu0 0
        %7937 = vmatmul.mubr.bf16.gmra.mrb[0].mxu0 %v7398
        %v7938 = vpop.f32.mrb[0].mxu0
        %v7939 = vadd.f32 %v7430, %v7938
        %v7940 = vpop.f32.mrb[0].mxu0
        %v7941 = vpop.f32.mrb[0].mxu0
        %v7942 = vadd.f32 %v7430, %v7941
        %v7943 = vpop.f32.mrb[0].mxu0
        %7944 = vmatprep.mubr.bf16.mxu0 0
        %7945 = vmatmul.mubr.bf16.gmra.mrb[0].mxu0 %v7399
        %v7946 = vpop.f32.mrb[0].mxu0
        %v7947 = vadd.f32 %v7430, %v7946
        %v7948 = vpop.f32.mrb[0].mxu0
        %v7949 = vpop.f32.mrb[0].mxu0
        %v7950 = vadd.f32 %v7430, %v7949
        %v7951 = vpop.f32.mrb[0].mxu0
        %7952 = vmatprep.mubr.bf16.mxu0 0
        %7953 = vmatmul.mubr.bf16.gmra.mrb[0].mxu0 %v7400
        %v7954 = vpop.f32.mrb[0].mxu0
        %v7955 = vadd.f32 %v7430, %v7954
        %v7956 = vpop.f32.mrb[0].mxu0
        %v7957 = vpop.f32.mrb[0].mxu0
        %v7958 = vadd.f32 %v7430, %v7957
        %v7959 = vpop.f32.mrb[0].mxu0
        %7960 = vmatprep.mubr.bf16.mxu0 0
        %7961 = vmatmul.mubr.bf16.gmra.mrb[0].mxu0 %v7401
        %v7962 = vpop.f32.mrb[0].mxu0
        %v7963 = vadd.f32 %v7430, %v7962
        %v7964 = vpop.f32.mrb[0].mxu0
        %v7965 = vpop.f32.mrb[0].mxu0
        %v7966 = vadd.f32 %v7430, %v7965
        %v7967 = vpop.f32.mrb[0].mxu0
        %7968 = vmatprep.mubr.bf16.mxu0 0
        %7969 = vmatmul.mubr.bf16.gmra.mrb[0].mxu0 %v7402
        %v7970 = vpop.f32.mrb[0].mxu0
        %v7971 = vadd.f32 %v7430, %v7970
        %v7972 = vpop.f32.mrb[0].mxu0
        %v7973 = vpop.f32.mrb[0].mxu0
        %v7974 = vadd.f32 %v7430, %v7973
        %v7975 = vpop.f32.mrb[0].mxu0
        %7976 = vmatprep.mubr.bf16.mxu0 0
        %7977 = vmatmul.mubr.bf16.gmra.mrb[0].mxu0 %v7403
        %v7978 = vpop.f32.mrb[0].mxu0
        %v7979 = vadd.f32 %v7430, %v7978
        %v7980 = vpop.f32.mrb[0].mxu0
        %v7981 = vpop.f32.mrb[0].mxu0
        %v7982 = vadd.f32 %v7430, %v7981
        %v7983 = vpop.f32.mrb[0].mxu0
        %7984 = vmatprep.mubr.bf16.mxu0 0
        %7985 = vmatmul.mubr.bf16.gmra.mrb[0].mxu0 %v7404
        %v7986 = vpop.f32.mrb[0].mxu0
        %v7987 = vadd.f32 %v7430, %v7986
        %v7988 = vpop.f32.mrb[0].mxu0
        %v7989 = vpop.f32.mrb[0].mxu0
        %v7990 = vadd.f32 %v7430, %v7989
        %v7991 = vpop.f32.mrb[0].mxu0
        %7992 = vmatprep.mubr.bf16.mxu0 0
        %7993 = vmatmul.mubr.bf16.gmra.mrb[0].mxu0 %v7405
        %v7994 = vpop.f32.mrb[0].mxu0
        %v7995 = vadd.f32 %v7430, %v7994
        %v7996 = vpop.f32.mrb[0].mxu0
        %v7997 = vpop.f32.mrb[0].mxu0
        %v7998 = vadd.f32 %v7430, %v7997
        %v7999 = vpop.f32.mrb[0].mxu0
        %8000 = vmatprep.mubr.bf16.mxu0 0
        %8001 = vmatmul.mubr.bf16.gmra.mrb[0].mxu0 %v7406
        %v8002 = vpop.f32.mrb[0].mxu0
        %v8003 = vadd.f32 %v7430, %v8002
        %v8004 = vpop.f32.mrb[0].mxu0
        %v8005 = vpop.f32.mrb[0].mxu0
        %v8006 = vadd.f32 %v7430, %v8005
        %v8007 = vpop.f32.mrb[0].mxu0
        %8008 = vmatprep.mubr.bf16.mxu0 0
        %8009 = vmatmul.mubr.bf16.gmra.mrb[0].mxu0 %v7407
        %v8010 = vpop.f32.mrb[0].mxu0
        %v8011 = vadd.f32 %v7430, %v8010
        %v8012 = vpop.f32.mrb[0].mxu0
        %v8013 = vpop.f32.mrb[0].mxu0
        %v8014 = vadd.f32 %v7430, %v8013
        %v8015 = vpop.f32.mrb[0].mxu0
        %8016 = vmatprep.mubr.bf16.mxu0 0
        %8017 = vmatmul.mubr.bf16.gmra.mrb[0].mxu0 %v7408
        %v8018 = vpop.f32.mrb[0].mxu0
        %v8019 = vadd.f32 %v7430, %v8018
        %v8020 = vpop.f32.mrb[0].mxu0
        %v8021 = vpop.f32.mrb[0].mxu0
        %v8022 = vadd.f32 %v7430, %v8021
        %v8023 = vpop.f32.mrb[0].mxu0
        %8024 = vdwg.mxu0
        %v8025 = vmax.f32 %v7515, 0.0
        %v8026 = vmax.f32 %v7518, 0.0
        %v8027 = vmax.f32 %v7523, 0.0
        %v8028 = vmax.f32 %v7526, 0.0
        %v8029 = vmax.f32 %v7531, 0.0
        %v8030 = vmax.f32 %v7534, 0.0
        %v8031 = vmax.f32 %v7539, 0.0
        %v8032 = vmax.f32 %v7542, 0.0
        %v8033 = vmax.f32 %v7547, 0.0
        %v8034 = vmax.f32 %v7550, 0.0
        %v8035 = vmax.f32 %v7555, 0.0
        %v8036 = vmax.f32 %v7558, 0.0
        %v8037 = vmax.f32 %v7563, 0.0
        %v8038 = vmax.f32 %v7566, 0.0
        %v8039 = vmax.f32 %v7571, 0.0
        %v8040 = vmax.f32 %v7574, 0.0
        %v8041 = vmax.f32 %v7579, 0.0
        %v8042 = vmax.f32 %v7582, 0.0
        %v8043 = vmax.f32 %v7587, 0.0
        %v8044 = vmax.f32 %v7590, 0.0
        %v8045 = vmax.f32 %v7595, 0.0
        %v8046 = vmax.f32 %v7598, 0.0
        %v8047 = vmax.f32 %v7603, 0.0
        %v8048 = vmax.f32 %v7606, 0.0
        %v8049 = vmax.f32 %v7611, 0.0
        %v8050 = vmax.f32 %v7614, 0.0
        %v8051 = vmax.f32 %v7619, 0.0
        %v8052 = vmax.f32 %v7622, 0.0
        %v8053 = vmax.f32 %v7627, 0.0
        %v8054 = vmax.f32 %v7630, 0.0
        %v8055 = vmax.f32 %v7635, 0.0
        %v8056 = vmax.f32 %v7638, 0.0
        %v8057 = vmax.f32 %v7643, 0.0
        %v8058 = vmax.f32 %v7646, 0.0
        %v8059 = vmax.f32 %v7651, 0.0
        %v8060 = vmax.f32 %v7654, 0.0
        %v8061 = vmax.f32 %v7659, 0.0
        %v8062 = vmax.f32 %v7662, 0.0
        %v8063 = vmax.f32 %v7667, 0.0
        %v8064 = vmax.f32 %v7670, 0.0
        %v8065 = vmax.f32 %v7675, 0.0
        %v8066 = vmax.f32 %v7678, 0.0
        %v8067 = vmax.f32 %v7683, 0.0
        %v8068 = vmax.f32 %v7686, 0.0
        %v8069 = vmax.f32 %v7691, 0.0
        %v8070 = vmax.f32 %v7694, 0.0
        %v8071 = vmax.f32 %v7699, 0.0
        %v8072 = vmax.f32 %v7702, 0.0
        %v8073 = vmax.f32 %v7707, 0.0
        %v8074 = vmax.f32 %v7710, 0.0
        %v8075 = vmax.f32 %v7715, 0.0
        %v8076 = vmax.f32 %v7718, 0.0
        %v8077 = vmax.f32 %v7723, 0.0
        %v8078 = vmax.f32 %v7726, 0.0
        %v8079 = vmax.f32 %v7731, 0.0
        %v8080 = vmax.f32 %v7734, 0.0
        %v8081 = vmax.f32 %v7739, 0.0
        %v8082 = vmax.f32 %v7742, 0.0
        %v8083 = vmax.f32 %v7747, 0.0
        %v8084 = vmax.f32 %v7750, 0.0
        %v8085 = vmax.f32 %v7755, 0.0
        %v8086 = vmax.f32 %v7758, 0.0
        %v8087 = vmax.f32 %v7763, 0.0
        %v8088 = vmax.f32 %v7766, 0.0
        %v8089 = vmax.f32 %v7771, 0.0
        %v8090 = vmax.f32 %v7774, 0.0
        %v8091 = vmax.f32 %v7779, 0.0
        %v8092 = vmax.f32 %v7782, 0.0
        %v8093 = vmax.f32 %v7787, 0.0
        %v8094 = vmax.f32 %v7790, 0.0
        %v8095 = vmax.f32 %v7795, 0.0
        %v8096 = vmax.f32 %v7798, 0.0
        %v8097 = vmax.f32 %v7803, 0.0
        %v8098 = vmax.f32 %v7806, 0.0
        %v8099 = vmax.f32 %v7811, 0.0
        %v8100 = vmax.f32 %v7814, 0.0
        %v8101 = vmax.f32 %v7819, 0.0
        %v8102 = vmax.f32 %v7822, 0.0
        %v8103 = vmax.f32 %v7827, 0.0
        %v8104 = vmax.f32 %v7830, 0.0
        %v8105 = vmax.f32 %v7835, 0.0
        %v8106 = vmax.f32 %v7838, 0.0
        %v8107 = vmax.f32 %v7843, 0.0
        %v8108 = vmax.f32 %v7846, 0.0
        %v8109 = vmax.f32 %v7851, 0.0
        %v8110 = vmax.f32 %v7854, 0.0
        %v8111 = vmax.f32 %v7859, 0.0
        %v8112 = vmax.f32 %v7862, 0.0
        %v8113 = vmax.f32 %v7867, 0.0
        %v8114 = vmax.f32 %v7870, 0.0
        %v8115 = vmax.f32 %v7875, 0.0
        %v8116 = vmax.f32 %v7878, 0.0
        %v8117 = vmax.f32 %v7883, 0.0
        %v8118 = vmax.f32 %v7886, 0.0
        %v8119 = vmax.f32 %v7891, 0.0
        %v8120 = vmax.f32 %v7894, 0.0
        %v8121 = vmax.f32 %v7899, 0.0
        %v8122 = vmax.f32 %v7902, 0.0
        %v8123 = vmax.f32 %v7907, 0.0
        %v8124 = vmax.f32 %v7910, 0.0
        %v8125 = vmax.f32 %v7915, 0.0
        %v8126 = vmax.f32 %v7918, 0.0
        %v8127 = vmax.f32 %v7923, 0.0
        %v8128 = vmax.f32 %v7926, 0.0
        %v8129 = vmax.f32 %v7931, 0.0
        %v8130 = vmax.f32 %v7934, 0.0
        %v8131 = vmax.f32 %v7939, 0.0
        %v8132 = vmax.f32 %v7942, 0.0
        %v8133 = vmax.f32 %v7947, 0.0
        %v8134 = vmax.f32 %v7950, 0.0
        %v8135 = vmax.f32 %v7955, 0.0
        %v8136 = vmax.f32 %v7958, 0.0
        %v8137 = vmax.f32 %v7963, 0.0
        %v8138 = vmax.f32 %v7966, 0.0
        %v8139 = vmax.f32 %v7971, 0.0
        %v8140 = vmax.f32 %v7974, 0.0
        %v8141 = vmax.f32 %v7979, 0.0
        %v8142 = vmax.f32 %v7982, 0.0
        %v8143 = vmax.f32 %v7987, 0.0
        %v8144 = vmax.f32 %v7990, 0.0
        %v8145 = vmax.f32 %v7995, 0.0
        %v8146 = vmax.f32 %v7998, 0.0
        %v8147 = vmax.f32 %v8003, 0.0
        %v8148 = vmax.f32 %v8006, 0.0
        %v8149 = vmax.f32 %v8011, 0.0
        %v8150 = vmax.f32 %v8014, 0.0
        %v8151 = vmax.f32 %v8019, 0.0
        %v8152 = vmax.f32 %v8022, 0.0
        %v8153 = vld [vmem:[%s9] sm:$0x1]
        %v8155 = vlaneseq
        %v8156 = vshrl.u32 %v8155, 7
        %v8157 = vsub.s32 0, %v8156
        %v8158 = vrot.slane %v8153, %v8157
        %v8160 = vmul.f32 %v8025, %v8158
        %v8161 = vmul.f32 %v8026, %v8158
        %v8162 = vmul.f32 %v8027, %v8158
        %v8163 = vmul.f32 %v8028, %v8158
        %v8164 = vmul.f32 %v8029, %v8158
        %v8165 = vmul.f32 %v8030, %v8158
        %v8166 = vmul.f32 %v8031, %v8158
        %v8167 = vmul.f32 %v8032, %v8158
        %v8168 = vmul.f32 %v8033, %v8158
        %v8169 = vmul.f32 %v8034, %v8158
        %v8170 = vmul.f32 %v8035, %v8158
        %v8171 = vmul.f32 %v8036, %v8158
        %v8172 = vmul.f32 %v8037, %v8158
        %v8173 = vmul.f32 %v8038, %v8158
        %v8174 = vmul.f32 %v8039, %v8158
        %v8175 = vmul.f32 %v8040, %v8158
        %v8176 = vmul.f32 %v8041, %v8158
        %v8177 = vmul.f32 %v8042, %v8158
        %v8178 = vmul.f32 %v8043, %v8158
        %v8179 = vmul.f32 %v8044, %v8158
        %v8180 = vmul.f32 %v8045, %v8158
        %v8181 = vmul.f32 %v8046, %v8158
        %v8182 = vmul.f32 %v8047, %v8158
        %v8183 = vmul.f32 %v8048, %v8158
        %v8184 = vmul.f32 %v8049, %v8158
        %v8185 = vmul.f32 %v8050, %v8158
        %v8186 = vmul.f32 %v8051, %v8158
        %v8187 = vmul.f32 %v8052, %v8158
        %v8188 = vmul.f32 %v8053, %v8158
        %v8189 = vmul.f32 %v8054, %v8158
        %v8190 = vmul.f32 %v8055, %v8158
        %v8191 = vmul.f32 %v8056, %v8158
        %v8192 = vmul.f32 %v8057, %v8158
        %v8193 = vmul.f32 %v8058, %v8158
        %v8194 = vmul.f32 %v8059, %v8158
        %v8195 = vmul.f32 %v8060, %v8158
        %v8196 = vmul.f32 %v8061, %v8158
        %v8197 = vmul.f32 %v8062, %v8158
        %v8198 = vmul.f32 %v8063, %v8158
        %v8199 = vmul.f32 %v8064, %v8158
        %v8200 = vmul.f32 %v8065, %v8158
        %v8201 = vmul.f32 %v8066, %v8158
        %v8202 = vmul.f32 %v8067, %v8158
        %v8203 = vmul.f32 %v8068, %v8158
        %v8204 = vmul.f32 %v8069, %v8158
        %v8205 = vmul.f32 %v8070, %v8158
        %v8206 = vmul.f32 %v8071, %v8158
        %v8207 = vmul.f32 %v8072, %v8158
        %v8208 = vmul.f32 %v8073, %v8158
        %v8209 = vmul.f32 %v8074, %v8158
        %v8210 = vmul.f32 %v8075, %v8158
        %v8211 = vmul.f32 %v8076, %v8158
        %v8212 = vmul.f32 %v8077, %v8158
        %v8213 = vmul.f32 %v8078, %v8158
        %v8214 = vmul.f32 %v8079, %v8158
        %v8215 = vmul.f32 %v8080, %v8158
        %v8216 = vmul.f32 %v8081, %v8158
        %v8217 = vmul.f32 %v8082, %v8158
        %v8218 = vmul.f32 %v8083, %v8158
        %v8219 = vmul.f32 %v8084, %v8158
        %v8220 = vmul.f32 %v8085, %v8158
        %v8221 = vmul.f32 %v8086, %v8158
        %v8222 = vmul.f32 %v8087, %v8158
        %v8223 = vmul.f32 %v8088, %v8158
        %v8224 = vmul.f32 %v8089, %v8158
        %v8225 = vmul.f32 %v8090, %v8158
        %v8226 = vmul.f32 %v8091, %v8158
        %v8227 = vmul.f32 %v8092, %v8158
        %v8228 = vmul.f32 %v8093, %v8158
        %v8229 = vmul.f32 %v8094, %v8158
        %v8230 = vmul.f32 %v8095, %v8158
        %v8231 = vmul.f32 %v8096, %v8158
        %v8232 = vmul.f32 %v8097, %v8158
        %v8233 = vmul.f32 %v8098, %v8158
        %v8234 = vmul.f32 %v8099, %v8158
        %v8235 = vmul.f32 %v8100, %v8158
        %v8236 = vmul.f32 %v8101, %v8158
        %v8237 = vmul.f32 %v8102, %v8158
        %v8238 = vmul.f32 %v8103, %v8158
        %v8239 = vmul.f32 %v8104, %v8158
        %v8240 = vmul.f32 %v8105, %v8158
        %v8241 = vmul.f32 %v8106, %v8158
        %v8242 = vmul.f32 %v8107, %v8158
        %v8243 = vmul.f32 %v8108, %v8158
        %v8244 = vmul.f32 %v8109, %v8158
        %v8245 = vmul.f32 %v8110, %v8158
        %v8246 = vmul.f32 %v8111, %v8158
        %v8247 = vmul.f32 %v8112, %v8158
        %v8248 = vmul.f32 %v8113, %v8158
        %v8249 = vmul.f32 %v8114, %v8158
        %v8250 = vmul.f32 %v8115, %v8158
        %v8251 = vmul.f32 %v8116, %v8158
        %v8252 = vmul.f32 %v8117, %v8158
        %v8253 = vmul.f32 %v8118, %v8158
        %v8254 = vmul.f32 %v8119, %v8158
        %v8255 = vmul.f32 %v8120, %v8158
        %v8256 = vmul.f32 %v8121, %v8158
        %v8257 = vmul.f32 %v8122, %v8158
        %v8258 = vmul.f32 %v8123, %v8158
        %v8259 = vmul.f32 %v8124, %v8158
        %v8260 = vmul.f32 %v8125, %v8158
        %v8261 = vmul.f32 %v8126, %v8158
        %v8262 = vmul.f32 %v8127, %v8158
        %v8263 = vmul.f32 %v8128, %v8158
        %v8264 = vmul.f32 %v8129, %v8158
        %v8265 = vmul.f32 %v8130, %v8158
        %v8266 = vmul.f32 %v8131, %v8158
        %v8267 = vmul.f32 %v8132, %v8158
        %v8268 = vmul.f32 %v8133, %v8158
        %v8269 = vmul.f32 %v8134, %v8158
        %v8270 = vmul.f32 %v8135, %v8158
        %v8271 = vmul.f32 %v8136, %v8158
        %v8272 = vmul.f32 %v8137, %v8158
        %v8273 = vmul.f32 %v8138, %v8158
        %v8274 = vmul.f32 %v8139, %v8158
        %v8275 = vmul.f32 %v8140, %v8158
        %v8276 = vmul.f32 %v8141, %v8158
        %v8277 = vmul.f32 %v8142, %v8158
        %v8278 = vmul.f32 %v8143, %v8158
        %v8279 = vmul.f32 %v8144, %v8158
        %v8280 = vmul.f32 %v8145, %v8158
        %v8281 = vmul.f32 %v8146, %v8158
        %v8282 = vmul.f32 %v8147, %v8158
        %v8283 = vmul.f32 %v8148, %v8158
        %v8284 = vmul.f32 %v8149, %v8158
        %v8285 = vmul.f32 %v8150, %v8158
        %v8286 = vmul.f32 %v8151, %v8158
        %v8287 = vmul.f32 %v8152, %v8158
        %8288 = vadd.xlane.f32.xlu0 %v8160
        %v8289 = vpop.xlane.xlu0 %8288
        %8290 = vadd.xlane.f32.xlu0 %v8161
        %v8291 = vpop.xlane.xlu0 %8290
        %8292 = vadd.xlane.f32.xlu0 %v8162
        %v8293 = vpop.xlane.xlu0 %8292
        %8294 = vadd.xlane.f32.xlu0 %v8163
        %v8295 = vpop.xlane.xlu0 %8294
        %8296 = vadd.xlane.f32.xlu0 %v8164
        %v8297 = vpop.xlane.xlu0 %8296
        %8298 = vadd.xlane.f32.xlu0 %v8165
        %v8299 = vpop.xlane.xlu0 %8298
        %8300 = vadd.xlane.f32.xlu0 %v8166
        %v8301 = vpop.xlane.xlu0 %8300
        %8302 = vadd.xlane.f32.xlu0 %v8167
        %v8303 = vpop.xlane.xlu0 %8302
        %8304 = vadd.xlane.f32.xlu0 %v8168
        %v8305 = vpop.xlane.xlu0 %8304
        %8306 = vadd.xlane.f32.xlu0 %v8169
        %v8307 = vpop.xlane.xlu0 %8306
        %8308 = vadd.xlane.f32.xlu0 %v8170
        %v8309 = vpop.xlane.xlu0 %8308
        %8310 = vadd.xlane.f32.xlu0 %v8171
        %v8311 = vpop.xlane.xlu0 %8310
        %8312 = vadd.xlane.f32.xlu0 %v8172
        %v8313 = vpop.xlane.xlu0 %8312
        %8314 = vadd.xlane.f32.xlu0 %v8173
        %v8315 = vpop.xlane.xlu0 %8314
        %8316 = vadd.xlane.f32.xlu0 %v8174
        %v8317 = vpop.xlane.xlu0 %8316
        %8318 = vadd.xlane.f32.xlu0 %v8175
        %v8319 = vpop.xlane.xlu0 %8318
        %8320 = vadd.xlane.f32.xlu0 %v8176
        %v8321 = vpop.xlane.xlu0 %8320
        %8322 = vadd.xlane.f32.xlu0 %v8177
        %v8323 = vpop.xlane.xlu0 %8322
        %8324 = vadd.xlane.f32.xlu0 %v8178
        %v8325 = vpop.xlane.xlu0 %8324
        %8326 = vadd.xlane.f32.xlu0 %v8179
        %v8327 = vpop.xlane.xlu0 %8326
        %8328 = vadd.xlane.f32.xlu0 %v8180
        %v8329 = vpop.xlane.xlu0 %8328
        %8330 = vadd.xlane.f32.xlu0 %v8181
        %v8331 = vpop.xlane.xlu0 %8330
        %8332 = vadd.xlane.f32.xlu0 %v8182
        %v8333 = vpop.xlane.xlu0 %8332
        %8334 = vadd.xlane.f32.xlu0 %v8183
        %v8335 = vpop.xlane.xlu0 %8334
        %8336 = vadd.xlane.f32.xlu0 %v8184
        %v8337 = vpop.xlane.xlu0 %8336
        %8338 = vadd.xlane.f32.xlu0 %v8185
        %v8339 = vpop.xlane.xlu0 %8338
        %8340 = vadd.xlane.f32.xlu0 %v8186
        %v8341 = vpop.xlane.xlu0 %8340
        %8342 = vadd.xlane.f32.xlu0 %v8187
        %v8343 = vpop.xlane.xlu0 %8342
        %8344 = vadd.xlane.f32.xlu0 %v8188
        %v8345 = vpop.xlane.xlu0 %8344
        %8346 = vadd.xlane.f32.xlu0 %v8189
        %v8347 = vpop.xlane.xlu0 %8346
        %8348 = vadd.xlane.f32.xlu0 %v8190
        %v8349 = vpop.xlane.xlu0 %8348
        %8350 = vadd.xlane.f32.xlu0 %v8191
        %v8351 = vpop.xlane.xlu0 %8350
        %8352 = vadd.xlane.f32.xlu0 %v8192
        %v8353 = vpop.xlane.xlu0 %8352
        %8354 = vadd.xlane.f32.xlu0 %v8193
        %v8355 = vpop.xlane.xlu0 %8354
        %8356 = vadd.xlane.f32.xlu0 %v8194
        %v8357 = vpop.xlane.xlu0 %8356
        %8358 = vadd.xlane.f32.xlu0 %v8195
        %v8359 = vpop.xlane.xlu0 %8358
        %8360 = vadd.xlane.f32.xlu0 %v8196
        %v8361 = vpop.xlane.xlu0 %8360
        %8362 = vadd.xlane.f32.xlu0 %v8197
        %v8363 = vpop.xlane.xlu0 %8362
        %8364 = vadd.xlane.f32.xlu0 %v8198
        %v8365 = vpop.xlane.xlu0 %8364
        %8366 = vadd.xlane.f32.xlu0 %v8199
        %v8367 = vpop.xlane.xlu0 %8366
        %8368 = vadd.xlane.f32.xlu0 %v8200
        %v8369 = vpop.xlane.xlu0 %8368
        %8370 = vadd.xlane.f32.xlu0 %v8201
        %v8371 = vpop.xlane.xlu0 %8370
        %8372 = vadd.xlane.f32.xlu0 %v8202
        %v8373 = vpop.xlane.xlu0 %8372
        %8374 = vadd.xlane.f32.xlu0 %v8203
        %v8375 = vpop.xlane.xlu0 %8374
        %8376 = vadd.xlane.f32.xlu0 %v8204
        %v8377 = vpop.xlane.xlu0 %8376
        %8378 = vadd.xlane.f32.xlu0 %v8205
        %v8379 = vpop.xlane.xlu0 %8378
        %8380 = vadd.xlane.f32.xlu0 %v8206
        %v8381 = vpop.xlane.xlu0 %8380
        %8382 = vadd.xlane.f32.xlu0 %v8207
        %v8383 = vpop.xlane.xlu0 %8382
        %8384 = vadd.xlane.f32.xlu0 %v8208
        %v8385 = vpop.xlane.xlu0 %8384
        %8386 = vadd.xlane.f32.xlu0 %v8209
        %v8387 = vpop.xlane.xlu0 %8386
        %8388 = vadd.xlane.f32.xlu0 %v8210
        %v8389 = vpop.xlane.xlu0 %8388
        %8390 = vadd.xlane.f32.xlu0 %v8211
        %v8391 = vpop.xlane.xlu0 %8390
        %8392 = vadd.xlane.f32.xlu0 %v8212
        %v8393 = vpop.xlane.xlu0 %8392
        %8394 = vadd.xlane.f32.xlu0 %v8213
        %v8395 = vpop.xlane.xlu0 %8394
        %8396 = vadd.xlane.f32.xlu0 %v8214
        %v8397 = vpop.xlane.xlu0 %8396
        %8398 = vadd.xlane.f32.xlu0 %v8215
        %v8399 = vpop.xlane.xlu0 %8398
        %8400 = vadd.xlane.f32.xlu0 %v8216
        %v8401 = vpop.xlane.xlu0 %8400
        %8402 = vadd.xlane.f32.xlu0 %v8217
        %v8403 = vpop.xlane.xlu0 %8402
        %8404 = vadd.xlane.f32.xlu0 %v8218
        %v8405 = vpop.xlane.xlu0 %8404
        %8406 = vadd.xlane.f32.xlu0 %v8219
        %v8407 = vpop.xlane.xlu0 %8406
        %8408 = vadd.xlane.f32.xlu0 %v8220
        %v8409 = vpop.xlane.xlu0 %8408
        %8410 = vadd.xlane.f32.xlu0 %v8221
        %v8411 = vpop.xlane.xlu0 %8410
        %8412 = vadd.xlane.f32.xlu0 %v8222
        %v8413 = vpop.xlane.xlu0 %8412
        %8414 = vadd.xlane.f32.xlu0 %v8223
        %v8415 = vpop.xlane.xlu0 %8414
        %8416 = vadd.xlane.f32.xlu0 %v8224
        %v8417 = vpop.xlane.xlu0 %8416
        %8418 = vadd.xlane.f32.xlu0 %v8225
        %v8419 = vpop.xlane.xlu0 %8418
        %8420 = vadd.xlane.f32.xlu0 %v8226
        %v8421 = vpop.xlane.xlu0 %8420
        %8422 = vadd.xlane.f32.xlu0 %v8227
        %v8423 = vpop.xlane.xlu0 %8422
        %8424 = vadd.xlane.f32.xlu0 %v8228
        %v8425 = vpop.xlane.xlu0 %8424
        %8426 = vadd.xlane.f32.xlu0 %v8229
        %v8427 = vpop.xlane.xlu0 %8426
        %8428 = vadd.xlane.f32.xlu0 %v8230
        %v8429 = vpop.xlane.xlu0 %8428
        %8430 = vadd.xlane.f32.xlu0 %v8231
        %v8431 = vpop.xlane.xlu0 %8430
        %8432 = vadd.xlane.f32.xlu0 %v8232
        %v8433 = vpop.xlane.xlu0 %8432
        %8434 = vadd.xlane.f32.xlu0 %v8233
        %v8435 = vpop.xlane.xlu0 %8434
        %8436 = vadd.xlane.f32.xlu0 %v8234
        %v8437 = vpop.xlane.xlu0 %8436
        %8438 = vadd.xlane.f32.xlu0 %v8235
        %v8439 = vpop.xlane.xlu0 %8438
        %8440 = vadd.xlane.f32.xlu0 %v8236
        %v8441 = vpop.xlane.xlu0 %8440
        %8442 = vadd.xlane.f32.xlu0 %v8237
        %v8443 = vpop.xlane.xlu0 %8442
        %8444 = vadd.xlane.f32.xlu0 %v8238
        %v8445 = vpop.xlane.xlu0 %8444
        %8446 = vadd.xlane.f32.xlu0 %v8239
        %v8447 = vpop.xlane.xlu0 %8446
        %8448 = vadd.xlane.f32.xlu0 %v8240
        %v8449 = vpop.xlane.xlu0 %8448
        %8450 = vadd.xlane.f32.xlu0 %v8241
        %v8451 = vpop.xlane.xlu0 %8450
        %8452 = vadd.xlane.f32.xlu0 %v8242
        %v8453 = vpop.xlane.xlu0 %8452
        %8454 = vadd.xlane.f32.xlu0 %v8243
        %v8455 = vpop.xlane.xlu0 %8454
        %8456 = vadd.xlane.f32.xlu0 %v8244
        %v8457 = vpop.xlane.xlu0 %8456
        %8458 = vadd.xlane.f32.xlu0 %v8245
        %v8459 = vpop.xlane.xlu0 %8458
        %8460 = vadd.xlane.f32.xlu0 %v8246
        %v8461 = vpop.xlane.xlu0 %8460
        %8462 = vadd.xlane.f32.xlu0 %v8247
        %v8463 = vpop.xlane.xlu0 %8462
        %8464 = vadd.xlane.f32.xlu0 %v8248
        %v8465 = vpop.xlane.xlu0 %8464
        %8466 = vadd.xlane.f32.xlu0 %v8249
        %v8467 = vpop.xlane.xlu0 %8466
        %8468 = vadd.xlane.f32.xlu0 %v8250
        %v8469 = vpop.xlane.xlu0 %8468
        %8470 = vadd.xlane.f32.xlu0 %v8251
        %v8471 = vpop.xlane.xlu0 %8470
        %8472 = vadd.xlane.f32.xlu0 %v8252
        %v8473 = vpop.xlane.xlu0 %8472
        %8474 = vadd.xlane.f32.xlu0 %v8253
        %v8475 = vpop.xlane.xlu0 %8474
        %8476 = vadd.xlane.f32.xlu0 %v8254
        %v8477 = vpop.xlane.xlu0 %8476
        %8478 = vadd.xlane.f32.xlu0 %v8255
        %v8479 = vpop.xlane.xlu0 %8478
        %8480 = vadd.xlane.f32.xlu0 %v8256
        %v8481 = vpop.xlane.xlu0 %8480
        %8482 = vadd.xlane.f32.xlu0 %v8257
        %v8483 = vpop.xlane.xlu0 %8482
        %8484 = vadd.xlane.f32.xlu0 %v8258
        %v8485 = vpop.xlane.xlu0 %8484
        %8486 = vadd.xlane.f32.xlu0 %v8259
        %v8487 = vpop.xlane.xlu0 %8486
        %8488 = vadd.xlane.f32.xlu0 %v8260
        %v8489 = vpop.xlane.xlu0 %8488
        %8490 = vadd.xlane.f32.xlu0 %v8261
        %v8491 = vpop.xlane.xlu0 %8490
        %8492 = vadd.xlane.f32.xlu0 %v8262
        %v8493 = vpop.xlane.xlu0 %8492
        %8494 = vadd.xlane.f32.xlu0 %v8263
        %v8495 = vpop.xlane.xlu0 %8494
        %8496 = vadd.xlane.f32.xlu0 %v8264
        %v8497 = vpop.xlane.xlu0 %8496
        %8498 = vadd.xlane.f32.xlu0 %v8265
        %v8499 = vpop.xlane.xlu0 %8498
        %8500 = vadd.xlane.f32.xlu0 %v8266
        %v8501 = vpop.xlane.xlu0 %8500
        %8502 = vadd.xlane.f32.xlu0 %v8267
        %v8503 = vpop.xlane.xlu0 %8502
        %8504 = vadd.xlane.f32.xlu0 %v8268
        %v8505 = vpop.xlane.xlu0 %8504
        %8506 = vadd.xlane.f32.xlu0 %v8269
        %v8507 = vpop.xlane.xlu0 %8506
        %8508 = vadd.xlane.f32.xlu0 %v8270
        %v8509 = vpop.xlane.xlu0 %8508
        %8510 = vadd.xlane.f32.xlu0 %v8271
        %v8511 = vpop.xlane.xlu0 %8510
        %8512 = vadd.xlane.f32.xlu0 %v8272
        %v8513 = vpop.xlane.xlu0 %8512
        %8514 = vadd.xlane.f32.xlu0 %v8273
        %v8515 = vpop.xlane.xlu0 %8514
        %8516 = vadd.xlane.f32.xlu0 %v8274
        %v8517 = vpop.xlane.xlu0 %8516
        %8518 = vadd.xlane.f32.xlu0 %v8275
        %v8519 = vpop.xlane.xlu0 %8518
        %8520 = vadd.xlane.f32.xlu0 %v8276
        %v8521 = vpop.xlane.xlu0 %8520
        %8522 = vadd.xlane.f32.xlu0 %v8277
        %v8523 = vpop.xlane.xlu0 %8522
        %8524 = vadd.xlane.f32.xlu0 %v8278
        %v8525 = vpop.xlane.xlu0 %8524
        %8526 = vadd.xlane.f32.xlu0 %v8279
        %v8527 = vpop.xlane.xlu0 %8526
        %8528 = vadd.xlane.f32.xlu0 %v8280
        %v8529 = vpop.xlane.xlu0 %8528
        %8530 = vadd.xlane.f32.xlu0 %v8281
        %v8531 = vpop.xlane.xlu0 %8530
        %8532 = vadd.xlane.f32.xlu0 %v8282
        %v8533 = vpop.xlane.xlu0 %8532
        %8534 = vadd.xlane.f32.xlu0 %v8283
        %v8535 = vpop.xlane.xlu0 %8534
        %8536 = vadd.xlane.f32.xlu0 %v8284
        %v8537 = vpop.xlane.xlu0 %8536
        %8538 = vadd.xlane.f32.xlu0 %v8285
        %v8539 = vpop.xlane.xlu0 %8538
        %8540 = vadd.xlane.f32.xlu0 %v8286
        %v8541 = vpop.xlane.xlu0 %8540
        %8542 = vadd.xlane.f32.xlu0 %v8287
        %v8543 = vpop.xlane.xlu0 %8542
        %v8544 = vld [vmem:[%s1483] sm:$0xff]
        %v8545 = vld [vmem:[%s1483 + $0x8] sm:$0xff]
        %v8546 = vld [vmem:[%s1483 + $0x10] sm:$0xff]
        %v8547 = vld [vmem:[%s1483 + $0x18] sm:$0xff]
        %v8548 = vld [vmem:[%s1483 + $0x20] sm:$0xff]
        %v8549 = vld [vmem:[%s1483 + $0x28] sm:$0xff]
        %v8550 = vld [vmem:[%s1483 + $0x30] sm:$0xff]
        %v8551 = vld [vmem:[%s1483 + $0x38] sm:$0xff]
        %v8552 = vld [vmem:[%s1483 + $0x40] sm:$0xff]
        %v8553 = vld [vmem:[%s1483 + $0x48] sm:$0xff]
        %v8554 = vld [vmem:[%s1483 + $0x50] sm:$0xff]
        %v8555 = vld [vmem:[%s1483 + $0x58] sm:$0xff]
        %v8556 = vld [vmem:[%s1483 + $0x60] sm:$0xff]
        %v8557 = vld [vmem:[%s1483 + $0x68] sm:$0xff]
        %v8558 = vld [vmem:[%s1483 + $0x70] sm:$0xff]
        %v8559 = vld [vmem:[%s1483 + $0x78] sm:$0xff]
        %v8560 = vld [vmem:[%s1483 + $0x80] sm:$0xff]
        %v8561 = vld [vmem:[%s1483 + $0x88] sm:$0xff]
        %v8562 = vld [vmem:[%s1483 + $0x90] sm:$0xff]
        %v8563 = vld [vmem:[%s1483 + $0x98] sm:$0xff]
        %v8564 = vld [vmem:[%s1483 + $0xa0] sm:$0xff]
        %v8565 = vld [vmem:[%s1483 + $0xa8] sm:$0xff]
        %v8566 = vld [vmem:[%s1483 + $0xb0] sm:$0xff]
        %v8567 = vld [vmem:[%s1483 + $0xb8] sm:$0xff]
        %v8568 = vld [vmem:[%s1483 + $0xc0] sm:$0xff]
        %v8569 = vld [vmem:[%s1483 + $0xc8] sm:$0xff]
        %v8570 = vld [vmem:[%s1483 + $0xd0] sm:$0xff]
        %v8571 = vld [vmem:[%s1483 + $0xd8] sm:$0xff]
        %v8572 = vld [vmem:[%s1483 + $0xe0] sm:$0xff]
        %v8573 = vld [vmem:[%s1483 + $0xe8] sm:$0xff]
        %v8574 = vld [vmem:[%s1483 + $0xf0] sm:$0xff]
        %v8575 = vld [vmem:[%s1483 + $0xf8] sm:$0xff]
        %v8576 = vmul.f32 %v8289, %v8544
        %v8577 = vmul.f32 %v8291, %v8545
        %v8578 = vmul.f32 %v8293, %v8546
        %v8579 = vmul.f32 %v8295, %v8547
        %v8580 = vmul.f32 %v8297, %v8548
        %v8581 = vmul.f32 %v8299, %v8549
        %v8582 = vmul.f32 %v8301, %v8550
        %v8583 = vmul.f32 %v8303, %v8551
        %v8584 = vmul.f32 %v8305, %v8552
        %v8585 = vmul.f32 %v8307, %v8553
        %v8586 = vmul.f32 %v8309, %v8554
        %v8587 = vmul.f32 %v8311, %v8555
        %v8588 = vmul.f32 %v8313, %v8556
        %v8589 = vmul.f32 %v8315, %v8557
        %v8590 = vmul.f32 %v8317, %v8558
        %v8591 = vmul.f32 %v8319, %v8559
        %v8592 = vmul.f32 %v8321, %v8560
        %v8593 = vmul.f32 %v8323, %v8561
        %v8594 = vmul.f32 %v8325, %v8562
        %v8595 = vmul.f32 %v8327, %v8563
        %v8596 = vmul.f32 %v8329, %v8564
        %v8597 = vmul.f32 %v8331, %v8565
        %v8598 = vmul.f32 %v8333, %v8566
        %v8599 = vmul.f32 %v8335, %v8567
        %v8600 = vmul.f32 %v8337, %v8568
        %v8601 = vmul.f32 %v8339, %v8569
        %v8602 = vmul.f32 %v8341, %v8570
        %v8603 = vmul.f32 %v8343, %v8571
        %v8604 = vmul.f32 %v8345, %v8572
        %v8605 = vmul.f32 %v8347, %v8573
        %v8606 = vmul.f32 %v8349, %v8574
        %v8607 = vmul.f32 %v8351, %v8575
        %v8608 = vmul.f32 %v8353, %v8544
        %v8609 = vmul.f32 %v8355, %v8545
        %v8610 = vmul.f32 %v8357, %v8546
        %v8611 = vmul.f32 %v8359, %v8547
        %v8612 = vmul.f32 %v8361, %v8548
        %v8613 = vmul.f32 %v8363, %v8549
        %v8614 = vmul.f32 %v8365, %v8550
        %v8615 = vmul.f32 %v8367, %v8551
        %v8616 = vmul.f32 %v8369, %v8552
        %v8617 = vmul.f32 %v8371, %v8553
        %v8618 = vmul.f32 %v8373, %v8554
        %v8619 = vmul.f32 %v8375, %v8555
        %v8620 = vmul.f32 %v8377, %v8556
        %v8621 = vmul.f32 %v8379, %v8557
        %v8622 = vmul.f32 %v8381, %v8558
        %v8623 = vmul.f32 %v8383, %v8559
        %v8624 = vmul.f32 %v8385, %v8560
        %v8625 = vmul.f32 %v8387, %v8561
        %v8626 = vmul.f32 %v8389, %v8562
        %v8627 = vmul.f32 %v8391, %v8563
        %v8628 = vmul.f32 %v8393, %v8564
        %v8629 = vmul.f32 %v8395, %v8565
        %v8630 = vmul.f32 %v8397, %v8566
        %v8631 = vmul.f32 %v8399, %v8567
        %v8632 = vmul.f32 %v8401, %v8568
        %v8633 = vmul.f32 %v8403, %v8569
        %v8634 = vmul.f32 %v8405, %v8570
        %v8635 = vmul.f32 %v8407, %v8571
        %v8636 = vmul.f32 %v8409, %v8572
        %v8637 = vmul.f32 %v8411, %v8573
        %v8638 = vmul.f32 %v8413, %v8574
        %v8639 = vmul.f32 %v8415, %v8575
        %8672 = vrot.lane.b32.xlu0 %v8608, 127
        %v8673 = vpop.permute.xlu0 %8672
        %8674 = vrot.lane.b32.xlu0 %v8609, 127
        %v8675 = vpop.permute.xlu0 %8674
        %8676 = vrot.lane.b32.xlu0 %v8610, 127
        %v8677 = vpop.permute.xlu0 %8676
        %8678 = vrot.lane.b32.xlu0 %v8611, 127
        %v8679 = vpop.permute.xlu0 %8678
        %8680 = vrot.lane.b32.xlu0 %v8612, 127
        %v8681 = vpop.permute.xlu0 %8680
        %8682 = vrot.lane.b32.xlu0 %v8613, 127
        %v8683 = vpop.permute.xlu0 %8682
        %8684 = vrot.lane.b32.xlu0 %v8614, 127
        %v8685 = vpop.permute.xlu0 %8684
        %8686 = vrot.lane.b32.xlu0 %v8615, 127
        %v8687 = vpop.permute.xlu0 %8686
        %8688 = vrot.lane.b32.xlu0 %v8616, 127
        %v8689 = vpop.permute.xlu0 %8688
        %8690 = vrot.lane.b32.xlu0 %v8617, 127
        %v8691 = vpop.permute.xlu0 %8690
        %8692 = vrot.lane.b32.xlu0 %v8618, 127
        %v8693 = vpop.permute.xlu0 %8692
        %8694 = vrot.lane.b32.xlu0 %v8619, 127
        %v8695 = vpop.permute.xlu0 %8694
        %8696 = vrot.lane.b32.xlu0 %v8620, 127
        %v8697 = vpop.permute.xlu0 %8696
        %8698 = vrot.lane.b32.xlu0 %v8621, 127
        %v8699 = vpop.permute.xlu0 %8698
        %8700 = vrot.lane.b32.xlu0 %v8622, 127
        %v8701 = vpop.permute.xlu0 %8700
        %8702 = vrot.lane.b32.xlu0 %v8623, 127
        %v8703 = vpop.permute.xlu0 %8702
        %8704 = vrot.lane.b32.xlu0 %v8624, 127
        %v8705 = vpop.permute.xlu0 %8704
        %8706 = vrot.lane.b32.xlu0 %v8625, 127
        %v8707 = vpop.permute.xlu0 %8706
        %8708 = vrot.lane.b32.xlu0 %v8626, 127
        %v8709 = vpop.permute.xlu0 %8708
        %8710 = vrot.lane.b32.xlu0 %v8627, 127
        %v8711 = vpop.permute.xlu0 %8710
        %8712 = vrot.lane.b32.xlu0 %v8628, 127
        %v8713 = vpop.permute.xlu0 %8712
        %8714 = vrot.lane.b32.xlu0 %v8629, 127
        %v8715 = vpop.permute.xlu0 %8714
        %8716 = vrot.lane.b32.xlu0 %v8630, 127
        %v8717 = vpop.permute.xlu0 %8716
        %8718 = vrot.lane.b32.xlu0 %v8631, 127
        %v8719 = vpop.permute.xlu0 %8718
        %8720 = vrot.lane.b32.xlu0 %v8632, 127
        %v8721 = vpop.permute.xlu0 %8720
        %8722 = vrot.lane.b32.xlu0 %v8633, 127
        %v8723 = vpop.permute.xlu0 %8722
        %8724 = vrot.lane.b32.xlu0 %v8634, 127
        %v8725 = vpop.permute.xlu0 %8724
        %8726 = vrot.lane.b32.xlu0 %v8635, 127
        %v8727 = vpop.permute.xlu0 %8726
        %8728 = vrot.lane.b32.xlu0 %v8636, 127
        %v8729 = vpop.permute.xlu0 %8728
        %8730 = vrot.lane.b32.xlu0 %v8637, 127
        %v8731 = vpop.permute.xlu0 %8730
        %8732 = vrot.lane.b32.xlu0 %v8638, 127
        %v8733 = vpop.permute.xlu0 %8732
        %8734 = vrot.lane.b32.xlu0 %v8639, 127
        %v8735 = vpop.permute.xlu0 %8734
        %v8768 = vadd.f32 %v8576, %v8673
        %v8769 = vadd.f32 %v8577, %v8675
        %v8770 = vadd.f32 %v8578, %v8677
        %v8771 = vadd.f32 %v8579, %v8679
        %v8772 = vadd.f32 %v8580, %v8681
        %v8773 = vadd.f32 %v8581, %v8683
        %v8774 = vadd.f32 %v8582, %v8685
        %v8775 = vadd.f32 %v8583, %v8687
        %v8776 = vadd.f32 %v8584, %v8689
        %v8777 = vadd.f32 %v8585, %v8691
        %v8778 = vadd.f32 %v8586, %v8693
        %v8779 = vadd.f32 %v8587, %v8695
        %v8780 = vadd.f32 %v8588, %v8697
        %v8781 = vadd.f32 %v8589, %v8699
        %v8782 = vadd.f32 %v8590, %v8701
        %v8783 = vadd.f32 %v8591, %v8703
        %v8784 = vadd.f32 %v8592, %v8705
        %v8785 = vadd.f32 %v8593, %v8707
        %v8786 = vadd.f32 %v8594, %v8709
        %v8787 = vadd.f32 %v8595, %v8711
        %v8788 = vadd.f32 %v8596, %v8713
        %v8789 = vadd.f32 %v8597, %v8715
        %v8790 = vadd.f32 %v8598, %v8717
        %v8791 = vadd.f32 %v8599, %v8719
        %v8792 = vadd.f32 %v8600, %v8721
        %v8793 = vadd.f32 %v8601, %v8723
        %v8794 = vadd.f32 %v8602, %v8725
        %v8795 = vadd.f32 %v8603, %v8727
        %v8796 = vadd.f32 %v8604, %v8729
        %v8797 = vadd.f32 %v8605, %v8731
        %v8798 = vadd.f32 %v8606, %v8733
        %v8799 = vadd.f32 %v8607, %v8735
        %v8800 = vmul.f32 %v8417, %v8544
        %v8801 = vmul.f32 %v8419, %v8545
        %v8802 = vmul.f32 %v8421, %v8546
        %v8803 = vmul.f32 %v8423, %v8547
        %v8804 = vmul.f32 %v8425, %v8548
        %v8805 = vmul.f32 %v8427, %v8549
        %v8806 = vmul.f32 %v8429, %v8550
        %v8807 = vmul.f32 %v8431, %v8551
        %v8808 = vmul.f32 %v8433, %v8552
        %v8809 = vmul.f32 %v8435, %v8553
        %v8810 = vmul.f32 %v8437, %v8554
        %v8811 = vmul.f32 %v8439, %v8555
        %v8812 = vmul.f32 %v8441, %v8556
        %v8813 = vmul.f32 %v8443, %v8557
        %v8814 = vmul.f32 %v8445, %v8558
        %v8815 = vmul.f32 %v8447, %v8559
        %v8816 = vmul.f32 %v8449, %v8560
        %v8817 = vmul.f32 %v8451, %v8561
        %v8818 = vmul.f32 %v8453, %v8562
        %v8819 = vmul.f32 %v8455, %v8563
        %v8820 = vmul.f32 %v8457, %v8564
        %v8821 = vmul.f32 %v8459, %v8565
        %v8822 = vmul.f32 %v8461, %v8566
        %v8823 = vmul.f32 %v8463, %v8567
        %v8824 = vmul.f32 %v8465, %v8568
        %v8825 = vmul.f32 %v8467, %v8569
        %v8826 = vmul.f32 %v8469, %v8570
        %v8827 = vmul.f32 %v8471, %v8571
        %v8828 = vmul.f32 %v8473, %v8572
        %v8829 = vmul.f32 %v8475, %v8573
        %v8830 = vmul.f32 %v8477, %v8574
        %v8831 = vmul.f32 %v8479, %v8575
        %8864 = vrot.lane.b32.xlu0 %v8800, 126
        %v8865 = vpop.permute.xlu0 %8864
        %8866 = vrot.lane.b32.xlu0 %v8801, 126
        %v8867 = vpop.permute.xlu0 %8866
        %8868 = vrot.lane.b32.xlu0 %v8802, 126
        %v8869 = vpop.permute.xlu0 %8868
        %8870 = vrot.lane.b32.xlu0 %v8803, 126
        %v8871 = vpop.permute.xlu0 %8870
        %8872 = vrot.lane.b32.xlu0 %v8804, 126
        %v8873 = vpop.permute.xlu0 %8872
        %8874 = vrot.lane.b32.xlu0 %v8805, 126
        %v8875 = vpop.permute.xlu0 %8874
        %8876 = vrot.lane.b32.xlu0 %v8806, 126
        %v8877 = vpop.permute.xlu0 %8876
        %8878 = vrot.lane.b32.xlu0 %v8807, 126
        %v8879 = vpop.permute.xlu0 %8878
        %8880 = vrot.lane.b32.xlu0 %v8808, 126
        %v8881 = vpop.permute.xlu0 %8880
        %8882 = vrot.lane.b32.xlu0 %v8809, 126
        %v8883 = vpop.permute.xlu0 %8882
        %8884 = vrot.lane.b32.xlu0 %v8810, 126
        %v8885 = vpop.permute.xlu0 %8884
        %8886 = vrot.lane.b32.xlu0 %v8811, 126
        %v8887 = vpop.permute.xlu0 %8886
        %8888 = vrot.lane.b32.xlu0 %v8812, 126
        %v8889 = vpop.permute.xlu0 %8888
        %8890 = vrot.lane.b32.xlu0 %v8813, 126
        %v8891 = vpop.permute.xlu0 %8890
        %8892 = vrot.lane.b32.xlu0 %v8814, 126
        %v8893 = vpop.permute.xlu0 %8892
        %8894 = vrot.lane.b32.xlu0 %v8815, 126
        %v8895 = vpop.permute.xlu0 %8894
        %8896 = vrot.lane.b32.xlu0 %v8816, 126
        %v8897 = vpop.permute.xlu0 %8896
        %8898 = vrot.lane.b32.xlu0 %v8817, 126
        %v8899 = vpop.permute.xlu0 %8898
        %8900 = vrot.lane.b32.xlu0 %v8818, 126
        %v8901 = vpop.permute.xlu0 %8900
        %8902 = vrot.lane.b32.xlu0 %v8819, 126
        %v8903 = vpop.permute.xlu0 %8902
        %8904 = vrot.lane.b32.xlu0 %v8820, 126
        %v8905 = vpop.permute.xlu0 %8904
        %8906 = vrot.lane.b32.xlu0 %v8821, 126
        %v8907 = vpop.permute.xlu0 %8906
        %8908 = vrot.lane.b32.xlu0 %v8822, 126
        %v8909 = vpop.permute.xlu0 %8908
        %8910 = vrot.lane.b32.xlu0 %v8823, 126
        %v8911 = vpop.permute.xlu0 %8910
        %8912 = vrot.lane.b32.xlu0 %v8824, 126
        %v8913 = vpop.permute.xlu0 %8912
        %8914 = vrot.lane.b32.xlu0 %v8825, 126
        %v8915 = vpop.permute.xlu0 %8914
        %8916 = vrot.lane.b32.xlu0 %v8826, 126
        %v8917 = vpop.permute.xlu0 %8916
        %8918 = vrot.lane.b32.xlu0 %v8827, 126
        %v8919 = vpop.permute.xlu0 %8918
        %8920 = vrot.lane.b32.xlu0 %v8828, 126
        %v8921 = vpop.permute.xlu0 %8920
        %8922 = vrot.lane.b32.xlu0 %v8829, 126
        %v8923 = vpop.permute.xlu0 %8922
        %8924 = vrot.lane.b32.xlu0 %v8830, 126
        %v8925 = vpop.permute.xlu0 %8924
        %8926 = vrot.lane.b32.xlu0 %v8831, 126
        %v8927 = vpop.permute.xlu0 %8926
        %v8960 = vadd.f32 %v8768, %v8865
        %v8961 = vadd.f32 %v8769, %v8867
        %v8962 = vadd.f32 %v8770, %v8869
        %v8963 = vadd.f32 %v8771, %v8871
        %v8964 = vadd.f32 %v8772, %v8873
        %v8965 = vadd.f32 %v8773, %v8875
        %v8966 = vadd.f32 %v8774, %v8877
        %v8967 = vadd.f32 %v8775, %v8879
        %v8968 = vadd.f32 %v8776, %v8881
        %v8969 = vadd.f32 %v8777, %v8883
        %v8970 = vadd.f32 %v8778, %v8885
        %v8971 = vadd.f32 %v8779, %v8887
        %v8972 = vadd.f32 %v8780, %v8889
        %v8973 = vadd.f32 %v8781, %v8891
        %v8974 = vadd.f32 %v8782, %v8893
        %v8975 = vadd.f32 %v8783, %v8895
        %v8976 = vadd.f32 %v8784, %v8897
        %v8977 = vadd.f32 %v8785, %v8899
        %v8978 = vadd.f32 %v8786, %v8901
        %v8979 = vadd.f32 %v8787, %v8903
        %v8980 = vadd.f32 %v8788, %v8905
        %v8981 = vadd.f32 %v8789, %v8907
        %v8982 = vadd.f32 %v8790, %v8909
        %v8983 = vadd.f32 %v8791, %v8911
        %v8984 = vadd.f32 %v8792, %v8913
        %v8985 = vadd.f32 %v8793, %v8915
        %v8986 = vadd.f32 %v8794, %v8917
        %v8987 = vadd.f32 %v8795, %v8919
        %v8988 = vadd.f32 %v8796, %v8921
        %v8989 = vadd.f32 %v8797, %v8923
        %v8990 = vadd.f32 %v8798, %v8925
        %v8991 = vadd.f32 %v8799, %v8927
        %v8992 = vmul.f32 %v8481, %v8544
        %v8993 = vmul.f32 %v8483, %v8545
        %v8994 = vmul.f32 %v8485, %v8546
        %v8995 = vmul.f32 %v8487, %v8547
        %v8996 = vmul.f32 %v8489, %v8548
        %v8997 = vmul.f32 %v8491, %v8549
        %v8998 = vmul.f32 %v8493, %v8550
        %v8999 = vmul.f32 %v8495, %v8551
        %v9000 = vmul.f32 %v8497, %v8552
        %v9001 = vmul.f32 %v8499, %v8553
        %v9002 = vmul.f32 %v8501, %v8554
        %v9003 = vmul.f32 %v8503, %v8555
        %v9004 = vmul.f32 %v8505, %v8556
        %v9005 = vmul.f32 %v8507, %v8557
        %v9006 = vmul.f32 %v8509, %v8558
        %v9007 = vmul.f32 %v8511, %v8559
        %v9008 = vmul.f32 %v8513, %v8560
        %v9009 = vmul.f32 %v8515, %v8561
        %v9010 = vmul.f32 %v8517, %v8562
        %v9011 = vmul.f32 %v8519, %v8563
        %v9012 = vmul.f32 %v8521, %v8564
        %v9013 = vmul.f32 %v8523, %v8565
        %v9014 = vmul.f32 %v8525, %v8566
        %v9015 = vmul.f32 %v8527, %v8567
        %v9016 = vmul.f32 %v8529, %v8568
        %v9017 = vmul.f32 %v8531, %v8569
        %v9018 = vmul.f32 %v8533, %v8570
        %v9019 = vmul.f32 %v8535, %v8571
        %v9020 = vmul.f32 %v8537, %v8572
        %v9021 = vmul.f32 %v8539, %v8573
        %v9022 = vmul.f32 %v8541, %v8574
        %v9023 = vmul.f32 %v8543, %v8575
        %9056 = vrot.lane.b32.xlu0 %v8992, 125
        %v9057 = vpop.permute.xlu0 %9056
        %9058 = vrot.lane.b32.xlu0 %v8993, 125
        %v9059 = vpop.permute.xlu0 %9058
        %9060 = vrot.lane.b32.xlu0 %v8994, 125
        %v9061 = vpop.permute.xlu0 %9060
        %9062 = vrot.lane.b32.xlu0 %v8995, 125
        %v9063 = vpop.permute.xlu0 %9062
        %9064 = vrot.lane.b32.xlu0 %v8996, 125
        %v9065 = vpop.permute.xlu0 %9064
        %9066 = vrot.lane.b32.xlu0 %v8997, 125
        %v9067 = vpop.permute.xlu0 %9066
        %9068 = vrot.lane.b32.xlu0 %v8998, 125
        %v9069 = vpop.permute.xlu0 %9068
        %9070 = vrot.lane.b32.xlu0 %v8999, 125
        %v9071 = vpop.permute.xlu0 %9070
        %9072 = vrot.lane.b32.xlu0 %v9000, 125
        %v9073 = vpop.permute.xlu0 %9072
        %9074 = vrot.lane.b32.xlu0 %v9001, 125
        %v9075 = vpop.permute.xlu0 %9074
        %9076 = vrot.lane.b32.xlu0 %v9002, 125
        %v9077 = vpop.permute.xlu0 %9076
        %9078 = vrot.lane.b32.xlu0 %v9003, 125
        %v9079 = vpop.permute.xlu0 %9078
        %9080 = vrot.lane.b32.xlu0 %v9004, 125
        %v9081 = vpop.permute.xlu0 %9080
        %9082 = vrot.lane.b32.xlu0 %v9005, 125
        %v9083 = vpop.permute.xlu0 %9082
        %9084 = vrot.lane.b32.xlu0 %v9006, 125
        %v9085 = vpop.permute.xlu0 %9084
        %9086 = vrot.lane.b32.xlu0 %v9007, 125
        %v9087 = vpop.permute.xlu0 %9086
        %9088 = vrot.lane.b32.xlu0 %v9008, 125
        %v9089 = vpop.permute.xlu0 %9088
        %9090 = vrot.lane.b32.xlu0 %v9009, 125
        %v9091 = vpop.permute.xlu0 %9090
        %9092 = vrot.lane.b32.xlu0 %v9010, 125
        %v9093 = vpop.permute.xlu0 %9092
        %9094 = vrot.lane.b32.xlu0 %v9011, 125
        %v9095 = vpop.permute.xlu0 %9094
        %9096 = vrot.lane.b32.xlu0 %v9012, 125
        %v9097 = vpop.permute.xlu0 %9096
        %9098 = vrot.lane.b32.xlu0 %v9013, 125
        %v9099 = vpop.permute.xlu0 %9098
        %9100 = vrot.lane.b32.xlu0 %v9014, 125
        %v9101 = vpop.permute.xlu0 %9100
        %9102 = vrot.lane.b32.xlu0 %v9015, 125
        %v9103 = vpop.permute.xlu0 %9102
        %9104 = vrot.lane.b32.xlu0 %v9016, 125
        %v9105 = vpop.permute.xlu0 %9104
        %9106 = vrot.lane.b32.xlu0 %v9017, 125
        %v9107 = vpop.permute.xlu0 %9106
        %9108 = vrot.lane.b32.xlu0 %v9018, 125
        %v9109 = vpop.permute.xlu0 %9108
        %9110 = vrot.lane.b32.xlu0 %v9019, 125
        %v9111 = vpop.permute.xlu0 %9110
        %9112 = vrot.lane.b32.xlu0 %v9020, 125
        %v9113 = vpop.permute.xlu0 %9112
        %9114 = vrot.lane.b32.xlu0 %v9021, 125
        %v9115 = vpop.permute.xlu0 %9114
        %9116 = vrot.lane.b32.xlu0 %v9022, 125
        %v9117 = vpop.permute.xlu0 %9116
        %9118 = vrot.lane.b32.xlu0 %v9023, 125
        %v9119 = vpop.permute.xlu0 %9118
        %v9152 = vadd.f32 %v8960, %v9057
        %v9153 = vadd.f32 %v8961, %v9059
        %v9154 = vadd.f32 %v8962, %v9061
        %v9155 = vadd.f32 %v8963, %v9063
        %v9156 = vadd.f32 %v8964, %v9065
        %v9157 = vadd.f32 %v8965, %v9067
        %v9158 = vadd.f32 %v8966, %v9069
        %v9159 = vadd.f32 %v8967, %v9071
        %v9160 = vadd.f32 %v8968, %v9073
        %v9161 = vadd.f32 %v8969, %v9075
        %v9162 = vadd.f32 %v8970, %v9077
        %v9163 = vadd.f32 %v8971, %v9079
        %v9164 = vadd.f32 %v8972, %v9081
        %v9165 = vadd.f32 %v8973, %v9083
        %v9166 = vadd.f32 %v8974, %v9085
        %v9167 = vadd.f32 %v8975, %v9087
        %v9168 = vadd.f32 %v8976, %v9089
        %v9169 = vadd.f32 %v8977, %v9091
        %v9170 = vadd.f32 %v8978, %v9093
        %v9171 = vadd.f32 %v8979, %v9095
        %v9172 = vadd.f32 %v8980, %v9097
        %v9173 = vadd.f32 %v8981, %v9099
        %v9174 = vadd.f32 %v8982, %v9101
        %v9175 = vadd.f32 %v8983, %v9103
        %v9176 = vadd.f32 %v8984, %v9105
        %v9177 = vadd.f32 %v8985, %v9107
        %v9178 = vadd.f32 %v8986, %v9109
        %v9179 = vadd.f32 %v8987, %v9111
        %v9180 = vadd.f32 %v8988, %v9113
        %v9181 = vadd.f32 %v8989, %v9115
        %v9182 = vadd.f32 %v8990, %v9117
        %v9183 = vadd.f32 %v8991, %v9119
        %vm9184 = vcmask 7168
        %9185 = vst.msk [vmem:[%s1489] sm:$0xff] %vm9184, %v9152
        %9186 = vst.msk [vmem:[%s1489 + $0x8] sm:$0xff] %vm9184, %v9153
        %9187 = vst.msk [vmem:[%s1489 + $0x10] sm:$0xff] %vm9184, %v9154
        %9188 = vst.msk [vmem:[%s1489 + $0x18] sm:$0xff] %vm9184, %v9155
        %9189 = vst.msk [vmem:[%s1489 + $0x20] sm:$0xff] %vm9184, %v9156
        %9190 = vst.msk [vmem:[%s1489 + $0x28] sm:$0xff] %vm9184, %v9157
        %9191 = vst.msk [vmem:[%s1489 + $0x30] sm:$0xff] %vm9184, %v9158
        %9192 = vst.msk [vmem:[%s1489 + $0x38] sm:$0xff] %vm9184, %v9159
        %9193 = vst.msk [vmem:[%s1489 + $0x40] sm:$0xff] %vm9184, %v9160
        %9194 = vst.msk [vmem:[%s1489 + $0x48] sm:$0xff] %vm9184, %v9161
        %9195 = vst.msk [vmem:[%s1489 + $0x50] sm:$0xff] %vm9184, %v9162
        %9196 = vst.msk [vmem:[%s1489 + $0x58] sm:$0xff] %vm9184, %v9163
        %9197 = vst.msk [vmem:[%s1489 + $0x60] sm:$0xff] %vm9184, %v9164
        %9198 = vst.msk [vmem:[%s1489 + $0x68] sm:$0xff] %vm9184, %v9165
        %9199 = vst.msk [vmem:[%s1489 + $0x70] sm:$0xff] %vm9184, %v9166
        %9200 = vst.msk [vmem:[%s1489 + $0x78] sm:$0xff] %vm9184, %v9167
        %9201 = vst.msk [vmem:[%s1489 + $0x80] sm:$0xff] %vm9184, %v9168
        %9202 = vst.msk [vmem:[%s1489 + $0x88] sm:$0xff] %vm9184, %v9169
        %9203 = vst.msk [vmem:[%s1489 + $0x90] sm:$0xff] %vm9184, %v9170
        %9204 = vst.msk [vmem:[%s1489 + $0x98] sm:$0xff] %vm9184, %v9171
        %9205 = vst.msk [vmem:[%s1489 + $0xa0] sm:$0xff] %vm9184, %v9172
        %9206 = vst.msk [vmem:[%s1489 + $0xa8] sm:$0xff] %vm9184, %v9173
        %9207 = vst.msk [vmem:[%s1489 + $0xb0] sm:$0xff] %vm9184, %v9174
        %9208 = vst.msk [vmem:[%s1489 + $0xb8] sm:$0xff] %vm9184, %v9175
        %9209 = vst.msk [vmem:[%s1489 + $0xc0] sm:$0xff] %vm9184, %v9176
        %9210 = vst.msk [vmem:[%s1489 + $0xc8] sm:$0xff] %vm9184, %v9177
        %9211 = vst.msk [vmem:[%s1489 + $0xd0] sm:$0xff] %vm9184, %v9178
        %9212 = vst.msk [vmem:[%s1489 + $0xd8] sm:$0xff] %vm9184, %v9179
        %9213 = vst.msk [vmem:[%s1489 + $0xe0] sm:$0xff] %vm9184, %v9180
        %9214 = vst.msk [vmem:[%s1489 + $0xe8] sm:$0xff] %vm9184, %v9181
        %9215 = vst.msk [vmem:[%s1489 + $0xf0] sm:$0xff] %vm9184, %v9182
        %9216 = vst.msk [vmem:[%s1489 + $0xf8] sm:$0xff] %vm9184, %v9183
        %s9217 = smul.u32 32, %s21
        %p9218 = scmp.lt.s32.totalorder %s9217, 127
        %s9219 = scalar_select %p9218, %s9217, 127
        %s9220 = smul.addr %s9219, 8
        %s9221 = scalar_lea.vmem %s10, %s9220
        // Predicated region
        $region137: #{tpu_custom_call.1} parent=127 // pred_check
          %p9222 = pneg %p264
        $region138: #{tpu_custom_call.1} parent=127 // pred_check_branch
          %9224 = sbr.rel (%p9222) target = $region140
        $region139: #{tpu_custom_call.1} parent=127 // pred_region
          %s9225 = smul.u32 32, %s21
        $region140: #{tpu_custom_call.1} parent=127 // pred_fallthru
          _
      $region128: #{tpu_custom_call.1} parent=5 // pred_fallthru
        _
      %p9226 = scmp.le.s32.totalorder 2, %s16
      // Predicated region
      $region141: #{tpu_custom_call.1} parent=5 // pred_check
        %p9227 = pneg %p9226
      $region142: #{tpu_custom_call.1} parent=5 // pred_check_branch
        %9229 = sbr.rel (%p9227) target = $region144
      $region143: #{tpu_custom_call.1} parent=5 // pred_region
        %s9230 = ssub.s32 %s16, 2
        // Predicated region
        $region145: #{tpu_custom_call.1} parent=143 // pred_check
          %p9231 = pneg %p270
        $region146: #{tpu_custom_call.1} parent=143 // pred_check_branch
          %9233 = sbr.rel (%p9231) target = $region148
        $region147: #{tpu_custom_call.1} parent=143 // pred_region
          %s9234 = smul.u32 32, %s22
          %p9235 = scmp.lt.s32.totalorder %s9234, 127
          %s9236 = scalar_select %p9235, %s9234, 127
          %s9237 = smul.addr %s9236, 8
          %s9238 = scalar_lea.vmem %s10, %s9237
        $region148: #{tpu_custom_call.1} parent=143 // pred_fallthru
          _
      $region144: #{tpu_custom_call.1} parent=5 // pred_fallthru
        _
    $region6: #{tpu_custom_call.1} parent=1 // loop_footer
      %s20 = sadd.s32 1, %s16
    $region7: #{tpu_custom_call.1} parent=1 // loop_footer_branch
      %15 = sbr.rel target = $region3
    $region8: #{tpu_custom_call.1} parent=1 // loop_exit
      _

</llo_original>
